<compile_context>
chip_gen: v6e
topology: v6e:2x2x1
jax: 0.10.0
libtpu: 0.0.40
codegen_flags: <defaults>
</compile_context>

<pallas_src>
import math
from functools import partial

import numpy as np

import jax
import jax.numpy as jnp
from jax.experimental import pallas as pl
from jax.experimental.pallas import tpu as pltpu


def _round_up(x: int, m: int) -> int:
    return (x + m - 1) // m * m


# ----------------------------- MLP head kernel ----------------------------- #

def _mlp_kernel(x_ref, w1_ref, b1_ref, w2_ref, b2_ref, out_ref):
    # Linear(H, 3H) -> ReLU -> Linear(3H, 3[pad 8]).
    # First matmul bf16 on the MXU with f32 accumulation; second (tiny) in f32.
    h = jnp.dot(x_ref[...], w1_ref[...], preferred_element_type=jnp.float32)
    h = jnp.maximum(h + b1_ref[...], 0.0)
    y = jnp.dot(h, w2_ref[...], preferred_element_type=jnp.float32)
    out_ref[...] = y + b2_ref[...]


def _mlp_head(x_pad_bf16, w1, b1, w2, b2, *, row_tile):
    NP, HP = x_pad_bf16.shape
    H3P = w1.shape[1]
    OP = w2.shape[1]                      # 8 (3 useful lanes + zero pad)
    grid = (NP // row_tile,)
    flops = 2 * NP * HP * H3P + 2 * NP * H3P * OP
    bytes_accessed = NP * HP * 2 + HP * H3P * 2 + H3P * OP * 4 + NP * OP * 4
    return pl.pallas_call(
        _mlp_kernel,
        out_shape=jax.ShapeDtypeStruct((NP, OP), jnp.float32),
        grid_spec=pltpu.PrefetchScalarGridSpec(
            num_scalar_prefetch=0,
            grid=grid,
            in_specs=[
                pl.BlockSpec((row_tile, HP), lambda i: (i, 0)),   # activations
                pl.BlockSpec((HP, H3P), lambda i: (0, 0)),        # w1 (resident)
                pl.BlockSpec((1, H3P), lambda i: (0, 0)),         # b1
                pl.BlockSpec((H3P, OP), lambda i: (0, 0)),        # w2 (resident)
                pl.BlockSpec((1, OP), lambda i: (0, 0)),          # b2
            ],
            out_specs=pl.BlockSpec((row_tile, OP), lambda i: (i, 0)),
        ),
        compiler_params=pltpu.CompilerParams(
            dimension_semantics=("parallel",),
            vmem_limit_bytes=32 * 1024 * 1024),
        cost_estimate=pl.CostEstimate(
            flops=flops, transcendentals=0, bytes_accessed=bytes_accessed),
    )(x_pad_bf16, w1, b1, w2, b2)


# ------------------------- masked cdist loss kernel ------------------------- #

def _reduce_pair_to_vreg(x):
    """(tm, tn) f32 -> (sum(x), sum(x*x)) as two (8,128) vregs.

    Static, vreg-aligned strip adds only (pure VALU; no cross-lane XLU reduce).
    Requires tm % 8 == 0 and tn % 128 == 0.
    """
    tm, tn = x.shape
    a = x[:, 0:128]
    s = a * a
    for j in range(1, tn // 128):
        blk = x[:, j * 128:(j + 1) * 128]
        a = a + blk
        s = s + blk * blk
    a8 = a[0:8, :]
    s8 = s[0:8, :]
    for r in range(1, tm // 8):
        a8 = a8 + a[r * 8:(r + 1) * 8, :]
        s8 = s8 + s[r * 8:(r + 1) * 8, :]
    return a8, s8


def _loss_kernel(nact_ref, cidx_ref,                         # scalar-prefetch (SMEM)
                 c_ref, ct_ref, ch_ref, cht_ref, bcol_ref, brow_ref,
                 mae_part_ref, mse_part_ref,
                 acc_mae_ref, acc_mse_ref):                  # VMEM (8,128) scratch
    del cidx_ref                                             # used only in index_maps
    i = pl.program_id(0)
    k = pl.program_id(1)

    @pl.when(k == 0)
    def _():
        acc_mae_ref[...] = jnp.zeros_like(acc_mae_ref)
        acc_mse_ref[...] = jnp.zeros_like(acc_mse_ref)

    # Only the first n_active[i] column-tile slots of this row carry real work.
    @pl.when(k < nact_ref[i])
    def _():
        c = c_ref[...]          # [TM, 3]  row-tile coords
        ct = ct_ref[...]        # [3, TN]  col-tile coords (lane-dense)
        ch = ch_ref[...]        # [TM, 8]  row-tile predicted coords
        cht = cht_ref[...]      # [8, TN]  col-tile predicted coords (lane-dense)

        d0 = c[:, 0:1] - ct[0:1, :]
        d1 = c[:, 1:2] - ct[1:2, :]
        d2 = c[:, 2:3] - ct[2:3, :]
        dist = jnp.sqrt(d0 * d0 + d1 * d1 + d2 * d2)

        e0 = ch[:, 0:1] - cht[0:1, :]
        e1 = ch[:, 1:2] - cht[1:2, :]
        e2 = ch[:, 2:3] - cht[2:3, :]
        dist_h = jnp.sqrt(e0 * e0 + e1 * e1 + e2 * e2)

        diff = dist - dist_h
        m = bcol_ref[...] == brow_ref[...]            # int32 compare, [TM, TN]
        adiff = jnp.where(m, jnp.abs(diff), 0.0)      # m*|d-dh|; m*(d-dh)^2 = adiff^2

        a8, s8 = _reduce_pair_to_vreg(adiff)
        acc_mae_ref[...] += a8
        acc_mse_ref[...] += s8

    @pl.when(k == pl.num_programs(1) - 1)
    def _():
        mae_part_ref[...] = acc_mae_ref[...]
        mse_part_ref[...] = acc_mse_ref[...]


def _masked_cdist_sums(c_pad, ct_pad, ch_rm, ch_T, bcol, brow,
                       n_act, col_idx, *, tm, tn):
    NP = c_pad.shape[0]
    gi = NP // tm
    kmax = col_idx.shape[0] // gi                     # static under jit

    row_map = lambda i, k, *_: (i, 0)
    col_map = lambda i, k, nact, cidx: (0, cidx[i * kmax + k])

    active = gi * kmax
    flops = 22 * active * tm * tn
    bytes_accessed = active * (tm * (3 + 8 + 1) * 4 + tn * (3 + 8 + 1) * 4) \
        + gi * 8 * 128 * 4 * 2

    mae_part, mse_part = pl.pallas_call(
        _loss_kernel,
        out_shape=(jax.ShapeDtypeStruct((gi * 8, 128), jnp.float32),
                   jax.ShapeDtypeStruct((gi * 8, 128), jnp.float32)),
        grid_spec=pltpu.PrefetchScalarGridSpec(
            num_scalar_prefetch=2,                 # n_act, col_idx
            grid=(gi, kmax),
            in_specs=[
                pl.BlockSpec((tm, 3), row_map),    # conformer rows
                pl.BlockSpec((3, tn), col_map),    # conformer cols^T (lane-dense)
                pl.BlockSpec((tm, 8), row_map),    # conformer_hat rows
                pl.BlockSpec((8, tn), col_map),    # conformer_hat cols^T
                pl.BlockSpec((tm, 1), row_map),    # batch ids (col vec)
                pl.BlockSpec((1, tn), col_map),    # batch ids (row vec)
            ],
            out_specs=(pl.BlockSpec((8, 128), lambda i, k, *_: (i, 0)),
                       pl.BlockSpec((8, 128), lambda i, k, *_: (i, 0))),
            scratch_shapes=[pltpu.VMEM((8, 128), jnp.float32),
                            pltpu.VMEM((8, 128), jnp.float32)],
        ),
        compiler_params=pltpu.CompilerParams(
            dimension_semantics=("parallel", "arbitrary"),
            vmem_limit_bytes=32 * 1024 * 1024),
        cost_estimate=pl.CostEstimate(
            flops=flops, transcendentals=2 * active * tm * tn,
            bytes_accessed=bytes_accessed),
    )(n_act, col_idx, c_pad, ct_pad, ch_rm, ch_T, bcol, brow)

    return jnp.sum(mae_part), jnp.sum(mse_part)


# ------------------------------- parameters -------------------------------- #

def init_params(key, hidden_dim: int):
    """Deterministic nn.Linear-style init (uniform +/- 1/sqrt(fan_in)), f32."""
    k1, k2, k3, k4 = jax.random.split(key, 4)
    s1 = 1.0 / jnp.sqrt(jnp.float32(hidden_dim))
    s2 = 1.0 / jnp.sqrt(jnp.float32(3 * hidden_dim))
    w1 = jax.random.uniform(k1, (hidden_dim, 3 * hidden_dim), jnp.float32, -s1, s1)
    b1 = jax.random.uniform(k2, (3 * hidden_dim,), jnp.float32, -s1, s1)
    w2 = jax.random.uniform(k3, (3 * hidden_dim, 3), jnp.float32, -s2, s2)
    b2 = jax.random.uniform(k4, (3,), jnp.float32, -s2, s2)
    return {"w1": w1, "b1": b1, "w2": w2, "b2": b2}


# --------------------------- jitted forward (static shapes) ----------------- #

@partial(jax.jit, static_argnames=("mlp_row_tile", "loss_tm", "loss_tn"))
def _forward_impl(conformer, hidden_X, params, batch_pad, col_idx, n_act, msum,
                  *, mlp_row_tile, loss_tm, loss_tn):
    N, H = hidden_X.shape
    NP = batch_pad.shape[0]
    H3 = 3 * H
    HP = _round_up(H, 128)
    H3P = _round_up(H3, 128)
    OP = 8

    # ---- conformer_hat = head(hidden_X) ----
    x_pad = jnp.zeros((NP, HP), jnp.bfloat16).at[:N, :H].set(
        hidden_X.astype(jnp.bfloat16))
    w1 = jnp.zeros((HP, H3P), jnp.bfloat16).at[:H, :H3].set(
        params["w1"].astype(jnp.bfloat16))
    b1 = jnp.zeros((1, H3P), jnp.float32).at[0, :H3].set(params["b1"])
    w2 = jnp.zeros((H3P, OP), jnp.float32).at[:H3, :3].set(params["w2"])
    b2 = jnp.zeros((1, OP), jnp.float32).at[0, :3].set(params["b2"])

    chat_rm = _mlp_head(x_pad, w1, b1, w2, b2, row_tile=mlp_row_tile)  # [NP, 8]
    conformer_hat = chat_rm[:N, :3]
    chat_T = chat_rm.T                                                 # [8, NP]

    # ---- padded coordinate slabs (row-major + lane-dense transposed) ----
    c_pad = jnp.zeros((NP, 3), jnp.float32).at[:N].set(conformer)
    ct_pad = c_pad.T                                                   # [3, NP]

    bcol = batch_pad.reshape(NP, 1)
    brow = batch_pad.reshape(1, NP)

    mae_sum, mse_sum = _masked_cdist_sums(
        c_pad, ct_pad, chat_rm, chat_T, bcol, brow, n_act, col_idx,
        tm=loss_tm, tn=loss_tn)

    mae = mae_sum / msum
    mse = mse_sum / msum
    return {"loss": mae, "cdist_mae": mae, "cdist_mse": mse,
            "conformer": conformer, "conformer_hat": conformer_hat}


# ------------------------ host wrapper (tile schedule) ---------------------- #

def _build_tile_schedule(batch_pad_np, gi, gj, tm, tn):
    """Per row-tile list of overlapping column tiles (conservative id ranges)."""
    rb = batch_pad_np.reshape(gi, tm)
    cb = batch_pad_np.reshape(gj, tn)
    rmin, rmax = rb.min(axis=1), rb.max(axis=1)
    cmin, cmax = cb.min(axis=1), cb.max(axis=1)
    overlap = (rmin[:, None] <= cmax[None, :]) & (cmin[None, :] <= rmax[:, None])
    n_act = overlap.sum(axis=1).astype(np.int32)
    kmax = int(max(1, n_act.max()))
    col_idx = np.zeros((gi, kmax), dtype=np.int32)
    for i in range(gi):
        cols = np.nonzero(overlap[i])[0].astype(np.int32)
        col_idx[i, :cols.size] = cols
    return n_act, col_idx.reshape(-1), kmax


def gnn_conformer_prediction_head(conformer, hidden_X, batch, params,
                                  *, mlp_row_tile=512, loss_tm=256, loss_tn=512):
    assert mlp_row_tile % 8 == 0 and loss_tm % 8 == 0 and loss_tn % 128 == 0
    N, H = hidden_X.shape
    NP = _round_up(N, math.lcm(mlp_row_tile, loss_tm, loss_tn))
    gi, gj = NP // loss_tm, NP // loss_tn

    # Host-side (numpy) schedule: padded batch ids with unique sentinels for
    # padded nodes (never match a real node; pad-pad off-diagonal never match,
    # diagonal contributes exactly 0), active-tile compaction, and M.sum().
    batch_np = np.asarray(jax.device_get(batch)).astype(np.int32)
    base = int(batch_np.max()) + 1
    pad_ids = base + np.arange(NP - N, dtype=np.int32)
    batch_pad_np = np.concatenate([batch_np, pad_ids])

    n_act_np, col_idx_np, _ = _build_tile_schedule(
        batch_pad_np, gi, gj, loss_tm, loss_tn)

    # M.sum() = sum over graphs of n_g^2 (robust to non-contiguous ids).
    _, counts = np.unique(batch_np, return_counts=True)
    msum = float(np.sum(counts.astype(np.float64) ** 2))

    return _forward_impl(
        conformer, hidden_X, params,
        jnp.asarray(batch_pad_np, dtype=jnp.int32),
        jnp.asarray(col_idx_np, dtype=jnp.int32),
        jnp.asarray(n_act_np, dtype=jnp.int32),
        jnp.float32(msum),
        mlp_row_tile=mlp_row_tile, loss_tm=loss_tm, loss_tn=loss_tn)


# -------------------------------- reference --------------------------------- #

def _reference(conformer, hidden_X, batch, params):
    h = jnp.maximum(hidden_X @ params["w1"] + params["b1"], 0.0)
    chat = h @ params["w2"] + params["b2"]

    def cdist(x):
        d2 = jnp.sum((x[:, None, :] - x[None, :, :]) ** 2, axis=-1)
        return jnp.sqrt(d2)

    D, Dh = cdist(conformer), cdist(chat)
    M = (batch[:, None] == batch[None, :]).astype(jnp.float32)
    mae = jnp.sum(jnp.abs(D * M - Dh * M)) / jnp.sum(M)
    mse = jnp.sum((D * M - Dh * M) ** 2) / jnp.sum(M)
    return chat, mae, mse


# ----------------------------------- main ------------------------------------ #

if __name__ == "__main__":
    key = jax.random.PRNGKey(0)
    H = 32      # hidden_X_dim (small test size; module default is 300)
    N = 16      # total nodes across the batched graphs

    kx, kc, kp = jax.random.split(key, 3)
    hidden_X = jax.random.normal(kx, (N, H), dtype=jnp.float32)
    conformer = jax.random.normal(kc, (N, 3), dtype=jnp.float32)
    batch = jnp.array([0] * 6 + [1] * 10, dtype=jnp.int32)
    params = init_params(kp, H)

    out = gnn_conformer_prediction_head(conformer, hidden_X, batch, params)
    out = jax.block_until_ready(out)

    chat_ref, mae_ref, mse_ref = _reference(conformer, hidden_X, batch, params)
    # bf16 first matmul on the MXU -> slightly looser tolerance than pure f32.
    assert jnp.allclose(out["conformer_hat"], chat_ref, rtol=2e-2, atol=2e-2)
    assert jnp.allclose(out["cdist_mae"], mae_ref, rtol=2e-2, atol=2e-2)
    assert jnp.allclose(out["cdist_mse"], mse_ref, rtol=2e-2, atol=2e-2)
    assert jnp.allclose(out["loss"], out["cdist_mae"])

    print("KERNEL_OK")
</pallas_src>

<mosaic_0001>
module attributes {stable_mosaic.version = 11 : i64} {
  func.func @_mlp_kernel(%arg0: i32, %arg1: memref<512x128xbf16, #tpu.memory_space<vmem>>, %arg2: memref<128x128xbf16, #tpu.memory_space<vmem>>, %arg3: memref<1x128xf32, #tpu.memory_space<vmem>>, %arg4: memref<128x8xf32, #tpu.memory_space<vmem>>, %arg5: memref<1x8xf32, #tpu.memory_space<vmem>>, %arg6: memref<512x8xf32, #tpu.memory_space<vmem>>) attributes {dimension_semantics = [#tpu.dimension_semantics<parallel>], iteration_bounds = array<i64: 1>, scalar_prefetch = 0 : i64, scratch_operands = 0 : i64, tpu.core_type = #tpu.core_type<tc>, window_params = [{transform_indices = @transform_0, window_bounds = array<i64: 512, 128>}, {pipeline_mode = #tpu.pipeline_mode<synchronous>, transform_indices = @transform_1, window_bounds = array<i64: 128, 128>}, {pipeline_mode = #tpu.pipeline_mode<synchronous>, transform_indices = @transform_2, window_bounds = array<i64: 1, 128>}, {pipeline_mode = #tpu.pipeline_mode<synchronous>, transform_indices = @transform_3, window_bounds = array<i64: 128, 8>}, {pipeline_mode = #tpu.pipeline_mode<synchronous>, transform_indices = @transform_4, window_bounds = array<i64: 1, 8>}, {transform_indices = @transform_5, window_bounds = array<i64: 512, 8>}]} {
    %c0 = arith.constant 0 : index
    %c0_0 = arith.constant 0 : index
    %0 = vector.load %arg1[%c0, %c0_0] : memref<512x128xbf16, #tpu.memory_space<vmem>>, vector<512x128xbf16>
    %c0_1 = arith.constant 0 : index
    %c0_2 = arith.constant 0 : index
    %1 = vector.load %arg2[%c0_1, %c0_2] : memref<128x128xbf16, #tpu.memory_space<vmem>>, vector<128x128xbf16>
    %cst = arith.constant dense<0.000000e+00> : vector<512x128xf32>
    %2 = tpu.matmul %0, %1, %cst {dimension_numbers = #tpu.dot_dimension_numbers<[1], [0], [0], [1], [0, 0, 1, 1], [], []>} : vector<512x128xbf16>, vector<128x128xbf16>, vector<512x128xf32> -> vector<512x128xf32>
    %c0_3 = arith.constant 0 : index
    %c0_4 = arith.constant 0 : index
    %3 = vector.load %arg3[%c0_3, %c0_4] : memref<1x128xf32, #tpu.memory_space<vmem>>, vector<1x128xf32>
    %4 = vector.broadcast %3 : vector<1x128xf32> to vector<512x128xf32>
    %5 = arith.addf %2, %4 : vector<512x128xf32>
    %cst_5 = arith.constant 0.000000e+00 : f32
    %6 = vector.broadcast %cst_5 : f32 to vector<512x128xf32>
    %7 = arith.maximumf %5, %6 : vector<512x128xf32>
    %c0_6 = arith.constant 0 : index
    %c0_7 = arith.constant 0 : index
    %8 = vector.load %arg4[%c0_6, %c0_7] : memref<128x8xf32, #tpu.memory_space<vmem>>, vector<128x8xf32>
    %cst_8 = arith.constant dense<0.000000e+00> : vector<512x8xf32>
    %9 = tpu.matmul %7, %8, %cst_8 {dimension_numbers = #tpu.dot_dimension_numbers<[1], [0], [0], [1], [0, 0, 1, 1], [], []>} : vector<512x128xf32>, vector<128x8xf32>, vector<512x8xf32> -> vector<512x8xf32>
    %c0_9 = arith.constant 0 : index
    %c0_10 = arith.constant 0 : index
    %10 = vector.load %arg5[%c0_9, %c0_10] : memref<1x8xf32, #tpu.memory_space<vmem>>, vector<1x8xf32>
    %11 = vector.broadcast %10 : vector<1x8xf32> to vector<512x8xf32>
    %12 = arith.addf %9, %11 : vector<512x8xf32>
    %c0_11 = arith.constant 0 : index
    %c0_12 = arith.constant 0 : index
    %13 = vector.load %arg6[%c0_11, %c0_12] : memref<512x8xf32, #tpu.memory_space<vmem>>, vector<512x8xf32>
    tpu.vector_store %arg6[%c0_11, %c0_12], %12 {strides = array<i32>} : memref<512x8xf32, #tpu.memory_space<vmem>>, vector<512x8xf32>,
    return
  }
  func.func @transform_0(%arg0: i32) -> (i32, i32) {
    %c0_i32 = arith.constant 0 : i32
    %c0_i32_0 = arith.constant 0 : i32
    return %arg0, %c0_i32 : i32, i32
  }
  func.func @transform_1(%arg0: i32) -> (i32, i32) {
    %c0_i32 = arith.constant 0 : i32
    %c0_i32_0 = arith.constant 0 : i32
    %c0_i32_1 = arith.constant 0 : i32
    return %c0_i32, %c0_i32_0 : i32, i32
  }
  func.func @transform_2(%arg0: i32) -> (i32, i32) {
    %c0_i32 = arith.constant 0 : i32
    %c0_i32_0 = arith.constant 0 : i32
    %c0_i32_1 = arith.constant 0 : i32
    return %c0_i32, %c0_i32_0 : i32, i32
  }
  func.func @transform_3(%arg0: i32) -> (i32, i32) {
    %c0_i32 = arith.constant 0 : i32
    %c0_i32_0 = arith.constant 0 : i32
    %c0_i32_1 = arith.constant 0 : i32
    return %c0_i32, %c0_i32_0 : i32, i32
  }
  func.func @transform_4(%arg0: i32) -> (i32, i32) {
    %c0_i32 = arith.constant 0 : i32
    %c0_i32_0 = arith.constant 0 : i32
    %c0_i32_1 = arith.constant 0 : i32
    return %c0_i32, %c0_i32_0 : i32, i32
  }
  func.func @transform_5(%arg0: i32) -> (i32, i32) {
    %c0_i32 = arith.constant 0 : i32
    %c0_i32_0 = arith.constant 0 : i32
    return %arg0, %c0_i32 : i32, i32
  }
}

module attributes {stable_mosaic.version = 11 : i64} {
  func.func @_loss_kernel(%arg0: i32, %arg1: i32, %arg2: memref<2xi32, #tpu.memory_space<smem>>, %arg3: memref<2xi32, #tpu.memory_space<smem>>, %arg4: memref<256x3xf32, #tpu.memory_space<vmem>>, %arg5: memref<3x512xf32, #tpu.memory_space<vmem>>, %arg6: memref<256x8xf32, #tpu.memory_space<vmem>>, %arg7: memref<8x512xf32, #tpu.memory_space<vmem>>, %arg8: memref<256x1xi32, #tpu.memory_space<vmem>>, %arg9: memref<1x512xi32, #tpu.memory_space<vmem>>, %arg10: memref<8x128xf32, #tpu.memory_space<vmem>>, %arg11: memref<8x128xf32, #tpu.memory_space<vmem>>, %arg12: memref<8x128xf32, #tpu.memory_space<vmem>>, %arg13: memref<8x128xf32, #tpu.memory_space<vmem>>) attributes {dimension_semantics = [#tpu.dimension_semantics<parallel>, #tpu.dimension_semantics<arbitrary>], iteration_bounds = array<i64: 2, 1>, scalar_prefetch = 2 : i64, scratch_operands = 2 : i64, tpu.core_type = #tpu.core_type<tc>, window_params = [{transform_indices = @transform_0, window_bounds = array<i64: 256, 3>}, {transform_indices = @transform_1, window_bounds = array<i64: 3, 512>}, {transform_indices = @transform_2, window_bounds = array<i64: 256, 8>}, {transform_indices = @transform_3, window_bounds = array<i64: 8, 512>}, {transform_indices = @transform_4, window_bounds = array<i64: 256, 1>}, {transform_indices = @transform_5, window_bounds = array<i64: 1, 512>}, {transform_indices = @transform_6, window_bounds = array<i64: 8, 128>}, {transform_indices = @transform_7, window_bounds = array<i64: 8, 128>}]} {
    %c0_i32 = arith.constant 0 : i32
    %0 = arith.cmpi eq, %arg1, %c0_i32 : i32
    %1 = arith.extui %0 : i1 to i32
    %c0_i32_0 = arith.constant 0 : i32
    %2 = arith.cmpi ne, %1, %c0_i32_0 : i32
    scf.if %2 {
      %cst = arith.constant 0.000000e+00 : f32
      %11 = vector.broadcast %cst : f32 to vector<8x128xf32>
      %c0 = arith.constant 0 : index
      %c0_4 = arith.constant 0 : index
      %12 = vector.load %arg12[%c0, %c0_4] : memref<8x128xf32, #tpu.memory_space<vmem>>, vector<8x128xf32>
      tpu.vector_store %arg12[%c0, %c0_4], %11 {strides = array<i32>} : memref<8x128xf32, #tpu.memory_space<vmem>>, vector<8x128xf32>,
      %cst_5 = arith.constant 0.000000e+00 : f32
      %13 = vector.broadcast %cst_5 : f32 to vector<8x128xf32>
      %c0_6 = arith.constant 0 : index
      %c0_7 = arith.constant 0 : index
      %14 = vector.load %arg13[%c0_6, %c0_7] : memref<8x128xf32, #tpu.memory_space<vmem>>, vector<8x128xf32>
      tpu.vector_store %arg13[%c0_6, %c0_7], %13 {strides = array<i32>} : memref<8x128xf32, #tpu.memory_space<vmem>>, vector<8x128xf32>,
    } else {
    }
    %3 = arith.index_cast %arg0 : i32 to index
    %4 = memref.load %arg2[%3] : memref<2xi32, #tpu.memory_space<smem>>
    %5 = arith.cmpi slt, %arg1, %4 : i32
    %6 = arith.extui %5 : i1 to i32
    %c0_i32_1 = arith.constant 0 : i32
    %7 = arith.cmpi ne, %6, %c0_i32_1 : i32
    scf.if %7 {
      %c0 = arith.constant 0 : index
      %c0_4 = arith.constant 0 : index
      %11 = vector.load %arg4[%c0, %c0_4] : memref<256x3xf32, #tpu.memory_space<vmem>>, vector<256x3xf32>
      %c0_5 = arith.constant 0 : index
      %c0_6 = arith.constant 0 : index
      %12 = vector.load %arg5[%c0_5, %c0_6] : memref<3x512xf32, #tpu.memory_space<vmem>>, vector<3x512xf32>
      %c0_7 = arith.constant 0 : index
      %c0_8 = arith.constant 0 : index
      %13 = vector.load %arg6[%c0_7, %c0_8] : memref<256x8xf32, #tpu.memory_space<vmem>>, vector<256x8xf32>
      %c0_9 = arith.constant 0 : index
      %c0_10 = arith.constant 0 : index
      %14 = vector.load %arg7[%c0_9, %c0_10] : memref<8x512xf32, #tpu.memory_space<vmem>>, vector<8x512xf32>
      %15 = vector.extract_strided_slice %11 {offsets = [0, 0], sizes = [256, 1], strides = [1, 1]} : vector<256x3xf32> to vector<256x1xf32>
      %16 = vector.extract_strided_slice %12 {offsets = [0, 0], sizes = [1, 512], strides = [1, 1]} : vector<3x512xf32> to vector<1x512xf32>
      %17 = vector.broadcast %15 : vector<256x1xf32> to vector<256x512xf32>
      %18 = vector.broadcast %16 : vector<1x512xf32> to vector<256x512xf32>
      %19 = arith.subf %17, %18 : vector<256x512xf32>
      %20 = vector.extract_strided_slice %11 {offsets = [0, 1], sizes = [256, 1], strides = [1, 1]} : vector<256x3xf32> to vector<256x1xf32>
      %21 = vector.extract_strided_slice %12 {offsets = [1, 0], sizes = [1, 512], strides = [1, 1]} : vector<3x512xf32> to vector<1x512xf32>
      %22 = vector.broadcast %20 : vector<256x1xf32> to vector<256x512xf32>
      %23 = vector.broadcast %21 : vector<1x512xf32> to vector<256x512xf32>
      %24 = arith.subf %22, %23 : vector<256x512xf32>
      %25 = vector.extract_strided_slice %11 {offsets = [0, 2], sizes = [256, 1], strides = [1, 1]} : vector<256x3xf32> to vector<256x1xf32>
      %26 = vector.extract_strided_slice %12 {offsets = [2, 0], sizes = [1, 512], strides = [1, 1]} : vector<3x512xf32> to vector<1x512xf32>
      %27 = vector.broadcast %25 : vector<256x1xf32> to vector<256x512xf32>
      %28 = vector.broadcast %26 : vector<1x512xf32> to vector<256x512xf32>
      %29 = arith.subf %27, %28 : vector<256x512xf32>
      %30 = arith.mulf %19, %19 : vector<256x512xf32>
      %31 = arith.mulf %24, %24 : vector<256x512xf32>
      %32 = arith.addf %30, %31 : vector<256x512xf32>
      %33 = arith.mulf %29, %29 : vector<256x512xf32>
      %34 = arith.addf %32, %33 : vector<256x512xf32>
      %35 = math.sqrt %34 : vector<256x512xf32>
      %36 = vector.extract_strided_slice %13 {offsets = [0, 0], sizes = [256, 1], strides = [1, 1]} : vector<256x8xf32> to vector<256x1xf32>
      %37 = vector.extract_strided_slice %14 {offsets = [0, 0], sizes = [1, 512], strides = [1, 1]} : vector<8x512xf32> to vector<1x512xf32>
      %38 = vector.broadcast %36 : vector<256x1xf32> to vector<256x512xf32>
      %39 = vector.broadcast %37 : vector<1x512xf32> to vector<256x512xf32>
      %40 = arith.subf %38, %39 : vector<256x512xf32>
      %41 = vector.extract_strided_slice %13 {offsets = [0, 1], sizes = [256, 1], strides = [1, 1]} : vector<256x8xf32> to vector<256x1xf32>
      %42 = vector.extract_strided_slice %14 {offsets = [1, 0], sizes = [1, 512], strides = [1, 1]} : vector<8x512xf32> to vector<1x512xf32>
      %43 = vector.broadcast %41 : vector<256x1xf32> to vector<256x512xf32>
      %44 = vector.broadcast %42 : vector<1x512xf32> to vector<256x512xf32>
      %45 = arith.subf %43, %44 : vector<256x512xf32>
      %46 = vector.extract_strided_slice %13 {offsets = [0, 2], sizes = [256, 1], strides = [1, 1]} : vector<256x8xf32> to vector<256x1xf32>
      %47 = vector.extract_strided_slice %14 {offsets = [2, 0], sizes = [1, 512], strides = [1, 1]} : vector<8x512xf32> to vector<1x512xf32>
      %48 = vector.broadcast %46 : vector<256x1xf32> to vector<256x512xf32>
      %49 = vector.broadcast %47 : vector<1x512xf32> to vector<256x512xf32>
      %50 = arith.subf %48, %49 : vector<256x512xf32>
      %51 = arith.mulf %40, %40 : vector<256x512xf32>
      %52 = arith.mulf %45, %45 : vector<256x512xf32>
      %53 = arith.addf %51, %52 : vector<256x512xf32>
      %54 = arith.mulf %50, %50 : vector<256x512xf32>
      %55 = arith.addf %53, %54 : vector<256x512xf32>
      %56 = math.sqrt %55 : vector<256x512xf32>
      %57 = arith.subf %35, %56 : vector<256x512xf32>
      %c0_11 = arith.constant 0 : index
      %c0_12 = arith.constant 0 : index
      %58 = vector.load %arg8[%c0_11, %c0_12] : memref<256x1xi32, #tpu.memory_space<vmem>>, vector<256x1xi32>
      %c0_13 = arith.constant 0 : index
      %c0_14 = arith.constant 0 : index
      %59 = vector.load %arg9[%c0_13, %c0_14] : memref<1x512xi32, #tpu.memory_space<vmem>>, vector<1x512xi32>
      %60 = vector.broadcast %58 : vector<256x1xi32> to vector<256x512xi32>
      %61 = vector.broadcast %59 : vector<1x512xi32> to vector<256x512xi32>
      %62 = arith.cmpi eq, %60, %61 : vector<256x512xi32>
      %63 = math.absf %57 : vector<256x512xf32>
      %cst = arith.constant 0.000000e+00 : f32
      %64 = vector.broadcast %cst : f32 to vector<256x512xf32>
      %65 = arith.select %62, %63, %64 : vector<256x512xi1>, vector<256x512xf32>
      %66 = vector.extract_strided_slice %65 {offsets = [0, 0], sizes = [256, 128], strides = [1, 1]} : vector<256x512xf32> to vector<256x128xf32>
      %67 = arith.mulf %66, %66 : vector<256x128xf32>
      %68 = vector.extract_strided_slice %65 {offsets = [0, 128], sizes = [256, 128], strides = [1, 1]} : vector<256x512xf32> to vector<256x128xf32>
      %69 = arith.addf %66, %68 : vector<256x128xf32>
      %70 = arith.mulf %68, %68 : vector<256x128xf32>
      %71 = arith.addf %67, %70 : vector<256x128xf32>
      %72 = vector.extract_strided_slice %65 {offsets = [0, 256], sizes = [256, 128], strides = [1, 1]} : vector<256x512xf32> to vector<256x128xf32>
      %73 = arith.addf %69, %72 : vector<256x128xf32>
      %74 = arith.mulf %72, %72 : vector<256x128xf32>
      %75 = arith.addf %71, %74 : vector<256x128xf32>
      %76 = vector.extract_strided_slice %65 {offsets = [0, 384], sizes = [256, 128], strides = [1, 1]} : vector<256x512xf32> to vector<256x128xf32>
      %77 = arith.addf %73, %76 : vector<256x128xf32>
      %78 = arith.mulf %76, %76 : vector<256x128xf32>
      %79 = arith.addf %75, %78 : vector<256x128xf32>
      %80 = vector.extract_strided_slice %77 {offsets = [0, 0], sizes = [8, 128], strides = [1, 1]} : vector<256x128xf32> to vector<8x128xf32>
      %81 = vector.extract_strided_slice %79 {offsets = [0, 0], sizes = [8, 128], strides = [1, 1]} : vector<256x128xf32> to vector<8x128xf32>
      %82 = vector.extract_strided_slice %77 {offsets = [8, 0], sizes = [8, 128], strides = [1, 1]} : vector<256x128xf32> to vector<8x128xf32>
      %83 = arith.addf %80, %82 : vector<8x128xf32>
      %84 = vector.extract_strided_slice %79 {offsets = [8, 0], sizes = [8, 128], strides = [1, 1]} : vector<256x128xf32> to vector<8x128xf32>
      %85 = arith.addf %81, %84 : vector<8x128xf32>
      %86 = vector.extract_strided_slice %77 {offsets = [16, 0], sizes = [8, 128], strides = [1, 1]} : vector<256x128xf32> to vector<8x128xf32>
      %87 = arith.addf %83, %86 : vector<8x128xf32>
      %88 = vector.extract_strided_slice %79 {offsets = [16, 0], sizes = [8, 128], strides = [1, 1]} : vector<256x128xf32> to vector<8x128xf32>
      %89 = arith.addf %85, %88 : vector<8x128xf32>
      %90 = vector.extract_strided_slice %77 {offsets = [24, 0], sizes = [8, 128], strides = [1, 1]} : vector<256x128xf32> to vector<8x128xf32>
      %91 = arith.addf %87, %90 : vector<8x128xf32>
      %92 = vector.extract_strided_slice %79 {offsets = [24, 0], sizes = [8, 128], strides = [1, 1]} : vector<256x128xf32> to vector<8x128xf32>
      %93 = arith.addf %89, %92 : vector<8x128xf32>
      %94 = vector.extract_strided_slice %77 {offsets = [32, 0], sizes = [8, 128], strides = [1, 1]} : vector<256x128xf32> to vector<8x128xf32>
      %95 = arith.addf %91, %94 : vector<8x128xf32>
      %96 = vector.extract_strided_slice %79 {offsets = [32, 0], sizes = [8, 128], strides = [1, 1]} : vector<256x128xf32> to vector<8x128xf32>
      %97 = arith.addf %93, %96 : vector<8x128xf32>
      %98 = vector.extract_strided_slice %77 {offsets = [40, 0], sizes = [8, 128], strides = [1, 1]} : vector<256x128xf32> to vector<8x128xf32>
      %99 = arith.addf %95, %98 : vector<8x128xf32>
      %100 = vector.extract_strided_slice %79 {offsets = [40, 0], sizes = [8, 128], strides = [1, 1]} : vector<256x128xf32> to vector<8x128xf32>
      %101 = arith.addf %97, %100 : vector<8x128xf32>
      %102 = vector.extract_strided_slice %77 {offsets = [48, 0], sizes = [8, 128], strides = [1, 1]} : vector<256x128xf32> to vector<8x128xf32>
      %103 = arith.addf %99, %102 : vector<8x128xf32>
      %104 = vector.extract_strided_slice %79 {offsets = [48, 0], sizes = [8, 128], strides = [1, 1]} : vector<256x128xf32> to vector<8x128xf32>
      %105 = arith.addf %101, %104 : vector<8x128xf32>
      %106 = vector.extract_strided_slice %77 {offsets = [56, 0], sizes = [8, 128], strides = [1, 1]} : vector<256x128xf32> to vector<8x128xf32>
      %107 = arith.addf %103, %106 : vector<8x128xf32>
      %108 = vector.extract_strided_slice %79 {offsets = [56, 0], sizes = [8, 128], strides = [1, 1]} : vector<256x128xf32> to vector<8x128xf32>
      %109 = arith.addf %105, %108 : vector<8x128xf32>
      %110 = vector.extract_strided_slice %77 {offsets = [64, 0], sizes = [8, 128], strides = [1, 1]} : vector<256x128xf32> to vector<8x128xf32>
      %111 = arith.addf %107, %110 : vector<8x128xf32>
      %112 = vector.extract_strided_slice %79 {offsets = [64, 0], sizes = [8, 128], strides = [1, 1]} : vector<256x128xf32> to vector<8x128xf32>
      %113 = arith.addf %109, %112 : vector<8x128xf32>
      %114 = vector.extract_strided_slice %77 {offsets = [72, 0], sizes = [8, 128], strides = [1, 1]} : vector<256x128xf32> to vector<8x128xf32>
      %115 = arith.addf %111, %114 : vector<8x128xf32>
      %116 = vector.extract_strided_slice %79 {offsets = [72, 0], sizes = [8, 128], strides = [1, 1]} : vector<256x128xf32> to vector<8x128xf32>
      %117 = arith.addf %113, %116 : vector<8x128xf32>
      %118 = vector.extract_strided_slice %77 {offsets = [80, 0], sizes = [8, 128], strides = [1, 1]} : vector<256x128xf32> to vector<8x128xf32>
      %119 = arith.addf %115, %118 : vector<8x128xf32>
      %120 = vector.extract_strided_slice %79 {offsets = [80, 0], sizes = [8, 128], strides = [1, 1]} : vector<256x128xf32> to vector<8x128xf32>
      %121 = arith.addf %117, %120 : vector<8x128xf32>
      %122 = vector.extract_strided_slice %77 {offsets = [88, 0], sizes = [8, 128], strides = [1, 1]} : vector<256x128xf32> to vector<8x128xf32>
      %123 = arith.addf %119, %122 : vector<8x128xf32>
      %124 = vector.extract_strided_slice %79 {offsets = [88, 0], sizes = [8, 128], strides = [1, 1]} : vector<256x128xf32> to vector<8x128xf32>
      %125 = arith.addf %121, %124 : vector<8x128xf32>
      %126 = vector.extract_strided_slice %77 {offsets = [96, 0], sizes = [8, 128], strides = [1, 1]} : vector<256x128xf32> to vector<8x128xf32>
      %127 = arith.addf %123, %126 : vector<8x128xf32>
      %128 = vector.extract_strided_slice %79 {offsets = [96, 0], sizes = [8, 128], strides = [1, 1]} : vector<256x128xf32> to vector<8x128xf32>
      %129 = arith.addf %125, %128 : vector<8x128xf32>
      %130 = vector.extract_strided_slice %77 {offsets = [104, 0], sizes = [8, 128], strides = [1, 1]} : vector<256x128xf32> to vector<8x128xf32>
      %131 = arith.addf %127, %130 : vector<8x128xf32>
      %132 = vector.extract_strided_slice %79 {offsets = [104, 0], sizes = [8, 128], strides = [1, 1]} : vector<256x128xf32> to vector<8x128xf32>
      %133 = arith.addf %129, %132 : vector<8x128xf32>
      %134 = vector.extract_strided_slice %77 {offsets = [112, 0], sizes = [8, 128], strides = [1, 1]} : vector<256x128xf32> to vector<8x128xf32>
      %135 = arith.addf %131, %134 : vector<8x128xf32>
      %136 = vector.extract_strided_slice %79 {offsets = [112, 0], sizes = [8, 128], strides = [1, 1]} : vector<256x128xf32> to vector<8x128xf32>
      %137 = arith.addf %133, %136 : vector<8x128xf32>
      %138 = vector.extract_strided_slice %77 {offsets = [120, 0], sizes = [8, 128], strides = [1, 1]} : vector<256x128xf32> to vector<8x128xf32>
      %139 = arith.addf %135, %138 : vector<8x128xf32>
      %140 = vector.extract_strided_slice %79 {offsets = [120, 0], sizes = [8, 128], strides = [1, 1]} : vector<256x128xf32> to vector<8x128xf32>
      %141 = arith.addf %137, %140 : vector<8x128xf32>
      %142 = vector.extract_strided_slice %77 {offsets = [128, 0], sizes = [8, 128], strides = [1, 1]} : vector<256x128xf32> to vector<8x128xf32>
      %143 = arith.addf %139, %142 : vector<8x128xf32>
      %144 = vector.extract_strided_slice %79 {offsets = [128, 0], sizes = [8, 128], strides = [1, 1]} : vector<256x128xf32> to vector<8x128xf32>
      %145 = arith.addf %141, %144 : vector<8x128xf32>
      %146 = vector.extract_strided_slice %77 {offsets = [136, 0], sizes = [8, 128], strides = [1, 1]} : vector<256x128xf32> to vector<8x128xf32>
      %147 = arith.addf %143, %146 : vector<8x128xf32>
      %148 = vector.extract_strided_slice %79 {offsets = [136, 0], sizes = [8, 128], strides = [1, 1]} : vector<256x128xf32> to vector<8x128xf32>
      %149 = arith.addf %145, %148 : vector<8x128xf32>
      %150 = vector.extract_strided_slice %77 {offsets = [144, 0], sizes = [8, 128], strides = [1, 1]} : vector<256x128xf32> to vector<8x128xf32>
      %151 = arith.addf %147, %150 : vector<8x128xf32>
      %152 = vector.extract_strided_slice %79 {offsets = [144, 0], sizes = [8, 128], strides = [1, 1]} : vector<256x128xf32> to vector<8x128xf32>
      %153 = arith.addf %149, %152 : vector<8x128xf32>
      %154 = vector.extract_strided_slice %77 {offsets = [152, 0], sizes = [8, 128], strides = [1, 1]} : vector<256x128xf32> to vector<8x128xf32>
      %155 = arith.addf %151, %154 : vector<8x128xf32>
      %156 = vector.extract_strided_slice %79 {offsets = [152, 0], sizes = [8, 128], strides = [1, 1]} : vector<256x128xf32> to vector<8x128xf32>
      %157 = arith.addf %153, %156 : vector<8x128xf32>
      %158 = vector.extract_strided_slice %77 {offsets = [160, 0], sizes = [8, 128], strides = [1, 1]} : vector<256x128xf32> to vector<8x128xf32>
      %159 = arith.addf %155, %158 : vector<8x128xf32>
      %160 = vector.extract_strided_slice %79 {offsets = [160, 0], sizes = [8, 128], strides = [1, 1]} : vector<256x128xf32> to vector<8x128xf32>
      %161 = arith.addf %157, %160 : vector<8x128xf32>
      %162 = vector.extract_strided_slice %77 {offsets = [168, 0], sizes = [8, 128], strides = [1, 1]} : vector<256x128xf32> to vector<8x128xf32>
      %163 = arith.addf %159, %162 : vector<8x128xf32>
      %164 = vector.extract_strided_slice %79 {offsets = [168, 0], sizes = [8, 128], strides = [1, 1]} : vector<256x128xf32> to vector<8x128xf32>
      %165 = arith.addf %161, %164 : vector<8x128xf32>
      %166 = vector.extract_strided_slice %77 {offsets = [176, 0], sizes = [8, 128], strides = [1, 1]} : vector<256x128xf32> to vector<8x128xf32>
      %167 = arith.addf %163, %166 : vector<8x128xf32>
      %168 = vector.extract_strided_slice %79 {offsets = [176, 0], sizes = [8, 128], strides = [1, 1]} : vector<256x128xf32> to vector<8x128xf32>
      %169 = arith.addf %165, %168 : vector<8x128xf32>
      %170 = vector.extract_strided_slice %77 {offsets = [184, 0], sizes = [8, 128], strides = [1, 1]} : vector<256x128xf32> to vector<8x128xf32>
      %171 = arith.addf %167, %170 : vector<8x128xf32>
      %172 = vector.extract_strided_slice %79 {offsets = [184, 0], sizes = [8, 128], strides = [1, 1]} : vector<256x128xf32> to vector<8x128xf32>
      %173 = arith.addf %169, %172 : vector<8x128xf32>
      %174 = vector.extract_strided_slice %77 {offsets = [192, 0], sizes = [8, 128], strides = [1, 1]} : vector<256x128xf32> to vector<8x128xf32>
      %175 = arith.addf %171, %174 : vector<8x128xf32>
      %176 = vector.extract_strided_slice %79 {offsets = [192, 0], sizes = [8, 128], strides = [1, 1]} : vector<256x128xf32> to vector<8x128xf32>
      %177 = arith.addf %173, %176 : vector<8x128xf32>
      %178 = vector.extract_strided_slice %77 {offsets = [200, 0], sizes = [8, 128], strides = [1, 1]} : vector<256x128xf32> to vector<8x128xf32>
      %179 = arith.addf %175, %178 : vector<8x128xf32>
      %180 = vector.extract_strided_slice %79 {offsets = [200, 0], sizes = [8, 128], strides = [1, 1]} : vector<256x128xf32> to vector<8x128xf32>
      %181 = arith.addf %177, %180 : vector<8x128xf32>
      %182 = vector.extract_strided_slice %77 {offsets = [208, 0], sizes = [8, 128], strides = [1, 1]} : vector<256x128xf32> to vector<8x128xf32>
      %183 = arith.addf %179, %182 : vector<8x128xf32>
      %184 = vector.extract_strided_slice %79 {offsets = [208, 0], sizes = [8, 128], strides = [1, 1]} : vector<256x128xf32> to vector<8x128xf32>
      %185 = arith.addf %181, %184 : vector<8x128xf32>
      %186 = vector.extract_strided_slice %77 {offsets = [216, 0], sizes = [8, 128], strides = [1, 1]} : vector<256x128xf32> to vector<8x128xf32>
      %187 = arith.addf %183, %186 : vector<8x128xf32>
      %188 = vector.extract_strided_slice %79 {offsets = [216, 0], sizes = [8, 128], strides = [1, 1]} : vector<256x128xf32> to vector<8x128xf32>
      %189 = arith.addf %185, %188 : vector<8x128xf32>
      %190 = vector.extract_strided_slice %77 {offsets = [224, 0], sizes = [8, 128], strides = [1, 1]} : vector<256x128xf32> to vector<8x128xf32>
      %191 = arith.addf %187, %190 : vector<8x128xf32>
      %192 = vector.extract_strided_slice %79 {offsets = [224, 0], sizes = [8, 128], strides = [1, 1]} : vector<256x128xf32> to vector<8x128xf32>
      %193 = arith.addf %189, %192 : vector<8x128xf32>
      %194 = vector.extract_strided_slice %77 {offsets = [232, 0], sizes = [8, 128], strides = [1, 1]} : vector<256x128xf32> to vector<8x128xf32>
      %195 = arith.addf %191, %194 : vector<8x128xf32>
      %196 = vector.extract_strided_slice %79 {offsets = [232, 0], sizes = [8, 128], strides = [1, 1]} : vector<256x128xf32> to vector<8x128xf32>
      %197 = arith.addf %193, %196 : vector<8x128xf32>
      %198 = vector.extract_strided_slice %77 {offsets = [240, 0], sizes = [8, 128], strides = [1, 1]} : vector<256x128xf32> to vector<8x128xf32>
      %199 = arith.addf %195, %198 : vector<8x128xf32>
      %200 = vector.extract_strided_slice %79 {offsets = [240, 0], sizes = [8, 128], strides = [1, 1]} : vector<256x128xf32> to vector<8x128xf32>
      %201 = arith.addf %197, %200 : vector<8x128xf32>
      %202 = vector.extract_strided_slice %77 {offsets = [248, 0], sizes = [8, 128], strides = [1, 1]} : vector<256x128xf32> to vector<8x128xf32>
      %203 = arith.addf %199, %202 : vector<8x128xf32>
      %204 = vector.extract_strided_slice %79 {offsets = [248, 0], sizes = [8, 128], strides = [1, 1]} : vector<256x128xf32> to vector<8x128xf32>
      %205 = arith.addf %201, %204 : vector<8x128xf32>
      %c0_15 = arith.constant 0 : index
      %c0_16 = arith.constant 0 : index
      %206 = vector.load %arg12[%c0_15, %c0_16] : memref<8x128xf32, #tpu.memory_space<vmem>>, vector<8x128xf32>
      %207 = arith.addf %206, %203 : vector<8x128xf32>
      %c0_17 = arith.constant 0 : index
      %c0_18 = arith.constant 0 : index
      %208 = vector.load %arg12[%c0_17, %c0_18] : memref<8x128xf32, #tpu.memory_space<vmem>>, vector<8x128xf32>
      tpu.vector_store %arg12[%c0_17, %c0_18], %207 {strides = array<i32>} : memref<8x128xf32, #tpu.memory_space<vmem>>, vector<8x128xf32>,
      %c0_19 = arith.constant 0 : index
      %c0_20 = arith.constant 0 : index
      %209 = vector.load %arg13[%c0_19, %c0_20] : memref<8x128xf32, #tpu.memory_space<vmem>>, vector<8x128xf32>
      %210 = arith.addf %209, %205 : vector<8x128xf32>
      %c0_21 = arith.constant 0 : index
      %c0_22 = arith.constant 0 : index
      %211 = vector.load %arg13[%c0_21, %c0_22] : memref<8x128xf32, #tpu.memory_space<vmem>>, vector<8x128xf32>
      tpu.vector_store %arg13[%c0_21, %c0_22], %210 {strides = array<i32>} : memref<8x128xf32, #tpu.memory_space<vmem>>, vector<8x128xf32>,
    } else {
    }
    %c0_i32_2 = arith.constant 0 : i32
    %8 = arith.cmpi eq, %arg1, %c0_i32_2 : i32
    %9 = arith.extui %8 : i1 to i32
    %c0_i32_3 = arith.constant 0 : i32
    %10 = arith.cmpi ne, %9, %c0_i32_3 : i32
    scf.if %10 {
      %c0 = arith.constant 0 : index
      %c0_4 = arith.constant 0 : index
      %11 = vector.load %arg12[%c0, %c0_4] : memref<8x128xf32, #tpu.memory_space<vmem>>, vector<8x128xf32>
      %c0_5 = arith.constant 0 : index
      %c0_6 = arith.constant 0 : index
      %12 = vector.load %arg10[%c0_5, %c0_6] : memref<8x128xf32, #tpu.memory_space<vmem>>, vector<8x128xf32>
      tpu.vector_store %arg10[%c0_5, %c0_6], %11 {strides = array<i32>} : memref<8x128xf32, #tpu.memory_space<vmem>>, vector<8x128xf32>,
      %c0_7 = arith.constant 0 : index
      %c0_8 = arith.constant 0 : index
      %13 = vector.load %arg13[%c0_7, %c0_8] : memref<8x128xf32, #tpu.memory_space<vmem>>, vector<8x128xf32>
      %c0_9 = arith.constant 0 : index
      %c0_10 = arith.constant 0 : index
      %14 = vector.load %arg11[%c0_9, %c0_10] : memref<8x128xf32, #tpu.memory_space<vmem>>, vector<8x128xf32>
      tpu.vector_store %arg11[%c0_9, %c0_10], %13 {strides = array<i32>} : memref<8x128xf32, #tpu.memory_space<vmem>>, vector<8x128xf32>,
    } else {
    }
    return
  }
  func.func @transform_0(%arg0: i32, %arg1: i32, %arg2: memref<2xi32, #tpu.memory_space<smem>>, %arg3: memref<2xi32, #tpu.memory_space<smem>>) -> (i32, i32) {
    %c0_i32 = arith.constant 0 : i32
    %c0_i32_0 = arith.constant 0 : i32
    return %arg0, %c0_i32 : i32, i32
  }
  func.func @transform_1(%arg0: i32, %arg1: i32, %arg2: memref<2xi32, #tpu.memory_space<smem>>, %arg3: memref<2xi32, #tpu.memory_space<smem>>) -> (i32, i32) {
    %c1_i32 = arith.constant 1 : i32
    %0 = arith.muli %arg0, %c1_i32 : i32
    %1 = arith.addi %0, %arg1 : i32
    %2 = arith.index_cast %1 : i32 to index
    %3 = memref.load %arg3[%2] : memref<2xi32, #tpu.memory_space<smem>>
    %c0_i32 = arith.constant 0 : i32
    %c0_i32_0 = arith.constant 0 : i32
    return %c0_i32, %3 : i32, i32
  }
  func.func @transform_2(%arg0: i32, %arg1: i32, %arg2: memref<2xi32, #tpu.memory_space<smem>>, %arg3: memref<2xi32, #tpu.memory_space<smem>>) -> (i32, i32) {
    %c0_i32 = arith.constant 0 : i32
    %c0_i32_0 = arith.constant 0 : i32
    return %arg0, %c0_i32 : i32, i32
  }
  func.func @transform_3(%arg0: i32, %arg1: i32, %arg2: memref<2xi32, #tpu.memory_space<smem>>, %arg3: memref<2xi32, #tpu.memory_space<smem>>) -> (i32, i32) {
    %c1_i32 = arith.constant 1 : i32
    %0 = arith.muli %arg0, %c1_i32 : i32
    %1 = arith.addi %0, %arg1 : i32
    %2 = arith.index_cast %1 : i32 to index
    %3 = memref.load %arg3[%2] : memref<2xi32, #tpu.memory_space<smem>>
    %c0_i32 = arith.constant 0 : i32
    %c0_i32_0 = arith.constant 0 : i32
    return %c0_i32, %3 : i32, i32
  }
  func.func @transform_4(%arg0: i32, %arg1: i32, %arg2: memref<2xi32, #tpu.memory_space<smem>>, %arg3: memref<2xi32, #tpu.memory_space<smem>>) -> (i32, i32) {
    %c0_i32 = arith.constant 0 : i32
    %c0_i32_0 = arith.constant 0 : i32
    return %arg0, %c0_i32 : i32, i32
  }
  func.func @transform_5(%arg0: i32, %arg1: i32, %arg2: memref<2xi32, #tpu.memory_space<smem>>, %arg3: memref<2xi32, #tpu.memory_space<smem>>) -> (i32, i32) {
    %c1_i32 = arith.constant 1 : i32
    %0 = arith.muli %arg0, %c1_i32 : i32
    %1 = arith.addi %0, %arg1 : i32
    %2 = arith.index_cast %1 : i32 to index
    %3 = memref.load %arg3[%2] : memref<2xi32, #tpu.memory_space<smem>>
    %c0_i32 = arith.constant 0 : i32
    %c0_i32_0 = arith.constant 0 : i32
    return %c0_i32, %3 : i32, i32
  }
  func.func @transform_6(%arg0: i32, %arg1: i32, %arg2: memref<2xi32, #tpu.memory_space<smem>>, %arg3: memref<2xi32, #tpu.memory_space<smem>>) -> (i32, i32) {
    %c0_i32 = arith.constant 0 : i32
    %c0_i32_0 = arith.constant 0 : i32
    return %arg0, %c0_i32 : i32, i32
  }
  func.func @transform_7(%arg0: i32, %arg1: i32, %arg2: memref<2xi32, #tpu.memory_space<smem>>, %arg3: memref<2xi32, #tpu.memory_space<smem>>) -> (i32, i32) {
    %c0_i32 = arith.constant 0 : i32
    %c0_i32_0 = arith.constant 0 : i32
    return %arg0, %c0_i32 : i32, i32
  }
}

</mosaic_0001>

<llo_original>
// kernel: _forward_impl.2
$region0: #{_forward_impl.2}
  #allocation0 [shape = 'u32[]', space=smem, size = 0x4, offset = 0x4, fixed_abs, tag = 'smem constant byte address 0x4 - core index']
  #allocation1 [shape = 'u32[144,128]{1,0:T(1,128)}', space=vmem, size = 0x12000, scoped, tag = 'internal scratch']
  %s0 = inlined_call_operand.vmem [shape: bf16[512,128], index: 0, kind: input, shape index: {}]
  %s1 = inlined_call_operand.vmem [shape: bf16[128,128], index: 1, kind: input, shape index: {}]
  %s2 = inlined_call_operand.vmem [shape: f32[1,128], index: 2, kind: input, shape index: {}]
  %s3 = inlined_call_operand.vmem [shape: f32[128,8], index: 3, kind: input, shape index: {}]
  %s4 = inlined_call_operand.vmem [shape: f32[1,8], index: 4, kind: input, shape index: {}]
  %s5 = inlined_call_operand.vmem [shape: f32[512,8], index: 5, kind: output, shape index: {}]
  %s6 = sld [smem:[#allocation0]]
  $region30: #{_forward_impl.2} parent=0
    _
  %s8 = ssub.s32 1, %s6
  %s9 = scalar_select 0, %s8, %s6
  // Predicated region
  $region2: #{_forward_impl.2} parent=0 // pred_check
    _
  $region3: #{_forward_impl.2} parent=0 // pred_check_branch
    %11 = sbr.rel (0) target = $region5
  $region4: #{_forward_impl.2} parent=0 // pred_region
    _
  $region5: #{_forward_impl.2} parent=0 // pred_fallthru
    _
  // Predicated region
  $region6: #{_forward_impl.2} parent=0 // pred_check
    _
  $region7: #{_forward_impl.2} parent=0 // pred_check_branch
    %13 = sbr.rel (0) target = $region9
  $region8: #{_forward_impl.2} parent=0 // pred_region
    _
  $region9: #{_forward_impl.2} parent=0 // pred_fallthru
    _
  // Predicated region
  $region10: #{_forward_impl.2} parent=0 // pred_check
    _
  $region11: #{_forward_impl.2} parent=0 // pred_check_branch
    %15 = sbr.rel (0) target = $region13
  $region12: #{_forward_impl.2} parent=0 // pred_region
    _
  $region13: #{_forward_impl.2} parent=0 // pred_fallthru
    _
  // Predicated region
  $region14: #{_forward_impl.2} parent=0 // pred_check
    _
  $region15: #{_forward_impl.2} parent=0 // pred_check_branch
    %17 = sbr.rel (0) target = $region17
  $region16: #{_forward_impl.2} parent=0 // pred_region
    _
  $region17: #{_forward_impl.2} parent=0 // pred_fallthru
    _
  // Predicated region
  $region18: #{_forward_impl.2} parent=0 // pred_check
    _
  $region19: #{_forward_impl.2} parent=0 // pred_check_branch
    %19 = sbr.rel (0) target = $region21
  $region20: #{_forward_impl.2} parent=0 // pred_region
    _
  $region21: #{_forward_impl.2} parent=0 // pred_fallthru
    _
  %v21 = vld [vmem:[%s0] sm:$0xf]
  %v22 = vld [vmem:[%s0 + $0x4] sm:$0xf]
  %v23 = vld [vmem:[%s0 + $0x8] sm:$0xf]
  %v24 = vld [vmem:[%s0 + $0xc] sm:$0xf]
  %v25 = vld [vmem:[%s0 + $0x10] sm:$0xf]
  %v26 = vld [vmem:[%s0 + $0x14] sm:$0xf]
  %v27 = vld [vmem:[%s0 + $0x18] sm:$0xf]
  %v28 = vld [vmem:[%s0 + $0x1c] sm:$0xf]
  %v29 = vld [vmem:[%s0 + $0x20] sm:$0xf]
  %v30 = vld [vmem:[%s0 + $0x24] sm:$0xf]
  %v31 = vld [vmem:[%s0 + $0x28] sm:$0xf]
  %v32 = vld [vmem:[%s0 + $0x2c] sm:$0xf]
  %v33 = vld [vmem:[%s0 + $0x30] sm:$0xf]
  %v34 = vld [vmem:[%s0 + $0x34] sm:$0xf]
  %v35 = vld [vmem:[%s0 + $0x38] sm:$0xf]
  %v36 = vld [vmem:[%s0 + $0x3c] sm:$0xf]
  %v37 = vld [vmem:[%s0 + $0x40] sm:$0xf]
  %v38 = vld [vmem:[%s0 + $0x44] sm:$0xf]
  %v39 = vld [vmem:[%s0 + $0x48] sm:$0xf]
  %v40 = vld [vmem:[%s0 + $0x4c] sm:$0xf]
  %v41 = vld [vmem:[%s0 + $0x50] sm:$0xf]
  %v42 = vld [vmem:[%s0 + $0x54] sm:$0xf]
  %v43 = vld [vmem:[%s0 + $0x58] sm:$0xf]
  %v44 = vld [vmem:[%s0 + $0x5c] sm:$0xf]
  %v45 = vld [vmem:[%s0 + $0x60] sm:$0xf]
  %v46 = vld [vmem:[%s0 + $0x64] sm:$0xf]
  %v47 = vld [vmem:[%s0 + $0x68] sm:$0xf]
  %v48 = vld [vmem:[%s0 + $0x6c] sm:$0xf]
  %v49 = vld [vmem:[%s0 + $0x70] sm:$0xf]
  %v50 = vld [vmem:[%s0 + $0x74] sm:$0xf]
  %v51 = vld [vmem:[%s0 + $0x78] sm:$0xf]
  %v52 = vld [vmem:[%s0 + $0x7c] sm:$0xf]
  %v53 = vld [vmem:[%s0 + $0x80] sm:$0xf]
  %v54 = vld [vmem:[%s0 + $0x84] sm:$0xf]
  %v55 = vld [vmem:[%s0 + $0x88] sm:$0xf]
  %v56 = vld [vmem:[%s0 + $0x8c] sm:$0xf]
  %v57 = vld [vmem:[%s0 + $0x90] sm:$0xf]
  %v58 = vld [vmem:[%s0 + $0x94] sm:$0xf]
  %v59 = vld [vmem:[%s0 + $0x98] sm:$0xf]
  %v60 = vld [vmem:[%s0 + $0x9c] sm:$0xf]
  %v61 = vld [vmem:[%s0 + $0xa0] sm:$0xf]
  %v62 = vld [vmem:[%s0 + $0xa4] sm:$0xf]
  %v63 = vld [vmem:[%s0 + $0xa8] sm:$0xf]
  %v64 = vld [vmem:[%s0 + $0xac] sm:$0xf]
  %v65 = vld [vmem:[%s0 + $0xb0] sm:$0xf]
  %v66 = vld [vmem:[%s0 + $0xb4] sm:$0xf]
  %v67 = vld [vmem:[%s0 + $0xb8] sm:$0xf]
  %v68 = vld [vmem:[%s0 + $0xbc] sm:$0xf]
  %v69 = vld [vmem:[%s0 + $0xc0] sm:$0xf]
  %v70 = vld [vmem:[%s0 + $0xc4] sm:$0xf]
  %v71 = vld [vmem:[%s0 + $0xc8] sm:$0xf]
  %v72 = vld [vmem:[%s0 + $0xcc] sm:$0xf]
  %v73 = vld [vmem:[%s0 + $0xd0] sm:$0xf]
  %v74 = vld [vmem:[%s0 + $0xd4] sm:$0xf]
  %v75 = vld [vmem:[%s0 + $0xd8] sm:$0xf]
  %v76 = vld [vmem:[%s0 + $0xdc] sm:$0xf]
  %v77 = vld [vmem:[%s0 + $0xe0] sm:$0xf]
  %v78 = vld [vmem:[%s0 + $0xe4] sm:$0xf]
  %v79 = vld [vmem:[%s0 + $0xe8] sm:$0xf]
  %v80 = vld [vmem:[%s0 + $0xec] sm:$0xf]
  %v81 = vld [vmem:[%s0 + $0xf0] sm:$0xf]
  %v82 = vld [vmem:[%s0 + $0xf4] sm:$0xf]
  %v83 = vld [vmem:[%s0 + $0xf8] sm:$0xf]
  %v84 = vld [vmem:[%s0 + $0xfc] sm:$0xf]
  %v85 = vld [vmem:[%s1] sm:$0xf]
  %v86 = vld [vmem:[%s1 + $0x4] sm:$0xf]
  %v87 = vld [vmem:[%s1 + $0x8] sm:$0xf]
  %v88 = vld [vmem:[%s1 + $0xc] sm:$0xf]
  %v89 = vld [vmem:[%s1 + $0x10] sm:$0xf]
  %v90 = vld [vmem:[%s1 + $0x14] sm:$0xf]
  %v91 = vld [vmem:[%s1 + $0x18] sm:$0xf]
  %v92 = vld [vmem:[%s1 + $0x1c] sm:$0xf]
  %v93 = vld [vmem:[%s1 + $0x20] sm:$0xf]
  %v94 = vld [vmem:[%s1 + $0x24] sm:$0xf]
  %v95 = vld [vmem:[%s1 + $0x28] sm:$0xf]
  %v96 = vld [vmem:[%s1 + $0x2c] sm:$0xf]
  %v97 = vld [vmem:[%s1 + $0x30] sm:$0xf]
  %v98 = vld [vmem:[%s1 + $0x34] sm:$0xf]
  %v99 = vld [vmem:[%s1 + $0x38] sm:$0xf]
  %v100 = vld [vmem:[%s1 + $0x3c] sm:$0xf]
  %v101 = vld [vmem:[%s2] sm:$0x1]
  %v103 = vlaneseq
  %v104 = vshrl.u32 %v103, 7
  %v105 = vsub.s32 0, %v104
  %v106 = vrot.slane %v101, %v105
  %v172 = vunpack.c.l.b16 %v21
  %v173 = vunpack.c.l.b16 %v22
  %v174 = vunpack.c.l.b16 %v23
  %v175 = vunpack.c.l.b16 %v24
  %v176 = vunpack.c.l.b16 %v25
  %v177 = vunpack.c.l.b16 %v26
  %v178 = vunpack.c.l.b16 %v27
  %v179 = vunpack.c.l.b16 %v28
  %v180 = vunpack.c.l.b16 %v29
  %v181 = vunpack.c.l.b16 %v30
  %v182 = vunpack.c.l.b16 %v31
  %v183 = vunpack.c.l.b16 %v32
  %v184 = vunpack.c.l.b16 %v33
  %v185 = vunpack.c.l.b16 %v34
  %v186 = vunpack.c.l.b16 %v35
  %v187 = vunpack.c.l.b16 %v36
  %v188 = vunpack.c.l.b16 %v37
  %v189 = vunpack.c.l.b16 %v38
  %v190 = vunpack.c.l.b16 %v39
  %v191 = vunpack.c.l.b16 %v40
  %v192 = vunpack.c.l.b16 %v41
  %v193 = vunpack.c.l.b16 %v42
  %v194 = vunpack.c.l.b16 %v43
  %v195 = vunpack.c.l.b16 %v44
  %v196 = vunpack.c.l.b16 %v45
  %v197 = vunpack.c.l.b16 %v46
  %v198 = vunpack.c.l.b16 %v47
  %v199 = vunpack.c.l.b16 %v48
  %v200 = vunpack.c.l.b16 %v49
  %v201 = vunpack.c.l.b16 %v50
  %v202 = vunpack.c.l.b16 %v51
  %v203 = vunpack.c.l.b16 %v52
  %v204 = vunpack.c.l.b16 %v53
  %v205 = vunpack.c.l.b16 %v54
  %v206 = vunpack.c.l.b16 %v55
  %v207 = vunpack.c.l.b16 %v56
  %v208 = vunpack.c.l.b16 %v57
  %v209 = vunpack.c.l.b16 %v58
  %v210 = vunpack.c.l.b16 %v59
  %v211 = vunpack.c.l.b16 %v60
  %v212 = vunpack.c.l.b16 %v61
  %v213 = vunpack.c.l.b16 %v62
  %v214 = vunpack.c.l.b16 %v63
  %v215 = vunpack.c.l.b16 %v64
  %v216 = vunpack.c.l.b16 %v65
  %v217 = vunpack.c.l.b16 %v66
  %v218 = vunpack.c.l.b16 %v67
  %v219 = vunpack.c.l.b16 %v68
  %v220 = vunpack.c.l.b16 %v69
  %v221 = vunpack.c.l.b16 %v70
  %v222 = vunpack.c.l.b16 %v71
  %v223 = vunpack.c.l.b16 %v72
  %v224 = vunpack.c.l.b16 %v73
  %v225 = vunpack.c.l.b16 %v74
  %v226 = vunpack.c.l.b16 %v75
  %v227 = vunpack.c.l.b16 %v76
  %v228 = vunpack.c.l.b16 %v77
  %v229 = vunpack.c.l.b16 %v78
  %v230 = vunpack.c.l.b16 %v79
  %v231 = vunpack.c.l.b16 %v80
  %v232 = vunpack.c.l.b16 %v81
  %v233 = vunpack.c.l.b16 %v82
  %v234 = vunpack.c.l.b16 %v83
  %v235 = vunpack.c.l.b16 %v84
  %v236 = vpack.c.b16 %v173, %v172
  %v237 = vpack.c.b16 %v175, %v174
  %v238 = vpack.c.b16 %v177, %v176
  %v239 = vpack.c.b16 %v179, %v178
  %v240 = vpack.c.b16 %v181, %v180
  %v241 = vpack.c.b16 %v183, %v182
  %v242 = vpack.c.b16 %v185, %v184
  %v243 = vpack.c.b16 %v187, %v186
  %v244 = vpack.c.b16 %v189, %v188
  %v245 = vpack.c.b16 %v191, %v190
  %v246 = vpack.c.b16 %v193, %v192
  %v247 = vpack.c.b16 %v195, %v194
  %v248 = vpack.c.b16 %v197, %v196
  %v249 = vpack.c.b16 %v199, %v198
  %v250 = vpack.c.b16 %v201, %v200
  %v251 = vpack.c.b16 %v203, %v202
  %v252 = vpack.c.b16 %v205, %v204
  %v253 = vpack.c.b16 %v207, %v206
  %v254 = vpack.c.b16 %v209, %v208
  %v255 = vpack.c.b16 %v211, %v210
  %v256 = vpack.c.b16 %v213, %v212
  %v257 = vpack.c.b16 %v215, %v214
  %v258 = vpack.c.b16 %v217, %v216
  %v259 = vpack.c.b16 %v219, %v218
  %v260 = vpack.c.b16 %v221, %v220
  %v261 = vpack.c.b16 %v223, %v222
  %v262 = vpack.c.b16 %v225, %v224
  %v263 = vpack.c.b16 %v227, %v226
  %v264 = vpack.c.b16 %v229, %v228
  %v265 = vpack.c.b16 %v231, %v230
  %v266 = vpack.c.b16 %v233, %v232
  %v267 = vpack.c.b16 %v235, %v234
  %v316 = vunpack.c.l.b16 %v85
  %v317 = vunpack.c.l.b16 %v86
  %v318 = vunpack.c.l.b16 %v87
  %v319 = vunpack.c.l.b16 %v88
  %v320 = vunpack.c.l.b16 %v89
  %v321 = vunpack.c.l.b16 %v90
  %v322 = vunpack.c.l.b16 %v91
  %v323 = vunpack.c.l.b16 %v92
  %v324 = vunpack.c.l.b16 %v93
  %v325 = vunpack.c.l.b16 %v94
  %v326 = vunpack.c.l.b16 %v95
  %v327 = vunpack.c.l.b16 %v96
  %v328 = vunpack.c.l.b16 %v97
  %v329 = vunpack.c.l.b16 %v98
  %v330 = vunpack.c.l.b16 %v99
  %v331 = vunpack.c.l.b16 %v100
  %v332 = vpack.c.b16 %v317, %v316
  %v333 = vpack.c.b16 %v319, %v318
  %v334 = vpack.c.b16 %v321, %v320
  %v335 = vpack.c.b16 %v323, %v322
  %v336 = vpack.c.b16 %v325, %v324
  %v337 = vpack.c.b16 %v327, %v326
  %v338 = vpack.c.b16 %v329, %v328
  %v339 = vpack.c.b16 %v331, %v330
  %348 = vmatprep.subr.bf16.mxu0 0
  %349 = vmatpush1.bf16.msra.mxu0 %v339
  %350 = vmatprep.subr.bf16.mxu0 0
  %351 = vmatpush1.bf16.msra.mxu0 %v338
  %352 = vmatprep.subr.bf16.mxu0 0
  %353 = vmatpush1.bf16.msra.mxu0 %v337
  %354 = vmatprep.subr.bf16.mxu0 0
  %355 = vmatpush1.bf16.msra.mxu0 %v336
  %356 = vmatprep.subr.bf16.mxu0 0
  %357 = vmatpush1.bf16.msra.mxu0 %v335
  %358 = vmatprep.subr.bf16.mxu0 0
  %359 = vmatpush1.bf16.msra.mxu0 %v334
  %360 = vmatprep.subr.bf16.mxu0 0
  %361 = vmatpush1.bf16.msra.mxu0 %v333
  %362 = vmatprep.subr.bf16.mxu0 0
  %363 = vmatpush1.bf16.msra.mxu0 %v332
  %364 = vmatprep.subr.bf16.mxu0 0
  %365 = vmatpush2.bf16.msra.mxu0 0
  %366 = vmatprep.subr.bf16.mxu0 0
  %367 = vmatpush2.bf16.msra.mxu0 0
  %368 = vmatprep.subr.bf16.mxu0 0
  %369 = vmatpush2.bf16.msra.mxu0 0
  %370 = vmatprep.subr.bf16.mxu0 0
  %371 = vmatpush2.bf16.msra.mxu0 0
  %372 = vmatprep.subr.bf16.mxu0 0
  %373 = vmatpush2.bf16.msra.mxu0 0
  %374 = vmatprep.subr.bf16.mxu0 0
  %375 = vmatpush2.bf16.msra.mxu0 0
  %376 = vmatprep.subr.bf16.mxu0 0
  %377 = vmatpush2.bf16.msra.mxu0 0
  %378 = vmatprep.subr.bf16.mxu0 0
  %379 = vmatpush2.bf16.msra.mxu0 0
  %380 = vmatprep.mubr.bf16.mxu0 0
  %381 = vmatmul.mubr.bf16.gmra.mxu0 %v236
  %v382 = vpop.f32.mrf.mxu0
  %v383 = vadd.f32 %v106, %v382
  %v384 = vpop.f32.mrf.mxu0
  %v385 = vpop.f32.mrf.mxu0
  %v386 = vadd.f32 %v106, %v385
  %v387 = vpop.f32.mrf.mxu0
  %388 = vmatprep.mubr.bf16.mxu0 0
  %389 = vmatmul.mubr.bf16.gmra.mxu0 %v237
  %v390 = vpop.f32.mrf.mxu0
  %v391 = vadd.f32 %v106, %v390
  %v392 = vpop.f32.mrf.mxu0
  %v393 = vpop.f32.mrf.mxu0
  %v394 = vadd.f32 %v106, %v393
  %v395 = vpop.f32.mrf.mxu0
  %396 = vmatprep.mubr.bf16.mxu0 0
  %397 = vmatmul.mubr.bf16.gmra.mxu0 %v238
  %v398 = vpop.f32.mrf.mxu0
  %v399 = vadd.f32 %v106, %v398
  %v400 = vpop.f32.mrf.mxu0
  %v401 = vpop.f32.mrf.mxu0
  %v402 = vadd.f32 %v106, %v401
  %v403 = vpop.f32.mrf.mxu0
  %404 = vmatprep.mubr.bf16.mxu0 0
  %405 = vmatmul.mubr.bf16.gmra.mxu0 %v239
  %v406 = vpop.f32.mrf.mxu0
  %v407 = vadd.f32 %v106, %v406
  %v408 = vpop.f32.mrf.mxu0
  %v409 = vpop.f32.mrf.mxu0
  %v410 = vadd.f32 %v106, %v409
  %v411 = vpop.f32.mrf.mxu0
  %412 = vmatprep.mubr.bf16.mxu0 0
  %413 = vmatmul.mubr.bf16.gmra.mxu0 %v240
  %v414 = vpop.f32.mrf.mxu0
  %v415 = vadd.f32 %v106, %v414
  %v416 = vpop.f32.mrf.mxu0
  %v417 = vpop.f32.mrf.mxu0
  %v418 = vadd.f32 %v106, %v417
  %v419 = vpop.f32.mrf.mxu0
  %420 = vmatprep.mubr.bf16.mxu0 0
  %421 = vmatmul.mubr.bf16.gmra.mxu0 %v241
  %v422 = vpop.f32.mrf.mxu0
  %v423 = vadd.f32 %v106, %v422
  %v424 = vpop.f32.mrf.mxu0
  %v425 = vpop.f32.mrf.mxu0
  %v426 = vadd.f32 %v106, %v425
  %v427 = vpop.f32.mrf.mxu0
  %428 = vmatprep.mubr.bf16.mxu0 0
  %429 = vmatmul.mubr.bf16.gmra.mxu0 %v242
  %v430 = vpop.f32.mrf.mxu0
  %v431 = vadd.f32 %v106, %v430
  %v432 = vpop.f32.mrf.mxu0
  %v433 = vpop.f32.mrf.mxu0
  %v434 = vadd.f32 %v106, %v433
  %v435 = vpop.f32.mrf.mxu0
  %436 = vmatprep.mubr.bf16.mxu0 0
  %437 = vmatmul.mubr.bf16.gmra.mxu0 %v243
  %v438 = vpop.f32.mrf.mxu0
  %v439 = vadd.f32 %v106, %v438
  %v440 = vpop.f32.mrf.mxu0
  %v441 = vpop.f32.mrf.mxu0
  %v442 = vadd.f32 %v106, %v441
  %v443 = vpop.f32.mrf.mxu0
  %444 = vmatprep.mubr.bf16.mxu0 0
  %445 = vmatmul.mubr.bf16.gmra.mxu0 %v244
  %v446 = vpop.f32.mrf.mxu0
  %v447 = vadd.f32 %v106, %v446
  %v448 = vpop.f32.mrf.mxu0
  %v449 = vpop.f32.mrf.mxu0
  %v450 = vadd.f32 %v106, %v449
  %v451 = vpop.f32.mrf.mxu0
  %452 = vmatprep.mubr.bf16.mxu0 0
  %453 = vmatmul.mubr.bf16.gmra.mxu0 %v245
  %v454 = vpop.f32.mrf.mxu0
  %v455 = vadd.f32 %v106, %v454
  %v456 = vpop.f32.mrf.mxu0
  %v457 = vpop.f32.mrf.mxu0
  %v458 = vadd.f32 %v106, %v457
  %v459 = vpop.f32.mrf.mxu0
  %460 = vmatprep.mubr.bf16.mxu0 0
  %461 = vmatmul.mubr.bf16.gmra.mxu0 %v246
  %v462 = vpop.f32.mrf.mxu0
  %v463 = vadd.f32 %v106, %v462
  %v464 = vpop.f32.mrf.mxu0
  %v465 = vpop.f32.mrf.mxu0
  %v466 = vadd.f32 %v106, %v465
  %v467 = vpop.f32.mrf.mxu0
  %468 = vmatprep.mubr.bf16.mxu0 0
  %469 = vmatmul.mubr.bf16.gmra.mxu0 %v247
  %v470 = vpop.f32.mrf.mxu0
  %v471 = vadd.f32 %v106, %v470
  %v472 = vpop.f32.mrf.mxu0
  %v473 = vpop.f32.mrf.mxu0
  %v474 = vadd.f32 %v106, %v473
  %v475 = vpop.f32.mrf.mxu0
  %476 = vmatprep.mubr.bf16.mxu0 0
  %477 = vmatmul.mubr.bf16.gmra.mxu0 %v248
  %v478 = vpop.f32.mrf.mxu0
  %v479 = vadd.f32 %v106, %v478
  %v480 = vpop.f32.mrf.mxu0
  %v481 = vpop.f32.mrf.mxu0
  %v482 = vadd.f32 %v106, %v481
  %v483 = vpop.f32.mrf.mxu0
  %484 = vmatprep.mubr.bf16.mxu0 0
  %485 = vmatmul.mubr.bf16.gmra.mxu0 %v249
  %v486 = vpop.f32.mrf.mxu0
  %v487 = vadd.f32 %v106, %v486
  %v488 = vpop.f32.mrf.mxu0
  %v489 = vpop.f32.mrf.mxu0
  %v490 = vadd.f32 %v106, %v489
  %v491 = vpop.f32.mrf.mxu0
  %492 = vmatprep.mubr.bf16.mxu0 0
  %493 = vmatmul.mubr.bf16.gmra.mxu0 %v250
  %v494 = vpop.f32.mrf.mxu0
  %v495 = vadd.f32 %v106, %v494
  %v496 = vpop.f32.mrf.mxu0
  %v497 = vpop.f32.mrf.mxu0
  %v498 = vadd.f32 %v106, %v497
  %v499 = vpop.f32.mrf.mxu0
  %500 = vmatprep.mubr.bf16.mxu0 0
  %501 = vmatmul.mubr.bf16.gmra.mxu0 %v251
  %v502 = vpop.f32.mrf.mxu0
  %v503 = vadd.f32 %v106, %v502
  %v504 = vpop.f32.mrf.mxu0
  %v505 = vpop.f32.mrf.mxu0
  %v506 = vadd.f32 %v106, %v505
  %v507 = vpop.f32.mrf.mxu0
  %508 = vmatprep.mubr.bf16.mxu0 0
  %509 = vmatmul.mubr.bf16.gmra.mxu0 %v252
  %v510 = vpop.f32.mrf.mxu0
  %v511 = vadd.f32 %v106, %v510
  %v512 = vpop.f32.mrf.mxu0
  %v513 = vpop.f32.mrf.mxu0
  %v514 = vadd.f32 %v106, %v513
  %v515 = vpop.f32.mrf.mxu0
  %516 = vmatprep.mubr.bf16.mxu0 0
  %517 = vmatmul.mubr.bf16.gmra.mxu0 %v253
  %v518 = vpop.f32.mrf.mxu0
  %v519 = vadd.f32 %v106, %v518
  %v520 = vpop.f32.mrf.mxu0
  %v521 = vpop.f32.mrf.mxu0
  %v522 = vadd.f32 %v106, %v521
  %v523 = vpop.f32.mrf.mxu0
  %524 = vmatprep.mubr.bf16.mxu0 0
  %525 = vmatmul.mubr.bf16.gmra.mxu0 %v254
  %v526 = vpop.f32.mrf.mxu0
  %v527 = vadd.f32 %v106, %v526
  %v528 = vpop.f32.mrf.mxu0
  %v529 = vpop.f32.mrf.mxu0
  %v530 = vadd.f32 %v106, %v529
  %v531 = vpop.f32.mrf.mxu0
  %532 = vmatprep.mubr.bf16.mxu0 0
  %533 = vmatmul.mubr.bf16.gmra.mxu0 %v255
  %v534 = vpop.f32.mrf.mxu0
  %v535 = vadd.f32 %v106, %v534
  %v536 = vpop.f32.mrf.mxu0
  %v537 = vpop.f32.mrf.mxu0
  %v538 = vadd.f32 %v106, %v537
  %v539 = vpop.f32.mrf.mxu0
  %540 = vmatprep.mubr.bf16.mxu0 0
  %541 = vmatmul.mubr.bf16.gmra.mxu0 %v256
  %v542 = vpop.f32.mrf.mxu0
  %v543 = vadd.f32 %v106, %v542
  %v544 = vpop.f32.mrf.mxu0
  %v545 = vpop.f32.mrf.mxu0
  %v546 = vadd.f32 %v106, %v545
  %v547 = vpop.f32.mrf.mxu0
  %548 = vmatprep.mubr.bf16.mxu0 0
  %549 = vmatmul.mubr.bf16.gmra.mxu0 %v257
  %v550 = vpop.f32.mrf.mxu0
  %v551 = vadd.f32 %v106, %v550
  %v552 = vpop.f32.mrf.mxu0
  %v553 = vpop.f32.mrf.mxu0
  %v554 = vadd.f32 %v106, %v553
  %v555 = vpop.f32.mrf.mxu0
  %556 = vmatprep.mubr.bf16.mxu0 0
  %557 = vmatmul.mubr.bf16.gmra.mxu0 %v258
  %v558 = vpop.f32.mrf.mxu0
  %v559 = vadd.f32 %v106, %v558
  %v560 = vpop.f32.mrf.mxu0
  %v561 = vpop.f32.mrf.mxu0
  %v562 = vadd.f32 %v106, %v561
  %v563 = vpop.f32.mrf.mxu0
  %564 = vmatprep.mubr.bf16.mxu0 0
  %565 = vmatmul.mubr.bf16.gmra.mxu0 %v259
  %v566 = vpop.f32.mrf.mxu0
  %v567 = vadd.f32 %v106, %v566
  %v568 = vpop.f32.mrf.mxu0
  %v569 = vpop.f32.mrf.mxu0
  %v570 = vadd.f32 %v106, %v569
  %v571 = vpop.f32.mrf.mxu0
  %572 = vmatprep.mubr.bf16.mxu0 0
  %573 = vmatmul.mubr.bf16.gmra.mxu0 %v260
  %v574 = vpop.f32.mrf.mxu0
  %v575 = vadd.f32 %v106, %v574
  %v576 = vpop.f32.mrf.mxu0
  %v577 = vpop.f32.mrf.mxu0
  %v578 = vadd.f32 %v106, %v577
  %v579 = vpop.f32.mrf.mxu0
  %580 = vmatprep.mubr.bf16.mxu0 0
  %581 = vmatmul.mubr.bf16.gmra.mxu0 %v261
  %v582 = vpop.f32.mrf.mxu0
  %v583 = vadd.f32 %v106, %v582
  %v584 = vpop.f32.mrf.mxu0
  %v585 = vpop.f32.mrf.mxu0
  %v586 = vadd.f32 %v106, %v585
  %v587 = vpop.f32.mrf.mxu0
  %588 = vmatprep.mubr.bf16.mxu0 0
  %589 = vmatmul.mubr.bf16.gmra.mxu0 %v262
  %v590 = vpop.f32.mrf.mxu0
  %v591 = vadd.f32 %v106, %v590
  %v592 = vpop.f32.mrf.mxu0
  %v593 = vpop.f32.mrf.mxu0
  %v594 = vadd.f32 %v106, %v593
  %v595 = vpop.f32.mrf.mxu0
  %596 = vmatprep.mubr.bf16.mxu0 0
  %597 = vmatmul.mubr.bf16.gmra.mxu0 %v263
  %v598 = vpop.f32.mrf.mxu0
  %v599 = vadd.f32 %v106, %v598
  %v600 = vpop.f32.mrf.mxu0
  %v601 = vpop.f32.mrf.mxu0
  %v602 = vadd.f32 %v106, %v601
  %v603 = vpop.f32.mrf.mxu0
  %604 = vmatprep.mubr.bf16.mxu0 0
  %605 = vmatmul.mubr.bf16.gmra.mxu0 %v264
  %v606 = vpop.f32.mrf.mxu0
  %v607 = vadd.f32 %v106, %v606
  %v608 = vpop.f32.mrf.mxu0
  %v609 = vpop.f32.mrf.mxu0
  %v610 = vadd.f32 %v106, %v609
  %v611 = vpop.f32.mrf.mxu0
  %612 = vmatprep.mubr.bf16.mxu0 0
  %613 = vmatmul.mubr.bf16.gmra.mxu0 %v265
  %v614 = vpop.f32.mrf.mxu0
  %v615 = vadd.f32 %v106, %v614
  %v616 = vpop.f32.mrf.mxu0
  %v617 = vpop.f32.mrf.mxu0
  %v618 = vadd.f32 %v106, %v617
  %v619 = vpop.f32.mrf.mxu0
  %620 = vmatprep.mubr.bf16.mxu0 0
  %621 = vmatmul.mubr.bf16.gmra.mxu0 %v266
  %v622 = vpop.f32.mrf.mxu0
  %v623 = vadd.f32 %v106, %v622
  %v624 = vpop.f32.mrf.mxu0
  %v625 = vpop.f32.mrf.mxu0
  %v626 = vadd.f32 %v106, %v625
  %v627 = vpop.f32.mrf.mxu0
  %628 = vmatprep.mubr.bf16.mxu0 0
  %629 = vmatmul.mubr.bf16.gmra.mxu0 %v267
  %v630 = vpop.f32.mrf.mxu0
  %v631 = vadd.f32 %v106, %v630
  %v632 = vpop.f32.mrf.mxu0
  %v633 = vpop.f32.mrf.mxu0
  %v634 = vadd.f32 %v106, %v633
  %v635 = vpop.f32.mrf.mxu0
  %636 = vdwg.mxu0
  %v637 = vmax.f32 %v383, 0.0
  %v638 = vmax.f32 %v386, 0.0
  %v639 = vmax.f32 %v391, 0.0
  %v640 = vmax.f32 %v394, 0.0
  %v641 = vmax.f32 %v399, 0.0
  %v642 = vmax.f32 %v402, 0.0
  %v643 = vmax.f32 %v407, 0.0
  %v644 = vmax.f32 %v410, 0.0
  %v645 = vmax.f32 %v415, 0.0
  %v646 = vmax.f32 %v418, 0.0
  %v647 = vmax.f32 %v423, 0.0
  %v648 = vmax.f32 %v426, 0.0
  %v649 = vmax.f32 %v431, 0.0
  %v650 = vmax.f32 %v434, 0.0
  %v651 = vmax.f32 %v439, 0.0
  %v652 = vmax.f32 %v442, 0.0
  %v653 = vmax.f32 %v447, 0.0
  %v654 = vmax.f32 %v450, 0.0
  %v655 = vmax.f32 %v455, 0.0
  %v656 = vmax.f32 %v458, 0.0
  %v657 = vmax.f32 %v463, 0.0
  %v658 = vmax.f32 %v466, 0.0
  %v659 = vmax.f32 %v471, 0.0
  %v660 = vmax.f32 %v474, 0.0
  %v661 = vmax.f32 %v479, 0.0
  %v662 = vmax.f32 %v482, 0.0
  %v663 = vmax.f32 %v487, 0.0
  %v664 = vmax.f32 %v490, 0.0
  %v665 = vmax.f32 %v495, 0.0
  %v666 = vmax.f32 %v498, 0.0
  %v667 = vmax.f32 %v503, 0.0
  %v668 = vmax.f32 %v506, 0.0
  %v669 = vmax.f32 %v511, 0.0
  %v670 = vmax.f32 %v514, 0.0
  %v671 = vmax.f32 %v519, 0.0
  %v672 = vmax.f32 %v522, 0.0
  %v673 = vmax.f32 %v527, 0.0
  %v674 = vmax.f32 %v530, 0.0
  %v675 = vmax.f32 %v535, 0.0
  %v676 = vmax.f32 %v538, 0.0
  %v677 = vmax.f32 %v543, 0.0
  %v678 = vmax.f32 %v546, 0.0
  %v679 = vmax.f32 %v551, 0.0
  %v680 = vmax.f32 %v554, 0.0
  %v681 = vmax.f32 %v559, 0.0
  %v682 = vmax.f32 %v562, 0.0
  %v683 = vmax.f32 %v567, 0.0
  %v684 = vmax.f32 %v570, 0.0
  %v685 = vmax.f32 %v575, 0.0
  %v686 = vmax.f32 %v578, 0.0
  %v687 = vmax.f32 %v583, 0.0
  %v688 = vmax.f32 %v586, 0.0
  %v689 = vmax.f32 %v591, 0.0
  %v690 = vmax.f32 %v594, 0.0
  %v691 = vmax.f32 %v599, 0.0
  %v692 = vmax.f32 %v602, 0.0
  %v693 = vmax.f32 %v607, 0.0
  %v694 = vmax.f32 %v610, 0.0
  %v695 = vmax.f32 %v615, 0.0
  %v696 = vmax.f32 %v618, 0.0
  %v697 = vmax.f32 %v623, 0.0
  %v698 = vmax.f32 %v626, 0.0
  %v699 = vmax.f32 %v631, 0.0
  %v700 = vmax.f32 %v634, 0.0
  %v701 = vld [vmem:[%s3] sm:$0xff]
  %v702 = vld [vmem:[%s3 + $0x8] sm:$0xff]
  %v703 = vld [vmem:[%s3 + $0x10] sm:$0xff]
  %v704 = vld [vmem:[%s3 + $0x18] sm:$0xff]
  %v705 = vld [vmem:[%s3 + $0x20] sm:$0xff]
  %v706 = vld [vmem:[%s3 + $0x28] sm:$0xff]
  %v707 = vld [vmem:[%s3 + $0x30] sm:$0xff]
  %v708 = vld [vmem:[%s3 + $0x38] sm:$0xff]
  %v709 = vld [vmem:[%s3 + $0x40] sm:$0xff]
  %v710 = vld [vmem:[%s3 + $0x48] sm:$0xff]
  %v711 = vld [vmem:[%s3 + $0x50] sm:$0xff]
  %v712 = vld [vmem:[%s3 + $0x58] sm:$0xff]
  %v713 = vld [vmem:[%s3 + $0x60] sm:$0xff]
  %v714 = vld [vmem:[%s3 + $0x68] sm:$0xff]
  %v715 = vld [vmem:[%s3 + $0x70] sm:$0xff]
  %v716 = vld [vmem:[%s3 + $0x78] sm:$0xff]
  %v717 = vld [vmem:[%s4] sm:$0x1]
  %v719 = vlaneseq
  %v720 = vshrl.u32 %v719, 7
  %v721 = vsub.s32 0, %v720
  %v722 = vrot.slane %v717, %v721
  %724 = vmatprep.subr.mxu0 0.0
  %725 = vmatpush1.msra.mxu0 %v716
  %726 = vmatprep.subr.mxu0 0.0
  %727 = vmatpush1.msra.mxu0 %v715
  %728 = vmatprep.subr.mxu0 0.0
  %729 = vmatpush1.msra.mxu0 %v714
  %730 = vmatprep.subr.mxu0 0.0
  %731 = vmatpush1.msra.mxu0 %v713
  %732 = vmatprep.subr.mxu0 0.0
  %733 = vmatpush1.msra.mxu0 %v712
  %734 = vmatprep.subr.mxu0 0.0
  %735 = vmatpush1.msra.mxu0 %v711
  %736 = vmatprep.subr.mxu0 0.0
  %737 = vmatpush1.msra.mxu0 %v710
  %738 = vmatprep.subr.mxu0 0.0
  %739 = vmatpush1.msra.mxu0 %v709
  %740 = vmatprep.subr.mxu0 0.0
  %741 = vmatpush1.msra.mxu0 %v708
  %742 = vmatprep.subr.mxu0 0.0
  %743 = vmatpush1.msra.mxu0 %v707
  %744 = vmatprep.subr.mxu0 0.0
  %745 = vmatpush1.msra.mxu0 %v706
  %746 = vmatprep.subr.mxu0 0.0
  %747 = vmatpush1.msra.mxu0 %v705
  %748 = vmatprep.subr.mxu0 0.0
  %749 = vmatpush1.msra.mxu0 %v704
  %750 = vmatprep.subr.mxu0 0.0
  %751 = vmatpush1.msra.mxu0 %v703
  %752 = vmatprep.subr.mxu0 0.0
  %753 = vmatpush1.msra.mxu0 %v702
  %754 = vmatprep.subr.mxu0 0.0
  %755 = vmatpush1.msra.mxu0 %v701
  %756 = vmatprep.subr.mxu0 0.0
  %757 = vmatpush2.msra.mxu0 0.0
  %758 = vmatprep.subr.mxu0 0.0
  %759 = vmatpush2.msra.mxu0 0.0
  %760 = vmatprep.subr.mxu0 0.0
  %761 = vmatpush2.msra.mxu0 0.0
  %762 = vmatprep.subr.mxu0 0.0
  %763 = vmatpush2.msra.mxu0 0.0
  %764 = vmatprep.subr.mxu0 0.0
  %765 = vmatpush2.msra.mxu0 0.0
  %766 = vmatprep.subr.mxu0 0.0
  %767 = vmatpush2.msra.mxu0 0.0
  %768 = vmatprep.subr.mxu0 0.0
  %769 = vmatpush2.msra.mxu0 0.0
  %770 = vmatprep.subr.mxu0 0.0
  %771 = vmatpush2.msra.mxu0 0.0
  %772 = vmatprep.subr.mxu0 0.0
  %773 = vmatpush2.msra.mxu0 0.0
  %774 = vmatprep.subr.mxu0 0.0
  %775 = vmatpush2.msra.mxu0 0.0
  %776 = vmatprep.subr.mxu0 0.0
  %777 = vmatpush2.msra.mxu0 0.0
  %778 = vmatprep.subr.mxu0 0.0
  %779 = vmatpush2.msra.mxu0 0.0
  %780 = vmatprep.subr.mxu0 0.0
  %781 = vmatpush2.msra.mxu0 0.0
  %782 = vmatprep.subr.mxu0 0.0
  %783 = vmatpush2.msra.mxu0 0.0
  %784 = vmatprep.subr.mxu0 0.0
  %785 = vmatpush2.msra.mxu0 0.0
  %786 = vmatprep.subr.mxu0 0.0
  %787 = vmatpush2.msra.mxu0 0.0
  %788 = vmatprep.mubr.f32.mxu0 0.0
  %789 = vmatmul.mubr.f32.gmra.mxu0 %v637
  %v790 = vpop.f32.mrf.mxu0
  %v791 = vadd.f32 %v722, %v790
  %v792 = vpop.f32.mrf.mxu0
  %793 = vmatprep.mubr.f32.mxu0 0.0
  %794 = vmatmul.mubr.f32.gmra.mxu0 %v638
  %v795 = vpop.f32.mrf.mxu0
  %v796 = vadd.f32 %v722, %v795
  %v797 = vpop.f32.mrf.mxu0
  %798 = vmatprep.mubr.f32.mxu0 0.0
  %799 = vmatmul.mubr.f32.gmra.mxu0 %v639
  %v800 = vpop.f32.mrf.mxu0
  %v801 = vadd.f32 %v722, %v800
  %v802 = vpop.f32.mrf.mxu0
  %803 = vmatprep.mubr.f32.mxu0 0.0
  %804 = vmatmul.mubr.f32.gmra.mxu0 %v640
  %v805 = vpop.f32.mrf.mxu0
  %v806 = vadd.f32 %v722, %v805
  %v807 = vpop.f32.mrf.mxu0
  %808 = vmatprep.mubr.f32.mxu0 0.0
  %809 = vmatmul.mubr.f32.gmra.mxu0 %v641
  %v810 = vpop.f32.mrf.mxu0
  %v811 = vadd.f32 %v722, %v810
  %v812 = vpop.f32.mrf.mxu0
  %813 = vmatprep.mubr.f32.mxu0 0.0
  %814 = vmatmul.mubr.f32.gmra.mxu0 %v642
  %v815 = vpop.f32.mrf.mxu0
  %v816 = vadd.f32 %v722, %v815
  %v817 = vpop.f32.mrf.mxu0
  %818 = vmatprep.mubr.f32.mxu0 0.0
  %819 = vmatmul.mubr.f32.gmra.mxu0 %v643
  %v820 = vpop.f32.mrf.mxu0
  %v821 = vadd.f32 %v722, %v820
  %v822 = vpop.f32.mrf.mxu0
  %823 = vmatprep.mubr.f32.mxu0 0.0
  %824 = vmatmul.mubr.f32.gmra.mxu0 %v644
  %v825 = vpop.f32.mrf.mxu0
  %v826 = vadd.f32 %v722, %v825
  %v827 = vpop.f32.mrf.mxu0
  %828 = vmatprep.mubr.f32.mxu0 0.0
  %829 = vmatmul.mubr.f32.gmra.mxu0 %v645
  %v830 = vpop.f32.mrf.mxu0
  %v831 = vadd.f32 %v722, %v830
  %v832 = vpop.f32.mrf.mxu0
  %833 = vmatprep.mubr.f32.mxu0 0.0
  %834 = vmatmul.mubr.f32.gmra.mxu0 %v646
  %v835 = vpop.f32.mrf.mxu0
  %v836 = vadd.f32 %v722, %v835
  %v837 = vpop.f32.mrf.mxu0
  %838 = vmatprep.mubr.f32.mxu0 0.0
  %839 = vmatmul.mubr.f32.gmra.mxu0 %v647
  %v840 = vpop.f32.mrf.mxu0
  %v841 = vadd.f32 %v722, %v840
  %v842 = vpop.f32.mrf.mxu0
  %843 = vmatprep.mubr.f32.mxu0 0.0
  %844 = vmatmul.mubr.f32.gmra.mxu0 %v648
  %v845 = vpop.f32.mrf.mxu0
  %v846 = vadd.f32 %v722, %v845
  %v847 = vpop.f32.mrf.mxu0
  %848 = vmatprep.mubr.f32.mxu0 0.0
  %849 = vmatmul.mubr.f32.gmra.mxu0 %v649
  %v850 = vpop.f32.mrf.mxu0
  %v851 = vadd.f32 %v722, %v850
  %v852 = vpop.f32.mrf.mxu0
  %853 = vmatprep.mubr.f32.mxu0 0.0
  %854 = vmatmul.mubr.f32.gmra.mxu0 %v650
  %v855 = vpop.f32.mrf.mxu0
  %v856 = vadd.f32 %v722, %v855
  %v857 = vpop.f32.mrf.mxu0
  %858 = vmatprep.mubr.f32.mxu0 0.0
  %859 = vmatmul.mubr.f32.gmra.mxu0 %v651
  %v860 = vpop.f32.mrf.mxu0
  %v861 = vadd.f32 %v722, %v860
  %v862 = vpop.f32.mrf.mxu0
  %863 = vmatprep.mubr.f32.mxu0 0.0
  %864 = vmatmul.mubr.f32.gmra.mxu0 %v652
  %v865 = vpop.f32.mrf.mxu0
  %v866 = vadd.f32 %v722, %v865
  %v867 = vpop.f32.mrf.mxu0
  %868 = vmatprep.mubr.f32.mxu0 0.0
  %869 = vmatmul.mubr.f32.gmra.mxu0 %v653
  %v870 = vpop.f32.mrf.mxu0
  %v871 = vadd.f32 %v722, %v870
  %v872 = vpop.f32.mrf.mxu0
  %873 = vmatprep.mubr.f32.mxu0 0.0
  %874 = vmatmul.mubr.f32.gmra.mxu0 %v654
  %v875 = vpop.f32.mrf.mxu0
  %v876 = vadd.f32 %v722, %v875
  %v877 = vpop.f32.mrf.mxu0
  %878 = vmatprep.mubr.f32.mxu0 0.0
  %879 = vmatmul.mubr.f32.gmra.mxu0 %v655
  %v880 = vpop.f32.mrf.mxu0
  %v881 = vadd.f32 %v722, %v880
  %v882 = vpop.f32.mrf.mxu0
  %883 = vmatprep.mubr.f32.mxu0 0.0
  %884 = vmatmul.mubr.f32.gmra.mxu0 %v656
  %v885 = vpop.f32.mrf.mxu0
  %v886 = vadd.f32 %v722, %v885
  %v887 = vpop.f32.mrf.mxu0
  %888 = vmatprep.mubr.f32.mxu0 0.0
  %889 = vmatmul.mubr.f32.gmra.mxu0 %v657
  %v890 = vpop.f32.mrf.mxu0
  %v891 = vadd.f32 %v722, %v890
  %v892 = vpop.f32.mrf.mxu0
  %893 = vmatprep.mubr.f32.mxu0 0.0
  %894 = vmatmul.mubr.f32.gmra.mxu0 %v658
  %v895 = vpop.f32.mrf.mxu0
  %v896 = vadd.f32 %v722, %v895
  %v897 = vpop.f32.mrf.mxu0
  %898 = vmatprep.mubr.f32.mxu0 0.0
  %899 = vmatmul.mubr.f32.gmra.mxu0 %v659
  %v900 = vpop.f32.mrf.mxu0
  %v901 = vadd.f32 %v722, %v900
  %v902 = vpop.f32.mrf.mxu0
  %903 = vmatprep.mubr.f32.mxu0 0.0
  %904 = vmatmul.mubr.f32.gmra.mxu0 %v660
  %v905 = vpop.f32.mrf.mxu0
  %v906 = vadd.f32 %v722, %v905
  %v907 = vpop.f32.mrf.mxu0
  %908 = vmatprep.mubr.f32.mxu0 0.0
  %909 = vmatmul.mubr.f32.gmra.mxu0 %v661
  %v910 = vpop.f32.mrf.mxu0
  %v911 = vadd.f32 %v722, %v910
  %v912 = vpop.f32.mrf.mxu0
  %913 = vmatprep.mubr.f32.mxu0 0.0
  %914 = vmatmul.mubr.f32.gmra.mxu0 %v662
  %v915 = vpop.f32.mrf.mxu0
  %v916 = vadd.f32 %v722, %v915
  %v917 = vpop.f32.mrf.mxu0
  %918 = vmatprep.mubr.f32.mxu0 0.0
  %919 = vmatmul.mubr.f32.gmra.mxu0 %v663
  %v920 = vpop.f32.mrf.mxu0
  %v921 = vadd.f32 %v722, %v920
  %v922 = vpop.f32.mrf.mxu0
  %923 = vmatprep.mubr.f32.mxu0 0.0
  %924 = vmatmul.mubr.f32.gmra.mxu0 %v664
  %v925 = vpop.f32.mrf.mxu0
  %v926 = vadd.f32 %v722, %v925
  %v927 = vpop.f32.mrf.mxu0
  %928 = vmatprep.mubr.f32.mxu0 0.0
  %929 = vmatmul.mubr.f32.gmra.mxu0 %v665
  %v930 = vpop.f32.mrf.mxu0
  %v931 = vadd.f32 %v722, %v930
  %v932 = vpop.f32.mrf.mxu0
  %933 = vmatprep.mubr.f32.mxu0 0.0
  %934 = vmatmul.mubr.f32.gmra.mxu0 %v666
  %v935 = vpop.f32.mrf.mxu0
  %v936 = vadd.f32 %v722, %v935
  %v937 = vpop.f32.mrf.mxu0
  %938 = vmatprep.mubr.f32.mxu0 0.0
  %939 = vmatmul.mubr.f32.gmra.mxu0 %v667
  %v940 = vpop.f32.mrf.mxu0
  %v941 = vadd.f32 %v722, %v940
  %v942 = vpop.f32.mrf.mxu0
  %943 = vmatprep.mubr.f32.mxu0 0.0
  %944 = vmatmul.mubr.f32.gmra.mxu0 %v668
  %v945 = vpop.f32.mrf.mxu0
  %v946 = vadd.f32 %v722, %v945
  %v947 = vpop.f32.mrf.mxu0
  %948 = vmatprep.mubr.f32.mxu0 0.0
  %949 = vmatmul.mubr.f32.gmra.mxu0 %v669
  %v950 = vpop.f32.mrf.mxu0
  %v951 = vadd.f32 %v722, %v950
  %v952 = vpop.f32.mrf.mxu0
  %953 = vmatprep.mubr.f32.mxu0 0.0
  %954 = vmatmul.mubr.f32.gmra.mxu0 %v670
  %v955 = vpop.f32.mrf.mxu0
  %v956 = vadd.f32 %v722, %v955
  %v957 = vpop.f32.mrf.mxu0
  %958 = vmatprep.mubr.f32.mxu0 0.0
  %959 = vmatmul.mubr.f32.gmra.mxu0 %v671
  %v960 = vpop.f32.mrf.mxu0
  %v961 = vadd.f32 %v722, %v960
  %v962 = vpop.f32.mrf.mxu0
  %963 = vmatprep.mubr.f32.mxu0 0.0
  %964 = vmatmul.mubr.f32.gmra.mxu0 %v672
  %v965 = vpop.f32.mrf.mxu0
  %v966 = vadd.f32 %v722, %v965
  %v967 = vpop.f32.mrf.mxu0
  %968 = vmatprep.mubr.f32.mxu0 0.0
  %969 = vmatmul.mubr.f32.gmra.mxu0 %v673
  %v970 = vpop.f32.mrf.mxu0
  %v971 = vadd.f32 %v722, %v970
  %v972 = vpop.f32.mrf.mxu0
  %973 = vmatprep.mubr.f32.mxu0 0.0
  %974 = vmatmul.mubr.f32.gmra.mxu0 %v674
  %v975 = vpop.f32.mrf.mxu0
  %v976 = vadd.f32 %v722, %v975
  %v977 = vpop.f32.mrf.mxu0
  %978 = vmatprep.mubr.f32.mxu0 0.0
  %979 = vmatmul.mubr.f32.gmra.mxu0 %v675
  %v980 = vpop.f32.mrf.mxu0
  %v981 = vadd.f32 %v722, %v980
  %v982 = vpop.f32.mrf.mxu0
  %983 = vmatprep.mubr.f32.mxu0 0.0
  %984 = vmatmul.mubr.f32.gmra.mxu0 %v676
  %v985 = vpop.f32.mrf.mxu0
  %v986 = vadd.f32 %v722, %v985
  %v987 = vpop.f32.mrf.mxu0
  %988 = vmatprep.mubr.f32.mxu0 0.0
  %989 = vmatmul.mubr.f32.gmra.mxu0 %v677
  %v990 = vpop.f32.mrf.mxu0
  %v991 = vadd.f32 %v722, %v990
  %v992 = vpop.f32.mrf.mxu0
  %993 = vmatprep.mubr.f32.mxu0 0.0
  %994 = vmatmul.mubr.f32.gmra.mxu0 %v678
  %v995 = vpop.f32.mrf.mxu0
  %v996 = vadd.f32 %v722, %v995
  %v997 = vpop.f32.mrf.mxu0
  %998 = vmatprep.mubr.f32.mxu0 0.0
  %999 = vmatmul.mubr.f32.gmra.mxu0 %v679
  %v1000 = vpop.f32.mrf.mxu0
  %v1001 = vadd.f32 %v722, %v1000
  %v1002 = vpop.f32.mrf.mxu0
  %1003 = vmatprep.mubr.f32.mxu0 0.0
  %1004 = vmatmul.mubr.f32.gmra.mxu0 %v680
  %v1005 = vpop.f32.mrf.mxu0
  %v1006 = vadd.f32 %v722, %v1005
  %v1007 = vpop.f32.mrf.mxu0
  %1008 = vmatprep.mubr.f32.mxu0 0.0
  %1009 = vmatmul.mubr.f32.gmra.mxu0 %v681
  %v1010 = vpop.f32.mrf.mxu0
  %v1011 = vadd.f32 %v722, %v1010
  %v1012 = vpop.f32.mrf.mxu0
  %1013 = vmatprep.mubr.f32.mxu0 0.0
  %1014 = vmatmul.mubr.f32.gmra.mxu0 %v682
  %v1015 = vpop.f32.mrf.mxu0
  %v1016 = vadd.f32 %v722, %v1015
  %v1017 = vpop.f32.mrf.mxu0
  %1018 = vmatprep.mubr.f32.mxu0 0.0
  %1019 = vmatmul.mubr.f32.gmra.mxu0 %v683
  %v1020 = vpop.f32.mrf.mxu0
  %v1021 = vadd.f32 %v722, %v1020
  %v1022 = vpop.f32.mrf.mxu0
  %1023 = vmatprep.mubr.f32.mxu0 0.0
  %1024 = vmatmul.mubr.f32.gmra.mxu0 %v684
  %v1025 = vpop.f32.mrf.mxu0
  %v1026 = vadd.f32 %v722, %v1025
  %v1027 = vpop.f32.mrf.mxu0
  %1028 = vmatprep.mubr.f32.mxu0 0.0
  %1029 = vmatmul.mubr.f32.gmra.mxu0 %v685
  %v1030 = vpop.f32.mrf.mxu0
  %v1031 = vadd.f32 %v722, %v1030
  %v1032 = vpop.f32.mrf.mxu0
  %1033 = vmatprep.mubr.f32.mxu0 0.0
  %1034 = vmatmul.mubr.f32.gmra.mxu0 %v686
  %v1035 = vpop.f32.mrf.mxu0
  %v1036 = vadd.f32 %v722, %v1035
  %v1037 = vpop.f32.mrf.mxu0
  %1038 = vmatprep.mubr.f32.mxu0 0.0
  %1039 = vmatmul.mubr.f32.gmra.mxu0 %v687
  %v1040 = vpop.f32.mrf.mxu0
  %v1041 = vadd.f32 %v722, %v1040
  %v1042 = vpop.f32.mrf.mxu0
  %1043 = vmatprep.mubr.f32.mxu0 0.0
  %1044 = vmatmul.mubr.f32.gmra.mxu0 %v688
  %v1045 = vpop.f32.mrf.mxu0
  %v1046 = vadd.f32 %v722, %v1045
  %v1047 = vpop.f32.mrf.mxu0
  %1048 = vmatprep.mubr.f32.mxu0 0.0
  %1049 = vmatmul.mubr.f32.gmra.mxu0 %v689
  %v1050 = vpop.f32.mrf.mxu0
  %v1051 = vadd.f32 %v722, %v1050
  %v1052 = vpop.f32.mrf.mxu0
  %1053 = vmatprep.mubr.f32.mxu0 0.0
  %1054 = vmatmul.mubr.f32.gmra.mxu0 %v690
  %v1055 = vpop.f32.mrf.mxu0
  %v1056 = vadd.f32 %v722, %v1055
  %v1057 = vpop.f32.mrf.mxu0
  %1058 = vmatprep.mubr.f32.mxu0 0.0
  %1059 = vmatmul.mubr.f32.gmra.mxu0 %v691
  %v1060 = vpop.f32.mrf.mxu0
  %v1061 = vadd.f32 %v722, %v1060
  %v1062 = vpop.f32.mrf.mxu0
  %1063 = vmatprep.mubr.f32.mxu0 0.0
  %1064 = vmatmul.mubr.f32.gmra.mxu0 %v692
  %v1065 = vpop.f32.mrf.mxu0
  %v1066 = vadd.f32 %v722, %v1065
  %v1067 = vpop.f32.mrf.mxu0
  %1068 = vmatprep.mubr.f32.mxu0 0.0
  %1069 = vmatmul.mubr.f32.gmra.mxu0 %v693
  %v1070 = vpop.f32.mrf.mxu0
  %v1071 = vadd.f32 %v722, %v1070
  %v1072 = vpop.f32.mrf.mxu0
  %1073 = vmatprep.mubr.f32.mxu0 0.0
  %1074 = vmatmul.mubr.f32.gmra.mxu0 %v694
  %v1075 = vpop.f32.mrf.mxu0
  %v1076 = vadd.f32 %v722, %v1075
  %v1077 = vpop.f32.mrf.mxu0
  %1078 = vmatprep.mubr.f32.mxu0 0.0
  %1079 = vmatmul.mubr.f32.gmra.mxu0 %v695
  %v1080 = vpop.f32.mrf.mxu0
  %v1081 = vadd.f32 %v722, %v1080
  %v1082 = vpop.f32.mrf.mxu0
  %1083 = vmatprep.mubr.f32.mxu0 0.0
  %1084 = vmatmul.mubr.f32.gmra.mxu0 %v696
  %v1085 = vpop.f32.mrf.mxu0
  %v1086 = vadd.f32 %v722, %v1085
  %v1087 = vpop.f32.mrf.mxu0
  %1088 = vmatprep.mubr.f32.mxu0 0.0
  %1089 = vmatmul.mubr.f32.gmra.mxu0 %v697
  %v1090 = vpop.f32.mrf.mxu0
  %v1091 = vadd.f32 %v722, %v1090
  %v1092 = vpop.f32.mrf.mxu0
  %1093 = vmatprep.mubr.f32.mxu0 0.0
  %1094 = vmatmul.mubr.f32.gmra.mxu0 %v698
  %v1095 = vpop.f32.mrf.mxu0
  %v1096 = vadd.f32 %v722, %v1095
  %v1097 = vpop.f32.mrf.mxu0
  %1098 = vmatprep.mubr.f32.mxu0 0.0
  %1099 = vmatmul.mubr.f32.gmra.mxu0 %v699
  %v1100 = vpop.f32.mrf.mxu0
  %v1101 = vadd.f32 %v722, %v1100
  %v1102 = vpop.f32.mrf.mxu0
  %1103 = vmatprep.mubr.f32.mxu0 0.0
  %1104 = vmatmul.mubr.f32.gmra.mxu0 %v700
  %v1105 = vpop.f32.mrf.mxu0
  %v1106 = vadd.f32 %v722, %v1105
  %v1107 = vpop.f32.mrf.mxu0
  %1108 = vdwg.mxu0
  %vm1109 = vcmask 64512
  %1110 = vst.msk [vmem:[%s5] sm:$0xff] %vm1109, %v791
  %1111 = vst.msk [vmem:[%s5 + $0x8] sm:$0xff] %vm1109, %v796
  %1112 = vst.msk [vmem:[%s5 + $0x10] sm:$0xff] %vm1109, %v801
  %1113 = vst.msk [vmem:[%s5 + $0x18] sm:$0xff] %vm1109, %v806
  %1114 = vst.msk [vmem:[%s5 + $0x20] sm:$0xff] %vm1109, %v811
  %1115 = vst.msk [vmem:[%s5 + $0x28] sm:$0xff] %vm1109, %v816
  %1116 = vst.msk [vmem:[%s5 + $0x30] sm:$0xff] %vm1109, %v821
  %1117 = vst.msk [vmem:[%s5 + $0x38] sm:$0xff] %vm1109, %v826
  %1118 = vst.msk [vmem:[%s5 + $0x40] sm:$0xff] %vm1109, %v831
  %1119 = vst.msk [vmem:[%s5 + $0x48] sm:$0xff] %vm1109, %v836
  %1120 = vst.msk [vmem:[%s5 + $0x50] sm:$0xff] %vm1109, %v841
  %1121 = vst.msk [vmem:[%s5 + $0x58] sm:$0xff] %vm1109, %v846
  %1122 = vst.msk [vmem:[%s5 + $0x60] sm:$0xff] %vm1109, %v851
  %1123 = vst.msk [vmem:[%s5 + $0x68] sm:$0xff] %vm1109, %v856
  %1124 = vst.msk [vmem:[%s5 + $0x70] sm:$0xff] %vm1109, %v861
  %1125 = vst.msk [vmem:[%s5 + $0x78] sm:$0xff] %vm1109, %v866
  %1126 = vst.msk [vmem:[%s5 + $0x80] sm:$0xff] %vm1109, %v871
  %1127 = vst.msk [vmem:[%s5 + $0x88] sm:$0xff] %vm1109, %v876
  %1128 = vst.msk [vmem:[%s5 + $0x90] sm:$0xff] %vm1109, %v881
  %1129 = vst.msk [vmem:[%s5 + $0x98] sm:$0xff] %vm1109, %v886
  %1130 = vst.msk [vmem:[%s5 + $0xa0] sm:$0xff] %vm1109, %v891
  %1131 = vst.msk [vmem:[%s5 + $0xa8] sm:$0xff] %vm1109, %v896
  %1132 = vst.msk [vmem:[%s5 + $0xb0] sm:$0xff] %vm1109, %v901
  %1133 = vst.msk [vmem:[%s5 + $0xb8] sm:$0xff] %vm1109, %v906
  %1134 = vst.msk [vmem:[%s5 + $0xc0] sm:$0xff] %vm1109, %v911
  %1135 = vst.msk [vmem:[%s5 + $0xc8] sm:$0xff] %vm1109, %v916
  %1136 = vst.msk [vmem:[%s5 + $0xd0] sm:$0xff] %vm1109, %v921
  %1137 = vst.msk [vmem:[%s5 + $0xd8] sm:$0xff] %vm1109, %v926
  %1138 = vst.msk [vmem:[%s5 + $0xe0] sm:$0xff] %vm1109, %v931
  %1139 = vst.msk [vmem:[%s5 + $0xe8] sm:$0xff] %vm1109, %v936
  %1140 = vst.msk [vmem:[%s5 + $0xf0] sm:$0xff] %vm1109, %v941
  %1141 = vst.msk [vmem:[%s5 + $0xf8] sm:$0xff] %vm1109, %v946
  %1142 = vst.msk [vmem:[%s5 + $0x100] sm:$0xff] %vm1109, %v951
  %1143 = vst.msk [vmem:[%s5 + $0x108] sm:$0xff] %vm1109, %v956
  %1144 = vst.msk [vmem:[%s5 + $0x110] sm:$0xff] %vm1109, %v961
  %1145 = vst.msk [vmem:[%s5 + $0x118] sm:$0xff] %vm1109, %v966
  %1146 = vst.msk [vmem:[%s5 + $0x120] sm:$0xff] %vm1109, %v971
  %1147 = vst.msk [vmem:[%s5 + $0x128] sm:$0xff] %vm1109, %v976
  %1148 = vst.msk [vmem:[%s5 + $0x130] sm:$0xff] %vm1109, %v981
  %1149 = vst.msk [vmem:[%s5 + $0x138] sm:$0xff] %vm1109, %v986
  %1150 = vst.msk [vmem:[%s5 + $0x140] sm:$0xff] %vm1109, %v991
  %1151 = vst.msk [vmem:[%s5 + $0x148] sm:$0xff] %vm1109, %v996
  %1152 = vst.msk [vmem:[%s5 + $0x150] sm:$0xff] %vm1109, %v1001
  %1153 = vst.msk [vmem:[%s5 + $0x158] sm:$0xff] %vm1109, %v1006
  %1154 = vst.msk [vmem:[%s5 + $0x160] sm:$0xff] %vm1109, %v1011
  %1155 = vst.msk [vmem:[%s5 + $0x168] sm:$0xff] %vm1109, %v1016
  %1156 = vst.msk [vmem:[%s5 + $0x170] sm:$0xff] %vm1109, %v1021
  %1157 = vst.msk [vmem:[%s5 + $0x178] sm:$0xff] %vm1109, %v1026
  %1158 = vst.msk [vmem:[%s5 + $0x180] sm:$0xff] %vm1109, %v1031
  %1159 = vst.msk [vmem:[%s5 + $0x188] sm:$0xff] %vm1109, %v1036
  %1160 = vst.msk [vmem:[%s5 + $0x190] sm:$0xff] %vm1109, %v1041
  %1161 = vst.msk [vmem:[%s5 + $0x198] sm:$0xff] %vm1109, %v1046
  %1162 = vst.msk [vmem:[%s5 + $0x1a0] sm:$0xff] %vm1109, %v1051
  %1163 = vst.msk [vmem:[%s5 + $0x1a8] sm:$0xff] %vm1109, %v1056
  %1164 = vst.msk [vmem:[%s5 + $0x1b0] sm:$0xff] %vm1109, %v1061
  %1165 = vst.msk [vmem:[%s5 + $0x1b8] sm:$0xff] %vm1109, %v1066
  %1166 = vst.msk [vmem:[%s5 + $0x1c0] sm:$0xff] %vm1109, %v1071
  %1167 = vst.msk [vmem:[%s5 + $0x1c8] sm:$0xff] %vm1109, %v1076
  %1168 = vst.msk [vmem:[%s5 + $0x1d0] sm:$0xff] %vm1109, %v1081
  %1169 = vst.msk [vmem:[%s5 + $0x1d8] sm:$0xff] %vm1109, %v1086
  %1170 = vst.msk [vmem:[%s5 + $0x1e0] sm:$0xff] %vm1109, %v1091
  %1171 = vst.msk [vmem:[%s5 + $0x1e8] sm:$0xff] %vm1109, %v1096
  %1172 = vst.msk [vmem:[%s5 + $0x1f0] sm:$0xff] %vm1109, %v1101
  %1173 = vst.msk [vmem:[%s5 + $0x1f8] sm:$0xff] %vm1109, %v1106
  // Predicated region
  $region22: #{_forward_impl.2} parent=0 // pred_check
    _
  $region23: #{_forward_impl.2} parent=0 // pred_check_branch
    %1175 = sbr.rel (0) target = $region25
  $region24: #{_forward_impl.2} parent=0 // pred_region
    _
  $region25: #{_forward_impl.2} parent=0 // pred_fallthru
    _
  // Predicated region
  $region26: #{_forward_impl.2} parent=0 // pred_check
    _
  $region27: #{_forward_impl.2} parent=0 // pred_check_branch
    %1177 = sbr.rel (0) target = $region29
  $region28: #{_forward_impl.2} parent=0 // pred_region
    _
  $region29: #{_forward_impl.2} parent=0 // pred_fallthru
    _

// kernel: _forward_impl.3
$region0: #{_forward_impl.3}
  #allocation0 [shape = 'u32[]', space=smem, size = 0x4, offset = 0x4, fixed_abs, tag = 'smem constant byte address 0x4 - core index']
  #allocation1 [shape = 'u32[144,128]{1,0:T(1,128)}', space=vmem, size = 0x12000, scoped, tag = 'internal scratch']
  #allocation2 [shape = 'f32[8,128]{1,0:T(8,128)}', space=vmem, size = 0x1000, scoped, tag = 'scratch operand']
  #allocation3 [shape = 'f32[8,128]{1,0:T(8,128)}', space=vmem, size = 0x1000, scoped, tag = 'scratch operand']
  #allocation4 [shape = 's32[1]{0}', space=sflag, size = 0x4, scoped, tag = 'scoped memory for _forward_impl.3']
  #allocation5 [shape = 'u8[512]{0}', space=smem, size = 0x200, scoped, tag = 'prefetched SMEM operand 0']
  #allocation6 [shape = 'u8[512]{0}', space=smem, size = 0x200, scoped, tag = 'prefetched SMEM operand 1']
  %s0 = inlined_call_operand.vmem [shape: s32[2], index: 0, kind: input, shape index: {}]
  %s1 = inlined_call_operand.vmem [shape: s32[2], index: 1, kind: input, shape index: {}]
  %s2 = inlined_call_operand.vmem [shape: f32[512,3], index: 2, kind: input, shape index: {}]
  %s3 = inlined_call_operand.vmem [shape: f32[3,512], index: 3, kind: input, shape index: {}]
  %s4 = inlined_call_operand.vmem [shape: f32[512,8], index: 4, kind: input, shape index: {}]
  %s5 = inlined_call_operand.vmem [shape: f32[8,512], index: 5, kind: input, shape index: {}]
  %s6 = inlined_call_operand.vmem [shape: s32[512,1], index: 6, kind: input, shape index: {}]
  %s7 = inlined_call_operand.vmem [shape: s32[1,512], index: 7, kind: input, shape index: {}]
  %s8 = inlined_call_operand.vmem [shape: f32[16,128], index: 8, kind: output, shape index: {0}]
  %s9 = inlined_call_operand.vmem [shape: f32[16,128], index: 9, kind: output, shape index: {1}]
  %10 = xla_tuple %s8, %s9
  %s11 = sld [smem:[#allocation0]]
  $region77: #{_forward_impl.3} parent=0
    _
  %s13 = ssub.s32 1, %s11
  %s14 = scalar_select 0, %s13, %s11
  %s15 = sshll.u32 %s0, 4
  %s16 = int_to_ptr.vmem [resolvable:$true] %s15
  %18 = dma.vmem_to_smem %s16, 16, [#allocation5], [#allocation4]
  %s19 = sshll.u32 %s1, 4
  %s20 = int_to_ptr.vmem [resolvable:$true] %s19
  %22 = dma.vmem_to_smem %s20, 16, [#allocation6], [#allocation4]
  %23 = dma.done [#allocation4], 32
  %24 = sfence
  loop: start=0, step=1, limit=4
  $region2: #{_forward_impl.3} parent=0 // loop_pre_header
    _
  $region3: #{_forward_impl.3} parent=0 // loop_header
    %s26 = sphi 0, %s30
    %p27 = scmp.ge.s32.totalorder %s26, 4
    %s33 = sphi 0, %s45
    %s34 = sphi 0, %s41
    %s35 = sphi 0, %s33
    %s36 = sphi 0, %s34
    %s37 = sphi 0, %s35
    %s38 = sphi 0, %s36
    %s48 = sphi 0, %s50
    %s51 = sphi 0, %s48
    %s52 = sphi 0, %s51
    %s68 = sphi 0, %s52
    %s78 = sphi 0, %s80
    %s81 = sphi 0, %s78
    %s82 = sphi 0, %s81
    %s98 = sphi 0, %s82
    %s104 = sphi 0, %s106
    %s107 = sphi 0, %s104
    %s108 = sphi 0, %s107
    %s124 = sphi 0, %s108
    %s134 = sphi 0, %s136
    %s137 = sphi 0, %s134
    %s138 = sphi 0, %s137
    %s154 = sphi 0, %s138
    %s160 = sphi 0, %s162
    %s163 = sphi 0, %s160
    %s164 = sphi 0, %s163
    %s180 = sphi 0, %s164
    %s190 = sphi 0, %s192
    %s193 = sphi 0, %s190
    %s194 = sphi 0, %s193
    %s210 = sphi 0, %s194
    %s216 = sphi 0, %s218
    %s219 = sphi 0, %s216
    %s220 = sphi 0, %s219
    %s236 = sphi 0, %s220
    %s242 = sphi 0, %s244
    %s245 = sphi 0, %s242
    %s246 = sphi 0, %s245
    %s262 = sphi 0, %s246
  $region4: #{_forward_impl.3} parent=0 // loop_header_branch
    %29 = sbr.rel (%p27) target = $region8
  $region5: #{_forward_impl.3} parent=0 // loop_body
    %s31 = ssub.s32 %s26, 1
    %s32 = ssub.s32 %s26, 2
    %s39 = sadd.s32 1, %s34
    %p40 = scmp.ge.s32.totalorder %s39, 1
    %s41 = scalar_select %p40, 0, %s39
    %s42 = sadd.s32 1, %s33
    %s43 = scalar_select %p40, %s42, %s33
    %p44 = scmp.ge.s32.totalorder %s43, 2
    %s45 = scalar_select %p44, 0, %s43
    %s46 = ssub.s32 %s33, %s45
    %p47 = scmp.eq.s32.totalorder %s46, 0
    %s49 = sadd.s32 %s48, 1
    %s50 = scalar_select %p47, %s48, %s49
    %p53 = pneg %p47
    %p54 = scmp.eq.s32.totalorder %s26, 1
    %p55 = por %p53, %p54
    %p56 = scmp.ne.s32.totalorder %s48, %s51
    %p57 = scmp.eq.s32.totalorder %s26, 0
    %p58 = por %p56, %p57
    %p59 = scmp.ne.s32.totalorder %s48, %s51
    %p60 = scmp.eq.s32.totalorder %s31, 1
    %p61 = por %p59, %p60
    %p62 = scmp.ne.s32.totalorder %s51, %s52
    %p63 = scmp.eq.s32.totalorder %s31, 0
    %p64 = por %p62, %p63
    %p65 = scmp.ne.s32.totalorder %s51, %s52
    %p66 = scmp.eq.s32.totalorder %s32, 1
    %p67 = por %p65, %p66
    %p69 = scmp.ne.s32.totalorder %s52, %s68
    %p70 = scmp.eq.s32.totalorder %s32, 0
    %p71 = por %p69, %p70
    %s72 = sadd.s32 %s33, %s34
    %s73 = sld [smem:[#allocation6 + %s72]]
    %s74 = sadd.s32 %s45, %s41
    %s75 = sld [smem:[#allocation6 + %s74]]
    %s76 = ssub.s32 %s73, %s75
    %p77 = scmp.eq.s32.totalorder %s76, 0
    %s79 = sadd.s32 %s78, 1
    %s80 = scalar_select %p77, %s78, %s79
    %p83 = pneg %p77
    %p84 = scmp.eq.s32.totalorder %s26, 1
    %p85 = por %p83, %p84
    %p86 = scmp.ne.s32.totalorder %s78, %s81
    %p87 = scmp.eq.s32.totalorder %s26, 0
    %p88 = por %p86, %p87
    %p89 = scmp.ne.s32.totalorder %s78, %s81
    %p90 = scmp.eq.s32.totalorder %s31, 1
    %p91 = por %p89, %p90
    %p92 = scmp.ne.s32.totalorder %s81, %s82
    %p93 = scmp.eq.s32.totalorder %s31, 0
    %p94 = por %p92, %p93
    %p95 = scmp.ne.s32.totalorder %s81, %s82
    %p96 = scmp.eq.s32.totalorder %s32, 1
    %p97 = por %p95, %p96
    %p99 = scmp.ne.s32.totalorder %s82, %s98
    %p100 = scmp.eq.s32.totalorder %s32, 0
    %p101 = por %p99, %p100
    %s102 = ssub.s32 %s33, %s45
    %p103 = scmp.eq.s32.totalorder %s102, 0
    %s105 = sadd.s32 %s104, 1
    %s106 = scalar_select %p103, %s104, %s105
    %p109 = pneg %p103
    %p110 = scmp.eq.s32.totalorder %s26, 1
    %p111 = por %p109, %p110
    %p112 = scmp.ne.s32.totalorder %s104, %s107
    %p113 = scmp.eq.s32.totalorder %s26, 0
    %p114 = por %p112, %p113
    %p115 = scmp.ne.s32.totalorder %s104, %s107
    %p116 = scmp.eq.s32.totalorder %s31, 1
    %p117 = por %p115, %p116
    %p118 = scmp.ne.s32.totalorder %s107, %s108
    %p119 = scmp.eq.s32.totalorder %s31, 0
    %p120 = por %p118, %p119
    %p121 = scmp.ne.s32.totalorder %s107, %s108
    %p122 = scmp.eq.s32.totalorder %s32, 1
    %p123 = por %p121, %p122
    %p125 = scmp.ne.s32.totalorder %s108, %s124
    %p126 = scmp.eq.s32.totalorder %s32, 0
    %p127 = por %p125, %p126
    %s128 = sadd.s32 %s33, %s34
    %s129 = sld [smem:[#allocation6 + %s128]]
    %s130 = sadd.s32 %s45, %s41
    %s131 = sld [smem:[#allocation6 + %s130]]
    %s132 = ssub.s32 %s129, %s131
    %p133 = scmp.eq.s32.totalorder %s132, 0
    %s135 = sadd.s32 %s134, 1
    %s136 = scalar_select %p133, %s134, %s135
    %p139 = pneg %p133
    %p140 = scmp.eq.s32.totalorder %s26, 1
    %p141 = por %p139, %p140
    %p142 = scmp.ne.s32.totalorder %s134, %s137
    %p143 = scmp.eq.s32.totalorder %s26, 0
    %p144 = por %p142, %p143
    %p145 = scmp.ne.s32.totalorder %s134, %s137
    %p146 = scmp.eq.s32.totalorder %s31, 1
    %p147 = por %p145, %p146
    %p148 = scmp.ne.s32.totalorder %s137, %s138
    %p149 = scmp.eq.s32.totalorder %s31, 0
    %p150 = por %p148, %p149
    %p151 = scmp.ne.s32.totalorder %s137, %s138
    %p152 = scmp.eq.s32.totalorder %s32, 1
    %p153 = por %p151, %p152
    %p155 = scmp.ne.s32.totalorder %s138, %s154
    %p156 = scmp.eq.s32.totalorder %s32, 0
    %p157 = por %p155, %p156
    %s158 = ssub.s32 %s33, %s45
    %p159 = scmp.eq.s32.totalorder %s158, 0
    %s161 = sadd.s32 %s160, 1
    %s162 = scalar_select %p159, %s160, %s161
    %p165 = pneg %p159
    %p166 = scmp.eq.s32.totalorder %s26, 1
    %p167 = por %p165, %p166
    %p168 = scmp.ne.s32.totalorder %s160, %s163
    %p169 = scmp.eq.s32.totalorder %s26, 0
    %p170 = por %p168, %p169
    %p171 = scmp.ne.s32.totalorder %s160, %s163
    %p172 = scmp.eq.s32.totalorder %s31, 1
    %p173 = por %p171, %p172
    %p174 = scmp.ne.s32.totalorder %s163, %s164
    %p175 = scmp.eq.s32.totalorder %s31, 0
    %p176 = por %p174, %p175
    %p177 = scmp.ne.s32.totalorder %s163, %s164
    %p178 = scmp.eq.s32.totalorder %s32, 1
    %p179 = por %p177, %p178
    %p181 = scmp.ne.s32.totalorder %s164, %s180
    %p182 = scmp.eq.s32.totalorder %s32, 0
    %p183 = por %p181, %p182
    %s184 = sadd.s32 %s33, %s34
    %s185 = sld [smem:[#allocation6 + %s184]]
    %s186 = sadd.s32 %s45, %s41
    %s187 = sld [smem:[#allocation6 + %s186]]
    %s188 = ssub.s32 %s185, %s187
    %p189 = scmp.eq.s32.totalorder %s188, 0
    %s191 = sadd.s32 %s190, 1
    %s192 = scalar_select %p189, %s190, %s191
    %p195 = pneg %p189
    %p196 = scmp.eq.s32.totalorder %s26, 1
    %p197 = por %p195, %p196
    %p198 = scmp.ne.s32.totalorder %s190, %s193
    %p199 = scmp.eq.s32.totalorder %s26, 0
    %p200 = por %p198, %p199
    %p201 = scmp.ne.s32.totalorder %s190, %s193
    %p202 = scmp.eq.s32.totalorder %s31, 1
    %p203 = por %p201, %p202
    %p204 = scmp.ne.s32.totalorder %s193, %s194
    %p205 = scmp.eq.s32.totalorder %s31, 0
    %p206 = por %p204, %p205
    %p207 = scmp.ne.s32.totalorder %s193, %s194
    %p208 = scmp.eq.s32.totalorder %s32, 1
    %p209 = por %p207, %p208
    %p211 = scmp.ne.s32.totalorder %s194, %s210
    %p212 = scmp.eq.s32.totalorder %s32, 0
    %p213 = por %p211, %p212
    %s214 = ssub.s32 %s33, %s45
    %p215 = scmp.eq.s32.totalorder %s214, 0
    %s217 = sadd.s32 %s216, 1
    %s218 = scalar_select %p215, %s216, %s217
    %p221 = pneg %p215
    %p222 = scmp.eq.s32.totalorder %s26, 1
    %p223 = por %p221, %p222
    %p224 = scmp.ne.s32.totalorder %s216, %s219
    %p225 = scmp.eq.s32.totalorder %s26, 0
    %p226 = por %p224, %p225
    %p227 = scmp.ne.s32.totalorder %s216, %s219
    %p228 = scmp.eq.s32.totalorder %s31, 1
    %p229 = por %p227, %p228
    %p230 = scmp.ne.s32.totalorder %s219, %s220
    %p231 = scmp.eq.s32.totalorder %s31, 0
    %p232 = por %p230, %p231
    %p233 = scmp.ne.s32.totalorder %s219, %s220
    %p234 = scmp.eq.s32.totalorder %s32, 1
    %p235 = por %p233, %p234
    %p237 = scmp.ne.s32.totalorder %s220, %s236
    %p238 = scmp.eq.s32.totalorder %s32, 0
    %p239 = por %p237, %p238
    %s240 = ssub.s32 %s33, %s45
    %p241 = scmp.eq.s32.totalorder %s240, 0
    %s243 = sadd.s32 %s242, 1
    %s244 = scalar_select %p241, %s242, %s243
    %p247 = pneg %p241
    %p248 = scmp.eq.s32.totalorder %s26, 1
    %p249 = por %p247, %p248
    %p250 = scmp.ne.s32.totalorder %s242, %s245
    %p251 = scmp.eq.s32.totalorder %s26, 0
    %p252 = por %p250, %p251
    %p253 = scmp.ne.s32.totalorder %s242, %s245
    %p254 = scmp.eq.s32.totalorder %s31, 1
    %p255 = por %p253, %p254
    %p256 = scmp.ne.s32.totalorder %s245, %s246
    %p257 = scmp.eq.s32.totalorder %s31, 0
    %p258 = por %p256, %p257
    %p259 = scmp.ne.s32.totalorder %s245, %s246
    %p260 = scmp.eq.s32.totalorder %s32, 1
    %p261 = por %p259, %p260
    %p263 = scmp.ne.s32.totalorder %s246, %s262
    %p264 = scmp.eq.s32.totalorder %s32, 0
    %p265 = por %p263, %p264
    %p266 = scmp.le.s32.totalorder 1, %s26
    %p267 = scmp.lt.s32.totalorder %s26, 3
    %p268 = pnand %p266, %p267
    %p269 = pneg %p268
    // Predicated region
    $region9: #{_forward_impl.3} parent=5 // pred_check
      _
    $region10: #{_forward_impl.3} parent=5 // pred_check_branch
      %271 = sbr.rel (%p268) target = $region12
    $region11: #{_forward_impl.3} parent=5 // pred_region
      %s272 = ssub.s32 %s26, 1
    $region12: #{_forward_impl.3} parent=5 // pred_fallthru
      _
    %p273 = scmp.lt.s32.totalorder %s26, 2
    // Predicated region
    $region13: #{_forward_impl.3} parent=5 // pred_check
      %p274 = pneg %p273
    $region14: #{_forward_impl.3} parent=5 // pred_check_branch
      %276 = sbr.rel (%p274) target = $region16
    $region15: #{_forward_impl.3} parent=5 // pred_region
      // Predicated region
      $region17: #{_forward_impl.3} parent=15 // pred_check
        %p277 = pneg %p58
      $region18: #{_forward_impl.3} parent=15 // pred_check_branch
        %279 = sbr.rel (%p277) target = $region20
      $region19: #{_forward_impl.3} parent=15 // pred_region
        %s280 = smul.u32 32, %s33
        %p281 = scmp.lt.s32.totalorder %s280, 63
        %s282 = scalar_select %p281, %s280, 63
        %s283 = smul.addr %s282, 8
        %s284 = scalar_lea.vmem %s2, %s283
        %s285 = smul.u32 32, %s33
      $region20: #{_forward_impl.3} parent=15 // pred_fallthru
        _
      // Predicated region
      $region21: #{_forward_impl.3} parent=15 // pred_check
        %p286 = pneg %p88
      $region22: #{_forward_impl.3} parent=15 // pred_check_branch
        %288 = sbr.rel (%p286) target = $region24
      $region23: #{_forward_impl.3} parent=15 // pred_region
        %s289 = sadd.s32 %s33, %s34
        %s290 = sld [smem:[#allocation6 + %s289]]
        %s291 = smul.u32 4, %s290
        %p292 = scmp.lt.s32.totalorder %s291, 3
        %s293 = scalar_select %p292, %s291, 3
        %s294 = smul.addr %s293, 4
        %s295 = scalar_lea.vmem %s3, %s294
        %s296 = sadd.s32 %s33, %s34
        %s297 = sld [smem:[#allocation6 + %s296]]
        %s298 = smul.u32 4, %s297
      $region24: #{_forward_impl.3} parent=15 // pred_fallthru
        _
      // Predicated region
      $region25: #{_forward_impl.3} parent=15 // pred_check
        %p299 = pneg %p114
      $region26: #{_forward_impl.3} parent=15 // pred_check_branch
        %301 = sbr.rel (%p299) target = $region28
      $region27: #{_forward_impl.3} parent=15 // pred_region
        %s302 = smul.u32 32, %s33
        %p303 = scmp.lt.s32.totalorder %s302, 63
        %s304 = scalar_select %p303, %s302, 63
        %s305 = smul.addr %s304, 8
        %s306 = scalar_lea.vmem %s4, %s305
        %s307 = smul.u32 32, %s33
      $region28: #{_forward_impl.3} parent=15 // pred_fallthru
        _
      // Predicated region
      $region29: #{_forward_impl.3} parent=15 // pred_check
        %p308 = pneg %p144
      $region30: #{_forward_impl.3} parent=15 // pred_check_branch
        %310 = sbr.rel (%p308) target = $region32
      $region31: #{_forward_impl.3} parent=15 // pred_region
        %s311 = sadd.s32 %s33, %s34
        %s312 = sld [smem:[#allocation6 + %s311]]
        %s313 = smul.u32 4, %s312
        %p314 = scmp.lt.s32.totalorder %s313, 3
        %s315 = scalar_select %p314, %s313, 3
        %s316 = smul.addr %s315, 8
        %s317 = scalar_lea.vmem %s5, %s316
        %s318 = sadd.s32 %s33, %s34
        %s319 = sld [smem:[#allocation6 + %s318]]
        %s320 = smul.u32 4, %s319
      $region32: #{_forward_impl.3} parent=15 // pred_fallthru
        _
      // Predicated region
      $region33: #{_forward_impl.3} parent=15 // pred_check
        %p321 = pneg %p170
      $region34: #{_forward_impl.3} parent=15 // pred_check_branch
        %323 = sbr.rel (%p321) target = $region36
      $region35: #{_forward_impl.3} parent=15 // pred_region
        %s324 = smul.u32 32, %s33
        %p325 = scmp.lt.s32.totalorder %s324, 63
        %s326 = scalar_select %p325, %s324, 63
        %s327 = smul.addr %s326, 8
        %s328 = scalar_lea.vmem %s6, %s327
        %s329 = smul.u32 32, %s33
      $region36: #{_forward_impl.3} parent=15 // pred_fallthru
        _
      // Predicated region
      $region37: #{_forward_impl.3} parent=15 // pred_check
        %p330 = pneg %p200
      $region38: #{_forward_impl.3} parent=15 // pred_check_branch
        %332 = sbr.rel (%p330) target = $region40
      $region39: #{_forward_impl.3} parent=15 // pred_region
        %s333 = sadd.s32 %s33, %s34
        %s334 = sld [smem:[#allocation6 + %s333]]
        %s335 = smul.u32 4, %s334
        %p336 = scmp.lt.s32.totalorder %s335, 3
        %s337 = scalar_select %p336, %s335, 3
        %s338 = scalar_lea.vmem %s7, %s337
        %s339 = sadd.s32 %s33, %s34
        %s340 = sld [smem:[#allocation6 + %s339]]
        %s341 = smul.u32 4, %s340
      $region40: #{_forward_impl.3} parent=15 // pred_fallthru
        _
    $region16: #{_forward_impl.3} parent=5 // pred_fallthru
      _
    %p342 = scmp.le.s32.totalorder 1, %s26
    %p343 = scmp.lt.s32.totalorder %s26, 3
    %p344 = pnand %p342, %p343
    %p345 = pneg %p344
    // Predicated region
    $region41: #{_forward_impl.3} parent=5 // pred_check
      _
    $region42: #{_forward_impl.3} parent=5 // pred_check_branch
      %347 = sbr.rel (%p344) target = $region44
    $region43: #{_forward_impl.3} parent=5 // pred_region
      %s348 = ssub.s32 %s26, 1
      %s349 = smul.u32 32, %s35
      %p350 = scmp.lt.s32.totalorder %s349, 63
      %s351 = scalar_select %p350, %s349, 63
      %s352 = smul.addr %s351, 8
      %s353 = scalar_lea.vmem %s2, %s352
      %p354 = pneg %p64
      %p355 = pneg %p61
      %s356 = sadd.s32 %s35, %s36
      %s357 = sld [smem:[#allocation6 + %s356]]
      %s358 = smul.u32 4, %s357
      %p359 = scmp.lt.s32.totalorder %s358, 3
      %s360 = scalar_select %p359, %s358, 3
      %s361 = smul.addr %s360, 4
      %s362 = scalar_lea.vmem %s3, %s361
      %p363 = pneg %p94
      %p364 = pneg %p91
      %s365 = smul.u32 32, %s35
      %p366 = scmp.lt.s32.totalorder %s365, 63
      %s367 = scalar_select %p366, %s365, 63
      %s368 = smul.addr %s367, 8
      %s369 = scalar_lea.vmem %s4, %s368
      %p370 = pneg %p120
      %p371 = pneg %p117
      %s372 = sadd.s32 %s35, %s36
      %s373 = sld [smem:[#allocation6 + %s372]]
      %s374 = smul.u32 4, %s373
      %p375 = scmp.lt.s32.totalorder %s374, 3
      %s376 = scalar_select %p375, %s374, 3
      %s377 = smul.addr %s376, 8
      %s378 = scalar_lea.vmem %s5, %s377
      %p379 = pneg %p150
      %p380 = pneg %p147
      %s381 = smul.u32 32, %s35
      %p382 = scmp.lt.s32.totalorder %s381, 63
      %s383 = scalar_select %p382, %s381, 63
      %s384 = smul.addr %s383, 8
      %s385 = scalar_lea.vmem %s6, %s384
      %p386 = pneg %p176
      %p387 = pneg %p173
      %s388 = sadd.s32 %s35, %s36
      %s389 = sld [smem:[#allocation6 + %s388]]
      %s390 = smul.u32 4, %s389
      %p391 = scmp.lt.s32.totalorder %s390, 3
      %s392 = scalar_select %p391, %s390, 3
      %s393 = scalar_lea.vmem %s7, %s392
      %p394 = pneg %p206
      %p395 = pneg %p203
      %p396 = pneg %p232
      %p397 = pneg %p229
      %p398 = scmp.lt.s32.totalorder %s35, 1
      %s399 = scalar_select %p398, %s35, 1
      %s400 = smul.addr %s399, 8
      %s401 = scalar_lea.vmem %s8, %s400
      %p402 = pneg %p258
      %p403 = pneg %p255
      %p404 = scmp.lt.s32.totalorder %s35, 1
      %s405 = scalar_select %p404, %s35, 1
      %s406 = smul.addr %s405, 8
      %s407 = scalar_lea.vmem %s9, %s406
      %s408 = smul.u32 32, %s35
      %p409 = scmp.lt.s32.totalorder %s408, 63
      %s410 = scalar_select %p409, %s408, 63
      %s411 = smul.addr %s410, 8
      %s412 = scalar_lea.vmem %s2, %s411
      %s413 = smul.u32 32, %s35
      %s414 = sadd.s32 %s35, %s36
      %s415 = sld [smem:[#allocation6 + %s414]]
      %s416 = smul.u32 4, %s415
      %p417 = scmp.lt.s32.totalorder %s416, 3
      %s418 = scalar_select %p417, %s416, 3
      %s419 = smul.addr %s418, 4
      %s420 = scalar_lea.vmem %s3, %s419
      %s421 = sadd.s32 %s35, %s36
      %s422 = sld [smem:[#allocation6 + %s421]]
      %s423 = smul.u32 4, %s422
      %s424 = smul.u32 32, %s35
      %p425 = scmp.lt.s32.totalorder %s424, 63
      %s426 = scalar_select %p425, %s424, 63
      %s427 = smul.addr %s426, 8
      %s428 = scalar_lea.vmem %s4, %s427
      %s429 = smul.u32 32, %s35
      %s430 = sadd.s32 %s35, %s36
      %s431 = sld [smem:[#allocation6 + %s430]]
      %s432 = smul.u32 4, %s431
      %p433 = scmp.lt.s32.totalorder %s432, 3
      %s434 = scalar_select %p433, %s432, 3
      %s435 = smul.addr %s434, 8
      %s436 = scalar_lea.vmem %s5, %s435
      %s437 = sadd.s32 %s35, %s36
      %s438 = sld [smem:[#allocation6 + %s437]]
      %s439 = smul.u32 4, %s438
      %s440 = smul.u32 32, %s35
      %p441 = scmp.lt.s32.totalorder %s440, 63
      %s442 = scalar_select %p441, %s440, 63
      %s443 = smul.addr %s442, 8
      %s444 = scalar_lea.vmem %s6, %s443
      %s445 = smul.u32 32, %s35
      %s446 = sadd.s32 %s35, %s36
      %s447 = sld [smem:[#allocation6 + %s446]]
      %s448 = smul.u32 4, %s447
      %p449 = scmp.lt.s32.totalorder %s448, 3
      %s450 = scalar_select %p449, %s448, 3
      %s451 = scalar_lea.vmem %s7, %s450
      %s452 = sadd.s32 %s35, %s36
      %s453 = sld [smem:[#allocation6 + %s452]]
      %s454 = smul.u32 4, %s453
      %p455 = scmp.lt.s32.totalorder %s35, 1
      %s456 = scalar_select %p455, %s35, 1
      %s457 = smul.addr %s456, 8
      %s458 = scalar_lea.vmem %s8, %s457
      %p459 = scmp.lt.s32.totalorder %s35, 1
      %s460 = scalar_select %p459, %s35, 1
      %s461 = smul.addr %s460, 8
      %s462 = scalar_lea.vmem %s9, %s461
      %p463 = scmp.eq.s32.totalorder %s36, 0
      // Predicated region
      $region45: #{_forward_impl.3} parent=43 // pred_check
        %p464 = pneg %p463
      $region46: #{_forward_impl.3} parent=43 // pred_check_branch
        %466 = sbr.rel (%p464) target = $region48
      $region47: #{_forward_impl.3} parent=43 // pred_region
        %467 = vst [vmem:[#allocation2] sm:$0xff] 0.0
        %468 = vst [vmem:[#allocation3] sm:$0xff] 0.0
      $region48: #{_forward_impl.3} parent=43 // pred_fallthru
        _
      %s469 = sld [smem:[#allocation5 + %s35]]
      %p470 = scmp.lt.s32.totalorder %s36, %s469
      // Predicated region
      $region49: #{_forward_impl.3} parent=43 // pred_check
        %p471 = pneg %p470
      $region50: #{_forward_impl.3} parent=43 // pred_check_branch
        %473 = sbr.rel (%p471) target = $region52
      $region51: #{_forward_impl.3} parent=43 // pred_region
        %v474 = vld [vmem:[%s412] sm:$0xff]
        %v475 = vld [vmem:[%s412 + $0x8] sm:$0xff]
        %v476 = vld [vmem:[%s412 + $0x10] sm:$0xff]
        %v477 = vld [vmem:[%s412 + $0x18] sm:$0xff]
        %v478 = vld [vmem:[%s412 + $0x20] sm:$0xff]
        %v479 = vld [vmem:[%s412 + $0x28] sm:$0xff]
        %v480 = vld [vmem:[%s412 + $0x30] sm:$0xff]
        %v481 = vld [vmem:[%s412 + $0x38] sm:$0xff]
        %v482 = vld [vmem:[%s412 + $0x40] sm:$0xff]
        %v483 = vld [vmem:[%s412 + $0x48] sm:$0xff]
        %v484 = vld [vmem:[%s412 + $0x50] sm:$0xff]
        %v485 = vld [vmem:[%s412 + $0x58] sm:$0xff]
        %v486 = vld [vmem:[%s412 + $0x60] sm:$0xff]
        %v487 = vld [vmem:[%s412 + $0x68] sm:$0xff]
        %v488 = vld [vmem:[%s412 + $0x70] sm:$0xff]
        %v489 = vld [vmem:[%s412 + $0x78] sm:$0xff]
        %v490 = vld [vmem:[%s412 + $0x80] sm:$0xff]
        %v491 = vld [vmem:[%s412 + $0x88] sm:$0xff]
        %v492 = vld [vmem:[%s412 + $0x90] sm:$0xff]
        %v493 = vld [vmem:[%s412 + $0x98] sm:$0xff]
        %v494 = vld [vmem:[%s412 + $0xa0] sm:$0xff]
        %v495 = vld [vmem:[%s412 + $0xa8] sm:$0xff]
        %v496 = vld [vmem:[%s412 + $0xb0] sm:$0xff]
        %v497 = vld [vmem:[%s412 + $0xb8] sm:$0xff]
        %v498 = vld [vmem:[%s412 + $0xc0] sm:$0xff]
        %v499 = vld [vmem:[%s412 + $0xc8] sm:$0xff]
        %v500 = vld [vmem:[%s412 + $0xd0] sm:$0xff]
        %v501 = vld [vmem:[%s412 + $0xd8] sm:$0xff]
        %v502 = vld [vmem:[%s412 + $0xe0] sm:$0xff]
        %v503 = vld [vmem:[%s412 + $0xe8] sm:$0xff]
        %v504 = vld [vmem:[%s412 + $0xf0] sm:$0xff]
        %v505 = vld [vmem:[%s412 + $0xf8] sm:$0xff]
        %v506 = vld [vmem:[%s420] sm:$0x77]
        %v507 = vld [vmem:[%s420 + $0x8] sm:$0x77]
        %v508 = vld [vmem:[%s428] sm:$0xff]
        %v509 = vld [vmem:[%s428 + $0x8] sm:$0xff]
        %v510 = vld [vmem:[%s428 + $0x10] sm:$0xff]
        %v511 = vld [vmem:[%s428 + $0x18] sm:$0xff]
        %v512 = vld [vmem:[%s428 + $0x20] sm:$0xff]
        %v513 = vld [vmem:[%s428 + $0x28] sm:$0xff]
        %v514 = vld [vmem:[%s428 + $0x30] sm:$0xff]
        %v515 = vld [vmem:[%s428 + $0x38] sm:$0xff]
        %v516 = vld [vmem:[%s428 + $0x40] sm:$0xff]
        %v517 = vld [vmem:[%s428 + $0x48] sm:$0xff]
        %v518 = vld [vmem:[%s428 + $0x50] sm:$0xff]
        %v519 = vld [vmem:[%s428 + $0x58] sm:$0xff]
        %v520 = vld [vmem:[%s428 + $0x60] sm:$0xff]
        %v521 = vld [vmem:[%s428 + $0x68] sm:$0xff]
        %v522 = vld [vmem:[%s428 + $0x70] sm:$0xff]
        %v523 = vld [vmem:[%s428 + $0x78] sm:$0xff]
        %v524 = vld [vmem:[%s428 + $0x80] sm:$0xff]
        %v525 = vld [vmem:[%s428 + $0x88] sm:$0xff]
        %v526 = vld [vmem:[%s428 + $0x90] sm:$0xff]
        %v527 = vld [vmem:[%s428 + $0x98] sm:$0xff]
        %v528 = vld [vmem:[%s428 + $0xa0] sm:$0xff]
        %v529 = vld [vmem:[%s428 + $0xa8] sm:$0xff]
        %v530 = vld [vmem:[%s428 + $0xb0] sm:$0xff]
        %v531 = vld [vmem:[%s428 + $0xb8] sm:$0xff]
        %v532 = vld [vmem:[%s428 + $0xc0] sm:$0xff]
        %v533 = vld [vmem:[%s428 + $0xc8] sm:$0xff]
        %v534 = vld [vmem:[%s428 + $0xd0] sm:$0xff]
        %v535 = vld [vmem:[%s428 + $0xd8] sm:$0xff]
        %v536 = vld [vmem:[%s428 + $0xe0] sm:$0xff]
        %v537 = vld [vmem:[%s428 + $0xe8] sm:$0xff]
        %v538 = vld [vmem:[%s428 + $0xf0] sm:$0xff]
        %v539 = vld [vmem:[%s428 + $0xf8] sm:$0xff]
        %v540 = vld [vmem:[%s436] sm:$0xff]
        %v541 = vld [vmem:[%s436 + $0x8] sm:$0xff]
        %v542 = vld [vmem:[%s436 + $0x10] sm:$0xff]
        %v543 = vld [vmem:[%s436 + $0x18] sm:$0xff]
        %545 = vset.pattern.permute.xlu0 0
        %546 = vperm.xlu0 %545, %v474
        %v547 = vpop.permute.xlu0 %546
        %550 = vset.pattern.permute.xlu0 0
        %551 = vperm.xlu0 %550, %v475
        %v552 = vpop.permute.xlu0 %551
        %555 = vset.pattern.permute.xlu0 0
        %556 = vperm.xlu0 %555, %v476
        %v557 = vpop.permute.xlu0 %556
        %560 = vset.pattern.permute.xlu0 0
        %561 = vperm.xlu0 %560, %v477
        %v562 = vpop.permute.xlu0 %561
        %565 = vset.pattern.permute.xlu0 0
        %566 = vperm.xlu0 %565, %v478
        %v567 = vpop.permute.xlu0 %566
        %570 = vset.pattern.permute.xlu0 0
        %571 = vperm.xlu0 %570, %v479
        %v572 = vpop.permute.xlu0 %571
        %575 = vset.pattern.permute.xlu0 0
        %576 = vperm.xlu0 %575, %v480
        %v577 = vpop.permute.xlu0 %576
        %580 = vset.pattern.permute.xlu0 0
        %581 = vperm.xlu0 %580, %v481
        %v582 = vpop.permute.xlu0 %581
        %585 = vset.pattern.permute.xlu0 0
        %586 = vperm.xlu0 %585, %v482
        %v587 = vpop.permute.xlu0 %586
        %590 = vset.pattern.permute.xlu0 0
        %591 = vperm.xlu0 %590, %v483
        %v592 = vpop.permute.xlu0 %591
        %595 = vset.pattern.permute.xlu0 0
        %596 = vperm.xlu0 %595, %v484
        %v597 = vpop.permute.xlu0 %596
        %600 = vset.pattern.permute.xlu0 0
        %601 = vperm.xlu0 %600, %v485
        %v602 = vpop.permute.xlu0 %601
        %605 = vset.pattern.permute.xlu0 0
        %606 = vperm.xlu0 %605, %v486
        %v607 = vpop.permute.xlu0 %606
        %610 = vset.pattern.permute.xlu0 0
        %611 = vperm.xlu0 %610, %v487
        %v612 = vpop.permute.xlu0 %611
        %615 = vset.pattern.permute.xlu0 0
        %616 = vperm.xlu0 %615, %v488
        %v617 = vpop.permute.xlu0 %616
        %620 = vset.pattern.permute.xlu0 0
        %621 = vperm.xlu0 %620, %v489
        %v622 = vpop.permute.xlu0 %621
        %625 = vset.pattern.permute.xlu0 0
        %626 = vperm.xlu0 %625, %v490
        %v627 = vpop.permute.xlu0 %626
        %630 = vset.pattern.permute.xlu0 0
        %631 = vperm.xlu0 %630, %v491
        %v632 = vpop.permute.xlu0 %631
        %635 = vset.pattern.permute.xlu0 0
        %636 = vperm.xlu0 %635, %v492
        %v637 = vpop.permute.xlu0 %636
        %640 = vset.pattern.permute.xlu0 0
        %641 = vperm.xlu0 %640, %v493
        %v642 = vpop.permute.xlu0 %641
        %645 = vset.pattern.permute.xlu0 0
        %646 = vperm.xlu0 %645, %v494
        %v647 = vpop.permute.xlu0 %646
        %650 = vset.pattern.permute.xlu0 0
        %651 = vperm.xlu0 %650, %v495
        %v652 = vpop.permute.xlu0 %651
        %655 = vset.pattern.permute.xlu0 0
        %656 = vperm.xlu0 %655, %v496
        %v657 = vpop.permute.xlu0 %656
        %660 = vset.pattern.permute.xlu0 0
        %661 = vperm.xlu0 %660, %v497
        %v662 = vpop.permute.xlu0 %661
        %665 = vset.pattern.permute.xlu0 0
        %666 = vperm.xlu0 %665, %v498
        %v667 = vpop.permute.xlu0 %666
        %670 = vset.pattern.permute.xlu0 0
        %671 = vperm.xlu0 %670, %v499
        %v672 = vpop.permute.xlu0 %671
        %675 = vset.pattern.permute.xlu0 0
        %676 = vperm.xlu0 %675, %v500
        %v677 = vpop.permute.xlu0 %676
        %680 = vset.pattern.permute.xlu0 0
        %681 = vperm.xlu0 %680, %v501
        %v682 = vpop.permute.xlu0 %681
        %685 = vset.pattern.permute.xlu0 0
        %686 = vperm.xlu0 %685, %v502
        %v687 = vpop.permute.xlu0 %686
        %690 = vset.pattern.permute.xlu0 0
        %691 = vperm.xlu0 %690, %v503
        %v692 = vpop.permute.xlu0 %691
        %695 = vset.pattern.permute.xlu0 0
        %696 = vperm.xlu0 %695, %v504
        %v697 = vpop.permute.xlu0 %696
        %700 = vset.pattern.permute.xlu0 0
        %701 = vperm.xlu0 %700, %v505
        %v702 = vpop.permute.xlu0 %701
        %v706 = vlaneseq
        %v707 = vshrl.u32 %v706, 7
        %v708 = vsub.s32 0, %v707
        %v709 = vrot.slane %v506, %v708
        %v710 = vlaneseq
        %v711 = vshrl.u32 %v710, 7
        %v712 = vsub.s32 4, %v711
        %v713 = vrot.slane %v506, %v712
        %v714 = vlaneseq
        %v715 = vshrl.u32 %v714, 7
        %v716 = vsub.s32 0, %v715
        %v717 = vrot.slane %v507, %v716
        %v718 = vlaneseq
        %v719 = vshrl.u32 %v718, 7
        %v720 = vsub.s32 4, %v719
        %v721 = vrot.slane %v507, %v720
        %v726 = vlaneseq
        %v727 = vshrl.u32 %v726, 7
        %v728 = vsub.s32 0, %v727
        %v729 = vrot.slane %v709, %v728
        %v730 = vlaneseq
        %v731 = vshrl.u32 %v730, 7
        %v732 = vsub.s32 0, %v731
        %v733 = vrot.slane %v713, %v732
        %v734 = vlaneseq
        %v735 = vshrl.u32 %v734, 7
        %v736 = vsub.s32 0, %v735
        %v737 = vrot.slane %v717, %v736
        %v738 = vlaneseq
        %v739 = vshrl.u32 %v738, 7
        %v740 = vsub.s32 0, %v739
        %v741 = vrot.slane %v721, %v740
        %v742 = vsub.f32 %v547, %v729
        %v743 = vsub.f32 %v547, %v733
        %v744 = vsub.f32 %v547, %v737
        %v745 = vsub.f32 %v547, %v741
        %v746 = vsub.f32 %v552, %v729
        %v747 = vsub.f32 %v552, %v733
        %v748 = vsub.f32 %v552, %v737
        %v749 = vsub.f32 %v552, %v741
        %v750 = vsub.f32 %v557, %v729
        %v751 = vsub.f32 %v557, %v733
        %v752 = vsub.f32 %v557, %v737
        %v753 = vsub.f32 %v557, %v741
        %v754 = vsub.f32 %v562, %v729
        %v755 = vsub.f32 %v562, %v733
        %v756 = vsub.f32 %v562, %v737
        %v757 = vsub.f32 %v562, %v741
        %v758 = vsub.f32 %v567, %v729
        %v759 = vsub.f32 %v567, %v733
        %v760 = vsub.f32 %v567, %v737
        %v761 = vsub.f32 %v567, %v741
        %v762 = vsub.f32 %v572, %v729
        %v763 = vsub.f32 %v572, %v733
        %v764 = vsub.f32 %v572, %v737
        %v765 = vsub.f32 %v572, %v741
        %v766 = vsub.f32 %v577, %v729
        %v767 = vsub.f32 %v577, %v733
        %v768 = vsub.f32 %v577, %v737
        %v769 = vsub.f32 %v577, %v741
        %v770 = vsub.f32 %v582, %v729
        %v771 = vsub.f32 %v582, %v733
        %v772 = vsub.f32 %v582, %v737
        %v773 = vsub.f32 %v582, %v741
        %v774 = vsub.f32 %v587, %v729
        %v775 = vsub.f32 %v587, %v733
        %v776 = vsub.f32 %v587, %v737
        %v777 = vsub.f32 %v587, %v741
        %v778 = vsub.f32 %v592, %v729
        %v779 = vsub.f32 %v592, %v733
        %v780 = vsub.f32 %v592, %v737
        %v781 = vsub.f32 %v592, %v741
        %v782 = vsub.f32 %v597, %v729
        %v783 = vsub.f32 %v597, %v733
        %v784 = vsub.f32 %v597, %v737
        %v785 = vsub.f32 %v597, %v741
        %v786 = vsub.f32 %v602, %v729
        %v787 = vsub.f32 %v602, %v733
        %v788 = vsub.f32 %v602, %v737
        %v789 = vsub.f32 %v602, %v741
        %v790 = vsub.f32 %v607, %v729
        %v791 = vsub.f32 %v607, %v733
        %v792 = vsub.f32 %v607, %v737
        %v793 = vsub.f32 %v607, %v741
        %v794 = vsub.f32 %v612, %v729
        %v795 = vsub.f32 %v612, %v733
        %v796 = vsub.f32 %v612, %v737
        %v797 = vsub.f32 %v612, %v741
        %v798 = vsub.f32 %v617, %v729
        %v799 = vsub.f32 %v617, %v733
        %v800 = vsub.f32 %v617, %v737
        %v801 = vsub.f32 %v617, %v741
        %v802 = vsub.f32 %v622, %v729
        %v803 = vsub.f32 %v622, %v733
        %v804 = vsub.f32 %v622, %v737
        %v805 = vsub.f32 %v622, %v741
        %v806 = vsub.f32 %v627, %v729
        %v807 = vsub.f32 %v627, %v733
        %v808 = vsub.f32 %v627, %v737
        %v809 = vsub.f32 %v627, %v741
        %v810 = vsub.f32 %v632, %v729
        %v811 = vsub.f32 %v632, %v733
        %v812 = vsub.f32 %v632, %v737
        %v813 = vsub.f32 %v632, %v741
        %v814 = vsub.f32 %v637, %v729
        %v815 = vsub.f32 %v637, %v733
        %v816 = vsub.f32 %v637, %v737
        %v817 = vsub.f32 %v637, %v741
        %v818 = vsub.f32 %v642, %v729
        %v819 = vsub.f32 %v642, %v733
        %v820 = vsub.f32 %v642, %v737
        %v821 = vsub.f32 %v642, %v741
        %v822 = vsub.f32 %v647, %v729
        %v823 = vsub.f32 %v647, %v733
        %v824 = vsub.f32 %v647, %v737
        %v825 = vsub.f32 %v647, %v741
        %v826 = vsub.f32 %v652, %v729
        %v827 = vsub.f32 %v652, %v733
        %v828 = vsub.f32 %v652, %v737
        %v829 = vsub.f32 %v652, %v741
        %v830 = vsub.f32 %v657, %v729
        %v831 = vsub.f32 %v657, %v733
        %v832 = vsub.f32 %v657, %v737
        %v833 = vsub.f32 %v657, %v741
        %v834 = vsub.f32 %v662, %v729
        %v835 = vsub.f32 %v662, %v733
        %v836 = vsub.f32 %v662, %v737
        %v837 = vsub.f32 %v662, %v741
        %v838 = vsub.f32 %v667, %v729
        %v839 = vsub.f32 %v667, %v733
        %v840 = vsub.f32 %v667, %v737
        %v841 = vsub.f32 %v667, %v741
        %v842 = vsub.f32 %v672, %v729
        %v843 = vsub.f32 %v672, %v733
        %v844 = vsub.f32 %v672, %v737
        %v845 = vsub.f32 %v672, %v741
        %v846 = vsub.f32 %v677, %v729
        %v847 = vsub.f32 %v677, %v733
        %v848 = vsub.f32 %v677, %v737
        %v849 = vsub.f32 %v677, %v741
        %v850 = vsub.f32 %v682, %v729
        %v851 = vsub.f32 %v682, %v733
        %v852 = vsub.f32 %v682, %v737
        %v853 = vsub.f32 %v682, %v741
        %v854 = vsub.f32 %v687, %v729
        %v855 = vsub.f32 %v687, %v733
        %v856 = vsub.f32 %v687, %v737
        %v857 = vsub.f32 %v687, %v741
        %v858 = vsub.f32 %v692, %v729
        %v859 = vsub.f32 %v692, %v733
        %v860 = vsub.f32 %v692, %v737
        %v861 = vsub.f32 %v692, %v741
        %v862 = vsub.f32 %v697, %v729
        %v863 = vsub.f32 %v697, %v733
        %v864 = vsub.f32 %v697, %v737
        %v865 = vsub.f32 %v697, %v741
        %v866 = vsub.f32 %v702, %v729
        %v867 = vsub.f32 %v702, %v733
        %v868 = vsub.f32 %v702, %v737
        %v869 = vsub.f32 %v702, %v741
        %870 = vset.pattern.permute.xlu0 1
        %871 = vperm.xlu0 %870, %v474
        %v872 = vpop.permute.xlu0 %871
        %874 = vset.pattern.permute.xlu0 1
        %875 = vperm.xlu0 %874, %v475
        %v876 = vpop.permute.xlu0 %875
        %878 = vset.pattern.permute.xlu0 1
        %879 = vperm.xlu0 %878, %v476
        %v880 = vpop.permute.xlu0 %879
        %882 = vset.pattern.permute.xlu0 1
        %883 = vperm.xlu0 %882, %v477
        %v884 = vpop.permute.xlu0 %883
        %886 = vset.pattern.permute.xlu0 1
        %887 = vperm.xlu0 %886, %v478
        %v888 = vpop.permute.xlu0 %887
        %890 = vset.pattern.permute.xlu0 1
        %891 = vperm.xlu0 %890, %v479
        %v892 = vpop.permute.xlu0 %891
        %894 = vset.pattern.permute.xlu0 1
        %895 = vperm.xlu0 %894, %v480
        %v896 = vpop.permute.xlu0 %895
        %898 = vset.pattern.permute.xlu0 1
        %899 = vperm.xlu0 %898, %v481
        %v900 = vpop.permute.xlu0 %899
        %902 = vset.pattern.permute.xlu0 1
        %903 = vperm.xlu0 %902, %v482
        %v904 = vpop.permute.xlu0 %903
        %906 = vset.pattern.permute.xlu0 1
        %907 = vperm.xlu0 %906, %v483
        %v908 = vpop.permute.xlu0 %907
        %910 = vset.pattern.permute.xlu0 1
        %911 = vperm.xlu0 %910, %v484
        %v912 = vpop.permute.xlu0 %911
        %914 = vset.pattern.permute.xlu0 1
        %915 = vperm.xlu0 %914, %v485
        %v916 = vpop.permute.xlu0 %915
        %918 = vset.pattern.permute.xlu0 1
        %919 = vperm.xlu0 %918, %v486
        %v920 = vpop.permute.xlu0 %919
        %922 = vset.pattern.permute.xlu0 1
        %923 = vperm.xlu0 %922, %v487
        %v924 = vpop.permute.xlu0 %923
        %926 = vset.pattern.permute.xlu0 1
        %927 = vperm.xlu0 %926, %v488
        %v928 = vpop.permute.xlu0 %927
        %930 = vset.pattern.permute.xlu0 1
        %931 = vperm.xlu0 %930, %v489
        %v932 = vpop.permute.xlu0 %931
        %934 = vset.pattern.permute.xlu0 1
        %935 = vperm.xlu0 %934, %v490
        %v936 = vpop.permute.xlu0 %935
        %938 = vset.pattern.permute.xlu0 1
        %939 = vperm.xlu0 %938, %v491
        %v940 = vpop.permute.xlu0 %939
        %942 = vset.pattern.permute.xlu0 1
        %943 = vperm.xlu0 %942, %v492
        %v944 = vpop.permute.xlu0 %943
        %946 = vset.pattern.permute.xlu0 1
        %947 = vperm.xlu0 %946, %v493
        %v948 = vpop.permute.xlu0 %947
        %950 = vset.pattern.permute.xlu0 1
        %951 = vperm.xlu0 %950, %v494
        %v952 = vpop.permute.xlu0 %951
        %954 = vset.pattern.permute.xlu0 1
        %955 = vperm.xlu0 %954, %v495
        %v956 = vpop.permute.xlu0 %955
        %958 = vset.pattern.permute.xlu0 1
        %959 = vperm.xlu0 %958, %v496
        %v960 = vpop.permute.xlu0 %959
        %962 = vset.pattern.permute.xlu0 1
        %963 = vperm.xlu0 %962, %v497
        %v964 = vpop.permute.xlu0 %963
        %966 = vset.pattern.permute.xlu0 1
        %967 = vperm.xlu0 %966, %v498
        %v968 = vpop.permute.xlu0 %967
        %970 = vset.pattern.permute.xlu0 1
        %971 = vperm.xlu0 %970, %v499
        %v972 = vpop.permute.xlu0 %971
        %974 = vset.pattern.permute.xlu0 1
        %975 = vperm.xlu0 %974, %v500
        %v976 = vpop.permute.xlu0 %975
        %978 = vset.pattern.permute.xlu0 1
        %979 = vperm.xlu0 %978, %v501
        %v980 = vpop.permute.xlu0 %979
        %982 = vset.pattern.permute.xlu0 1
        %983 = vperm.xlu0 %982, %v502
        %v984 = vpop.permute.xlu0 %983
        %986 = vset.pattern.permute.xlu0 1
        %987 = vperm.xlu0 %986, %v503
        %v988 = vpop.permute.xlu0 %987
        %990 = vset.pattern.permute.xlu0 1
        %991 = vperm.xlu0 %990, %v504
        %v992 = vpop.permute.xlu0 %991
        %994 = vset.pattern.permute.xlu0 1
        %995 = vperm.xlu0 %994, %v505
        %v996 = vpop.permute.xlu0 %995
        %v998 = vlaneseq
        %v999 = vshrl.u32 %v998, 7
        %v1000 = vsub.s32 1, %v999
        %v1001 = vrot.slane %v506, %v1000
        %v1002 = vlaneseq
        %v1003 = vshrl.u32 %v1002, 7
        %v1004 = vsub.s32 5, %v1003
        %v1005 = vrot.slane %v506, %v1004
        %v1006 = vlaneseq
        %v1007 = vshrl.u32 %v1006, 7
        %v1008 = vsub.s32 1, %v1007
        %v1009 = vrot.slane %v507, %v1008
        %v1010 = vlaneseq
        %v1011 = vshrl.u32 %v1010, 7
        %v1012 = vsub.s32 5, %v1011
        %v1013 = vrot.slane %v507, %v1012
        %v1018 = vlaneseq
        %v1019 = vshrl.u32 %v1018, 7
        %v1020 = vsub.s32 1, %v1019
        %v1021 = vrot.slane %v1001, %v1020
        %v1022 = vlaneseq
        %v1023 = vshrl.u32 %v1022, 7
        %v1024 = vsub.s32 1, %v1023
        %v1025 = vrot.slane %v1005, %v1024
        %v1026 = vlaneseq
        %v1027 = vshrl.u32 %v1026, 7
        %v1028 = vsub.s32 1, %v1027
        %v1029 = vrot.slane %v1009, %v1028
        %v1030 = vlaneseq
        %v1031 = vshrl.u32 %v1030, 7
        %v1032 = vsub.s32 1, %v1031
        %v1033 = vrot.slane %v1013, %v1032
        %v1034 = vsub.f32 %v872, %v1021
        %v1035 = vsub.f32 %v872, %v1025
        %v1036 = vsub.f32 %v872, %v1029
        %v1037 = vsub.f32 %v872, %v1033
        %v1038 = vsub.f32 %v876, %v1021
        %v1039 = vsub.f32 %v876, %v1025
        %v1040 = vsub.f32 %v876, %v1029
        %v1041 = vsub.f32 %v876, %v1033
        %v1042 = vsub.f32 %v880, %v1021
        %v1043 = vsub.f32 %v880, %v1025
        %v1044 = vsub.f32 %v880, %v1029
        %v1045 = vsub.f32 %v880, %v1033
        %v1046 = vsub.f32 %v884, %v1021
        %v1047 = vsub.f32 %v884, %v1025
        %v1048 = vsub.f32 %v884, %v1029
        %v1049 = vsub.f32 %v884, %v1033
        %v1050 = vsub.f32 %v888, %v1021
        %v1051 = vsub.f32 %v888, %v1025
        %v1052 = vsub.f32 %v888, %v1029
        %v1053 = vsub.f32 %v888, %v1033
        %v1054 = vsub.f32 %v892, %v1021
        %v1055 = vsub.f32 %v892, %v1025
        %v1056 = vsub.f32 %v892, %v1029
        %v1057 = vsub.f32 %v892, %v1033
        %v1058 = vsub.f32 %v896, %v1021
        %v1059 = vsub.f32 %v896, %v1025
        %v1060 = vsub.f32 %v896, %v1029
        %v1061 = vsub.f32 %v896, %v1033
        %v1062 = vsub.f32 %v900, %v1021
        %v1063 = vsub.f32 %v900, %v1025
        %v1064 = vsub.f32 %v900, %v1029
        %v1065 = vsub.f32 %v900, %v1033
        %v1066 = vsub.f32 %v904, %v1021
        %v1067 = vsub.f32 %v904, %v1025
        %v1068 = vsub.f32 %v904, %v1029
        %v1069 = vsub.f32 %v904, %v1033
        %v1070 = vsub.f32 %v908, %v1021
        %v1071 = vsub.f32 %v908, %v1025
        %v1072 = vsub.f32 %v908, %v1029
        %v1073 = vsub.f32 %v908, %v1033
        %v1074 = vsub.f32 %v912, %v1021
        %v1075 = vsub.f32 %v912, %v1025
        %v1076 = vsub.f32 %v912, %v1029
        %v1077 = vsub.f32 %v912, %v1033
        %v1078 = vsub.f32 %v916, %v1021
        %v1079 = vsub.f32 %v916, %v1025
        %v1080 = vsub.f32 %v916, %v1029
        %v1081 = vsub.f32 %v916, %v1033
        %v1082 = vsub.f32 %v920, %v1021
        %v1083 = vsub.f32 %v920, %v1025
        %v1084 = vsub.f32 %v920, %v1029
        %v1085 = vsub.f32 %v920, %v1033
        %v1086 = vsub.f32 %v924, %v1021
        %v1087 = vsub.f32 %v924, %v1025
        %v1088 = vsub.f32 %v924, %v1029
        %v1089 = vsub.f32 %v924, %v1033
        %v1090 = vsub.f32 %v928, %v1021
        %v1091 = vsub.f32 %v928, %v1025
        %v1092 = vsub.f32 %v928, %v1029
        %v1093 = vsub.f32 %v928, %v1033
        %v1094 = vsub.f32 %v932, %v1021
        %v1095 = vsub.f32 %v932, %v1025
        %v1096 = vsub.f32 %v932, %v1029
        %v1097 = vsub.f32 %v932, %v1033
        %v1098 = vsub.f32 %v936, %v1021
        %v1099 = vsub.f32 %v936, %v1025
        %v1100 = vsub.f32 %v936, %v1029
        %v1101 = vsub.f32 %v936, %v1033
        %v1102 = vsub.f32 %v940, %v1021
        %v1103 = vsub.f32 %v940, %v1025
        %v1104 = vsub.f32 %v940, %v1029
        %v1105 = vsub.f32 %v940, %v1033
        %v1106 = vsub.f32 %v944, %v1021
        %v1107 = vsub.f32 %v944, %v1025
        %v1108 = vsub.f32 %v944, %v1029
        %v1109 = vsub.f32 %v944, %v1033
        %v1110 = vsub.f32 %v948, %v1021
        %v1111 = vsub.f32 %v948, %v1025
        %v1112 = vsub.f32 %v948, %v1029
        %v1113 = vsub.f32 %v948, %v1033
        %v1114 = vsub.f32 %v952, %v1021
        %v1115 = vsub.f32 %v952, %v1025
        %v1116 = vsub.f32 %v952, %v1029
        %v1117 = vsub.f32 %v952, %v1033
        %v1118 = vsub.f32 %v956, %v1021
        %v1119 = vsub.f32 %v956, %v1025
        %v1120 = vsub.f32 %v956, %v1029
        %v1121 = vsub.f32 %v956, %v1033
        %v1122 = vsub.f32 %v960, %v1021
        %v1123 = vsub.f32 %v960, %v1025
        %v1124 = vsub.f32 %v960, %v1029
        %v1125 = vsub.f32 %v960, %v1033
        %v1126 = vsub.f32 %v964, %v1021
        %v1127 = vsub.f32 %v964, %v1025
        %v1128 = vsub.f32 %v964, %v1029
        %v1129 = vsub.f32 %v964, %v1033
        %v1130 = vsub.f32 %v968, %v1021
        %v1131 = vsub.f32 %v968, %v1025
        %v1132 = vsub.f32 %v968, %v1029
        %v1133 = vsub.f32 %v968, %v1033
        %v1134 = vsub.f32 %v972, %v1021
        %v1135 = vsub.f32 %v972, %v1025
        %v1136 = vsub.f32 %v972, %v1029
        %v1137 = vsub.f32 %v972, %v1033
        %v1138 = vsub.f32 %v976, %v1021
        %v1139 = vsub.f32 %v976, %v1025
        %v1140 = vsub.f32 %v976, %v1029
        %v1141 = vsub.f32 %v976, %v1033
        %v1142 = vsub.f32 %v980, %v1021
        %v1143 = vsub.f32 %v980, %v1025
        %v1144 = vsub.f32 %v980, %v1029
        %v1145 = vsub.f32 %v980, %v1033
        %v1146 = vsub.f32 %v984, %v1021
        %v1147 = vsub.f32 %v984, %v1025
        %v1148 = vsub.f32 %v984, %v1029
        %v1149 = vsub.f32 %v984, %v1033
        %v1150 = vsub.f32 %v988, %v1021
        %v1151 = vsub.f32 %v988, %v1025
        %v1152 = vsub.f32 %v988, %v1029
        %v1153 = vsub.f32 %v988, %v1033
        %v1154 = vsub.f32 %v992, %v1021
        %v1155 = vsub.f32 %v992, %v1025
        %v1156 = vsub.f32 %v992, %v1029
        %v1157 = vsub.f32 %v992, %v1033
        %v1158 = vsub.f32 %v996, %v1021
        %v1159 = vsub.f32 %v996, %v1025
        %v1160 = vsub.f32 %v996, %v1029
        %v1161 = vsub.f32 %v996, %v1033
        %1162 = vset.pattern.permute.xlu0 2
        %1163 = vperm.xlu0 %1162, %v474
        %v1164 = vpop.permute.xlu0 %1163
        %1166 = vset.pattern.permute.xlu0 2
        %1167 = vperm.xlu0 %1166, %v475
        %v1168 = vpop.permute.xlu0 %1167
        %1170 = vset.pattern.permute.xlu0 2
        %1171 = vperm.xlu0 %1170, %v476
        %v1172 = vpop.permute.xlu0 %1171
        %1174 = vset.pattern.permute.xlu0 2
        %1175 = vperm.xlu0 %1174, %v477
        %v1176 = vpop.permute.xlu0 %1175
        %1178 = vset.pattern.permute.xlu0 2
        %1179 = vperm.xlu0 %1178, %v478
        %v1180 = vpop.permute.xlu0 %1179
        %1182 = vset.pattern.permute.xlu0 2
        %1183 = vperm.xlu0 %1182, %v479
        %v1184 = vpop.permute.xlu0 %1183
        %1186 = vset.pattern.permute.xlu0 2
        %1187 = vperm.xlu0 %1186, %v480
        %v1188 = vpop.permute.xlu0 %1187
        %1190 = vset.pattern.permute.xlu0 2
        %1191 = vperm.xlu0 %1190, %v481
        %v1192 = vpop.permute.xlu0 %1191
        %1194 = vset.pattern.permute.xlu0 2
        %1195 = vperm.xlu0 %1194, %v482
        %v1196 = vpop.permute.xlu0 %1195
        %1198 = vset.pattern.permute.xlu0 2
        %1199 = vperm.xlu0 %1198, %v483
        %v1200 = vpop.permute.xlu0 %1199
        %1202 = vset.pattern.permute.xlu0 2
        %1203 = vperm.xlu0 %1202, %v484
        %v1204 = vpop.permute.xlu0 %1203
        %1206 = vset.pattern.permute.xlu0 2
        %1207 = vperm.xlu0 %1206, %v485
        %v1208 = vpop.permute.xlu0 %1207
        %1210 = vset.pattern.permute.xlu0 2
        %1211 = vperm.xlu0 %1210, %v486
        %v1212 = vpop.permute.xlu0 %1211
        %1214 = vset.pattern.permute.xlu0 2
        %1215 = vperm.xlu0 %1214, %v487
        %v1216 = vpop.permute.xlu0 %1215
        %1218 = vset.pattern.permute.xlu0 2
        %1219 = vperm.xlu0 %1218, %v488
        %v1220 = vpop.permute.xlu0 %1219
        %1222 = vset.pattern.permute.xlu0 2
        %1223 = vperm.xlu0 %1222, %v489
        %v1224 = vpop.permute.xlu0 %1223
        %1226 = vset.pattern.permute.xlu0 2
        %1227 = vperm.xlu0 %1226, %v490
        %v1228 = vpop.permute.xlu0 %1227
        %1230 = vset.pattern.permute.xlu0 2
        %1231 = vperm.xlu0 %1230, %v491
        %v1232 = vpop.permute.xlu0 %1231
        %1234 = vset.pattern.permute.xlu0 2
        %1235 = vperm.xlu0 %1234, %v492
        %v1236 = vpop.permute.xlu0 %1235
        %1238 = vset.pattern.permute.xlu0 2
        %1239 = vperm.xlu0 %1238, %v493
        %v1240 = vpop.permute.xlu0 %1239
        %1242 = vset.pattern.permute.xlu0 2
        %1243 = vperm.xlu0 %1242, %v494
        %v1244 = vpop.permute.xlu0 %1243
        %1246 = vset.pattern.permute.xlu0 2
        %1247 = vperm.xlu0 %1246, %v495
        %v1248 = vpop.permute.xlu0 %1247
        %1250 = vset.pattern.permute.xlu0 2
        %1251 = vperm.xlu0 %1250, %v496
        %v1252 = vpop.permute.xlu0 %1251
        %1254 = vset.pattern.permute.xlu0 2
        %1255 = vperm.xlu0 %1254, %v497
        %v1256 = vpop.permute.xlu0 %1255
        %1258 = vset.pattern.permute.xlu0 2
        %1259 = vperm.xlu0 %1258, %v498
        %v1260 = vpop.permute.xlu0 %1259
        %1262 = vset.pattern.permute.xlu0 2
        %1263 = vperm.xlu0 %1262, %v499
        %v1264 = vpop.permute.xlu0 %1263
        %1266 = vset.pattern.permute.xlu0 2
        %1267 = vperm.xlu0 %1266, %v500
        %v1268 = vpop.permute.xlu0 %1267
        %1270 = vset.pattern.permute.xlu0 2
        %1271 = vperm.xlu0 %1270, %v501
        %v1272 = vpop.permute.xlu0 %1271
        %1274 = vset.pattern.permute.xlu0 2
        %1275 = vperm.xlu0 %1274, %v502
        %v1276 = vpop.permute.xlu0 %1275
        %1278 = vset.pattern.permute.xlu0 2
        %1279 = vperm.xlu0 %1278, %v503
        %v1280 = vpop.permute.xlu0 %1279
        %1282 = vset.pattern.permute.xlu0 2
        %1283 = vperm.xlu0 %1282, %v504
        %v1284 = vpop.permute.xlu0 %1283
        %1286 = vset.pattern.permute.xlu0 2
        %1287 = vperm.xlu0 %1286, %v505
        %v1288 = vpop.permute.xlu0 %1287
        %v1290 = vlaneseq
        %v1291 = vshrl.u32 %v1290, 7
        %v1292 = vsub.s32 2, %v1291
        %v1293 = vrot.slane %v506, %v1292
        %v1294 = vlaneseq
        %v1295 = vshrl.u32 %v1294, 7
        %v1296 = vsub.s32 6, %v1295
        %v1297 = vrot.slane %v506, %v1296
        %v1298 = vlaneseq
        %v1299 = vshrl.u32 %v1298, 7
        %v1300 = vsub.s32 2, %v1299
        %v1301 = vrot.slane %v507, %v1300
        %v1302 = vlaneseq
        %v1303 = vshrl.u32 %v1302, 7
        %v1304 = vsub.s32 6, %v1303
        %v1305 = vrot.slane %v507, %v1304
        %v1310 = vlaneseq
        %v1311 = vshrl.u32 %v1310, 7
        %v1312 = vsub.s32 2, %v1311
        %v1313 = vrot.slane %v1293, %v1312
        %v1314 = vlaneseq
        %v1315 = vshrl.u32 %v1314, 7
        %v1316 = vsub.s32 2, %v1315
        %v1317 = vrot.slane %v1297, %v1316
        %v1318 = vlaneseq
        %v1319 = vshrl.u32 %v1318, 7
        %v1320 = vsub.s32 2, %v1319
        %v1321 = vrot.slane %v1301, %v1320
        %v1322 = vlaneseq
        %v1323 = vshrl.u32 %v1322, 7
        %v1324 = vsub.s32 2, %v1323
        %v1325 = vrot.slane %v1305, %v1324
        %v1326 = vsub.f32 %v1164, %v1313
        %v1327 = vsub.f32 %v1164, %v1317
        %v1328 = vsub.f32 %v1164, %v1321
        %v1329 = vsub.f32 %v1164, %v1325
        %v1330 = vsub.f32 %v1168, %v1313
        %v1331 = vsub.f32 %v1168, %v1317
        %v1332 = vsub.f32 %v1168, %v1321
        %v1333 = vsub.f32 %v1168, %v1325
        %v1334 = vsub.f32 %v1172, %v1313
        %v1335 = vsub.f32 %v1172, %v1317
        %v1336 = vsub.f32 %v1172, %v1321
        %v1337 = vsub.f32 %v1172, %v1325
        %v1338 = vsub.f32 %v1176, %v1313
        %v1339 = vsub.f32 %v1176, %v1317
        %v1340 = vsub.f32 %v1176, %v1321
        %v1341 = vsub.f32 %v1176, %v1325
        %v1342 = vsub.f32 %v1180, %v1313
        %v1343 = vsub.f32 %v1180, %v1317
        %v1344 = vsub.f32 %v1180, %v1321
        %v1345 = vsub.f32 %v1180, %v1325
        %v1346 = vsub.f32 %v1184, %v1313
        %v1347 = vsub.f32 %v1184, %v1317
        %v1348 = vsub.f32 %v1184, %v1321
        %v1349 = vsub.f32 %v1184, %v1325
        %v1350 = vsub.f32 %v1188, %v1313
        %v1351 = vsub.f32 %v1188, %v1317
        %v1352 = vsub.f32 %v1188, %v1321
        %v1353 = vsub.f32 %v1188, %v1325
        %v1354 = vsub.f32 %v1192, %v1313
        %v1355 = vsub.f32 %v1192, %v1317
        %v1356 = vsub.f32 %v1192, %v1321
        %v1357 = vsub.f32 %v1192, %v1325
        %v1358 = vsub.f32 %v1196, %v1313
        %v1359 = vsub.f32 %v1196, %v1317
        %v1360 = vsub.f32 %v1196, %v1321
        %v1361 = vsub.f32 %v1196, %v1325
        %v1362 = vsub.f32 %v1200, %v1313
        %v1363 = vsub.f32 %v1200, %v1317
        %v1364 = vsub.f32 %v1200, %v1321
        %v1365 = vsub.f32 %v1200, %v1325
        %v1366 = vsub.f32 %v1204, %v1313
        %v1367 = vsub.f32 %v1204, %v1317
        %v1368 = vsub.f32 %v1204, %v1321
        %v1369 = vsub.f32 %v1204, %v1325
        %v1370 = vsub.f32 %v1208, %v1313
        %v1371 = vsub.f32 %v1208, %v1317
        %v1372 = vsub.f32 %v1208, %v1321
        %v1373 = vsub.f32 %v1208, %v1325
        %v1374 = vsub.f32 %v1212, %v1313
        %v1375 = vsub.f32 %v1212, %v1317
        %v1376 = vsub.f32 %v1212, %v1321
        %v1377 = vsub.f32 %v1212, %v1325
        %v1378 = vsub.f32 %v1216, %v1313
        %v1379 = vsub.f32 %v1216, %v1317
        %v1380 = vsub.f32 %v1216, %v1321
        %v1381 = vsub.f32 %v1216, %v1325
        %v1382 = vsub.f32 %v1220, %v1313
        %v1383 = vsub.f32 %v1220, %v1317
        %v1384 = vsub.f32 %v1220, %v1321
        %v1385 = vsub.f32 %v1220, %v1325
        %v1386 = vsub.f32 %v1224, %v1313
        %v1387 = vsub.f32 %v1224, %v1317
        %v1388 = vsub.f32 %v1224, %v1321
        %v1389 = vsub.f32 %v1224, %v1325
        %v1390 = vsub.f32 %v1228, %v1313
        %v1391 = vsub.f32 %v1228, %v1317
        %v1392 = vsub.f32 %v1228, %v1321
        %v1393 = vsub.f32 %v1228, %v1325
        %v1394 = vsub.f32 %v1232, %v1313
        %v1395 = vsub.f32 %v1232, %v1317
        %v1396 = vsub.f32 %v1232, %v1321
        %v1397 = vsub.f32 %v1232, %v1325
        %v1398 = vsub.f32 %v1236, %v1313
        %v1399 = vsub.f32 %v1236, %v1317
        %v1400 = vsub.f32 %v1236, %v1321
        %v1401 = vsub.f32 %v1236, %v1325
        %v1402 = vsub.f32 %v1240, %v1313
        %v1403 = vsub.f32 %v1240, %v1317
        %v1404 = vsub.f32 %v1240, %v1321
        %v1405 = vsub.f32 %v1240, %v1325
        %v1406 = vsub.f32 %v1244, %v1313
        %v1407 = vsub.f32 %v1244, %v1317
        %v1408 = vsub.f32 %v1244, %v1321
        %v1409 = vsub.f32 %v1244, %v1325
        %v1410 = vsub.f32 %v1248, %v1313
        %v1411 = vsub.f32 %v1248, %v1317
        %v1412 = vsub.f32 %v1248, %v1321
        %v1413 = vsub.f32 %v1248, %v1325
        %v1414 = vsub.f32 %v1252, %v1313
        %v1415 = vsub.f32 %v1252, %v1317
        %v1416 = vsub.f32 %v1252, %v1321
        %v1417 = vsub.f32 %v1252, %v1325
        %v1418 = vsub.f32 %v1256, %v1313
        %v1419 = vsub.f32 %v1256, %v1317
        %v1420 = vsub.f32 %v1256, %v1321
        %v1421 = vsub.f32 %v1256, %v1325
        %v1422 = vsub.f32 %v1260, %v1313
        %v1423 = vsub.f32 %v1260, %v1317
        %v1424 = vsub.f32 %v1260, %v1321
        %v1425 = vsub.f32 %v1260, %v1325
        %v1426 = vsub.f32 %v1264, %v1313
        %v1427 = vsub.f32 %v1264, %v1317
        %v1428 = vsub.f32 %v1264, %v1321
        %v1429 = vsub.f32 %v1264, %v1325
        %v1430 = vsub.f32 %v1268, %v1313
        %v1431 = vsub.f32 %v1268, %v1317
        %v1432 = vsub.f32 %v1268, %v1321
        %v1433 = vsub.f32 %v1268, %v1325
        %v1434 = vsub.f32 %v1272, %v1313
        %v1435 = vsub.f32 %v1272, %v1317
        %v1436 = vsub.f32 %v1272, %v1321
        %v1437 = vsub.f32 %v1272, %v1325
        %v1438 = vsub.f32 %v1276, %v1313
        %v1439 = vsub.f32 %v1276, %v1317
        %v1440 = vsub.f32 %v1276, %v1321
        %v1441 = vsub.f32 %v1276, %v1325
        %v1442 = vsub.f32 %v1280, %v1313
        %v1443 = vsub.f32 %v1280, %v1317
        %v1444 = vsub.f32 %v1280, %v1321
        %v1445 = vsub.f32 %v1280, %v1325
        %v1446 = vsub.f32 %v1284, %v1313
        %v1447 = vsub.f32 %v1284, %v1317
        %v1448 = vsub.f32 %v1284, %v1321
        %v1449 = vsub.f32 %v1284, %v1325
        %v1450 = vsub.f32 %v1288, %v1313
        %v1451 = vsub.f32 %v1288, %v1317
        %v1452 = vsub.f32 %v1288, %v1321
        %v1453 = vsub.f32 %v1288, %v1325
        %v1454 = vmul.f32 %v742, %v742
        %v1455 = vmul.f32 %v743, %v743
        %v1456 = vmul.f32 %v744, %v744
        %v1457 = vmul.f32 %v745, %v745
        %v1458 = vmul.f32 %v746, %v746
        %v1459 = vmul.f32 %v747, %v747
        %v1460 = vmul.f32 %v748, %v748
        %v1461 = vmul.f32 %v749, %v749
        %v1462 = vmul.f32 %v750, %v750
        %v1463 = vmul.f32 %v751, %v751
        %v1464 = vmul.f32 %v752, %v752
        %v1465 = vmul.f32 %v753, %v753
        %v1466 = vmul.f32 %v754, %v754
        %v1467 = vmul.f32 %v755, %v755
        %v1468 = vmul.f32 %v756, %v756
        %v1469 = vmul.f32 %v757, %v757
        %v1470 = vmul.f32 %v758, %v758
        %v1471 = vmul.f32 %v759, %v759
        %v1472 = vmul.f32 %v760, %v760
        %v1473 = vmul.f32 %v761, %v761
        %v1474 = vmul.f32 %v762, %v762
        %v1475 = vmul.f32 %v763, %v763
        %v1476 = vmul.f32 %v764, %v764
        %v1477 = vmul.f32 %v765, %v765
        %v1478 = vmul.f32 %v766, %v766
        %v1479 = vmul.f32 %v767, %v767
        %v1480 = vmul.f32 %v768, %v768
        %v1481 = vmul.f32 %v769, %v769
        %v1482 = vmul.f32 %v770, %v770
        %v1483 = vmul.f32 %v771, %v771
        %v1484 = vmul.f32 %v772, %v772
        %v1485 = vmul.f32 %v773, %v773
        %v1486 = vmul.f32 %v774, %v774
        %v1487 = vmul.f32 %v775, %v775
        %v1488 = vmul.f32 %v776, %v776
        %v1489 = vmul.f32 %v777, %v777
        %v1490 = vmul.f32 %v778, %v778
        %v1491 = vmul.f32 %v779, %v779
        %v1492 = vmul.f32 %v780, %v780
        %v1493 = vmul.f32 %v781, %v781
        %v1494 = vmul.f32 %v782, %v782
        %v1495 = vmul.f32 %v783, %v783
        %v1496 = vmul.f32 %v784, %v784
        %v1497 = vmul.f32 %v785, %v785
        %v1498 = vmul.f32 %v786, %v786
        %v1499 = vmul.f32 %v787, %v787
        %v1500 = vmul.f32 %v788, %v788
        %v1501 = vmul.f32 %v789, %v789
        %v1502 = vmul.f32 %v790, %v790
        %v1503 = vmul.f32 %v791, %v791
        %v1504 = vmul.f32 %v792, %v792
        %v1505 = vmul.f32 %v793, %v793
        %v1506 = vmul.f32 %v794, %v794
        %v1507 = vmul.f32 %v795, %v795
        %v1508 = vmul.f32 %v796, %v796
        %v1509 = vmul.f32 %v797, %v797
        %v1510 = vmul.f32 %v798, %v798
        %v1511 = vmul.f32 %v799, %v799
        %v1512 = vmul.f32 %v800, %v800
        %v1513 = vmul.f32 %v801, %v801
        %v1514 = vmul.f32 %v802, %v802
        %v1515 = vmul.f32 %v803, %v803
        %v1516 = vmul.f32 %v804, %v804
        %v1517 = vmul.f32 %v805, %v805
        %v1518 = vmul.f32 %v806, %v806
        %v1519 = vmul.f32 %v807, %v807
        %v1520 = vmul.f32 %v808, %v808
        %v1521 = vmul.f32 %v809, %v809
        %v1522 = vmul.f32 %v810, %v810
        %v1523 = vmul.f32 %v811, %v811
        %v1524 = vmul.f32 %v812, %v812
        %v1525 = vmul.f32 %v813, %v813
        %v1526 = vmul.f32 %v814, %v814
        %v1527 = vmul.f32 %v815, %v815
        %v1528 = vmul.f32 %v816, %v816
        %v1529 = vmul.f32 %v817, %v817
        %v1530 = vmul.f32 %v818, %v818
        %v1531 = vmul.f32 %v819, %v819
        %v1532 = vmul.f32 %v820, %v820
        %v1533 = vmul.f32 %v821, %v821
        %v1534 = vmul.f32 %v822, %v822
        %v1535 = vmul.f32 %v823, %v823
        %v1536 = vmul.f32 %v824, %v824
        %v1537 = vmul.f32 %v825, %v825
        %v1538 = vmul.f32 %v826, %v826
        %v1539 = vmul.f32 %v827, %v827
        %v1540 = vmul.f32 %v828, %v828
        %v1541 = vmul.f32 %v829, %v829
        %v1542 = vmul.f32 %v830, %v830
        %v1543 = vmul.f32 %v831, %v831
        %v1544 = vmul.f32 %v832, %v832
        %v1545 = vmul.f32 %v833, %v833
        %v1546 = vmul.f32 %v834, %v834
        %v1547 = vmul.f32 %v835, %v835
        %v1548 = vmul.f32 %v836, %v836
        %v1549 = vmul.f32 %v837, %v837
        %v1550 = vmul.f32 %v838, %v838
        %v1551 = vmul.f32 %v839, %v839
        %v1552 = vmul.f32 %v840, %v840
        %v1553 = vmul.f32 %v841, %v841
        %v1554 = vmul.f32 %v842, %v842
        %v1555 = vmul.f32 %v843, %v843
        %v1556 = vmul.f32 %v844, %v844
        %v1557 = vmul.f32 %v845, %v845
        %v1558 = vmul.f32 %v846, %v846
        %v1559 = vmul.f32 %v847, %v847
        %v1560 = vmul.f32 %v848, %v848
        %v1561 = vmul.f32 %v849, %v849
        %v1562 = vmul.f32 %v850, %v850
        %v1563 = vmul.f32 %v851, %v851
        %v1564 = vmul.f32 %v852, %v852
        %v1565 = vmul.f32 %v853, %v853
        %v1566 = vmul.f32 %v854, %v854
        %v1567 = vmul.f32 %v855, %v855
        %v1568 = vmul.f32 %v856, %v856
        %v1569 = vmul.f32 %v857, %v857
        %v1570 = vmul.f32 %v858, %v858
        %v1571 = vmul.f32 %v859, %v859
        %v1572 = vmul.f32 %v860, %v860
        %v1573 = vmul.f32 %v861, %v861
        %v1574 = vmul.f32 %v862, %v862
        %v1575 = vmul.f32 %v863, %v863
        %v1576 = vmul.f32 %v864, %v864
        %v1577 = vmul.f32 %v865, %v865
        %v1578 = vmul.f32 %v866, %v866
        %v1579 = vmul.f32 %v867, %v867
        %v1580 = vmul.f32 %v868, %v868
        %v1581 = vmul.f32 %v869, %v869
        %v1582 = vmul.f32 %v1034, %v1034
        %v1583 = vmul.f32 %v1035, %v1035
        %v1584 = vmul.f32 %v1036, %v1036
        %v1585 = vmul.f32 %v1037, %v1037
        %v1586 = vmul.f32 %v1038, %v1038
        %v1587 = vmul.f32 %v1039, %v1039
        %v1588 = vmul.f32 %v1040, %v1040
        %v1589 = vmul.f32 %v1041, %v1041
        %v1590 = vmul.f32 %v1042, %v1042
        %v1591 = vmul.f32 %v1043, %v1043
        %v1592 = vmul.f32 %v1044, %v1044
        %v1593 = vmul.f32 %v1045, %v1045
        %v1594 = vmul.f32 %v1046, %v1046
        %v1595 = vmul.f32 %v1047, %v1047
        %v1596 = vmul.f32 %v1048, %v1048
        %v1597 = vmul.f32 %v1049, %v1049
        %v1598 = vmul.f32 %v1050, %v1050
        %v1599 = vmul.f32 %v1051, %v1051
        %v1600 = vmul.f32 %v1052, %v1052
        %v1601 = vmul.f32 %v1053, %v1053
        %v1602 = vmul.f32 %v1054, %v1054
        %v1603 = vmul.f32 %v1055, %v1055
        %v1604 = vmul.f32 %v1056, %v1056
        %v1605 = vmul.f32 %v1057, %v1057
        %v1606 = vmul.f32 %v1058, %v1058
        %v1607 = vmul.f32 %v1059, %v1059
        %v1608 = vmul.f32 %v1060, %v1060
        %v1609 = vmul.f32 %v1061, %v1061
        %v1610 = vmul.f32 %v1062, %v1062
        %v1611 = vmul.f32 %v1063, %v1063
        %v1612 = vmul.f32 %v1064, %v1064
        %v1613 = vmul.f32 %v1065, %v1065
        %v1614 = vmul.f32 %v1066, %v1066
        %v1615 = vmul.f32 %v1067, %v1067
        %v1616 = vmul.f32 %v1068, %v1068
        %v1617 = vmul.f32 %v1069, %v1069
        %v1618 = vmul.f32 %v1070, %v1070
        %v1619 = vmul.f32 %v1071, %v1071
        %v1620 = vmul.f32 %v1072, %v1072
        %v1621 = vmul.f32 %v1073, %v1073
        %v1622 = vmul.f32 %v1074, %v1074
        %v1623 = vmul.f32 %v1075, %v1075
        %v1624 = vmul.f32 %v1076, %v1076
        %v1625 = vmul.f32 %v1077, %v1077
        %v1626 = vmul.f32 %v1078, %v1078
        %v1627 = vmul.f32 %v1079, %v1079
        %v1628 = vmul.f32 %v1080, %v1080
        %v1629 = vmul.f32 %v1081, %v1081
        %v1630 = vmul.f32 %v1082, %v1082
        %v1631 = vmul.f32 %v1083, %v1083
        %v1632 = vmul.f32 %v1084, %v1084
        %v1633 = vmul.f32 %v1085, %v1085
        %v1634 = vmul.f32 %v1086, %v1086
        %v1635 = vmul.f32 %v1087, %v1087
        %v1636 = vmul.f32 %v1088, %v1088
        %v1637 = vmul.f32 %v1089, %v1089
        %v1638 = vmul.f32 %v1090, %v1090
        %v1639 = vmul.f32 %v1091, %v1091
        %v1640 = vmul.f32 %v1092, %v1092
        %v1641 = vmul.f32 %v1093, %v1093
        %v1642 = vmul.f32 %v1094, %v1094
        %v1643 = vmul.f32 %v1095, %v1095
        %v1644 = vmul.f32 %v1096, %v1096
        %v1645 = vmul.f32 %v1097, %v1097
        %v1646 = vmul.f32 %v1098, %v1098
        %v1647 = vmul.f32 %v1099, %v1099
        %v1648 = vmul.f32 %v1100, %v1100
        %v1649 = vmul.f32 %v1101, %v1101
        %v1650 = vmul.f32 %v1102, %v1102
        %v1651 = vmul.f32 %v1103, %v1103
        %v1652 = vmul.f32 %v1104, %v1104
        %v1653 = vmul.f32 %v1105, %v1105
        %v1654 = vmul.f32 %v1106, %v1106
        %v1655 = vmul.f32 %v1107, %v1107
        %v1656 = vmul.f32 %v1108, %v1108
        %v1657 = vmul.f32 %v1109, %v1109
        %v1658 = vmul.f32 %v1110, %v1110
        %v1659 = vmul.f32 %v1111, %v1111
        %v1660 = vmul.f32 %v1112, %v1112
        %v1661 = vmul.f32 %v1113, %v1113
        %v1662 = vmul.f32 %v1114, %v1114
        %v1663 = vmul.f32 %v1115, %v1115
        %v1664 = vmul.f32 %v1116, %v1116
        %v1665 = vmul.f32 %v1117, %v1117
        %v1666 = vmul.f32 %v1118, %v1118
        %v1667 = vmul.f32 %v1119, %v1119
        %v1668 = vmul.f32 %v1120, %v1120
        %v1669 = vmul.f32 %v1121, %v1121
        %v1670 = vmul.f32 %v1122, %v1122
        %v1671 = vmul.f32 %v1123, %v1123
        %v1672 = vmul.f32 %v1124, %v1124
        %v1673 = vmul.f32 %v1125, %v1125
        %v1674 = vmul.f32 %v1126, %v1126
        %v1675 = vmul.f32 %v1127, %v1127
        %v1676 = vmul.f32 %v1128, %v1128
        %v1677 = vmul.f32 %v1129, %v1129
        %v1678 = vmul.f32 %v1130, %v1130
        %v1679 = vmul.f32 %v1131, %v1131
        %v1680 = vmul.f32 %v1132, %v1132
        %v1681 = vmul.f32 %v1133, %v1133
        %v1682 = vmul.f32 %v1134, %v1134
        %v1683 = vmul.f32 %v1135, %v1135
        %v1684 = vmul.f32 %v1136, %v1136
        %v1685 = vmul.f32 %v1137, %v1137
        %v1686 = vmul.f32 %v1138, %v1138
        %v1687 = vmul.f32 %v1139, %v1139
        %v1688 = vmul.f32 %v1140, %v1140
        %v1689 = vmul.f32 %v1141, %v1141
        %v1690 = vmul.f32 %v1142, %v1142
        %v1691 = vmul.f32 %v1143, %v1143
        %v1692 = vmul.f32 %v1144, %v1144
        %v1693 = vmul.f32 %v1145, %v1145
        %v1694 = vmul.f32 %v1146, %v1146
        %v1695 = vmul.f32 %v1147, %v1147
        %v1696 = vmul.f32 %v1148, %v1148
        %v1697 = vmul.f32 %v1149, %v1149
        %v1698 = vmul.f32 %v1150, %v1150
        %v1699 = vmul.f32 %v1151, %v1151
        %v1700 = vmul.f32 %v1152, %v1152
        %v1701 = vmul.f32 %v1153, %v1153
        %v1702 = vmul.f32 %v1154, %v1154
        %v1703 = vmul.f32 %v1155, %v1155
        %v1704 = vmul.f32 %v1156, %v1156
        %v1705 = vmul.f32 %v1157, %v1157
        %v1706 = vmul.f32 %v1158, %v1158
        %v1707 = vmul.f32 %v1159, %v1159
        %v1708 = vmul.f32 %v1160, %v1160
        %v1709 = vmul.f32 %v1161, %v1161
        %v1710 = vadd.f32 %v1454, %v1582
        %v1711 = vadd.f32 %v1455, %v1583
        %v1712 = vadd.f32 %v1456, %v1584
        %v1713 = vadd.f32 %v1457, %v1585
        %v1714 = vadd.f32 %v1458, %v1586
        %v1715 = vadd.f32 %v1459, %v1587
        %v1716 = vadd.f32 %v1460, %v1588
        %v1717 = vadd.f32 %v1461, %v1589
        %v1718 = vadd.f32 %v1462, %v1590
        %v1719 = vadd.f32 %v1463, %v1591
        %v1720 = vadd.f32 %v1464, %v1592
        %v1721 = vadd.f32 %v1465, %v1593
        %v1722 = vadd.f32 %v1466, %v1594
        %v1723 = vadd.f32 %v1467, %v1595
        %v1724 = vadd.f32 %v1468, %v1596
        %v1725 = vadd.f32 %v1469, %v1597
        %v1726 = vadd.f32 %v1470, %v1598
        %v1727 = vadd.f32 %v1471, %v1599
        %v1728 = vadd.f32 %v1472, %v1600
        %v1729 = vadd.f32 %v1473, %v1601
        %v1730 = vadd.f32 %v1474, %v1602
        %v1731 = vadd.f32 %v1475, %v1603
        %v1732 = vadd.f32 %v1476, %v1604
        %v1733 = vadd.f32 %v1477, %v1605
        %v1734 = vadd.f32 %v1478, %v1606
        %v1735 = vadd.f32 %v1479, %v1607
        %v1736 = vadd.f32 %v1480, %v1608
        %v1737 = vadd.f32 %v1481, %v1609
        %v1738 = vadd.f32 %v1482, %v1610
        %v1739 = vadd.f32 %v1483, %v1611
        %v1740 = vadd.f32 %v1484, %v1612
        %v1741 = vadd.f32 %v1485, %v1613
        %v1742 = vadd.f32 %v1486, %v1614
        %v1743 = vadd.f32 %v1487, %v1615
        %v1744 = vadd.f32 %v1488, %v1616
        %v1745 = vadd.f32 %v1489, %v1617
        %v1746 = vadd.f32 %v1490, %v1618
        %v1747 = vadd.f32 %v1491, %v1619
        %v1748 = vadd.f32 %v1492, %v1620
        %v1749 = vadd.f32 %v1493, %v1621
        %v1750 = vadd.f32 %v1494, %v1622
        %v1751 = vadd.f32 %v1495, %v1623
        %v1752 = vadd.f32 %v1496, %v1624
        %v1753 = vadd.f32 %v1497, %v1625
        %v1754 = vadd.f32 %v1498, %v1626
        %v1755 = vadd.f32 %v1499, %v1627
        %v1756 = vadd.f32 %v1500, %v1628
        %v1757 = vadd.f32 %v1501, %v1629
        %v1758 = vadd.f32 %v1502, %v1630
        %v1759 = vadd.f32 %v1503, %v1631
        %v1760 = vadd.f32 %v1504, %v1632
        %v1761 = vadd.f32 %v1505, %v1633
        %v1762 = vadd.f32 %v1506, %v1634
        %v1763 = vadd.f32 %v1507, %v1635
        %v1764 = vadd.f32 %v1508, %v1636
        %v1765 = vadd.f32 %v1509, %v1637
        %v1766 = vadd.f32 %v1510, %v1638
        %v1767 = vadd.f32 %v1511, %v1639
        %v1768 = vadd.f32 %v1512, %v1640
        %v1769 = vadd.f32 %v1513, %v1641
        %v1770 = vadd.f32 %v1514, %v1642
        %v1771 = vadd.f32 %v1515, %v1643
        %v1772 = vadd.f32 %v1516, %v1644
        %v1773 = vadd.f32 %v1517, %v1645
        %v1774 = vadd.f32 %v1518, %v1646
        %v1775 = vadd.f32 %v1519, %v1647
        %v1776 = vadd.f32 %v1520, %v1648
        %v1777 = vadd.f32 %v1521, %v1649
        %v1778 = vadd.f32 %v1522, %v1650
        %v1779 = vadd.f32 %v1523, %v1651
        %v1780 = vadd.f32 %v1524, %v1652
        %v1781 = vadd.f32 %v1525, %v1653
        %v1782 = vadd.f32 %v1526, %v1654
        %v1783 = vadd.f32 %v1527, %v1655
        %v1784 = vadd.f32 %v1528, %v1656
        %v1785 = vadd.f32 %v1529, %v1657
        %v1786 = vadd.f32 %v1530, %v1658
        %v1787 = vadd.f32 %v1531, %v1659
        %v1788 = vadd.f32 %v1532, %v1660
        %v1789 = vadd.f32 %v1533, %v1661
        %v1790 = vadd.f32 %v1534, %v1662
        %v1791 = vadd.f32 %v1535, %v1663
        %v1792 = vadd.f32 %v1536, %v1664
        %v1793 = vadd.f32 %v1537, %v1665
        %v1794 = vadd.f32 %v1538, %v1666
        %v1795 = vadd.f32 %v1539, %v1667
        %v1796 = vadd.f32 %v1540, %v1668
        %v1797 = vadd.f32 %v1541, %v1669
        %v1798 = vadd.f32 %v1542, %v1670
        %v1799 = vadd.f32 %v1543, %v1671
        %v1800 = vadd.f32 %v1544, %v1672
        %v1801 = vadd.f32 %v1545, %v1673
        %v1802 = vadd.f32 %v1546, %v1674
        %v1803 = vadd.f32 %v1547, %v1675
        %v1804 = vadd.f32 %v1548, %v1676
        %v1805 = vadd.f32 %v1549, %v1677
        %v1806 = vadd.f32 %v1550, %v1678
        %v1807 = vadd.f32 %v1551, %v1679
        %v1808 = vadd.f32 %v1552, %v1680
        %v1809 = vadd.f32 %v1553, %v1681
        %v1810 = vadd.f32 %v1554, %v1682
        %v1811 = vadd.f32 %v1555, %v1683
        %v1812 = vadd.f32 %v1556, %v1684
        %v1813 = vadd.f32 %v1557, %v1685
        %v1814 = vadd.f32 %v1558, %v1686
        %v1815 = vadd.f32 %v1559, %v1687
        %v1816 = vadd.f32 %v1560, %v1688
        %v1817 = vadd.f32 %v1561, %v1689
        %v1818 = vadd.f32 %v1562, %v1690
        %v1819 = vadd.f32 %v1563, %v1691
        %v1820 = vadd.f32 %v1564, %v1692
        %v1821 = vadd.f32 %v1565, %v1693
        %v1822 = vadd.f32 %v1566, %v1694
        %v1823 = vadd.f32 %v1567, %v1695
        %v1824 = vadd.f32 %v1568, %v1696
        %v1825 = vadd.f32 %v1569, %v1697
        %v1826 = vadd.f32 %v1570, %v1698
        %v1827 = vadd.f32 %v1571, %v1699
        %v1828 = vadd.f32 %v1572, %v1700
        %v1829 = vadd.f32 %v1573, %v1701
        %v1830 = vadd.f32 %v1574, %v1702
        %v1831 = vadd.f32 %v1575, %v1703
        %v1832 = vadd.f32 %v1576, %v1704
        %v1833 = vadd.f32 %v1577, %v1705
        %v1834 = vadd.f32 %v1578, %v1706
        %v1835 = vadd.f32 %v1579, %v1707
        %v1836 = vadd.f32 %v1580, %v1708
        %v1837 = vadd.f32 %v1581, %v1709
        %v1838 = vmul.f32 %v1326, %v1326
        %v1839 = vmul.f32 %v1327, %v1327
        %v1840 = vmul.f32 %v1328, %v1328
        %v1841 = vmul.f32 %v1329, %v1329
        %v1842 = vmul.f32 %v1330, %v1330
        %v1843 = vmul.f32 %v1331, %v1331
        %v1844 = vmul.f32 %v1332, %v1332
        %v1845 = vmul.f32 %v1333, %v1333
        %v1846 = vmul.f32 %v1334, %v1334
        %v1847 = vmul.f32 %v1335, %v1335
        %v1848 = vmul.f32 %v1336, %v1336
        %v1849 = vmul.f32 %v1337, %v1337
        %v1850 = vmul.f32 %v1338, %v1338
        %v1851 = vmul.f32 %v1339, %v1339
        %v1852 = vmul.f32 %v1340, %v1340
        %v1853 = vmul.f32 %v1341, %v1341
        %v1854 = vmul.f32 %v1342, %v1342
        %v1855 = vmul.f32 %v1343, %v1343
        %v1856 = vmul.f32 %v1344, %v1344
        %v1857 = vmul.f32 %v1345, %v1345
        %v1858 = vmul.f32 %v1346, %v1346
        %v1859 = vmul.f32 %v1347, %v1347
        %v1860 = vmul.f32 %v1348, %v1348
        %v1861 = vmul.f32 %v1349, %v1349
        %v1862 = vmul.f32 %v1350, %v1350
        %v1863 = vmul.f32 %v1351, %v1351
        %v1864 = vmul.f32 %v1352, %v1352
        %v1865 = vmul.f32 %v1353, %v1353
        %v1866 = vmul.f32 %v1354, %v1354
        %v1867 = vmul.f32 %v1355, %v1355
        %v1868 = vmul.f32 %v1356, %v1356
        %v1869 = vmul.f32 %v1357, %v1357
        %v1870 = vmul.f32 %v1358, %v1358
        %v1871 = vmul.f32 %v1359, %v1359
        %v1872 = vmul.f32 %v1360, %v1360
        %v1873 = vmul.f32 %v1361, %v1361
        %v1874 = vmul.f32 %v1362, %v1362
        %v1875 = vmul.f32 %v1363, %v1363
        %v1876 = vmul.f32 %v1364, %v1364
        %v1877 = vmul.f32 %v1365, %v1365
        %v1878 = vmul.f32 %v1366, %v1366
        %v1879 = vmul.f32 %v1367, %v1367
        %v1880 = vmul.f32 %v1368, %v1368
        %v1881 = vmul.f32 %v1369, %v1369
        %v1882 = vmul.f32 %v1370, %v1370
        %v1883 = vmul.f32 %v1371, %v1371
        %v1884 = vmul.f32 %v1372, %v1372
        %v1885 = vmul.f32 %v1373, %v1373
        %v1886 = vmul.f32 %v1374, %v1374
        %v1887 = vmul.f32 %v1375, %v1375
        %v1888 = vmul.f32 %v1376, %v1376
        %v1889 = vmul.f32 %v1377, %v1377
        %v1890 = vmul.f32 %v1378, %v1378
        %v1891 = vmul.f32 %v1379, %v1379
        %v1892 = vmul.f32 %v1380, %v1380
        %v1893 = vmul.f32 %v1381, %v1381
        %v1894 = vmul.f32 %v1382, %v1382
        %v1895 = vmul.f32 %v1383, %v1383
        %v1896 = vmul.f32 %v1384, %v1384
        %v1897 = vmul.f32 %v1385, %v1385
        %v1898 = vmul.f32 %v1386, %v1386
        %v1899 = vmul.f32 %v1387, %v1387
        %v1900 = vmul.f32 %v1388, %v1388
        %v1901 = vmul.f32 %v1389, %v1389
        %v1902 = vmul.f32 %v1390, %v1390
        %v1903 = vmul.f32 %v1391, %v1391
        %v1904 = vmul.f32 %v1392, %v1392
        %v1905 = vmul.f32 %v1393, %v1393
        %v1906 = vmul.f32 %v1394, %v1394
        %v1907 = vmul.f32 %v1395, %v1395
        %v1908 = vmul.f32 %v1396, %v1396
        %v1909 = vmul.f32 %v1397, %v1397
        %v1910 = vmul.f32 %v1398, %v1398
        %v1911 = vmul.f32 %v1399, %v1399
        %v1912 = vmul.f32 %v1400, %v1400
        %v1913 = vmul.f32 %v1401, %v1401
        %v1914 = vmul.f32 %v1402, %v1402
        %v1915 = vmul.f32 %v1403, %v1403
        %v1916 = vmul.f32 %v1404, %v1404
        %v1917 = vmul.f32 %v1405, %v1405
        %v1918 = vmul.f32 %v1406, %v1406
        %v1919 = vmul.f32 %v1407, %v1407
        %v1920 = vmul.f32 %v1408, %v1408
        %v1921 = vmul.f32 %v1409, %v1409
        %v1922 = vmul.f32 %v1410, %v1410
        %v1923 = vmul.f32 %v1411, %v1411
        %v1924 = vmul.f32 %v1412, %v1412
        %v1925 = vmul.f32 %v1413, %v1413
        %v1926 = vmul.f32 %v1414, %v1414
        %v1927 = vmul.f32 %v1415, %v1415
        %v1928 = vmul.f32 %v1416, %v1416
        %v1929 = vmul.f32 %v1417, %v1417
        %v1930 = vmul.f32 %v1418, %v1418
        %v1931 = vmul.f32 %v1419, %v1419
        %v1932 = vmul.f32 %v1420, %v1420
        %v1933 = vmul.f32 %v1421, %v1421
        %v1934 = vmul.f32 %v1422, %v1422
        %v1935 = vmul.f32 %v1423, %v1423
        %v1936 = vmul.f32 %v1424, %v1424
        %v1937 = vmul.f32 %v1425, %v1425
        %v1938 = vmul.f32 %v1426, %v1426
        %v1939 = vmul.f32 %v1427, %v1427
        %v1940 = vmul.f32 %v1428, %v1428
        %v1941 = vmul.f32 %v1429, %v1429
        %v1942 = vmul.f32 %v1430, %v1430
        %v1943 = vmul.f32 %v1431, %v1431
        %v1944 = vmul.f32 %v1432, %v1432
        %v1945 = vmul.f32 %v1433, %v1433
        %v1946 = vmul.f32 %v1434, %v1434
        %v1947 = vmul.f32 %v1435, %v1435
        %v1948 = vmul.f32 %v1436, %v1436
        %v1949 = vmul.f32 %v1437, %v1437
        %v1950 = vmul.f32 %v1438, %v1438
        %v1951 = vmul.f32 %v1439, %v1439
        %v1952 = vmul.f32 %v1440, %v1440
        %v1953 = vmul.f32 %v1441, %v1441
        %v1954 = vmul.f32 %v1442, %v1442
        %v1955 = vmul.f32 %v1443, %v1443
        %v1956 = vmul.f32 %v1444, %v1444
        %v1957 = vmul.f32 %v1445, %v1445
        %v1958 = vmul.f32 %v1446, %v1446
        %v1959 = vmul.f32 %v1447, %v1447
        %v1960 = vmul.f32 %v1448, %v1448
        %v1961 = vmul.f32 %v1449, %v1449
        %v1962 = vmul.f32 %v1450, %v1450
        %v1963 = vmul.f32 %v1451, %v1451
        %v1964 = vmul.f32 %v1452, %v1452
        %v1965 = vmul.f32 %v1453, %v1453
        %v1966 = vadd.f32 %v1710, %v1838
        %v1967 = vadd.f32 %v1711, %v1839
        %v1968 = vadd.f32 %v1712, %v1840
        %v1969 = vadd.f32 %v1713, %v1841
        %v1970 = vadd.f32 %v1714, %v1842
        %v1971 = vadd.f32 %v1715, %v1843
        %v1972 = vadd.f32 %v1716, %v1844
        %v1973 = vadd.f32 %v1717, %v1845
        %v1974 = vadd.f32 %v1718, %v1846
        %v1975 = vadd.f32 %v1719, %v1847
        %v1976 = vadd.f32 %v1720, %v1848
        %v1977 = vadd.f32 %v1721, %v1849
        %v1978 = vadd.f32 %v1722, %v1850
        %v1979 = vadd.f32 %v1723, %v1851
        %v1980 = vadd.f32 %v1724, %v1852
        %v1981 = vadd.f32 %v1725, %v1853
        %v1982 = vadd.f32 %v1726, %v1854
        %v1983 = vadd.f32 %v1727, %v1855
        %v1984 = vadd.f32 %v1728, %v1856
        %v1985 = vadd.f32 %v1729, %v1857
        %v1986 = vadd.f32 %v1730, %v1858
        %v1987 = vadd.f32 %v1731, %v1859
        %v1988 = vadd.f32 %v1732, %v1860
        %v1989 = vadd.f32 %v1733, %v1861
        %v1990 = vadd.f32 %v1734, %v1862
        %v1991 = vadd.f32 %v1735, %v1863
        %v1992 = vadd.f32 %v1736, %v1864
        %v1993 = vadd.f32 %v1737, %v1865
        %v1994 = vadd.f32 %v1738, %v1866
        %v1995 = vadd.f32 %v1739, %v1867
        %v1996 = vadd.f32 %v1740, %v1868
        %v1997 = vadd.f32 %v1741, %v1869
        %v1998 = vadd.f32 %v1742, %v1870
        %v1999 = vadd.f32 %v1743, %v1871
        %v2000 = vadd.f32 %v1744, %v1872
        %v2001 = vadd.f32 %v1745, %v1873
        %v2002 = vadd.f32 %v1746, %v1874
        %v2003 = vadd.f32 %v1747, %v1875
        %v2004 = vadd.f32 %v1748, %v1876
        %v2005 = vadd.f32 %v1749, %v1877
        %v2006 = vadd.f32 %v1750, %v1878
        %v2007 = vadd.f32 %v1751, %v1879
        %v2008 = vadd.f32 %v1752, %v1880
        %v2009 = vadd.f32 %v1753, %v1881
        %v2010 = vadd.f32 %v1754, %v1882
        %v2011 = vadd.f32 %v1755, %v1883
        %v2012 = vadd.f32 %v1756, %v1884
        %v2013 = vadd.f32 %v1757, %v1885
        %v2014 = vadd.f32 %v1758, %v1886
        %v2015 = vadd.f32 %v1759, %v1887
        %v2016 = vadd.f32 %v1760, %v1888
        %v2017 = vadd.f32 %v1761, %v1889
        %v2018 = vadd.f32 %v1762, %v1890
        %v2019 = vadd.f32 %v1763, %v1891
        %v2020 = vadd.f32 %v1764, %v1892
        %v2021 = vadd.f32 %v1765, %v1893
        %v2022 = vadd.f32 %v1766, %v1894
        %v2023 = vadd.f32 %v1767, %v1895
        %v2024 = vadd.f32 %v1768, %v1896
        %v2025 = vadd.f32 %v1769, %v1897
        %v2026 = vadd.f32 %v1770, %v1898
        %v2027 = vadd.f32 %v1771, %v1899
        %v2028 = vadd.f32 %v1772, %v1900
        %v2029 = vadd.f32 %v1773, %v1901
        %v2030 = vadd.f32 %v1774, %v1902
        %v2031 = vadd.f32 %v1775, %v1903
        %v2032 = vadd.f32 %v1776, %v1904
        %v2033 = vadd.f32 %v1777, %v1905
        %v2034 = vadd.f32 %v1778, %v1906
        %v2035 = vadd.f32 %v1779, %v1907
        %v2036 = vadd.f32 %v1780, %v1908
        %v2037 = vadd.f32 %v1781, %v1909
        %v2038 = vadd.f32 %v1782, %v1910
        %v2039 = vadd.f32 %v1783, %v1911
        %v2040 = vadd.f32 %v1784, %v1912
        %v2041 = vadd.f32 %v1785, %v1913
        %v2042 = vadd.f32 %v1786, %v1914
        %v2043 = vadd.f32 %v1787, %v1915
        %v2044 = vadd.f32 %v1788, %v1916
        %v2045 = vadd.f32 %v1789, %v1917
        %v2046 = vadd.f32 %v1790, %v1918
        %v2047 = vadd.f32 %v1791, %v1919
        %v2048 = vadd.f32 %v1792, %v1920
        %v2049 = vadd.f32 %v1793, %v1921
        %v2050 = vadd.f32 %v1794, %v1922
        %v2051 = vadd.f32 %v1795, %v1923
        %v2052 = vadd.f32 %v1796, %v1924
        %v2053 = vadd.f32 %v1797, %v1925
        %v2054 = vadd.f32 %v1798, %v1926
        %v2055 = vadd.f32 %v1799, %v1927
        %v2056 = vadd.f32 %v1800, %v1928
        %v2057 = vadd.f32 %v1801, %v1929
        %v2058 = vadd.f32 %v1802, %v1930
        %v2059 = vadd.f32 %v1803, %v1931
        %v2060 = vadd.f32 %v1804, %v1932
        %v2061 = vadd.f32 %v1805, %v1933
        %v2062 = vadd.f32 %v1806, %v1934
        %v2063 = vadd.f32 %v1807, %v1935
        %v2064 = vadd.f32 %v1808, %v1936
        %v2065 = vadd.f32 %v1809, %v1937
        %v2066 = vadd.f32 %v1810, %v1938
        %v2067 = vadd.f32 %v1811, %v1939
        %v2068 = vadd.f32 %v1812, %v1940
        %v2069 = vadd.f32 %v1813, %v1941
        %v2070 = vadd.f32 %v1814, %v1942
        %v2071 = vadd.f32 %v1815, %v1943
        %v2072 = vadd.f32 %v1816, %v1944
        %v2073 = vadd.f32 %v1817, %v1945
        %v2074 = vadd.f32 %v1818, %v1946
        %v2075 = vadd.f32 %v1819, %v1947
        %v2076 = vadd.f32 %v1820, %v1948
        %v2077 = vadd.f32 %v1821, %v1949
        %v2078 = vadd.f32 %v1822, %v1950
        %v2079 = vadd.f32 %v1823, %v1951
        %v2080 = vadd.f32 %v1824, %v1952
        %v2081 = vadd.f32 %v1825, %v1953
        %v2082 = vadd.f32 %v1826, %v1954
        %v2083 = vadd.f32 %v1827, %v1955
        %v2084 = vadd.f32 %v1828, %v1956
        %v2085 = vadd.f32 %v1829, %v1957
        %v2086 = vadd.f32 %v1830, %v1958
        %v2087 = vadd.f32 %v1831, %v1959
        %v2088 = vadd.f32 %v1832, %v1960
        %v2089 = vadd.f32 %v1833, %v1961
        %v2090 = vadd.f32 %v1834, %v1962
        %v2091 = vadd.f32 %v1835, %v1963
        %v2092 = vadd.f32 %v1836, %v1964
        %v2093 = vadd.f32 %v1837, %v1965
        %v2094 = vrsqrt.pop %v1966
        %v2095 = vmul.f32 %v1966, %v2094
        %vm2096 = vcmp.eq.f32.partialorder %v1966, inf
        %v2097 = vsel %vm2096, %v1966, %v2095
        %vm2098 = vcmp.eq.f32.partialorder %v1966, 0.0
        %v2099 = vand.u32 %v1966, 2147483648
        %v2100 = vsel %vm2098, %v2099, %v2097
        %v2101 = vrsqrt.pop %v1967
        %v2102 = vmul.f32 %v1967, %v2101
        %vm2103 = vcmp.eq.f32.partialorder %v1967, inf
        %v2104 = vsel %vm2103, %v1967, %v2102
        %vm2105 = vcmp.eq.f32.partialorder %v1967, 0.0
        %v2106 = vand.u32 %v1967, 2147483648
        %v2107 = vsel %vm2105, %v2106, %v2104
        %v2108 = vrsqrt.pop %v1968
        %v2109 = vmul.f32 %v1968, %v2108
        %vm2110 = vcmp.eq.f32.partialorder %v1968, inf
        %v2111 = vsel %vm2110, %v1968, %v2109
        %vm2112 = vcmp.eq.f32.partialorder %v1968, 0.0
        %v2113 = vand.u32 %v1968, 2147483648
        %v2114 = vsel %vm2112, %v2113, %v2111
        %v2115 = vrsqrt.pop %v1969
        %v2116 = vmul.f32 %v1969, %v2115
        %vm2117 = vcmp.eq.f32.partialorder %v1969, inf
        %v2118 = vsel %vm2117, %v1969, %v2116
        %vm2119 = vcmp.eq.f32.partialorder %v1969, 0.0
        %v2120 = vand.u32 %v1969, 2147483648
        %v2121 = vsel %vm2119, %v2120, %v2118
        %v2122 = vrsqrt.pop %v1970
        %v2123 = vmul.f32 %v1970, %v2122
        %vm2124 = vcmp.eq.f32.partialorder %v1970, inf
        %v2125 = vsel %vm2124, %v1970, %v2123
        %vm2126 = vcmp.eq.f32.partialorder %v1970, 0.0
        %v2127 = vand.u32 %v1970, 2147483648
        %v2128 = vsel %vm2126, %v2127, %v2125
        %v2129 = vrsqrt.pop %v1971
        %v2130 = vmul.f32 %v1971, %v2129
        %vm2131 = vcmp.eq.f32.partialorder %v1971, inf
        %v2132 = vsel %vm2131, %v1971, %v2130
        %vm2133 = vcmp.eq.f32.partialorder %v1971, 0.0
        %v2134 = vand.u32 %v1971, 2147483648
        %v2135 = vsel %vm2133, %v2134, %v2132
        %v2136 = vrsqrt.pop %v1972
        %v2137 = vmul.f32 %v1972, %v2136
        %vm2138 = vcmp.eq.f32.partialorder %v1972, inf
        %v2139 = vsel %vm2138, %v1972, %v2137
        %vm2140 = vcmp.eq.f32.partialorder %v1972, 0.0
        %v2141 = vand.u32 %v1972, 2147483648
        %v2142 = vsel %vm2140, %v2141, %v2139
        %v2143 = vrsqrt.pop %v1973
        %v2144 = vmul.f32 %v1973, %v2143
        %vm2145 = vcmp.eq.f32.partialorder %v1973, inf
        %v2146 = vsel %vm2145, %v1973, %v2144
        %vm2147 = vcmp.eq.f32.partialorder %v1973, 0.0
        %v2148 = vand.u32 %v1973, 2147483648
        %v2149 = vsel %vm2147, %v2148, %v2146
        %v2150 = vrsqrt.pop %v1974
        %v2151 = vmul.f32 %v1974, %v2150
        %vm2152 = vcmp.eq.f32.partialorder %v1974, inf
        %v2153 = vsel %vm2152, %v1974, %v2151
        %vm2154 = vcmp.eq.f32.partialorder %v1974, 0.0
        %v2155 = vand.u32 %v1974, 2147483648
        %v2156 = vsel %vm2154, %v2155, %v2153
        %v2157 = vrsqrt.pop %v1975
        %v2158 = vmul.f32 %v1975, %v2157
        %vm2159 = vcmp.eq.f32.partialorder %v1975, inf
        %v2160 = vsel %vm2159, %v1975, %v2158
        %vm2161 = vcmp.eq.f32.partialorder %v1975, 0.0
        %v2162 = vand.u32 %v1975, 2147483648
        %v2163 = vsel %vm2161, %v2162, %v2160
        %v2164 = vrsqrt.pop %v1976
        %v2165 = vmul.f32 %v1976, %v2164
        %vm2166 = vcmp.eq.f32.partialorder %v1976, inf
        %v2167 = vsel %vm2166, %v1976, %v2165
        %vm2168 = vcmp.eq.f32.partialorder %v1976, 0.0
        %v2169 = vand.u32 %v1976, 2147483648
        %v2170 = vsel %vm2168, %v2169, %v2167
        %v2171 = vrsqrt.pop %v1977
        %v2172 = vmul.f32 %v1977, %v2171
        %vm2173 = vcmp.eq.f32.partialorder %v1977, inf
        %v2174 = vsel %vm2173, %v1977, %v2172
        %vm2175 = vcmp.eq.f32.partialorder %v1977, 0.0
        %v2176 = vand.u32 %v1977, 2147483648
        %v2177 = vsel %vm2175, %v2176, %v2174
        %v2178 = vrsqrt.pop %v1978
        %v2179 = vmul.f32 %v1978, %v2178
        %vm2180 = vcmp.eq.f32.partialorder %v1978, inf
        %v2181 = vsel %vm2180, %v1978, %v2179
        %vm2182 = vcmp.eq.f32.partialorder %v1978, 0.0
        %v2183 = vand.u32 %v1978, 2147483648
        %v2184 = vsel %vm2182, %v2183, %v2181
        %v2185 = vrsqrt.pop %v1979
        %v2186 = vmul.f32 %v1979, %v2185
        %vm2187 = vcmp.eq.f32.partialorder %v1979, inf
        %v2188 = vsel %vm2187, %v1979, %v2186
        %vm2189 = vcmp.eq.f32.partialorder %v1979, 0.0
        %v2190 = vand.u32 %v1979, 2147483648
        %v2191 = vsel %vm2189, %v2190, %v2188
        %v2192 = vrsqrt.pop %v1980
        %v2193 = vmul.f32 %v1980, %v2192
        %vm2194 = vcmp.eq.f32.partialorder %v1980, inf
        %v2195 = vsel %vm2194, %v1980, %v2193
        %vm2196 = vcmp.eq.f32.partialorder %v1980, 0.0
        %v2197 = vand.u32 %v1980, 2147483648
        %v2198 = vsel %vm2196, %v2197, %v2195
        %v2199 = vrsqrt.pop %v1981
        %v2200 = vmul.f32 %v1981, %v2199
        %vm2201 = vcmp.eq.f32.partialorder %v1981, inf
        %v2202 = vsel %vm2201, %v1981, %v2200
        %vm2203 = vcmp.eq.f32.partialorder %v1981, 0.0
        %v2204 = vand.u32 %v1981, 2147483648
        %v2205 = vsel %vm2203, %v2204, %v2202
        %v2206 = vrsqrt.pop %v1982
        %v2207 = vmul.f32 %v1982, %v2206
        %vm2208 = vcmp.eq.f32.partialorder %v1982, inf
        %v2209 = vsel %vm2208, %v1982, %v2207
        %vm2210 = vcmp.eq.f32.partialorder %v1982, 0.0
        %v2211 = vand.u32 %v1982, 2147483648
        %v2212 = vsel %vm2210, %v2211, %v2209
        %v2213 = vrsqrt.pop %v1983
        %v2214 = vmul.f32 %v1983, %v2213
        %vm2215 = vcmp.eq.f32.partialorder %v1983, inf
        %v2216 = vsel %vm2215, %v1983, %v2214
        %vm2217 = vcmp.eq.f32.partialorder %v1983, 0.0
        %v2218 = vand.u32 %v1983, 2147483648
        %v2219 = vsel %vm2217, %v2218, %v2216
        %v2220 = vrsqrt.pop %v1984
        %v2221 = vmul.f32 %v1984, %v2220
        %vm2222 = vcmp.eq.f32.partialorder %v1984, inf
        %v2223 = vsel %vm2222, %v1984, %v2221
        %vm2224 = vcmp.eq.f32.partialorder %v1984, 0.0
        %v2225 = vand.u32 %v1984, 2147483648
        %v2226 = vsel %vm2224, %v2225, %v2223
        %v2227 = vrsqrt.pop %v1985
        %v2228 = vmul.f32 %v1985, %v2227
        %vm2229 = vcmp.eq.f32.partialorder %v1985, inf
        %v2230 = vsel %vm2229, %v1985, %v2228
        %vm2231 = vcmp.eq.f32.partialorder %v1985, 0.0
        %v2232 = vand.u32 %v1985, 2147483648
        %v2233 = vsel %vm2231, %v2232, %v2230
        %v2234 = vrsqrt.pop %v1986
        %v2235 = vmul.f32 %v1986, %v2234
        %vm2236 = vcmp.eq.f32.partialorder %v1986, inf
        %v2237 = vsel %vm2236, %v1986, %v2235
        %vm2238 = vcmp.eq.f32.partialorder %v1986, 0.0
        %v2239 = vand.u32 %v1986, 2147483648
        %v2240 = vsel %vm2238, %v2239, %v2237
        %v2241 = vrsqrt.pop %v1987
        %v2242 = vmul.f32 %v1987, %v2241
        %vm2243 = vcmp.eq.f32.partialorder %v1987, inf
        %v2244 = vsel %vm2243, %v1987, %v2242
        %vm2245 = vcmp.eq.f32.partialorder %v1987, 0.0
        %v2246 = vand.u32 %v1987, 2147483648
        %v2247 = vsel %vm2245, %v2246, %v2244
        %v2248 = vrsqrt.pop %v1988
        %v2249 = vmul.f32 %v1988, %v2248
        %vm2250 = vcmp.eq.f32.partialorder %v1988, inf
        %v2251 = vsel %vm2250, %v1988, %v2249
        %vm2252 = vcmp.eq.f32.partialorder %v1988, 0.0
        %v2253 = vand.u32 %v1988, 2147483648
        %v2254 = vsel %vm2252, %v2253, %v2251
        %v2255 = vrsqrt.pop %v1989
        %v2256 = vmul.f32 %v1989, %v2255
        %vm2257 = vcmp.eq.f32.partialorder %v1989, inf
        %v2258 = vsel %vm2257, %v1989, %v2256
        %vm2259 = vcmp.eq.f32.partialorder %v1989, 0.0
        %v2260 = vand.u32 %v1989, 2147483648
        %v2261 = vsel %vm2259, %v2260, %v2258
        %v2262 = vrsqrt.pop %v1990
        %v2263 = vmul.f32 %v1990, %v2262
        %vm2264 = vcmp.eq.f32.partialorder %v1990, inf
        %v2265 = vsel %vm2264, %v1990, %v2263
        %vm2266 = vcmp.eq.f32.partialorder %v1990, 0.0
        %v2267 = vand.u32 %v1990, 2147483648
        %v2268 = vsel %vm2266, %v2267, %v2265
        %v2269 = vrsqrt.pop %v1991
        %v2270 = vmul.f32 %v1991, %v2269
        %vm2271 = vcmp.eq.f32.partialorder %v1991, inf
        %v2272 = vsel %vm2271, %v1991, %v2270
        %vm2273 = vcmp.eq.f32.partialorder %v1991, 0.0
        %v2274 = vand.u32 %v1991, 2147483648
        %v2275 = vsel %vm2273, %v2274, %v2272
        %v2276 = vrsqrt.pop %v1992
        %v2277 = vmul.f32 %v1992, %v2276
        %vm2278 = vcmp.eq.f32.partialorder %v1992, inf
        %v2279 = vsel %vm2278, %v1992, %v2277
        %vm2280 = vcmp.eq.f32.partialorder %v1992, 0.0
        %v2281 = vand.u32 %v1992, 2147483648
        %v2282 = vsel %vm2280, %v2281, %v2279
        %v2283 = vrsqrt.pop %v1993
        %v2284 = vmul.f32 %v1993, %v2283
        %vm2285 = vcmp.eq.f32.partialorder %v1993, inf
        %v2286 = vsel %vm2285, %v1993, %v2284
        %vm2287 = vcmp.eq.f32.partialorder %v1993, 0.0
        %v2288 = vand.u32 %v1993, 2147483648
        %v2289 = vsel %vm2287, %v2288, %v2286
        %v2290 = vrsqrt.pop %v1994
        %v2291 = vmul.f32 %v1994, %v2290
        %vm2292 = vcmp.eq.f32.partialorder %v1994, inf
        %v2293 = vsel %vm2292, %v1994, %v2291
        %vm2294 = vcmp.eq.f32.partialorder %v1994, 0.0
        %v2295 = vand.u32 %v1994, 2147483648
        %v2296 = vsel %vm2294, %v2295, %v2293
        %v2297 = vrsqrt.pop %v1995
        %v2298 = vmul.f32 %v1995, %v2297
        %vm2299 = vcmp.eq.f32.partialorder %v1995, inf
        %v2300 = vsel %vm2299, %v1995, %v2298
        %vm2301 = vcmp.eq.f32.partialorder %v1995, 0.0
        %v2302 = vand.u32 %v1995, 2147483648
        %v2303 = vsel %vm2301, %v2302, %v2300
        %v2304 = vrsqrt.pop %v1996
        %v2305 = vmul.f32 %v1996, %v2304
        %vm2306 = vcmp.eq.f32.partialorder %v1996, inf
        %v2307 = vsel %vm2306, %v1996, %v2305
        %vm2308 = vcmp.eq.f32.partialorder %v1996, 0.0
        %v2309 = vand.u32 %v1996, 2147483648
        %v2310 = vsel %vm2308, %v2309, %v2307
        %v2311 = vrsqrt.pop %v1997
        %v2312 = vmul.f32 %v1997, %v2311
        %vm2313 = vcmp.eq.f32.partialorder %v1997, inf
        %v2314 = vsel %vm2313, %v1997, %v2312
        %vm2315 = vcmp.eq.f32.partialorder %v1997, 0.0
        %v2316 = vand.u32 %v1997, 2147483648
        %v2317 = vsel %vm2315, %v2316, %v2314
        %v2318 = vrsqrt.pop %v1998
        %v2319 = vmul.f32 %v1998, %v2318
        %vm2320 = vcmp.eq.f32.partialorder %v1998, inf
        %v2321 = vsel %vm2320, %v1998, %v2319
        %vm2322 = vcmp.eq.f32.partialorder %v1998, 0.0
        %v2323 = vand.u32 %v1998, 2147483648
        %v2324 = vsel %vm2322, %v2323, %v2321
        %v2325 = vrsqrt.pop %v1999
        %v2326 = vmul.f32 %v1999, %v2325
        %vm2327 = vcmp.eq.f32.partialorder %v1999, inf
        %v2328 = vsel %vm2327, %v1999, %v2326
        %vm2329 = vcmp.eq.f32.partialorder %v1999, 0.0
        %v2330 = vand.u32 %v1999, 2147483648
        %v2331 = vsel %vm2329, %v2330, %v2328
        %v2332 = vrsqrt.pop %v2000
        %v2333 = vmul.f32 %v2000, %v2332
        %vm2334 = vcmp.eq.f32.partialorder %v2000, inf
        %v2335 = vsel %vm2334, %v2000, %v2333
        %vm2336 = vcmp.eq.f32.partialorder %v2000, 0.0
        %v2337 = vand.u32 %v2000, 2147483648
        %v2338 = vsel %vm2336, %v2337, %v2335
        %v2339 = vrsqrt.pop %v2001
        %v2340 = vmul.f32 %v2001, %v2339
        %vm2341 = vcmp.eq.f32.partialorder %v2001, inf
        %v2342 = vsel %vm2341, %v2001, %v2340
        %vm2343 = vcmp.eq.f32.partialorder %v2001, 0.0
        %v2344 = vand.u32 %v2001, 2147483648
        %v2345 = vsel %vm2343, %v2344, %v2342
        %v2346 = vrsqrt.pop %v2002
        %v2347 = vmul.f32 %v2002, %v2346
        %vm2348 = vcmp.eq.f32.partialorder %v2002, inf
        %v2349 = vsel %vm2348, %v2002, %v2347
        %vm2350 = vcmp.eq.f32.partialorder %v2002, 0.0
        %v2351 = vand.u32 %v2002, 2147483648
        %v2352 = vsel %vm2350, %v2351, %v2349
        %v2353 = vrsqrt.pop %v2003
        %v2354 = vmul.f32 %v2003, %v2353
        %vm2355 = vcmp.eq.f32.partialorder %v2003, inf
        %v2356 = vsel %vm2355, %v2003, %v2354
        %vm2357 = vcmp.eq.f32.partialorder %v2003, 0.0
        %v2358 = vand.u32 %v2003, 2147483648
        %v2359 = vsel %vm2357, %v2358, %v2356
        %v2360 = vrsqrt.pop %v2004
        %v2361 = vmul.f32 %v2004, %v2360
        %vm2362 = vcmp.eq.f32.partialorder %v2004, inf
        %v2363 = vsel %vm2362, %v2004, %v2361
        %vm2364 = vcmp.eq.f32.partialorder %v2004, 0.0
        %v2365 = vand.u32 %v2004, 2147483648
        %v2366 = vsel %vm2364, %v2365, %v2363
        %v2367 = vrsqrt.pop %v2005
        %v2368 = vmul.f32 %v2005, %v2367
        %vm2369 = vcmp.eq.f32.partialorder %v2005, inf
        %v2370 = vsel %vm2369, %v2005, %v2368
        %vm2371 = vcmp.eq.f32.partialorder %v2005, 0.0
        %v2372 = vand.u32 %v2005, 2147483648
        %v2373 = vsel %vm2371, %v2372, %v2370
        %v2374 = vrsqrt.pop %v2006
        %v2375 = vmul.f32 %v2006, %v2374
        %vm2376 = vcmp.eq.f32.partialorder %v2006, inf
        %v2377 = vsel %vm2376, %v2006, %v2375
        %vm2378 = vcmp.eq.f32.partialorder %v2006, 0.0
        %v2379 = vand.u32 %v2006, 2147483648
        %v2380 = vsel %vm2378, %v2379, %v2377
        %v2381 = vrsqrt.pop %v2007
        %v2382 = vmul.f32 %v2007, %v2381
        %vm2383 = vcmp.eq.f32.partialorder %v2007, inf
        %v2384 = vsel %vm2383, %v2007, %v2382
        %vm2385 = vcmp.eq.f32.partialorder %v2007, 0.0
        %v2386 = vand.u32 %v2007, 2147483648
        %v2387 = vsel %vm2385, %v2386, %v2384
        %v2388 = vrsqrt.pop %v2008
        %v2389 = vmul.f32 %v2008, %v2388
        %vm2390 = vcmp.eq.f32.partialorder %v2008, inf
        %v2391 = vsel %vm2390, %v2008, %v2389
        %vm2392 = vcmp.eq.f32.partialorder %v2008, 0.0
        %v2393 = vand.u32 %v2008, 2147483648
        %v2394 = vsel %vm2392, %v2393, %v2391
        %v2395 = vrsqrt.pop %v2009
        %v2396 = vmul.f32 %v2009, %v2395
        %vm2397 = vcmp.eq.f32.partialorder %v2009, inf
        %v2398 = vsel %vm2397, %v2009, %v2396
        %vm2399 = vcmp.eq.f32.partialorder %v2009, 0.0
        %v2400 = vand.u32 %v2009, 2147483648
        %v2401 = vsel %vm2399, %v2400, %v2398
        %v2402 = vrsqrt.pop %v2010
        %v2403 = vmul.f32 %v2010, %v2402
        %vm2404 = vcmp.eq.f32.partialorder %v2010, inf
        %v2405 = vsel %vm2404, %v2010, %v2403
        %vm2406 = vcmp.eq.f32.partialorder %v2010, 0.0
        %v2407 = vand.u32 %v2010, 2147483648
        %v2408 = vsel %vm2406, %v2407, %v2405
        %v2409 = vrsqrt.pop %v2011
        %v2410 = vmul.f32 %v2011, %v2409
        %vm2411 = vcmp.eq.f32.partialorder %v2011, inf
        %v2412 = vsel %vm2411, %v2011, %v2410
        %vm2413 = vcmp.eq.f32.partialorder %v2011, 0.0
        %v2414 = vand.u32 %v2011, 2147483648
        %v2415 = vsel %vm2413, %v2414, %v2412
        %v2416 = vrsqrt.pop %v2012
        %v2417 = vmul.f32 %v2012, %v2416
        %vm2418 = vcmp.eq.f32.partialorder %v2012, inf
        %v2419 = vsel %vm2418, %v2012, %v2417
        %vm2420 = vcmp.eq.f32.partialorder %v2012, 0.0
        %v2421 = vand.u32 %v2012, 2147483648
        %v2422 = vsel %vm2420, %v2421, %v2419
        %v2423 = vrsqrt.pop %v2013
        %v2424 = vmul.f32 %v2013, %v2423
        %vm2425 = vcmp.eq.f32.partialorder %v2013, inf
        %v2426 = vsel %vm2425, %v2013, %v2424
        %vm2427 = vcmp.eq.f32.partialorder %v2013, 0.0
        %v2428 = vand.u32 %v2013, 2147483648
        %v2429 = vsel %vm2427, %v2428, %v2426
        %v2430 = vrsqrt.pop %v2014
        %v2431 = vmul.f32 %v2014, %v2430
        %vm2432 = vcmp.eq.f32.partialorder %v2014, inf
        %v2433 = vsel %vm2432, %v2014, %v2431
        %vm2434 = vcmp.eq.f32.partialorder %v2014, 0.0
        %v2435 = vand.u32 %v2014, 2147483648
        %v2436 = vsel %vm2434, %v2435, %v2433
        %v2437 = vrsqrt.pop %v2015
        %v2438 = vmul.f32 %v2015, %v2437
        %vm2439 = vcmp.eq.f32.partialorder %v2015, inf
        %v2440 = vsel %vm2439, %v2015, %v2438
        %vm2441 = vcmp.eq.f32.partialorder %v2015, 0.0
        %v2442 = vand.u32 %v2015, 2147483648
        %v2443 = vsel %vm2441, %v2442, %v2440
        %v2444 = vrsqrt.pop %v2016
        %v2445 = vmul.f32 %v2016, %v2444
        %vm2446 = vcmp.eq.f32.partialorder %v2016, inf
        %v2447 = vsel %vm2446, %v2016, %v2445
        %vm2448 = vcmp.eq.f32.partialorder %v2016, 0.0
        %v2449 = vand.u32 %v2016, 2147483648
        %v2450 = vsel %vm2448, %v2449, %v2447
        %v2451 = vrsqrt.pop %v2017
        %v2452 = vmul.f32 %v2017, %v2451
        %vm2453 = vcmp.eq.f32.partialorder %v2017, inf
        %v2454 = vsel %vm2453, %v2017, %v2452
        %vm2455 = vcmp.eq.f32.partialorder %v2017, 0.0
        %v2456 = vand.u32 %v2017, 2147483648
        %v2457 = vsel %vm2455, %v2456, %v2454
        %v2458 = vrsqrt.pop %v2018
        %v2459 = vmul.f32 %v2018, %v2458
        %vm2460 = vcmp.eq.f32.partialorder %v2018, inf
        %v2461 = vsel %vm2460, %v2018, %v2459
        %vm2462 = vcmp.eq.f32.partialorder %v2018, 0.0
        %v2463 = vand.u32 %v2018, 2147483648
        %v2464 = vsel %vm2462, %v2463, %v2461
        %v2465 = vrsqrt.pop %v2019
        %v2466 = vmul.f32 %v2019, %v2465
        %vm2467 = vcmp.eq.f32.partialorder %v2019, inf
        %v2468 = vsel %vm2467, %v2019, %v2466
        %vm2469 = vcmp.eq.f32.partialorder %v2019, 0.0
        %v2470 = vand.u32 %v2019, 2147483648
        %v2471 = vsel %vm2469, %v2470, %v2468
        %v2472 = vrsqrt.pop %v2020
        %v2473 = vmul.f32 %v2020, %v2472
        %vm2474 = vcmp.eq.f32.partialorder %v2020, inf
        %v2475 = vsel %vm2474, %v2020, %v2473
        %vm2476 = vcmp.eq.f32.partialorder %v2020, 0.0
        %v2477 = vand.u32 %v2020, 2147483648
        %v2478 = vsel %vm2476, %v2477, %v2475
        %v2479 = vrsqrt.pop %v2021
        %v2480 = vmul.f32 %v2021, %v2479
        %vm2481 = vcmp.eq.f32.partialorder %v2021, inf
        %v2482 = vsel %vm2481, %v2021, %v2480
        %vm2483 = vcmp.eq.f32.partialorder %v2021, 0.0
        %v2484 = vand.u32 %v2021, 2147483648
        %v2485 = vsel %vm2483, %v2484, %v2482
        %v2486 = vrsqrt.pop %v2022
        %v2487 = vmul.f32 %v2022, %v2486
        %vm2488 = vcmp.eq.f32.partialorder %v2022, inf
        %v2489 = vsel %vm2488, %v2022, %v2487
        %vm2490 = vcmp.eq.f32.partialorder %v2022, 0.0
        %v2491 = vand.u32 %v2022, 2147483648
        %v2492 = vsel %vm2490, %v2491, %v2489
        %v2493 = vrsqrt.pop %v2023
        %v2494 = vmul.f32 %v2023, %v2493
        %vm2495 = vcmp.eq.f32.partialorder %v2023, inf
        %v2496 = vsel %vm2495, %v2023, %v2494
        %vm2497 = vcmp.eq.f32.partialorder %v2023, 0.0
        %v2498 = vand.u32 %v2023, 2147483648
        %v2499 = vsel %vm2497, %v2498, %v2496
        %v2500 = vrsqrt.pop %v2024
        %v2501 = vmul.f32 %v2024, %v2500
        %vm2502 = vcmp.eq.f32.partialorder %v2024, inf
        %v2503 = vsel %vm2502, %v2024, %v2501
        %vm2504 = vcmp.eq.f32.partialorder %v2024, 0.0
        %v2505 = vand.u32 %v2024, 2147483648
        %v2506 = vsel %vm2504, %v2505, %v2503
        %v2507 = vrsqrt.pop %v2025
        %v2508 = vmul.f32 %v2025, %v2507
        %vm2509 = vcmp.eq.f32.partialorder %v2025, inf
        %v2510 = vsel %vm2509, %v2025, %v2508
        %vm2511 = vcmp.eq.f32.partialorder %v2025, 0.0
        %v2512 = vand.u32 %v2025, 2147483648
        %v2513 = vsel %vm2511, %v2512, %v2510
        %v2514 = vrsqrt.pop %v2026
        %v2515 = vmul.f32 %v2026, %v2514
        %vm2516 = vcmp.eq.f32.partialorder %v2026, inf
        %v2517 = vsel %vm2516, %v2026, %v2515
        %vm2518 = vcmp.eq.f32.partialorder %v2026, 0.0
        %v2519 = vand.u32 %v2026, 2147483648
        %v2520 = vsel %vm2518, %v2519, %v2517
        %v2521 = vrsqrt.pop %v2027
        %v2522 = vmul.f32 %v2027, %v2521
        %vm2523 = vcmp.eq.f32.partialorder %v2027, inf
        %v2524 = vsel %vm2523, %v2027, %v2522
        %vm2525 = vcmp.eq.f32.partialorder %v2027, 0.0
        %v2526 = vand.u32 %v2027, 2147483648
        %v2527 = vsel %vm2525, %v2526, %v2524
        %v2528 = vrsqrt.pop %v2028
        %v2529 = vmul.f32 %v2028, %v2528
        %vm2530 = vcmp.eq.f32.partialorder %v2028, inf
        %v2531 = vsel %vm2530, %v2028, %v2529
        %vm2532 = vcmp.eq.f32.partialorder %v2028, 0.0
        %v2533 = vand.u32 %v2028, 2147483648
        %v2534 = vsel %vm2532, %v2533, %v2531
        %v2535 = vrsqrt.pop %v2029
        %v2536 = vmul.f32 %v2029, %v2535
        %vm2537 = vcmp.eq.f32.partialorder %v2029, inf
        %v2538 = vsel %vm2537, %v2029, %v2536
        %vm2539 = vcmp.eq.f32.partialorder %v2029, 0.0
        %v2540 = vand.u32 %v2029, 2147483648
        %v2541 = vsel %vm2539, %v2540, %v2538
        %v2542 = vrsqrt.pop %v2030
        %v2543 = vmul.f32 %v2030, %v2542
        %vm2544 = vcmp.eq.f32.partialorder %v2030, inf
        %v2545 = vsel %vm2544, %v2030, %v2543
        %vm2546 = vcmp.eq.f32.partialorder %v2030, 0.0
        %v2547 = vand.u32 %v2030, 2147483648
        %v2548 = vsel %vm2546, %v2547, %v2545
        %v2549 = vrsqrt.pop %v2031
        %v2550 = vmul.f32 %v2031, %v2549
        %vm2551 = vcmp.eq.f32.partialorder %v2031, inf
        %v2552 = vsel %vm2551, %v2031, %v2550
        %vm2553 = vcmp.eq.f32.partialorder %v2031, 0.0
        %v2554 = vand.u32 %v2031, 2147483648
        %v2555 = vsel %vm2553, %v2554, %v2552
        %v2556 = vrsqrt.pop %v2032
        %v2557 = vmul.f32 %v2032, %v2556
        %vm2558 = vcmp.eq.f32.partialorder %v2032, inf
        %v2559 = vsel %vm2558, %v2032, %v2557
        %vm2560 = vcmp.eq.f32.partialorder %v2032, 0.0
        %v2561 = vand.u32 %v2032, 2147483648
        %v2562 = vsel %vm2560, %v2561, %v2559
        %v2563 = vrsqrt.pop %v2033
        %v2564 = vmul.f32 %v2033, %v2563
        %vm2565 = vcmp.eq.f32.partialorder %v2033, inf
        %v2566 = vsel %vm2565, %v2033, %v2564
        %vm2567 = vcmp.eq.f32.partialorder %v2033, 0.0
        %v2568 = vand.u32 %v2033, 2147483648
        %v2569 = vsel %vm2567, %v2568, %v2566
        %v2570 = vrsqrt.pop %v2034
        %v2571 = vmul.f32 %v2034, %v2570
        %vm2572 = vcmp.eq.f32.partialorder %v2034, inf
        %v2573 = vsel %vm2572, %v2034, %v2571
        %vm2574 = vcmp.eq.f32.partialorder %v2034, 0.0
        %v2575 = vand.u32 %v2034, 2147483648
        %v2576 = vsel %vm2574, %v2575, %v2573
        %v2577 = vrsqrt.pop %v2035
        %v2578 = vmul.f32 %v2035, %v2577
        %vm2579 = vcmp.eq.f32.partialorder %v2035, inf
        %v2580 = vsel %vm2579, %v2035, %v2578
        %vm2581 = vcmp.eq.f32.partialorder %v2035, 0.0
        %v2582 = vand.u32 %v2035, 2147483648
        %v2583 = vsel %vm2581, %v2582, %v2580
        %v2584 = vrsqrt.pop %v2036
        %v2585 = vmul.f32 %v2036, %v2584
        %vm2586 = vcmp.eq.f32.partialorder %v2036, inf
        %v2587 = vsel %vm2586, %v2036, %v2585
        %vm2588 = vcmp.eq.f32.partialorder %v2036, 0.0
        %v2589 = vand.u32 %v2036, 2147483648
        %v2590 = vsel %vm2588, %v2589, %v2587
        %v2591 = vrsqrt.pop %v2037
        %v2592 = vmul.f32 %v2037, %v2591
        %vm2593 = vcmp.eq.f32.partialorder %v2037, inf
        %v2594 = vsel %vm2593, %v2037, %v2592
        %vm2595 = vcmp.eq.f32.partialorder %v2037, 0.0
        %v2596 = vand.u32 %v2037, 2147483648
        %v2597 = vsel %vm2595, %v2596, %v2594
        %v2598 = vrsqrt.pop %v2038
        %v2599 = vmul.f32 %v2038, %v2598
        %vm2600 = vcmp.eq.f32.partialorder %v2038, inf
        %v2601 = vsel %vm2600, %v2038, %v2599
        %vm2602 = vcmp.eq.f32.partialorder %v2038, 0.0
        %v2603 = vand.u32 %v2038, 2147483648
        %v2604 = vsel %vm2602, %v2603, %v2601
        %v2605 = vrsqrt.pop %v2039
        %v2606 = vmul.f32 %v2039, %v2605
        %vm2607 = vcmp.eq.f32.partialorder %v2039, inf
        %v2608 = vsel %vm2607, %v2039, %v2606
        %vm2609 = vcmp.eq.f32.partialorder %v2039, 0.0
        %v2610 = vand.u32 %v2039, 2147483648
        %v2611 = vsel %vm2609, %v2610, %v2608
        %v2612 = vrsqrt.pop %v2040
        %v2613 = vmul.f32 %v2040, %v2612
        %vm2614 = vcmp.eq.f32.partialorder %v2040, inf
        %v2615 = vsel %vm2614, %v2040, %v2613
        %vm2616 = vcmp.eq.f32.partialorder %v2040, 0.0
        %v2617 = vand.u32 %v2040, 2147483648
        %v2618 = vsel %vm2616, %v2617, %v2615
        %v2619 = vrsqrt.pop %v2041
        %v2620 = vmul.f32 %v2041, %v2619
        %vm2621 = vcmp.eq.f32.partialorder %v2041, inf
        %v2622 = vsel %vm2621, %v2041, %v2620
        %vm2623 = vcmp.eq.f32.partialorder %v2041, 0.0
        %v2624 = vand.u32 %v2041, 2147483648
        %v2625 = vsel %vm2623, %v2624, %v2622
        %v2626 = vrsqrt.pop %v2042
        %v2627 = vmul.f32 %v2042, %v2626
        %vm2628 = vcmp.eq.f32.partialorder %v2042, inf
        %v2629 = vsel %vm2628, %v2042, %v2627
        %vm2630 = vcmp.eq.f32.partialorder %v2042, 0.0
        %v2631 = vand.u32 %v2042, 2147483648
        %v2632 = vsel %vm2630, %v2631, %v2629
        %v2633 = vrsqrt.pop %v2043
        %v2634 = vmul.f32 %v2043, %v2633
        %vm2635 = vcmp.eq.f32.partialorder %v2043, inf
        %v2636 = vsel %vm2635, %v2043, %v2634
        %vm2637 = vcmp.eq.f32.partialorder %v2043, 0.0
        %v2638 = vand.u32 %v2043, 2147483648
        %v2639 = vsel %vm2637, %v2638, %v2636
        %v2640 = vrsqrt.pop %v2044
        %v2641 = vmul.f32 %v2044, %v2640
        %vm2642 = vcmp.eq.f32.partialorder %v2044, inf
        %v2643 = vsel %vm2642, %v2044, %v2641
        %vm2644 = vcmp.eq.f32.partialorder %v2044, 0.0
        %v2645 = vand.u32 %v2044, 2147483648
        %v2646 = vsel %vm2644, %v2645, %v2643
        %v2647 = vrsqrt.pop %v2045
        %v2648 = vmul.f32 %v2045, %v2647
        %vm2649 = vcmp.eq.f32.partialorder %v2045, inf
        %v2650 = vsel %vm2649, %v2045, %v2648
        %vm2651 = vcmp.eq.f32.partialorder %v2045, 0.0
        %v2652 = vand.u32 %v2045, 2147483648
        %v2653 = vsel %vm2651, %v2652, %v2650
        %v2654 = vrsqrt.pop %v2046
        %v2655 = vmul.f32 %v2046, %v2654
        %vm2656 = vcmp.eq.f32.partialorder %v2046, inf
        %v2657 = vsel %vm2656, %v2046, %v2655
        %vm2658 = vcmp.eq.f32.partialorder %v2046, 0.0
        %v2659 = vand.u32 %v2046, 2147483648
        %v2660 = vsel %vm2658, %v2659, %v2657
        %v2661 = vrsqrt.pop %v2047
        %v2662 = vmul.f32 %v2047, %v2661
        %vm2663 = vcmp.eq.f32.partialorder %v2047, inf
        %v2664 = vsel %vm2663, %v2047, %v2662
        %vm2665 = vcmp.eq.f32.partialorder %v2047, 0.0
        %v2666 = vand.u32 %v2047, 2147483648
        %v2667 = vsel %vm2665, %v2666, %v2664
        %v2668 = vrsqrt.pop %v2048
        %v2669 = vmul.f32 %v2048, %v2668
        %vm2670 = vcmp.eq.f32.partialorder %v2048, inf
        %v2671 = vsel %vm2670, %v2048, %v2669
        %vm2672 = vcmp.eq.f32.partialorder %v2048, 0.0
        %v2673 = vand.u32 %v2048, 2147483648
        %v2674 = vsel %vm2672, %v2673, %v2671
        %v2675 = vrsqrt.pop %v2049
        %v2676 = vmul.f32 %v2049, %v2675
        %vm2677 = vcmp.eq.f32.partialorder %v2049, inf
        %v2678 = vsel %vm2677, %v2049, %v2676
        %vm2679 = vcmp.eq.f32.partialorder %v2049, 0.0
        %v2680 = vand.u32 %v2049, 2147483648
        %v2681 = vsel %vm2679, %v2680, %v2678
        %v2682 = vrsqrt.pop %v2050
        %v2683 = vmul.f32 %v2050, %v2682
        %vm2684 = vcmp.eq.f32.partialorder %v2050, inf
        %v2685 = vsel %vm2684, %v2050, %v2683
        %vm2686 = vcmp.eq.f32.partialorder %v2050, 0.0
        %v2687 = vand.u32 %v2050, 2147483648
        %v2688 = vsel %vm2686, %v2687, %v2685
        %v2689 = vrsqrt.pop %v2051
        %v2690 = vmul.f32 %v2051, %v2689
        %vm2691 = vcmp.eq.f32.partialorder %v2051, inf
        %v2692 = vsel %vm2691, %v2051, %v2690
        %vm2693 = vcmp.eq.f32.partialorder %v2051, 0.0
        %v2694 = vand.u32 %v2051, 2147483648
        %v2695 = vsel %vm2693, %v2694, %v2692
        %v2696 = vrsqrt.pop %v2052
        %v2697 = vmul.f32 %v2052, %v2696
        %vm2698 = vcmp.eq.f32.partialorder %v2052, inf
        %v2699 = vsel %vm2698, %v2052, %v2697
        %vm2700 = vcmp.eq.f32.partialorder %v2052, 0.0
        %v2701 = vand.u32 %v2052, 2147483648
        %v2702 = vsel %vm2700, %v2701, %v2699
        %v2703 = vrsqrt.pop %v2053
        %v2704 = vmul.f32 %v2053, %v2703
        %vm2705 = vcmp.eq.f32.partialorder %v2053, inf
        %v2706 = vsel %vm2705, %v2053, %v2704
        %vm2707 = vcmp.eq.f32.partialorder %v2053, 0.0
        %v2708 = vand.u32 %v2053, 2147483648
        %v2709 = vsel %vm2707, %v2708, %v2706
        %v2710 = vrsqrt.pop %v2054
        %v2711 = vmul.f32 %v2054, %v2710
        %vm2712 = vcmp.eq.f32.partialorder %v2054, inf
        %v2713 = vsel %vm2712, %v2054, %v2711
        %vm2714 = vcmp.eq.f32.partialorder %v2054, 0.0
        %v2715 = vand.u32 %v2054, 2147483648
        %v2716 = vsel %vm2714, %v2715, %v2713
        %v2717 = vrsqrt.pop %v2055
        %v2718 = vmul.f32 %v2055, %v2717
        %vm2719 = vcmp.eq.f32.partialorder %v2055, inf
        %v2720 = vsel %vm2719, %v2055, %v2718
        %vm2721 = vcmp.eq.f32.partialorder %v2055, 0.0
        %v2722 = vand.u32 %v2055, 2147483648
        %v2723 = vsel %vm2721, %v2722, %v2720
        %v2724 = vrsqrt.pop %v2056
        %v2725 = vmul.f32 %v2056, %v2724
        %vm2726 = vcmp.eq.f32.partialorder %v2056, inf
        %v2727 = vsel %vm2726, %v2056, %v2725
        %vm2728 = vcmp.eq.f32.partialorder %v2056, 0.0
        %v2729 = vand.u32 %v2056, 2147483648
        %v2730 = vsel %vm2728, %v2729, %v2727
        %v2731 = vrsqrt.pop %v2057
        %v2732 = vmul.f32 %v2057, %v2731
        %vm2733 = vcmp.eq.f32.partialorder %v2057, inf
        %v2734 = vsel %vm2733, %v2057, %v2732
        %vm2735 = vcmp.eq.f32.partialorder %v2057, 0.0
        %v2736 = vand.u32 %v2057, 2147483648
        %v2737 = vsel %vm2735, %v2736, %v2734
        %v2738 = vrsqrt.pop %v2058
        %v2739 = vmul.f32 %v2058, %v2738
        %vm2740 = vcmp.eq.f32.partialorder %v2058, inf
        %v2741 = vsel %vm2740, %v2058, %v2739
        %vm2742 = vcmp.eq.f32.partialorder %v2058, 0.0
        %v2743 = vand.u32 %v2058, 2147483648
        %v2744 = vsel %vm2742, %v2743, %v2741
        %v2745 = vrsqrt.pop %v2059
        %v2746 = vmul.f32 %v2059, %v2745
        %vm2747 = vcmp.eq.f32.partialorder %v2059, inf
        %v2748 = vsel %vm2747, %v2059, %v2746
        %vm2749 = vcmp.eq.f32.partialorder %v2059, 0.0
        %v2750 = vand.u32 %v2059, 2147483648
        %v2751 = vsel %vm2749, %v2750, %v2748
        %v2752 = vrsqrt.pop %v2060
        %v2753 = vmul.f32 %v2060, %v2752
        %vm2754 = vcmp.eq.f32.partialorder %v2060, inf
        %v2755 = vsel %vm2754, %v2060, %v2753
        %vm2756 = vcmp.eq.f32.partialorder %v2060, 0.0
        %v2757 = vand.u32 %v2060, 2147483648
        %v2758 = vsel %vm2756, %v2757, %v2755
        %v2759 = vrsqrt.pop %v2061
        %v2760 = vmul.f32 %v2061, %v2759
        %vm2761 = vcmp.eq.f32.partialorder %v2061, inf
        %v2762 = vsel %vm2761, %v2061, %v2760
        %vm2763 = vcmp.eq.f32.partialorder %v2061, 0.0
        %v2764 = vand.u32 %v2061, 2147483648
        %v2765 = vsel %vm2763, %v2764, %v2762
        %v2766 = vrsqrt.pop %v2062
        %v2767 = vmul.f32 %v2062, %v2766
        %vm2768 = vcmp.eq.f32.partialorder %v2062, inf
        %v2769 = vsel %vm2768, %v2062, %v2767
        %vm2770 = vcmp.eq.f32.partialorder %v2062, 0.0
        %v2771 = vand.u32 %v2062, 2147483648
        %v2772 = vsel %vm2770, %v2771, %v2769
        %v2773 = vrsqrt.pop %v2063
        %v2774 = vmul.f32 %v2063, %v2773
        %vm2775 = vcmp.eq.f32.partialorder %v2063, inf
        %v2776 = vsel %vm2775, %v2063, %v2774
        %vm2777 = vcmp.eq.f32.partialorder %v2063, 0.0
        %v2778 = vand.u32 %v2063, 2147483648
        %v2779 = vsel %vm2777, %v2778, %v2776
        %v2780 = vrsqrt.pop %v2064
        %v2781 = vmul.f32 %v2064, %v2780
        %vm2782 = vcmp.eq.f32.partialorder %v2064, inf
        %v2783 = vsel %vm2782, %v2064, %v2781
        %vm2784 = vcmp.eq.f32.partialorder %v2064, 0.0
        %v2785 = vand.u32 %v2064, 2147483648
        %v2786 = vsel %vm2784, %v2785, %v2783
        %v2787 = vrsqrt.pop %v2065
        %v2788 = vmul.f32 %v2065, %v2787
        %vm2789 = vcmp.eq.f32.partialorder %v2065, inf
        %v2790 = vsel %vm2789, %v2065, %v2788
        %vm2791 = vcmp.eq.f32.partialorder %v2065, 0.0
        %v2792 = vand.u32 %v2065, 2147483648
        %v2793 = vsel %vm2791, %v2792, %v2790
        %v2794 = vrsqrt.pop %v2066
        %v2795 = vmul.f32 %v2066, %v2794
        %vm2796 = vcmp.eq.f32.partialorder %v2066, inf
        %v2797 = vsel %vm2796, %v2066, %v2795
        %vm2798 = vcmp.eq.f32.partialorder %v2066, 0.0
        %v2799 = vand.u32 %v2066, 2147483648
        %v2800 = vsel %vm2798, %v2799, %v2797
        %v2801 = vrsqrt.pop %v2067
        %v2802 = vmul.f32 %v2067, %v2801
        %vm2803 = vcmp.eq.f32.partialorder %v2067, inf
        %v2804 = vsel %vm2803, %v2067, %v2802
        %vm2805 = vcmp.eq.f32.partialorder %v2067, 0.0
        %v2806 = vand.u32 %v2067, 2147483648
        %v2807 = vsel %vm2805, %v2806, %v2804
        %v2808 = vrsqrt.pop %v2068
        %v2809 = vmul.f32 %v2068, %v2808
        %vm2810 = vcmp.eq.f32.partialorder %v2068, inf
        %v2811 = vsel %vm2810, %v2068, %v2809
        %vm2812 = vcmp.eq.f32.partialorder %v2068, 0.0
        %v2813 = vand.u32 %v2068, 2147483648
        %v2814 = vsel %vm2812, %v2813, %v2811
        %v2815 = vrsqrt.pop %v2069
        %v2816 = vmul.f32 %v2069, %v2815
        %vm2817 = vcmp.eq.f32.partialorder %v2069, inf
        %v2818 = vsel %vm2817, %v2069, %v2816
        %vm2819 = vcmp.eq.f32.partialorder %v2069, 0.0
        %v2820 = vand.u32 %v2069, 2147483648
        %v2821 = vsel %vm2819, %v2820, %v2818
        %v2822 = vrsqrt.pop %v2070
        %v2823 = vmul.f32 %v2070, %v2822
        %vm2824 = vcmp.eq.f32.partialorder %v2070, inf
        %v2825 = vsel %vm2824, %v2070, %v2823
        %vm2826 = vcmp.eq.f32.partialorder %v2070, 0.0
        %v2827 = vand.u32 %v2070, 2147483648
        %v2828 = vsel %vm2826, %v2827, %v2825
        %v2829 = vrsqrt.pop %v2071
        %v2830 = vmul.f32 %v2071, %v2829
        %vm2831 = vcmp.eq.f32.partialorder %v2071, inf
        %v2832 = vsel %vm2831, %v2071, %v2830
        %vm2833 = vcmp.eq.f32.partialorder %v2071, 0.0
        %v2834 = vand.u32 %v2071, 2147483648
        %v2835 = vsel %vm2833, %v2834, %v2832
        %v2836 = vrsqrt.pop %v2072
        %v2837 = vmul.f32 %v2072, %v2836
        %vm2838 = vcmp.eq.f32.partialorder %v2072, inf
        %v2839 = vsel %vm2838, %v2072, %v2837
        %vm2840 = vcmp.eq.f32.partialorder %v2072, 0.0
        %v2841 = vand.u32 %v2072, 2147483648
        %v2842 = vsel %vm2840, %v2841, %v2839
        %v2843 = vrsqrt.pop %v2073
        %v2844 = vmul.f32 %v2073, %v2843
        %vm2845 = vcmp.eq.f32.partialorder %v2073, inf
        %v2846 = vsel %vm2845, %v2073, %v2844
        %vm2847 = vcmp.eq.f32.partialorder %v2073, 0.0
        %v2848 = vand.u32 %v2073, 2147483648
        %v2849 = vsel %vm2847, %v2848, %v2846
        %v2850 = vrsqrt.pop %v2074
        %v2851 = vmul.f32 %v2074, %v2850
        %vm2852 = vcmp.eq.f32.partialorder %v2074, inf
        %v2853 = vsel %vm2852, %v2074, %v2851
        %vm2854 = vcmp.eq.f32.partialorder %v2074, 0.0
        %v2855 = vand.u32 %v2074, 2147483648
        %v2856 = vsel %vm2854, %v2855, %v2853
        %v2857 = vrsqrt.pop %v2075
        %v2858 = vmul.f32 %v2075, %v2857
        %vm2859 = vcmp.eq.f32.partialorder %v2075, inf
        %v2860 = vsel %vm2859, %v2075, %v2858
        %vm2861 = vcmp.eq.f32.partialorder %v2075, 0.0
        %v2862 = vand.u32 %v2075, 2147483648
        %v2863 = vsel %vm2861, %v2862, %v2860
        %v2864 = vrsqrt.pop %v2076
        %v2865 = vmul.f32 %v2076, %v2864
        %vm2866 = vcmp.eq.f32.partialorder %v2076, inf
        %v2867 = vsel %vm2866, %v2076, %v2865
        %vm2868 = vcmp.eq.f32.partialorder %v2076, 0.0
        %v2869 = vand.u32 %v2076, 2147483648
        %v2870 = vsel %vm2868, %v2869, %v2867
        %v2871 = vrsqrt.pop %v2077
        %v2872 = vmul.f32 %v2077, %v2871
        %vm2873 = vcmp.eq.f32.partialorder %v2077, inf
        %v2874 = vsel %vm2873, %v2077, %v2872
        %vm2875 = vcmp.eq.f32.partialorder %v2077, 0.0
        %v2876 = vand.u32 %v2077, 2147483648
        %v2877 = vsel %vm2875, %v2876, %v2874
        %v2878 = vrsqrt.pop %v2078
        %v2879 = vmul.f32 %v2078, %v2878
        %vm2880 = vcmp.eq.f32.partialorder %v2078, inf
        %v2881 = vsel %vm2880, %v2078, %v2879
        %vm2882 = vcmp.eq.f32.partialorder %v2078, 0.0
        %v2883 = vand.u32 %v2078, 2147483648
        %v2884 = vsel %vm2882, %v2883, %v2881
        %v2885 = vrsqrt.pop %v2079
        %v2886 = vmul.f32 %v2079, %v2885
        %vm2887 = vcmp.eq.f32.partialorder %v2079, inf
        %v2888 = vsel %vm2887, %v2079, %v2886
        %vm2889 = vcmp.eq.f32.partialorder %v2079, 0.0
        %v2890 = vand.u32 %v2079, 2147483648
        %v2891 = vsel %vm2889, %v2890, %v2888
        %v2892 = vrsqrt.pop %v2080
        %v2893 = vmul.f32 %v2080, %v2892
        %vm2894 = vcmp.eq.f32.partialorder %v2080, inf
        %v2895 = vsel %vm2894, %v2080, %v2893
        %vm2896 = vcmp.eq.f32.partialorder %v2080, 0.0
        %v2897 = vand.u32 %v2080, 2147483648
        %v2898 = vsel %vm2896, %v2897, %v2895
        %v2899 = vrsqrt.pop %v2081
        %v2900 = vmul.f32 %v2081, %v2899
        %vm2901 = vcmp.eq.f32.partialorder %v2081, inf
        %v2902 = vsel %vm2901, %v2081, %v2900
        %vm2903 = vcmp.eq.f32.partialorder %v2081, 0.0
        %v2904 = vand.u32 %v2081, 2147483648
        %v2905 = vsel %vm2903, %v2904, %v2902
        %v2906 = vrsqrt.pop %v2082
        %v2907 = vmul.f32 %v2082, %v2906
        %vm2908 = vcmp.eq.f32.partialorder %v2082, inf
        %v2909 = vsel %vm2908, %v2082, %v2907
        %vm2910 = vcmp.eq.f32.partialorder %v2082, 0.0
        %v2911 = vand.u32 %v2082, 2147483648
        %v2912 = vsel %vm2910, %v2911, %v2909
        %v2913 = vrsqrt.pop %v2083
        %v2914 = vmul.f32 %v2083, %v2913
        %vm2915 = vcmp.eq.f32.partialorder %v2083, inf
        %v2916 = vsel %vm2915, %v2083, %v2914
        %vm2917 = vcmp.eq.f32.partialorder %v2083, 0.0
        %v2918 = vand.u32 %v2083, 2147483648
        %v2919 = vsel %vm2917, %v2918, %v2916
        %v2920 = vrsqrt.pop %v2084
        %v2921 = vmul.f32 %v2084, %v2920
        %vm2922 = vcmp.eq.f32.partialorder %v2084, inf
        %v2923 = vsel %vm2922, %v2084, %v2921
        %vm2924 = vcmp.eq.f32.partialorder %v2084, 0.0
        %v2925 = vand.u32 %v2084, 2147483648
        %v2926 = vsel %vm2924, %v2925, %v2923
        %v2927 = vrsqrt.pop %v2085
        %v2928 = vmul.f32 %v2085, %v2927
        %vm2929 = vcmp.eq.f32.partialorder %v2085, inf
        %v2930 = vsel %vm2929, %v2085, %v2928
        %vm2931 = vcmp.eq.f32.partialorder %v2085, 0.0
        %v2932 = vand.u32 %v2085, 2147483648
        %v2933 = vsel %vm2931, %v2932, %v2930
        %v2934 = vrsqrt.pop %v2086
        %v2935 = vmul.f32 %v2086, %v2934
        %vm2936 = vcmp.eq.f32.partialorder %v2086, inf
        %v2937 = vsel %vm2936, %v2086, %v2935
        %vm2938 = vcmp.eq.f32.partialorder %v2086, 0.0
        %v2939 = vand.u32 %v2086, 2147483648
        %v2940 = vsel %vm2938, %v2939, %v2937
        %v2941 = vrsqrt.pop %v2087
        %v2942 = vmul.f32 %v2087, %v2941
        %vm2943 = vcmp.eq.f32.partialorder %v2087, inf
        %v2944 = vsel %vm2943, %v2087, %v2942
        %vm2945 = vcmp.eq.f32.partialorder %v2087, 0.0
        %v2946 = vand.u32 %v2087, 2147483648
        %v2947 = vsel %vm2945, %v2946, %v2944
        %v2948 = vrsqrt.pop %v2088
        %v2949 = vmul.f32 %v2088, %v2948
        %vm2950 = vcmp.eq.f32.partialorder %v2088, inf
        %v2951 = vsel %vm2950, %v2088, %v2949
        %vm2952 = vcmp.eq.f32.partialorder %v2088, 0.0
        %v2953 = vand.u32 %v2088, 2147483648
        %v2954 = vsel %vm2952, %v2953, %v2951
        %v2955 = vrsqrt.pop %v2089
        %v2956 = vmul.f32 %v2089, %v2955
        %vm2957 = vcmp.eq.f32.partialorder %v2089, inf
        %v2958 = vsel %vm2957, %v2089, %v2956
        %vm2959 = vcmp.eq.f32.partialorder %v2089, 0.0
        %v2960 = vand.u32 %v2089, 2147483648
        %v2961 = vsel %vm2959, %v2960, %v2958
        %v2962 = vrsqrt.pop %v2090
        %v2963 = vmul.f32 %v2090, %v2962
        %vm2964 = vcmp.eq.f32.partialorder %v2090, inf
        %v2965 = vsel %vm2964, %v2090, %v2963
        %vm2966 = vcmp.eq.f32.partialorder %v2090, 0.0
        %v2967 = vand.u32 %v2090, 2147483648
        %v2968 = vsel %vm2966, %v2967, %v2965
        %v2969 = vrsqrt.pop %v2091
        %v2970 = vmul.f32 %v2091, %v2969
        %vm2971 = vcmp.eq.f32.partialorder %v2091, inf
        %v2972 = vsel %vm2971, %v2091, %v2970
        %vm2973 = vcmp.eq.f32.partialorder %v2091, 0.0
        %v2974 = vand.u32 %v2091, 2147483648
        %v2975 = vsel %vm2973, %v2974, %v2972
        %v2976 = vrsqrt.pop %v2092
        %v2977 = vmul.f32 %v2092, %v2976
        %vm2978 = vcmp.eq.f32.partialorder %v2092, inf
        %v2979 = vsel %vm2978, %v2092, %v2977
        %vm2980 = vcmp.eq.f32.partialorder %v2092, 0.0
        %v2981 = vand.u32 %v2092, 2147483648
        %v2982 = vsel %vm2980, %v2981, %v2979
        %v2983 = vrsqrt.pop %v2093
        %v2984 = vmul.f32 %v2093, %v2983
        %vm2985 = vcmp.eq.f32.partialorder %v2093, inf
        %v2986 = vsel %vm2985, %v2093, %v2984
        %vm2987 = vcmp.eq.f32.partialorder %v2093, 0.0
        %v2988 = vand.u32 %v2093, 2147483648
        %v2989 = vsel %vm2987, %v2988, %v2986
        %2991 = vset.pattern.permute.xlu0 0
        %2992 = vperm.xlu0 %2991, %v508
        %v2993 = vpop.permute.xlu0 %2992
        %2996 = vset.pattern.permute.xlu0 0
        %2997 = vperm.xlu0 %2996, %v509
        %v2998 = vpop.permute.xlu0 %2997
        %3001 = vset.pattern.permute.xlu0 0
        %3002 = vperm.xlu0 %3001, %v510
        %v3003 = vpop.permute.xlu0 %3002
        %3006 = vset.pattern.permute.xlu0 0
        %3007 = vperm.xlu0 %3006, %v511
        %v3008 = vpop.permute.xlu0 %3007
        %3011 = vset.pattern.permute.xlu0 0
        %3012 = vperm.xlu0 %3011, %v512
        %v3013 = vpop.permute.xlu0 %3012
        %3016 = vset.pattern.permute.xlu0 0
        %3017 = vperm.xlu0 %3016, %v513
        %v3018 = vpop.permute.xlu0 %3017
        %3021 = vset.pattern.permute.xlu0 0
        %3022 = vperm.xlu0 %3021, %v514
        %v3023 = vpop.permute.xlu0 %3022
        %3026 = vset.pattern.permute.xlu0 0
        %3027 = vperm.xlu0 %3026, %v515
        %v3028 = vpop.permute.xlu0 %3027
        %3031 = vset.pattern.permute.xlu0 0
        %3032 = vperm.xlu0 %3031, %v516
        %v3033 = vpop.permute.xlu0 %3032
        %3036 = vset.pattern.permute.xlu0 0
        %3037 = vperm.xlu0 %3036, %v517
        %v3038 = vpop.permute.xlu0 %3037
        %3041 = vset.pattern.permute.xlu0 0
        %3042 = vperm.xlu0 %3041, %v518
        %v3043 = vpop.permute.xlu0 %3042
        %3046 = vset.pattern.permute.xlu0 0
        %3047 = vperm.xlu0 %3046, %v519
        %v3048 = vpop.permute.xlu0 %3047
        %3051 = vset.pattern.permute.xlu0 0
        %3052 = vperm.xlu0 %3051, %v520
        %v3053 = vpop.permute.xlu0 %3052
        %3056 = vset.pattern.permute.xlu0 0
        %3057 = vperm.xlu0 %3056, %v521
        %v3058 = vpop.permute.xlu0 %3057
        %3061 = vset.pattern.permute.xlu0 0
        %3062 = vperm.xlu0 %3061, %v522
        %v3063 = vpop.permute.xlu0 %3062
        %3066 = vset.pattern.permute.xlu0 0
        %3067 = vperm.xlu0 %3066, %v523
        %v3068 = vpop.permute.xlu0 %3067
        %3071 = vset.pattern.permute.xlu0 0
        %3072 = vperm.xlu0 %3071, %v524
        %v3073 = vpop.permute.xlu0 %3072
        %3076 = vset.pattern.permute.xlu0 0
        %3077 = vperm.xlu0 %3076, %v525
        %v3078 = vpop.permute.xlu0 %3077
        %3081 = vset.pattern.permute.xlu0 0
        %3082 = vperm.xlu0 %3081, %v526
        %v3083 = vpop.permute.xlu0 %3082
        %3086 = vset.pattern.permute.xlu0 0
        %3087 = vperm.xlu0 %3086, %v527
        %v3088 = vpop.permute.xlu0 %3087
        %3091 = vset.pattern.permute.xlu0 0
        %3092 = vperm.xlu0 %3091, %v528
        %v3093 = vpop.permute.xlu0 %3092
        %3096 = vset.pattern.permute.xlu0 0
        %3097 = vperm.xlu0 %3096, %v529
        %v3098 = vpop.permute.xlu0 %3097
        %3101 = vset.pattern.permute.xlu0 0
        %3102 = vperm.xlu0 %3101, %v530
        %v3103 = vpop.permute.xlu0 %3102
        %3106 = vset.pattern.permute.xlu0 0
        %3107 = vperm.xlu0 %3106, %v531
        %v3108 = vpop.permute.xlu0 %3107
        %3111 = vset.pattern.permute.xlu0 0
        %3112 = vperm.xlu0 %3111, %v532
        %v3113 = vpop.permute.xlu0 %3112
        %3116 = vset.pattern.permute.xlu0 0
        %3117 = vperm.xlu0 %3116, %v533
        %v3118 = vpop.permute.xlu0 %3117
        %3121 = vset.pattern.permute.xlu0 0
        %3122 = vperm.xlu0 %3121, %v534
        %v3123 = vpop.permute.xlu0 %3122
        %3126 = vset.pattern.permute.xlu0 0
        %3127 = vperm.xlu0 %3126, %v535
        %v3128 = vpop.permute.xlu0 %3127
        %3131 = vset.pattern.permute.xlu0 0
        %3132 = vperm.xlu0 %3131, %v536
        %v3133 = vpop.permute.xlu0 %3132
        %3136 = vset.pattern.permute.xlu0 0
        %3137 = vperm.xlu0 %3136, %v537
        %v3138 = vpop.permute.xlu0 %3137
        %3141 = vset.pattern.permute.xlu0 0
        %3142 = vperm.xlu0 %3141, %v538
        %v3143 = vpop.permute.xlu0 %3142
        %3146 = vset.pattern.permute.xlu0 0
        %3147 = vperm.xlu0 %3146, %v539
        %v3148 = vpop.permute.xlu0 %3147
        %v3150 = vlaneseq
        %v3151 = vshrl.u32 %v3150, 7
        %v3152 = vsub.s32 0, %v3151
        %v3153 = vrot.slane %v540, %v3152
        %v3154 = vlaneseq
        %v3155 = vshrl.u32 %v3154, 7
        %v3156 = vsub.s32 0, %v3155
        %v3157 = vrot.slane %v541, %v3156
        %v3158 = vlaneseq
        %v3159 = vshrl.u32 %v3158, 7
        %v3160 = vsub.s32 0, %v3159
        %v3161 = vrot.slane %v542, %v3160
        %v3162 = vlaneseq
        %v3163 = vshrl.u32 %v3162, 7
        %v3164 = vsub.s32 0, %v3163
        %v3165 = vrot.slane %v543, %v3164
        %v3166 = vsub.f32 %v2993, %v3153
        %v3167 = vsub.f32 %v2993, %v3157
        %v3168 = vsub.f32 %v2993, %v3161
        %v3169 = vsub.f32 %v2993, %v3165
        %v3170 = vsub.f32 %v2998, %v3153
        %v3171 = vsub.f32 %v2998, %v3157
        %v3172 = vsub.f32 %v2998, %v3161
        %v3173 = vsub.f32 %v2998, %v3165
        %v3174 = vsub.f32 %v3003, %v3153
        %v3175 = vsub.f32 %v3003, %v3157
        %v3176 = vsub.f32 %v3003, %v3161
        %v3177 = vsub.f32 %v3003, %v3165
        %v3178 = vsub.f32 %v3008, %v3153
        %v3179 = vsub.f32 %v3008, %v3157
        %v3180 = vsub.f32 %v3008, %v3161
        %v3181 = vsub.f32 %v3008, %v3165
        %v3182 = vsub.f32 %v3013, %v3153
        %v3183 = vsub.f32 %v3013, %v3157
        %v3184 = vsub.f32 %v3013, %v3161
        %v3185 = vsub.f32 %v3013, %v3165
        %v3186 = vsub.f32 %v3018, %v3153
        %v3187 = vsub.f32 %v3018, %v3157
        %v3188 = vsub.f32 %v3018, %v3161
        %v3189 = vsub.f32 %v3018, %v3165
        %v3190 = vsub.f32 %v3023, %v3153
        %v3191 = vsub.f32 %v3023, %v3157
        %v3192 = vsub.f32 %v3023, %v3161
        %v3193 = vsub.f32 %v3023, %v3165
        %v3194 = vsub.f32 %v3028, %v3153
        %v3195 = vsub.f32 %v3028, %v3157
        %v3196 = vsub.f32 %v3028, %v3161
        %v3197 = vsub.f32 %v3028, %v3165
        %v3198 = vsub.f32 %v3033, %v3153
        %v3199 = vsub.f32 %v3033, %v3157
        %v3200 = vsub.f32 %v3033, %v3161
        %v3201 = vsub.f32 %v3033, %v3165
        %v3202 = vsub.f32 %v3038, %v3153
        %v3203 = vsub.f32 %v3038, %v3157
        %v3204 = vsub.f32 %v3038, %v3161
        %v3205 = vsub.f32 %v3038, %v3165
        %v3206 = vsub.f32 %v3043, %v3153
        %v3207 = vsub.f32 %v3043, %v3157
        %v3208 = vsub.f32 %v3043, %v3161
        %v3209 = vsub.f32 %v3043, %v3165
        %v3210 = vsub.f32 %v3048, %v3153
        %v3211 = vsub.f32 %v3048, %v3157
        %v3212 = vsub.f32 %v3048, %v3161
        %v3213 = vsub.f32 %v3048, %v3165
        %v3214 = vsub.f32 %v3053, %v3153
        %v3215 = vsub.f32 %v3053, %v3157
        %v3216 = vsub.f32 %v3053, %v3161
        %v3217 = vsub.f32 %v3053, %v3165
        %v3218 = vsub.f32 %v3058, %v3153
        %v3219 = vsub.f32 %v3058, %v3157
        %v3220 = vsub.f32 %v3058, %v3161
        %v3221 = vsub.f32 %v3058, %v3165
        %v3222 = vsub.f32 %v3063, %v3153
        %v3223 = vsub.f32 %v3063, %v3157
        %v3224 = vsub.f32 %v3063, %v3161
        %v3225 = vsub.f32 %v3063, %v3165
        %v3226 = vsub.f32 %v3068, %v3153
        %v3227 = vsub.f32 %v3068, %v3157
        %v3228 = vsub.f32 %v3068, %v3161
        %v3229 = vsub.f32 %v3068, %v3165
        %v3230 = vsub.f32 %v3073, %v3153
        %v3231 = vsub.f32 %v3073, %v3157
        %v3232 = vsub.f32 %v3073, %v3161
        %v3233 = vsub.f32 %v3073, %v3165
        %v3234 = vsub.f32 %v3078, %v3153
        %v3235 = vsub.f32 %v3078, %v3157
        %v3236 = vsub.f32 %v3078, %v3161
        %v3237 = vsub.f32 %v3078, %v3165
        %v3238 = vsub.f32 %v3083, %v3153
        %v3239 = vsub.f32 %v3083, %v3157
        %v3240 = vsub.f32 %v3083, %v3161
        %v3241 = vsub.f32 %v3083, %v3165
        %v3242 = vsub.f32 %v3088, %v3153
        %v3243 = vsub.f32 %v3088, %v3157
        %v3244 = vsub.f32 %v3088, %v3161
        %v3245 = vsub.f32 %v3088, %v3165
        %v3246 = vsub.f32 %v3093, %v3153
        %v3247 = vsub.f32 %v3093, %v3157
        %v3248 = vsub.f32 %v3093, %v3161
        %v3249 = vsub.f32 %v3093, %v3165
        %v3250 = vsub.f32 %v3098, %v3153
        %v3251 = vsub.f32 %v3098, %v3157
        %v3252 = vsub.f32 %v3098, %v3161
        %v3253 = vsub.f32 %v3098, %v3165
        %v3254 = vsub.f32 %v3103, %v3153
        %v3255 = vsub.f32 %v3103, %v3157
        %v3256 = vsub.f32 %v3103, %v3161
        %v3257 = vsub.f32 %v3103, %v3165
        %v3258 = vsub.f32 %v3108, %v3153
        %v3259 = vsub.f32 %v3108, %v3157
        %v3260 = vsub.f32 %v3108, %v3161
        %v3261 = vsub.f32 %v3108, %v3165
        %v3262 = vsub.f32 %v3113, %v3153
        %v3263 = vsub.f32 %v3113, %v3157
        %v3264 = vsub.f32 %v3113, %v3161
        %v3265 = vsub.f32 %v3113, %v3165
        %v3266 = vsub.f32 %v3118, %v3153
        %v3267 = vsub.f32 %v3118, %v3157
        %v3268 = vsub.f32 %v3118, %v3161
        %v3269 = vsub.f32 %v3118, %v3165
        %v3270 = vsub.f32 %v3123, %v3153
        %v3271 = vsub.f32 %v3123, %v3157
        %v3272 = vsub.f32 %v3123, %v3161
        %v3273 = vsub.f32 %v3123, %v3165
        %v3274 = vsub.f32 %v3128, %v3153
        %v3275 = vsub.f32 %v3128, %v3157
        %v3276 = vsub.f32 %v3128, %v3161
        %v3277 = vsub.f32 %v3128, %v3165
        %v3278 = vsub.f32 %v3133, %v3153
        %v3279 = vsub.f32 %v3133, %v3157
        %v3280 = vsub.f32 %v3133, %v3161
        %v3281 = vsub.f32 %v3133, %v3165
        %v3282 = vsub.f32 %v3138, %v3153
        %v3283 = vsub.f32 %v3138, %v3157
        %v3284 = vsub.f32 %v3138, %v3161
        %v3285 = vsub.f32 %v3138, %v3165
        %v3286 = vsub.f32 %v3143, %v3153
        %v3287 = vsub.f32 %v3143, %v3157
        %v3288 = vsub.f32 %v3143, %v3161
        %v3289 = vsub.f32 %v3143, %v3165
        %v3290 = vsub.f32 %v3148, %v3153
        %v3291 = vsub.f32 %v3148, %v3157
        %v3292 = vsub.f32 %v3148, %v3161
        %v3293 = vsub.f32 %v3148, %v3165
        %3294 = vset.pattern.permute.xlu0 1
        %3295 = vperm.xlu0 %3294, %v508
        %v3296 = vpop.permute.xlu0 %3295
        %3298 = vset.pattern.permute.xlu0 1
        %3299 = vperm.xlu0 %3298, %v509
        %v3300 = vpop.permute.xlu0 %3299
        %3302 = vset.pattern.permute.xlu0 1
        %3303 = vperm.xlu0 %3302, %v510
        %v3304 = vpop.permute.xlu0 %3303
        %3306 = vset.pattern.permute.xlu0 1
        %3307 = vperm.xlu0 %3306, %v511
        %v3308 = vpop.permute.xlu0 %3307
        %3310 = vset.pattern.permute.xlu0 1
        %3311 = vperm.xlu0 %3310, %v512
        %v3312 = vpop.permute.xlu0 %3311
        %3314 = vset.pattern.permute.xlu0 1
        %3315 = vperm.xlu0 %3314, %v513
        %v3316 = vpop.permute.xlu0 %3315
        %3318 = vset.pattern.permute.xlu0 1
        %3319 = vperm.xlu0 %3318, %v514
        %v3320 = vpop.permute.xlu0 %3319
        %3322 = vset.pattern.permute.xlu0 1
        %3323 = vperm.xlu0 %3322, %v515
        %v3324 = vpop.permute.xlu0 %3323
        %3326 = vset.pattern.permute.xlu0 1
        %3327 = vperm.xlu0 %3326, %v516
        %v3328 = vpop.permute.xlu0 %3327
        %3330 = vset.pattern.permute.xlu0 1
        %3331 = vperm.xlu0 %3330, %v517
        %v3332 = vpop.permute.xlu0 %3331
        %3334 = vset.pattern.permute.xlu0 1
        %3335 = vperm.xlu0 %3334, %v518
        %v3336 = vpop.permute.xlu0 %3335
        %3338 = vset.pattern.permute.xlu0 1
        %3339 = vperm.xlu0 %3338, %v519
        %v3340 = vpop.permute.xlu0 %3339
        %3342 = vset.pattern.permute.xlu0 1
        %3343 = vperm.xlu0 %3342, %v520
        %v3344 = vpop.permute.xlu0 %3343
        %3346 = vset.pattern.permute.xlu0 1
        %3347 = vperm.xlu0 %3346, %v521
        %v3348 = vpop.permute.xlu0 %3347
        %3350 = vset.pattern.permute.xlu0 1
        %3351 = vperm.xlu0 %3350, %v522
        %v3352 = vpop.permute.xlu0 %3351
        %3354 = vset.pattern.permute.xlu0 1
        %3355 = vperm.xlu0 %3354, %v523
        %v3356 = vpop.permute.xlu0 %3355
        %3358 = vset.pattern.permute.xlu0 1
        %3359 = vperm.xlu0 %3358, %v524
        %v3360 = vpop.permute.xlu0 %3359
        %3362 = vset.pattern.permute.xlu0 1
        %3363 = vperm.xlu0 %3362, %v525
        %v3364 = vpop.permute.xlu0 %3363
        %3366 = vset.pattern.permute.xlu0 1
        %3367 = vperm.xlu0 %3366, %v526
        %v3368 = vpop.permute.xlu0 %3367
        %3370 = vset.pattern.permute.xlu0 1
        %3371 = vperm.xlu0 %3370, %v527
        %v3372 = vpop.permute.xlu0 %3371
        %3374 = vset.pattern.permute.xlu0 1
        %3375 = vperm.xlu0 %3374, %v528
        %v3376 = vpop.permute.xlu0 %3375
        %3378 = vset.pattern.permute.xlu0 1
        %3379 = vperm.xlu0 %3378, %v529
        %v3380 = vpop.permute.xlu0 %3379
        %3382 = vset.pattern.permute.xlu0 1
        %3383 = vperm.xlu0 %3382, %v530
        %v3384 = vpop.permute.xlu0 %3383
        %3386 = vset.pattern.permute.xlu0 1
        %3387 = vperm.xlu0 %3386, %v531
        %v3388 = vpop.permute.xlu0 %3387
        %3390 = vset.pattern.permute.xlu0 1
        %3391 = vperm.xlu0 %3390, %v532
        %v3392 = vpop.permute.xlu0 %3391
        %3394 = vset.pattern.permute.xlu0 1
        %3395 = vperm.xlu0 %3394, %v533
        %v3396 = vpop.permute.xlu0 %3395
        %3398 = vset.pattern.permute.xlu0 1
        %3399 = vperm.xlu0 %3398, %v534
        %v3400 = vpop.permute.xlu0 %3399
        %3402 = vset.pattern.permute.xlu0 1
        %3403 = vperm.xlu0 %3402, %v535
        %v3404 = vpop.permute.xlu0 %3403
        %3406 = vset.pattern.permute.xlu0 1
        %3407 = vperm.xlu0 %3406, %v536
        %v3408 = vpop.permute.xlu0 %3407
        %3410 = vset.pattern.permute.xlu0 1
        %3411 = vperm.xlu0 %3410, %v537
        %v3412 = vpop.permute.xlu0 %3411
        %3414 = vset.pattern.permute.xlu0 1
        %3415 = vperm.xlu0 %3414, %v538
        %v3416 = vpop.permute.xlu0 %3415
        %3418 = vset.pattern.permute.xlu0 1
        %3419 = vperm.xlu0 %3418, %v539
        %v3420 = vpop.permute.xlu0 %3419
        %v3422 = vlaneseq
        %v3423 = vshrl.u32 %v3422, 7
        %v3424 = vsub.s32 1, %v3423
        %v3425 = vrot.slane %v540, %v3424
        %v3426 = vlaneseq
        %v3427 = vshrl.u32 %v3426, 7
        %v3428 = vsub.s32 1, %v3427
        %v3429 = vrot.slane %v541, %v3428
        %v3430 = vlaneseq
        %v3431 = vshrl.u32 %v3430, 7
        %v3432 = vsub.s32 1, %v3431
        %v3433 = vrot.slane %v542, %v3432
        %v3434 = vlaneseq
        %v3435 = vshrl.u32 %v3434, 7
        %v3436 = vsub.s32 1, %v3435
        %v3437 = vrot.slane %v543, %v3436
        %v3438 = vsub.f32 %v3296, %v3425
        %v3439 = vsub.f32 %v3296, %v3429
        %v3440 = vsub.f32 %v3296, %v3433
        %v3441 = vsub.f32 %v3296, %v3437
        %v3442 = vsub.f32 %v3300, %v3425
        %v3443 = vsub.f32 %v3300, %v3429
        %v3444 = vsub.f32 %v3300, %v3433
        %v3445 = vsub.f32 %v3300, %v3437
        %v3446 = vsub.f32 %v3304, %v3425
        %v3447 = vsub.f32 %v3304, %v3429
        %v3448 = vsub.f32 %v3304, %v3433
        %v3449 = vsub.f32 %v3304, %v3437
        %v3450 = vsub.f32 %v3308, %v3425
        %v3451 = vsub.f32 %v3308, %v3429
        %v3452 = vsub.f32 %v3308, %v3433
        %v3453 = vsub.f32 %v3308, %v3437
        %v3454 = vsub.f32 %v3312, %v3425
        %v3455 = vsub.f32 %v3312, %v3429
        %v3456 = vsub.f32 %v3312, %v3433
        %v3457 = vsub.f32 %v3312, %v3437
        %v3458 = vsub.f32 %v3316, %v3425
        %v3459 = vsub.f32 %v3316, %v3429
        %v3460 = vsub.f32 %v3316, %v3433
        %v3461 = vsub.f32 %v3316, %v3437
        %v3462 = vsub.f32 %v3320, %v3425
        %v3463 = vsub.f32 %v3320, %v3429
        %v3464 = vsub.f32 %v3320, %v3433
        %v3465 = vsub.f32 %v3320, %v3437
        %v3466 = vsub.f32 %v3324, %v3425
        %v3467 = vsub.f32 %v3324, %v3429
        %v3468 = vsub.f32 %v3324, %v3433
        %v3469 = vsub.f32 %v3324, %v3437
        %v3470 = vsub.f32 %v3328, %v3425
        %v3471 = vsub.f32 %v3328, %v3429
        %v3472 = vsub.f32 %v3328, %v3433
        %v3473 = vsub.f32 %v3328, %v3437
        %v3474 = vsub.f32 %v3332, %v3425
        %v3475 = vsub.f32 %v3332, %v3429
        %v3476 = vsub.f32 %v3332, %v3433
        %v3477 = vsub.f32 %v3332, %v3437
        %v3478 = vsub.f32 %v3336, %v3425
        %v3479 = vsub.f32 %v3336, %v3429
        %v3480 = vsub.f32 %v3336, %v3433
        %v3481 = vsub.f32 %v3336, %v3437
        %v3482 = vsub.f32 %v3340, %v3425
        %v3483 = vsub.f32 %v3340, %v3429
        %v3484 = vsub.f32 %v3340, %v3433
        %v3485 = vsub.f32 %v3340, %v3437
        %v3486 = vsub.f32 %v3344, %v3425
        %v3487 = vsub.f32 %v3344, %v3429
        %v3488 = vsub.f32 %v3344, %v3433
        %v3489 = vsub.f32 %v3344, %v3437
        %v3490 = vsub.f32 %v3348, %v3425
        %v3491 = vsub.f32 %v3348, %v3429
        %v3492 = vsub.f32 %v3348, %v3433
        %v3493 = vsub.f32 %v3348, %v3437
        %v3494 = vsub.f32 %v3352, %v3425
        %v3495 = vsub.f32 %v3352, %v3429
        %v3496 = vsub.f32 %v3352, %v3433
        %v3497 = vsub.f32 %v3352, %v3437
        %v3498 = vsub.f32 %v3356, %v3425
        %v3499 = vsub.f32 %v3356, %v3429
        %v3500 = vsub.f32 %v3356, %v3433
        %v3501 = vsub.f32 %v3356, %v3437
        %v3502 = vsub.f32 %v3360, %v3425
        %v3503 = vsub.f32 %v3360, %v3429
        %v3504 = vsub.f32 %v3360, %v3433
        %v3505 = vsub.f32 %v3360, %v3437
        %v3506 = vsub.f32 %v3364, %v3425
        %v3507 = vsub.f32 %v3364, %v3429
        %v3508 = vsub.f32 %v3364, %v3433
        %v3509 = vsub.f32 %v3364, %v3437
        %v3510 = vsub.f32 %v3368, %v3425
        %v3511 = vsub.f32 %v3368, %v3429
        %v3512 = vsub.f32 %v3368, %v3433
        %v3513 = vsub.f32 %v3368, %v3437
        %v3514 = vsub.f32 %v3372, %v3425
        %v3515 = vsub.f32 %v3372, %v3429
        %v3516 = vsub.f32 %v3372, %v3433
        %v3517 = vsub.f32 %v3372, %v3437
        %v3518 = vsub.f32 %v3376, %v3425
        %v3519 = vsub.f32 %v3376, %v3429
        %v3520 = vsub.f32 %v3376, %v3433
        %v3521 = vsub.f32 %v3376, %v3437
        %v3522 = vsub.f32 %v3380, %v3425
        %v3523 = vsub.f32 %v3380, %v3429
        %v3524 = vsub.f32 %v3380, %v3433
        %v3525 = vsub.f32 %v3380, %v3437
        %v3526 = vsub.f32 %v3384, %v3425
        %v3527 = vsub.f32 %v3384, %v3429
        %v3528 = vsub.f32 %v3384, %v3433
        %v3529 = vsub.f32 %v3384, %v3437
        %v3530 = vsub.f32 %v3388, %v3425
        %v3531 = vsub.f32 %v3388, %v3429
        %v3532 = vsub.f32 %v3388, %v3433
        %v3533 = vsub.f32 %v3388, %v3437
        %v3534 = vsub.f32 %v3392, %v3425
        %v3535 = vsub.f32 %v3392, %v3429
        %v3536 = vsub.f32 %v3392, %v3433
        %v3537 = vsub.f32 %v3392, %v3437
        %v3538 = vsub.f32 %v3396, %v3425
        %v3539 = vsub.f32 %v3396, %v3429
        %v3540 = vsub.f32 %v3396, %v3433
        %v3541 = vsub.f32 %v3396, %v3437
        %v3542 = vsub.f32 %v3400, %v3425
        %v3543 = vsub.f32 %v3400, %v3429
        %v3544 = vsub.f32 %v3400, %v3433
        %v3545 = vsub.f32 %v3400, %v3437
        %v3546 = vsub.f32 %v3404, %v3425
        %v3547 = vsub.f32 %v3404, %v3429
        %v3548 = vsub.f32 %v3404, %v3433
        %v3549 = vsub.f32 %v3404, %v3437
        %v3550 = vsub.f32 %v3408, %v3425
        %v3551 = vsub.f32 %v3408, %v3429
        %v3552 = vsub.f32 %v3408, %v3433
        %v3553 = vsub.f32 %v3408, %v3437
        %v3554 = vsub.f32 %v3412, %v3425
        %v3555 = vsub.f32 %v3412, %v3429
        %v3556 = vsub.f32 %v3412, %v3433
        %v3557 = vsub.f32 %v3412, %v3437
        %v3558 = vsub.f32 %v3416, %v3425
        %v3559 = vsub.f32 %v3416, %v3429
        %v3560 = vsub.f32 %v3416, %v3433
        %v3561 = vsub.f32 %v3416, %v3437
        %v3562 = vsub.f32 %v3420, %v3425
        %v3563 = vsub.f32 %v3420, %v3429
        %v3564 = vsub.f32 %v3420, %v3433
        %v3565 = vsub.f32 %v3420, %v3437
        %3566 = vset.pattern.permute.xlu0 2
        %3567 = vperm.xlu0 %3566, %v508
        %v3568 = vpop.permute.xlu0 %3567
        %3570 = vset.pattern.permute.xlu0 2
        %3571 = vperm.xlu0 %3570, %v509
        %v3572 = vpop.permute.xlu0 %3571
        %3574 = vset.pattern.permute.xlu0 2
        %3575 = vperm.xlu0 %3574, %v510
        %v3576 = vpop.permute.xlu0 %3575
        %3578 = vset.pattern.permute.xlu0 2
        %3579 = vperm.xlu0 %3578, %v511
        %v3580 = vpop.permute.xlu0 %3579
        %3582 = vset.pattern.permute.xlu0 2
        %3583 = vperm.xlu0 %3582, %v512
        %v3584 = vpop.permute.xlu0 %3583
        %3586 = vset.pattern.permute.xlu0 2
        %3587 = vperm.xlu0 %3586, %v513
        %v3588 = vpop.permute.xlu0 %3587
        %3590 = vset.pattern.permute.xlu0 2
        %3591 = vperm.xlu0 %3590, %v514
        %v3592 = vpop.permute.xlu0 %3591
        %3594 = vset.pattern.permute.xlu0 2
        %3595 = vperm.xlu0 %3594, %v515
        %v3596 = vpop.permute.xlu0 %3595
        %3598 = vset.pattern.permute.xlu0 2
        %3599 = vperm.xlu0 %3598, %v516
        %v3600 = vpop.permute.xlu0 %3599
        %3602 = vset.pattern.permute.xlu0 2
        %3603 = vperm.xlu0 %3602, %v517
        %v3604 = vpop.permute.xlu0 %3603
        %3606 = vset.pattern.permute.xlu0 2
        %3607 = vperm.xlu0 %3606, %v518
        %v3608 = vpop.permute.xlu0 %3607
        %3610 = vset.pattern.permute.xlu0 2
        %3611 = vperm.xlu0 %3610, %v519
        %v3612 = vpop.permute.xlu0 %3611
        %3614 = vset.pattern.permute.xlu0 2
        %3615 = vperm.xlu0 %3614, %v520
        %v3616 = vpop.permute.xlu0 %3615
        %3618 = vset.pattern.permute.xlu0 2
        %3619 = vperm.xlu0 %3618, %v521
        %v3620 = vpop.permute.xlu0 %3619
        %3622 = vset.pattern.permute.xlu0 2
        %3623 = vperm.xlu0 %3622, %v522
        %v3624 = vpop.permute.xlu0 %3623
        %3626 = vset.pattern.permute.xlu0 2
        %3627 = vperm.xlu0 %3626, %v523
        %v3628 = vpop.permute.xlu0 %3627
        %3630 = vset.pattern.permute.xlu0 2
        %3631 = vperm.xlu0 %3630, %v524
        %v3632 = vpop.permute.xlu0 %3631
        %3634 = vset.pattern.permute.xlu0 2
        %3635 = vperm.xlu0 %3634, %v525
        %v3636 = vpop.permute.xlu0 %3635
        %3638 = vset.pattern.permute.xlu0 2
        %3639 = vperm.xlu0 %3638, %v526
        %v3640 = vpop.permute.xlu0 %3639
        %3642 = vset.pattern.permute.xlu0 2
        %3643 = vperm.xlu0 %3642, %v527
        %v3644 = vpop.permute.xlu0 %3643
        %3646 = vset.pattern.permute.xlu0 2
        %3647 = vperm.xlu0 %3646, %v528
        %v3648 = vpop.permute.xlu0 %3647
        %3650 = vset.pattern.permute.xlu0 2
        %3651 = vperm.xlu0 %3650, %v529
        %v3652 = vpop.permute.xlu0 %3651
        %3654 = vset.pattern.permute.xlu0 2
        %3655 = vperm.xlu0 %3654, %v530
        %v3656 = vpop.permute.xlu0 %3655
        %3658 = vset.pattern.permute.xlu0 2
        %3659 = vperm.xlu0 %3658, %v531
        %v3660 = vpop.permute.xlu0 %3659
        %3662 = vset.pattern.permute.xlu0 2
        %3663 = vperm.xlu0 %3662, %v532
        %v3664 = vpop.permute.xlu0 %3663
        %3666 = vset.pattern.permute.xlu0 2
        %3667 = vperm.xlu0 %3666, %v533
        %v3668 = vpop.permute.xlu0 %3667
        %3670 = vset.pattern.permute.xlu0 2
        %3671 = vperm.xlu0 %3670, %v534
        %v3672 = vpop.permute.xlu0 %3671
        %3674 = vset.pattern.permute.xlu0 2
        %3675 = vperm.xlu0 %3674, %v535
        %v3676 = vpop.permute.xlu0 %3675
        %3678 = vset.pattern.permute.xlu0 2
        %3679 = vperm.xlu0 %3678, %v536
        %v3680 = vpop.permute.xlu0 %3679
        %3682 = vset.pattern.permute.xlu0 2
        %3683 = vperm.xlu0 %3682, %v537
        %v3684 = vpop.permute.xlu0 %3683
        %3686 = vset.pattern.permute.xlu0 2
        %3687 = vperm.xlu0 %3686, %v538
        %v3688 = vpop.permute.xlu0 %3687
        %3690 = vset.pattern.permute.xlu0 2
        %3691 = vperm.xlu0 %3690, %v539
        %v3692 = vpop.permute.xlu0 %3691
        %v3694 = vlaneseq
        %v3695 = vshrl.u32 %v3694, 7
        %v3696 = vsub.s32 2, %v3695
        %v3697 = vrot.slane %v540, %v3696
        %v3698 = vlaneseq
        %v3699 = vshrl.u32 %v3698, 7
        %v3700 = vsub.s32 2, %v3699
        %v3701 = vrot.slane %v541, %v3700
        %v3702 = vlaneseq
        %v3703 = vshrl.u32 %v3702, 7
        %v3704 = vsub.s32 2, %v3703
        %v3705 = vrot.slane %v542, %v3704
        %v3706 = vlaneseq
        %v3707 = vshrl.u32 %v3706, 7
        %v3708 = vsub.s32 2, %v3707
        %v3709 = vrot.slane %v543, %v3708
        %v3710 = vsub.f32 %v3568, %v3697
        %v3711 = vsub.f32 %v3568, %v3701
        %v3712 = vsub.f32 %v3568, %v3705
        %v3713 = vsub.f32 %v3568, %v3709
        %v3714 = vsub.f32 %v3572, %v3697
        %v3715 = vsub.f32 %v3572, %v3701
        %v3716 = vsub.f32 %v3572, %v3705
        %v3717 = vsub.f32 %v3572, %v3709
        %v3718 = vsub.f32 %v3576, %v3697
        %v3719 = vsub.f32 %v3576, %v3701
        %v3720 = vsub.f32 %v3576, %v3705
        %v3721 = vsub.f32 %v3576, %v3709
        %v3722 = vsub.f32 %v3580, %v3697
        %v3723 = vsub.f32 %v3580, %v3701
        %v3724 = vsub.f32 %v3580, %v3705
        %v3725 = vsub.f32 %v3580, %v3709
        %v3726 = vsub.f32 %v3584, %v3697
        %v3727 = vsub.f32 %v3584, %v3701
        %v3728 = vsub.f32 %v3584, %v3705
        %v3729 = vsub.f32 %v3584, %v3709
        %v3730 = vsub.f32 %v3588, %v3697
        %v3731 = vsub.f32 %v3588, %v3701
        %v3732 = vsub.f32 %v3588, %v3705
        %v3733 = vsub.f32 %v3588, %v3709
        %v3734 = vsub.f32 %v3592, %v3697
        %v3735 = vsub.f32 %v3592, %v3701
        %v3736 = vsub.f32 %v3592, %v3705
        %v3737 = vsub.f32 %v3592, %v3709
        %v3738 = vsub.f32 %v3596, %v3697
        %v3739 = vsub.f32 %v3596, %v3701
        %v3740 = vsub.f32 %v3596, %v3705
        %v3741 = vsub.f32 %v3596, %v3709
        %v3742 = vsub.f32 %v3600, %v3697
        %v3743 = vsub.f32 %v3600, %v3701
        %v3744 = vsub.f32 %v3600, %v3705
        %v3745 = vsub.f32 %v3600, %v3709
        %v3746 = vsub.f32 %v3604, %v3697
        %v3747 = vsub.f32 %v3604, %v3701
        %v3748 = vsub.f32 %v3604, %v3705
        %v3749 = vsub.f32 %v3604, %v3709
        %v3750 = vsub.f32 %v3608, %v3697
        %v3751 = vsub.f32 %v3608, %v3701
        %v3752 = vsub.f32 %v3608, %v3705
        %v3753 = vsub.f32 %v3608, %v3709
        %v3754 = vsub.f32 %v3612, %v3697
        %v3755 = vsub.f32 %v3612, %v3701
        %v3756 = vsub.f32 %v3612, %v3705
        %v3757 = vsub.f32 %v3612, %v3709
        %v3758 = vsub.f32 %v3616, %v3697
        %v3759 = vsub.f32 %v3616, %v3701
        %v3760 = vsub.f32 %v3616, %v3705
        %v3761 = vsub.f32 %v3616, %v3709
        %v3762 = vsub.f32 %v3620, %v3697
        %v3763 = vsub.f32 %v3620, %v3701
        %v3764 = vsub.f32 %v3620, %v3705
        %v3765 = vsub.f32 %v3620, %v3709
        %v3766 = vsub.f32 %v3624, %v3697
        %v3767 = vsub.f32 %v3624, %v3701
        %v3768 = vsub.f32 %v3624, %v3705
        %v3769 = vsub.f32 %v3624, %v3709
        %v3770 = vsub.f32 %v3628, %v3697
        %v3771 = vsub.f32 %v3628, %v3701
        %v3772 = vsub.f32 %v3628, %v3705
        %v3773 = vsub.f32 %v3628, %v3709
        %v3774 = vsub.f32 %v3632, %v3697
        %v3775 = vsub.f32 %v3632, %v3701
        %v3776 = vsub.f32 %v3632, %v3705
        %v3777 = vsub.f32 %v3632, %v3709
        %v3778 = vsub.f32 %v3636, %v3697
        %v3779 = vsub.f32 %v3636, %v3701
        %v3780 = vsub.f32 %v3636, %v3705
        %v3781 = vsub.f32 %v3636, %v3709
        %v3782 = vsub.f32 %v3640, %v3697
        %v3783 = vsub.f32 %v3640, %v3701
        %v3784 = vsub.f32 %v3640, %v3705
        %v3785 = vsub.f32 %v3640, %v3709
        %v3786 = vsub.f32 %v3644, %v3697
        %v3787 = vsub.f32 %v3644, %v3701
        %v3788 = vsub.f32 %v3644, %v3705
        %v3789 = vsub.f32 %v3644, %v3709
        %v3790 = vsub.f32 %v3648, %v3697
        %v3791 = vsub.f32 %v3648, %v3701
        %v3792 = vsub.f32 %v3648, %v3705
        %v3793 = vsub.f32 %v3648, %v3709
        %v3794 = vsub.f32 %v3652, %v3697
        %v3795 = vsub.f32 %v3652, %v3701
        %v3796 = vsub.f32 %v3652, %v3705
        %v3797 = vsub.f32 %v3652, %v3709
        %v3798 = vsub.f32 %v3656, %v3697
        %v3799 = vsub.f32 %v3656, %v3701
        %v3800 = vsub.f32 %v3656, %v3705
        %v3801 = vsub.f32 %v3656, %v3709
        %v3802 = vsub.f32 %v3660, %v3697
        %v3803 = vsub.f32 %v3660, %v3701
        %v3804 = vsub.f32 %v3660, %v3705
        %v3805 = vsub.f32 %v3660, %v3709
        %v3806 = vsub.f32 %v3664, %v3697
        %v3807 = vsub.f32 %v3664, %v3701
        %v3808 = vsub.f32 %v3664, %v3705
        %v3809 = vsub.f32 %v3664, %v3709
        %v3810 = vsub.f32 %v3668, %v3697
        %v3811 = vsub.f32 %v3668, %v3701
        %v3812 = vsub.f32 %v3668, %v3705
        %v3813 = vsub.f32 %v3668, %v3709
        %v3814 = vsub.f32 %v3672, %v3697
        %v3815 = vsub.f32 %v3672, %v3701
        %v3816 = vsub.f32 %v3672, %v3705
        %v3817 = vsub.f32 %v3672, %v3709
        %v3818 = vsub.f32 %v3676, %v3697
        %v3819 = vsub.f32 %v3676, %v3701
        %v3820 = vsub.f32 %v3676, %v3705
        %v3821 = vsub.f32 %v3676, %v3709
        %v3822 = vsub.f32 %v3680, %v3697
        %v3823 = vsub.f32 %v3680, %v3701
        %v3824 = vsub.f32 %v3680, %v3705
        %v3825 = vsub.f32 %v3680, %v3709
        %v3826 = vsub.f32 %v3684, %v3697
        %v3827 = vsub.f32 %v3684, %v3701
        %v3828 = vsub.f32 %v3684, %v3705
        %v3829 = vsub.f32 %v3684, %v3709
        %v3830 = vsub.f32 %v3688, %v3697
        %v3831 = vsub.f32 %v3688, %v3701
        %v3832 = vsub.f32 %v3688, %v3705
        %v3833 = vsub.f32 %v3688, %v3709
        %v3834 = vsub.f32 %v3692, %v3697
        %v3835 = vsub.f32 %v3692, %v3701
        %v3836 = vsub.f32 %v3692, %v3705
        %v3837 = vsub.f32 %v3692, %v3709
        %v3838 = vmul.f32 %v3166, %v3166
        %v3839 = vmul.f32 %v3167, %v3167
        %v3840 = vmul.f32 %v3168, %v3168
        %v3841 = vmul.f32 %v3169, %v3169
        %v3842 = vmul.f32 %v3170, %v3170
        %v3843 = vmul.f32 %v3171, %v3171
        %v3844 = vmul.f32 %v3172, %v3172
        %v3845 = vmul.f32 %v3173, %v3173
        %v3846 = vmul.f32 %v3174, %v3174
        %v3847 = vmul.f32 %v3175, %v3175
        %v3848 = vmul.f32 %v3176, %v3176
        %v3849 = vmul.f32 %v3177, %v3177
        %v3850 = vmul.f32 %v3178, %v3178
        %v3851 = vmul.f32 %v3179, %v3179
        %v3852 = vmul.f32 %v3180, %v3180
        %v3853 = vmul.f32 %v3181, %v3181
        %v3854 = vmul.f32 %v3182, %v3182
        %v3855 = vmul.f32 %v3183, %v3183
        %v3856 = vmul.f32 %v3184, %v3184
        %v3857 = vmul.f32 %v3185, %v3185
        %v3858 = vmul.f32 %v3186, %v3186
        %v3859 = vmul.f32 %v3187, %v3187
        %v3860 = vmul.f32 %v3188, %v3188
        %v3861 = vmul.f32 %v3189, %v3189
        %v3862 = vmul.f32 %v3190, %v3190
        %v3863 = vmul.f32 %v3191, %v3191
        %v3864 = vmul.f32 %v3192, %v3192
        %v3865 = vmul.f32 %v3193, %v3193
        %v3866 = vmul.f32 %v3194, %v3194
        %v3867 = vmul.f32 %v3195, %v3195
        %v3868 = vmul.f32 %v3196, %v3196
        %v3869 = vmul.f32 %v3197, %v3197
        %v3870 = vmul.f32 %v3198, %v3198
        %v3871 = vmul.f32 %v3199, %v3199
        %v3872 = vmul.f32 %v3200, %v3200
        %v3873 = vmul.f32 %v3201, %v3201
        %v3874 = vmul.f32 %v3202, %v3202
        %v3875 = vmul.f32 %v3203, %v3203
        %v3876 = vmul.f32 %v3204, %v3204
        %v3877 = vmul.f32 %v3205, %v3205
        %v3878 = vmul.f32 %v3206, %v3206
        %v3879 = vmul.f32 %v3207, %v3207
        %v3880 = vmul.f32 %v3208, %v3208
        %v3881 = vmul.f32 %v3209, %v3209
        %v3882 = vmul.f32 %v3210, %v3210
        %v3883 = vmul.f32 %v3211, %v3211
        %v3884 = vmul.f32 %v3212, %v3212
        %v3885 = vmul.f32 %v3213, %v3213
        %v3886 = vmul.f32 %v3214, %v3214
        %v3887 = vmul.f32 %v3215, %v3215
        %v3888 = vmul.f32 %v3216, %v3216
        %v3889 = vmul.f32 %v3217, %v3217
        %v3890 = vmul.f32 %v3218, %v3218
        %v3891 = vmul.f32 %v3219, %v3219
        %v3892 = vmul.f32 %v3220, %v3220
        %v3893 = vmul.f32 %v3221, %v3221
        %v3894 = vmul.f32 %v3222, %v3222
        %v3895 = vmul.f32 %v3223, %v3223
        %v3896 = vmul.f32 %v3224, %v3224
        %v3897 = vmul.f32 %v3225, %v3225
        %v3898 = vmul.f32 %v3226, %v3226
        %v3899 = vmul.f32 %v3227, %v3227
        %v3900 = vmul.f32 %v3228, %v3228
        %v3901 = vmul.f32 %v3229, %v3229
        %v3902 = vmul.f32 %v3230, %v3230
        %v3903 = vmul.f32 %v3231, %v3231
        %v3904 = vmul.f32 %v3232, %v3232
        %v3905 = vmul.f32 %v3233, %v3233
        %v3906 = vmul.f32 %v3234, %v3234
        %v3907 = vmul.f32 %v3235, %v3235
        %v3908 = vmul.f32 %v3236, %v3236
        %v3909 = vmul.f32 %v3237, %v3237
        %v3910 = vmul.f32 %v3238, %v3238
        %v3911 = vmul.f32 %v3239, %v3239
        %v3912 = vmul.f32 %v3240, %v3240
        %v3913 = vmul.f32 %v3241, %v3241
        %v3914 = vmul.f32 %v3242, %v3242
        %v3915 = vmul.f32 %v3243, %v3243
        %v3916 = vmul.f32 %v3244, %v3244
        %v3917 = vmul.f32 %v3245, %v3245
        %v3918 = vmul.f32 %v3246, %v3246
        %v3919 = vmul.f32 %v3247, %v3247
        %v3920 = vmul.f32 %v3248, %v3248
        %v3921 = vmul.f32 %v3249, %v3249
        %v3922 = vmul.f32 %v3250, %v3250
        %v3923 = vmul.f32 %v3251, %v3251
        %v3924 = vmul.f32 %v3252, %v3252
        %v3925 = vmul.f32 %v3253, %v3253
        %v3926 = vmul.f32 %v3254, %v3254
        %v3927 = vmul.f32 %v3255, %v3255
        %v3928 = vmul.f32 %v3256, %v3256
        %v3929 = vmul.f32 %v3257, %v3257
        %v3930 = vmul.f32 %v3258, %v3258
        %v3931 = vmul.f32 %v3259, %v3259
        %v3932 = vmul.f32 %v3260, %v3260
        %v3933 = vmul.f32 %v3261, %v3261
        %v3934 = vmul.f32 %v3262, %v3262
        %v3935 = vmul.f32 %v3263, %v3263
        %v3936 = vmul.f32 %v3264, %v3264
        %v3937 = vmul.f32 %v3265, %v3265
        %v3938 = vmul.f32 %v3266, %v3266
        %v3939 = vmul.f32 %v3267, %v3267
        %v3940 = vmul.f32 %v3268, %v3268
        %v3941 = vmul.f32 %v3269, %v3269
        %v3942 = vmul.f32 %v3270, %v3270
        %v3943 = vmul.f32 %v3271, %v3271
        %v3944 = vmul.f32 %v3272, %v3272
        %v3945 = vmul.f32 %v3273, %v3273
        %v3946 = vmul.f32 %v3274, %v3274
        %v3947 = vmul.f32 %v3275, %v3275
        %v3948 = vmul.f32 %v3276, %v3276
        %v3949 = vmul.f32 %v3277, %v3277
        %v3950 = vmul.f32 %v3278, %v3278
        %v3951 = vmul.f32 %v3279, %v3279
        %v3952 = vmul.f32 %v3280, %v3280
        %v3953 = vmul.f32 %v3281, %v3281
        %v3954 = vmul.f32 %v3282, %v3282
        %v3955 = vmul.f32 %v3283, %v3283
        %v3956 = vmul.f32 %v3284, %v3284
        %v3957 = vmul.f32 %v3285, %v3285
        %v3958 = vmul.f32 %v3286, %v3286
        %v3959 = vmul.f32 %v3287, %v3287
        %v3960 = vmul.f32 %v3288, %v3288
        %v3961 = vmul.f32 %v3289, %v3289
        %v3962 = vmul.f32 %v3290, %v3290
        %v3963 = vmul.f32 %v3291, %v3291
        %v3964 = vmul.f32 %v3292, %v3292
        %v3965 = vmul.f32 %v3293, %v3293
        %v3966 = vmul.f32 %v3438, %v3438
        %v3967 = vmul.f32 %v3439, %v3439
        %v3968 = vmul.f32 %v3440, %v3440
        %v3969 = vmul.f32 %v3441, %v3441
        %v3970 = vmul.f32 %v3442, %v3442
        %v3971 = vmul.f32 %v3443, %v3443
        %v3972 = vmul.f32 %v3444, %v3444
        %v3973 = vmul.f32 %v3445, %v3445
        %v3974 = vmul.f32 %v3446, %v3446
        %v3975 = vmul.f32 %v3447, %v3447
        %v3976 = vmul.f32 %v3448, %v3448
        %v3977 = vmul.f32 %v3449, %v3449
        %v3978 = vmul.f32 %v3450, %v3450
        %v3979 = vmul.f32 %v3451, %v3451
        %v3980 = vmul.f32 %v3452, %v3452
        %v3981 = vmul.f32 %v3453, %v3453
        %v3982 = vmul.f32 %v3454, %v3454
        %v3983 = vmul.f32 %v3455, %v3455
        %v3984 = vmul.f32 %v3456, %v3456
        %v3985 = vmul.f32 %v3457, %v3457
        %v3986 = vmul.f32 %v3458, %v3458
        %v3987 = vmul.f32 %v3459, %v3459
        %v3988 = vmul.f32 %v3460, %v3460
        %v3989 = vmul.f32 %v3461, %v3461
        %v3990 = vmul.f32 %v3462, %v3462
        %v3991 = vmul.f32 %v3463, %v3463
        %v3992 = vmul.f32 %v3464, %v3464
        %v3993 = vmul.f32 %v3465, %v3465
        %v3994 = vmul.f32 %v3466, %v3466
        %v3995 = vmul.f32 %v3467, %v3467
        %v3996 = vmul.f32 %v3468, %v3468
        %v3997 = vmul.f32 %v3469, %v3469
        %v3998 = vmul.f32 %v3470, %v3470
        %v3999 = vmul.f32 %v3471, %v3471
        %v4000 = vmul.f32 %v3472, %v3472
        %v4001 = vmul.f32 %v3473, %v3473
        %v4002 = vmul.f32 %v3474, %v3474
        %v4003 = vmul.f32 %v3475, %v3475
        %v4004 = vmul.f32 %v3476, %v3476
        %v4005 = vmul.f32 %v3477, %v3477
        %v4006 = vmul.f32 %v3478, %v3478
        %v4007 = vmul.f32 %v3479, %v3479
        %v4008 = vmul.f32 %v3480, %v3480
        %v4009 = vmul.f32 %v3481, %v3481
        %v4010 = vmul.f32 %v3482, %v3482
        %v4011 = vmul.f32 %v3483, %v3483
        %v4012 = vmul.f32 %v3484, %v3484
        %v4013 = vmul.f32 %v3485, %v3485
        %v4014 = vmul.f32 %v3486, %v3486
        %v4015 = vmul.f32 %v3487, %v3487
        %v4016 = vmul.f32 %v3488, %v3488
        %v4017 = vmul.f32 %v3489, %v3489
        %v4018 = vmul.f32 %v3490, %v3490
        %v4019 = vmul.f32 %v3491, %v3491
        %v4020 = vmul.f32 %v3492, %v3492
        %v4021 = vmul.f32 %v3493, %v3493
        %v4022 = vmul.f32 %v3494, %v3494
        %v4023 = vmul.f32 %v3495, %v3495
        %v4024 = vmul.f32 %v3496, %v3496
        %v4025 = vmul.f32 %v3497, %v3497
        %v4026 = vmul.f32 %v3498, %v3498
        %v4027 = vmul.f32 %v3499, %v3499
        %v4028 = vmul.f32 %v3500, %v3500
        %v4029 = vmul.f32 %v3501, %v3501
        %v4030 = vmul.f32 %v3502, %v3502
        %v4031 = vmul.f32 %v3503, %v3503
        %v4032 = vmul.f32 %v3504, %v3504
        %v4033 = vmul.f32 %v3505, %v3505
        %v4034 = vmul.f32 %v3506, %v3506
        %v4035 = vmul.f32 %v3507, %v3507
        %v4036 = vmul.f32 %v3508, %v3508
        %v4037 = vmul.f32 %v3509, %v3509
        %v4038 = vmul.f32 %v3510, %v3510
        %v4039 = vmul.f32 %v3511, %v3511
        %v4040 = vmul.f32 %v3512, %v3512
        %v4041 = vmul.f32 %v3513, %v3513
        %v4042 = vmul.f32 %v3514, %v3514
        %v4043 = vmul.f32 %v3515, %v3515
        %v4044 = vmul.f32 %v3516, %v3516
        %v4045 = vmul.f32 %v3517, %v3517
        %v4046 = vmul.f32 %v3518, %v3518
        %v4047 = vmul.f32 %v3519, %v3519
        %v4048 = vmul.f32 %v3520, %v3520
        %v4049 = vmul.f32 %v3521, %v3521
        %v4050 = vmul.f32 %v3522, %v3522
        %v4051 = vmul.f32 %v3523, %v3523
        %v4052 = vmul.f32 %v3524, %v3524
        %v4053 = vmul.f32 %v3525, %v3525
        %v4054 = vmul.f32 %v3526, %v3526
        %v4055 = vmul.f32 %v3527, %v3527
        %v4056 = vmul.f32 %v3528, %v3528
        %v4057 = vmul.f32 %v3529, %v3529
        %v4058 = vmul.f32 %v3530, %v3530
        %v4059 = vmul.f32 %v3531, %v3531
        %v4060 = vmul.f32 %v3532, %v3532
        %v4061 = vmul.f32 %v3533, %v3533
        %v4062 = vmul.f32 %v3534, %v3534
        %v4063 = vmul.f32 %v3535, %v3535
        %v4064 = vmul.f32 %v3536, %v3536
        %v4065 = vmul.f32 %v3537, %v3537
        %v4066 = vmul.f32 %v3538, %v3538
        %v4067 = vmul.f32 %v3539, %v3539
        %v4068 = vmul.f32 %v3540, %v3540
        %v4069 = vmul.f32 %v3541, %v3541
        %v4070 = vmul.f32 %v3542, %v3542
        %v4071 = vmul.f32 %v3543, %v3543
        %v4072 = vmul.f32 %v3544, %v3544
        %v4073 = vmul.f32 %v3545, %v3545
        %v4074 = vmul.f32 %v3546, %v3546
        %v4075 = vmul.f32 %v3547, %v3547
        %v4076 = vmul.f32 %v3548, %v3548
        %v4077 = vmul.f32 %v3549, %v3549
        %v4078 = vmul.f32 %v3550, %v3550
        %v4079 = vmul.f32 %v3551, %v3551
        %v4080 = vmul.f32 %v3552, %v3552
        %v4081 = vmul.f32 %v3553, %v3553
        %v4082 = vmul.f32 %v3554, %v3554
        %v4083 = vmul.f32 %v3555, %v3555
        %v4084 = vmul.f32 %v3556, %v3556
        %v4085 = vmul.f32 %v3557, %v3557
        %v4086 = vmul.f32 %v3558, %v3558
        %v4087 = vmul.f32 %v3559, %v3559
        %v4088 = vmul.f32 %v3560, %v3560
        %v4089 = vmul.f32 %v3561, %v3561
        %v4090 = vmul.f32 %v3562, %v3562
        %v4091 = vmul.f32 %v3563, %v3563
        %v4092 = vmul.f32 %v3564, %v3564
        %v4093 = vmul.f32 %v3565, %v3565
        %v4094 = vadd.f32 %v3838, %v3966
        %v4095 = vadd.f32 %v3839, %v3967
        %v4096 = vadd.f32 %v3840, %v3968
        %v4097 = vadd.f32 %v3841, %v3969
        %v4098 = vadd.f32 %v3842, %v3970
        %v4099 = vadd.f32 %v3843, %v3971
        %v4100 = vadd.f32 %v3844, %v3972
        %v4101 = vadd.f32 %v3845, %v3973
        %v4102 = vadd.f32 %v3846, %v3974
        %v4103 = vadd.f32 %v3847, %v3975
        %v4104 = vadd.f32 %v3848, %v3976
        %v4105 = vadd.f32 %v3849, %v3977
        %v4106 = vadd.f32 %v3850, %v3978
        %v4107 = vadd.f32 %v3851, %v3979
        %v4108 = vadd.f32 %v3852, %v3980
        %v4109 = vadd.f32 %v3853, %v3981
        %v4110 = vadd.f32 %v3854, %v3982
        %v4111 = vadd.f32 %v3855, %v3983
        %v4112 = vadd.f32 %v3856, %v3984
        %v4113 = vadd.f32 %v3857, %v3985
        %v4114 = vadd.f32 %v3858, %v3986
        %v4115 = vadd.f32 %v3859, %v3987
        %v4116 = vadd.f32 %v3860, %v3988
        %v4117 = vadd.f32 %v3861, %v3989
        %v4118 = vadd.f32 %v3862, %v3990
        %v4119 = vadd.f32 %v3863, %v3991
        %v4120 = vadd.f32 %v3864, %v3992
        %v4121 = vadd.f32 %v3865, %v3993
        %v4122 = vadd.f32 %v3866, %v3994
        %v4123 = vadd.f32 %v3867, %v3995
        %v4124 = vadd.f32 %v3868, %v3996
        %v4125 = vadd.f32 %v3869, %v3997
        %v4126 = vadd.f32 %v3870, %v3998
        %v4127 = vadd.f32 %v3871, %v3999
        %v4128 = vadd.f32 %v3872, %v4000
        %v4129 = vadd.f32 %v3873, %v4001
        %v4130 = vadd.f32 %v3874, %v4002
        %v4131 = vadd.f32 %v3875, %v4003
        %v4132 = vadd.f32 %v3876, %v4004
        %v4133 = vadd.f32 %v3877, %v4005
        %v4134 = vadd.f32 %v3878, %v4006
        %v4135 = vadd.f32 %v3879, %v4007
        %v4136 = vadd.f32 %v3880, %v4008
        %v4137 = vadd.f32 %v3881, %v4009
        %v4138 = vadd.f32 %v3882, %v4010
        %v4139 = vadd.f32 %v3883, %v4011
        %v4140 = vadd.f32 %v3884, %v4012
        %v4141 = vadd.f32 %v3885, %v4013
        %v4142 = vadd.f32 %v3886, %v4014
        %v4143 = vadd.f32 %v3887, %v4015
        %v4144 = vadd.f32 %v3888, %v4016
        %v4145 = vadd.f32 %v3889, %v4017
        %v4146 = vadd.f32 %v3890, %v4018
        %v4147 = vadd.f32 %v3891, %v4019
        %v4148 = vadd.f32 %v3892, %v4020
        %v4149 = vadd.f32 %v3893, %v4021
        %v4150 = vadd.f32 %v3894, %v4022
        %v4151 = vadd.f32 %v3895, %v4023
        %v4152 = vadd.f32 %v3896, %v4024
        %v4153 = vadd.f32 %v3897, %v4025
        %v4154 = vadd.f32 %v3898, %v4026
        %v4155 = vadd.f32 %v3899, %v4027
        %v4156 = vadd.f32 %v3900, %v4028
        %v4157 = vadd.f32 %v3901, %v4029
        %v4158 = vadd.f32 %v3902, %v4030
        %v4159 = vadd.f32 %v3903, %v4031
        %v4160 = vadd.f32 %v3904, %v4032
        %v4161 = vadd.f32 %v3905, %v4033
        %v4162 = vadd.f32 %v3906, %v4034
        %v4163 = vadd.f32 %v3907, %v4035
        %v4164 = vadd.f32 %v3908, %v4036
        %v4165 = vadd.f32 %v3909, %v4037
        %v4166 = vadd.f32 %v3910, %v4038
        %v4167 = vadd.f32 %v3911, %v4039
        %v4168 = vadd.f32 %v3912, %v4040
        %v4169 = vadd.f32 %v3913, %v4041
        %v4170 = vadd.f32 %v3914, %v4042
        %v4171 = vadd.f32 %v3915, %v4043
        %v4172 = vadd.f32 %v3916, %v4044
        %v4173 = vadd.f32 %v3917, %v4045
        %v4174 = vadd.f32 %v3918, %v4046
        %v4175 = vadd.f32 %v3919, %v4047
        %v4176 = vadd.f32 %v3920, %v4048
        %v4177 = vadd.f32 %v3921, %v4049
        %v4178 = vadd.f32 %v3922, %v4050
        %v4179 = vadd.f32 %v3923, %v4051
        %v4180 = vadd.f32 %v3924, %v4052
        %v4181 = vadd.f32 %v3925, %v4053
        %v4182 = vadd.f32 %v3926, %v4054
        %v4183 = vadd.f32 %v3927, %v4055
        %v4184 = vadd.f32 %v3928, %v4056
        %v4185 = vadd.f32 %v3929, %v4057
        %v4186 = vadd.f32 %v3930, %v4058
        %v4187 = vadd.f32 %v3931, %v4059
        %v4188 = vadd.f32 %v3932, %v4060
        %v4189 = vadd.f32 %v3933, %v4061
        %v4190 = vadd.f32 %v3934, %v4062
        %v4191 = vadd.f32 %v3935, %v4063
        %v4192 = vadd.f32 %v3936, %v4064
        %v4193 = vadd.f32 %v3937, %v4065
        %v4194 = vadd.f32 %v3938, %v4066
        %v4195 = vadd.f32 %v3939, %v4067
        %v4196 = vadd.f32 %v3940, %v4068
        %v4197 = vadd.f32 %v3941, %v4069
        %v4198 = vadd.f32 %v3942, %v4070
        %v4199 = vadd.f32 %v3943, %v4071
        %v4200 = vadd.f32 %v3944, %v4072
        %v4201 = vadd.f32 %v3945, %v4073
        %v4202 = vadd.f32 %v3946, %v4074
        %v4203 = vadd.f32 %v3947, %v4075
        %v4204 = vadd.f32 %v3948, %v4076
        %v4205 = vadd.f32 %v3949, %v4077
        %v4206 = vadd.f32 %v3950, %v4078
        %v4207 = vadd.f32 %v3951, %v4079
        %v4208 = vadd.f32 %v3952, %v4080
        %v4209 = vadd.f32 %v3953, %v4081
        %v4210 = vadd.f32 %v3954, %v4082
        %v4211 = vadd.f32 %v3955, %v4083
        %v4212 = vadd.f32 %v3956, %v4084
        %v4213 = vadd.f32 %v3957, %v4085
        %v4214 = vadd.f32 %v3958, %v4086
        %v4215 = vadd.f32 %v3959, %v4087
        %v4216 = vadd.f32 %v3960, %v4088
        %v4217 = vadd.f32 %v3961, %v4089
        %v4218 = vadd.f32 %v3962, %v4090
        %v4219 = vadd.f32 %v3963, %v4091
        %v4220 = vadd.f32 %v3964, %v4092
        %v4221 = vadd.f32 %v3965, %v4093
        %v4222 = vmul.f32 %v3710, %v3710
        %v4223 = vmul.f32 %v3711, %v3711
        %v4224 = vmul.f32 %v3712, %v3712
        %v4225 = vmul.f32 %v3713, %v3713
        %v4226 = vmul.f32 %v3714, %v3714
        %v4227 = vmul.f32 %v3715, %v3715
        %v4228 = vmul.f32 %v3716, %v3716
        %v4229 = vmul.f32 %v3717, %v3717
        %v4230 = vmul.f32 %v3718, %v3718
        %v4231 = vmul.f32 %v3719, %v3719
        %v4232 = vmul.f32 %v3720, %v3720
        %v4233 = vmul.f32 %v3721, %v3721
        %v4234 = vmul.f32 %v3722, %v3722
        %v4235 = vmul.f32 %v3723, %v3723
        %v4236 = vmul.f32 %v3724, %v3724
        %v4237 = vmul.f32 %v3725, %v3725
        %v4238 = vmul.f32 %v3726, %v3726
        %v4239 = vmul.f32 %v3727, %v3727
        %v4240 = vmul.f32 %v3728, %v3728
        %v4241 = vmul.f32 %v3729, %v3729
        %v4242 = vmul.f32 %v3730, %v3730
        %v4243 = vmul.f32 %v3731, %v3731
        %v4244 = vmul.f32 %v3732, %v3732
        %v4245 = vmul.f32 %v3733, %v3733
        %v4246 = vmul.f32 %v3734, %v3734
        %v4247 = vmul.f32 %v3735, %v3735
        %v4248 = vmul.f32 %v3736, %v3736
        %v4249 = vmul.f32 %v3737, %v3737
        %v4250 = vmul.f32 %v3738, %v3738
        %v4251 = vmul.f32 %v3739, %v3739
        %v4252 = vmul.f32 %v3740, %v3740
        %v4253 = vmul.f32 %v3741, %v3741
        %v4254 = vmul.f32 %v3742, %v3742
        %v4255 = vmul.f32 %v3743, %v3743
        %v4256 = vmul.f32 %v3744, %v3744
        %v4257 = vmul.f32 %v3745, %v3745
        %v4258 = vmul.f32 %v3746, %v3746
        %v4259 = vmul.f32 %v3747, %v3747
        %v4260 = vmul.f32 %v3748, %v3748
        %v4261 = vmul.f32 %v3749, %v3749
        %v4262 = vmul.f32 %v3750, %v3750
        %v4263 = vmul.f32 %v3751, %v3751
        %v4264 = vmul.f32 %v3752, %v3752
        %v4265 = vmul.f32 %v3753, %v3753
        %v4266 = vmul.f32 %v3754, %v3754
        %v4267 = vmul.f32 %v3755, %v3755
        %v4268 = vmul.f32 %v3756, %v3756
        %v4269 = vmul.f32 %v3757, %v3757
        %v4270 = vmul.f32 %v3758, %v3758
        %v4271 = vmul.f32 %v3759, %v3759
        %v4272 = vmul.f32 %v3760, %v3760
        %v4273 = vmul.f32 %v3761, %v3761
        %v4274 = vmul.f32 %v3762, %v3762
        %v4275 = vmul.f32 %v3763, %v3763
        %v4276 = vmul.f32 %v3764, %v3764
        %v4277 = vmul.f32 %v3765, %v3765
        %v4278 = vmul.f32 %v3766, %v3766
        %v4279 = vmul.f32 %v3767, %v3767
        %v4280 = vmul.f32 %v3768, %v3768
        %v4281 = vmul.f32 %v3769, %v3769
        %v4282 = vmul.f32 %v3770, %v3770
        %v4283 = vmul.f32 %v3771, %v3771
        %v4284 = vmul.f32 %v3772, %v3772
        %v4285 = vmul.f32 %v3773, %v3773
        %v4286 = vmul.f32 %v3774, %v3774
        %v4287 = vmul.f32 %v3775, %v3775
        %v4288 = vmul.f32 %v3776, %v3776
        %v4289 = vmul.f32 %v3777, %v3777
        %v4290 = vmul.f32 %v3778, %v3778
        %v4291 = vmul.f32 %v3779, %v3779
        %v4292 = vmul.f32 %v3780, %v3780
        %v4293 = vmul.f32 %v3781, %v3781
        %v4294 = vmul.f32 %v3782, %v3782
        %v4295 = vmul.f32 %v3783, %v3783
        %v4296 = vmul.f32 %v3784, %v3784
        %v4297 = vmul.f32 %v3785, %v3785
        %v4298 = vmul.f32 %v3786, %v3786
        %v4299 = vmul.f32 %v3787, %v3787
        %v4300 = vmul.f32 %v3788, %v3788
        %v4301 = vmul.f32 %v3789, %v3789
        %v4302 = vmul.f32 %v3790, %v3790
        %v4303 = vmul.f32 %v3791, %v3791
        %v4304 = vmul.f32 %v3792, %v3792
        %v4305 = vmul.f32 %v3793, %v3793
        %v4306 = vmul.f32 %v3794, %v3794
        %v4307 = vmul.f32 %v3795, %v3795
        %v4308 = vmul.f32 %v3796, %v3796
        %v4309 = vmul.f32 %v3797, %v3797
        %v4310 = vmul.f32 %v3798, %v3798
        %v4311 = vmul.f32 %v3799, %v3799
        %v4312 = vmul.f32 %v3800, %v3800
        %v4313 = vmul.f32 %v3801, %v3801
        %v4314 = vmul.f32 %v3802, %v3802
        %v4315 = vmul.f32 %v3803, %v3803
        %v4316 = vmul.f32 %v3804, %v3804
        %v4317 = vmul.f32 %v3805, %v3805
        %v4318 = vmul.f32 %v3806, %v3806
        %v4319 = vmul.f32 %v3807, %v3807
        %v4320 = vmul.f32 %v3808, %v3808
        %v4321 = vmul.f32 %v3809, %v3809
        %v4322 = vmul.f32 %v3810, %v3810
        %v4323 = vmul.f32 %v3811, %v3811
        %v4324 = vmul.f32 %v3812, %v3812
        %v4325 = vmul.f32 %v3813, %v3813
        %v4326 = vmul.f32 %v3814, %v3814
        %v4327 = vmul.f32 %v3815, %v3815
        %v4328 = vmul.f32 %v3816, %v3816
        %v4329 = vmul.f32 %v3817, %v3817
        %v4330 = vmul.f32 %v3818, %v3818
        %v4331 = vmul.f32 %v3819, %v3819
        %v4332 = vmul.f32 %v3820, %v3820
        %v4333 = vmul.f32 %v3821, %v3821
        %v4334 = vmul.f32 %v3822, %v3822
        %v4335 = vmul.f32 %v3823, %v3823
        %v4336 = vmul.f32 %v3824, %v3824
        %v4337 = vmul.f32 %v3825, %v3825
        %v4338 = vmul.f32 %v3826, %v3826
        %v4339 = vmul.f32 %v3827, %v3827
        %v4340 = vmul.f32 %v3828, %v3828
        %v4341 = vmul.f32 %v3829, %v3829
        %v4342 = vmul.f32 %v3830, %v3830
        %v4343 = vmul.f32 %v3831, %v3831
        %v4344 = vmul.f32 %v3832, %v3832
        %v4345 = vmul.f32 %v3833, %v3833
        %v4346 = vmul.f32 %v3834, %v3834
        %v4347 = vmul.f32 %v3835, %v3835
        %v4348 = vmul.f32 %v3836, %v3836
        %v4349 = vmul.f32 %v3837, %v3837
        %v4350 = vadd.f32 %v4094, %v4222
        %v4351 = vadd.f32 %v4095, %v4223
        %v4352 = vadd.f32 %v4096, %v4224
        %v4353 = vadd.f32 %v4097, %v4225
        %v4354 = vadd.f32 %v4098, %v4226
        %v4355 = vadd.f32 %v4099, %v4227
        %v4356 = vadd.f32 %v4100, %v4228
        %v4357 = vadd.f32 %v4101, %v4229
        %v4358 = vadd.f32 %v4102, %v4230
        %v4359 = vadd.f32 %v4103, %v4231
        %v4360 = vadd.f32 %v4104, %v4232
        %v4361 = vadd.f32 %v4105, %v4233
        %v4362 = vadd.f32 %v4106, %v4234
        %v4363 = vadd.f32 %v4107, %v4235
        %v4364 = vadd.f32 %v4108, %v4236
        %v4365 = vadd.f32 %v4109, %v4237
        %v4366 = vadd.f32 %v4110, %v4238
        %v4367 = vadd.f32 %v4111, %v4239
        %v4368 = vadd.f32 %v4112, %v4240
        %v4369 = vadd.f32 %v4113, %v4241
        %v4370 = vadd.f32 %v4114, %v4242
        %v4371 = vadd.f32 %v4115, %v4243
        %v4372 = vadd.f32 %v4116, %v4244
        %v4373 = vadd.f32 %v4117, %v4245
        %v4374 = vadd.f32 %v4118, %v4246
        %v4375 = vadd.f32 %v4119, %v4247
        %v4376 = vadd.f32 %v4120, %v4248
        %v4377 = vadd.f32 %v4121, %v4249
        %v4378 = vadd.f32 %v4122, %v4250
        %v4379 = vadd.f32 %v4123, %v4251
        %v4380 = vadd.f32 %v4124, %v4252
        %v4381 = vadd.f32 %v4125, %v4253
        %v4382 = vadd.f32 %v4126, %v4254
        %v4383 = vadd.f32 %v4127, %v4255
        %v4384 = vadd.f32 %v4128, %v4256
        %v4385 = vadd.f32 %v4129, %v4257
        %v4386 = vadd.f32 %v4130, %v4258
        %v4387 = vadd.f32 %v4131, %v4259
        %v4388 = vadd.f32 %v4132, %v4260
        %v4389 = vadd.f32 %v4133, %v4261
        %v4390 = vadd.f32 %v4134, %v4262
        %v4391 = vadd.f32 %v4135, %v4263
        %v4392 = vadd.f32 %v4136, %v4264
        %v4393 = vadd.f32 %v4137, %v4265
        %v4394 = vadd.f32 %v4138, %v4266
        %v4395 = vadd.f32 %v4139, %v4267
        %v4396 = vadd.f32 %v4140, %v4268
        %v4397 = vadd.f32 %v4141, %v4269
        %v4398 = vadd.f32 %v4142, %v4270
        %v4399 = vadd.f32 %v4143, %v4271
        %v4400 = vadd.f32 %v4144, %v4272
        %v4401 = vadd.f32 %v4145, %v4273
        %v4402 = vadd.f32 %v4146, %v4274
        %v4403 = vadd.f32 %v4147, %v4275
        %v4404 = vadd.f32 %v4148, %v4276
        %v4405 = vadd.f32 %v4149, %v4277
        %v4406 = vadd.f32 %v4150, %v4278
        %v4407 = vadd.f32 %v4151, %v4279
        %v4408 = vadd.f32 %v4152, %v4280
        %v4409 = vadd.f32 %v4153, %v4281
        %v4410 = vadd.f32 %v4154, %v4282
        %v4411 = vadd.f32 %v4155, %v4283
        %v4412 = vadd.f32 %v4156, %v4284
        %v4413 = vadd.f32 %v4157, %v4285
        %v4414 = vadd.f32 %v4158, %v4286
        %v4415 = vadd.f32 %v4159, %v4287
        %v4416 = vadd.f32 %v4160, %v4288
        %v4417 = vadd.f32 %v4161, %v4289
        %v4418 = vadd.f32 %v4162, %v4290
        %v4419 = vadd.f32 %v4163, %v4291
        %v4420 = vadd.f32 %v4164, %v4292
        %v4421 = vadd.f32 %v4165, %v4293
        %v4422 = vadd.f32 %v4166, %v4294
        %v4423 = vadd.f32 %v4167, %v4295
        %v4424 = vadd.f32 %v4168, %v4296
        %v4425 = vadd.f32 %v4169, %v4297
        %v4426 = vadd.f32 %v4170, %v4298
        %v4427 = vadd.f32 %v4171, %v4299
        %v4428 = vadd.f32 %v4172, %v4300
        %v4429 = vadd.f32 %v4173, %v4301
        %v4430 = vadd.f32 %v4174, %v4302
        %v4431 = vadd.f32 %v4175, %v4303
        %v4432 = vadd.f32 %v4176, %v4304
        %v4433 = vadd.f32 %v4177, %v4305
        %v4434 = vadd.f32 %v4178, %v4306
        %v4435 = vadd.f32 %v4179, %v4307
        %v4436 = vadd.f32 %v4180, %v4308
        %v4437 = vadd.f32 %v4181, %v4309
        %v4438 = vadd.f32 %v4182, %v4310
        %v4439 = vadd.f32 %v4183, %v4311
        %v4440 = vadd.f32 %v4184, %v4312
        %v4441 = vadd.f32 %v4185, %v4313
        %v4442 = vadd.f32 %v4186, %v4314
        %v4443 = vadd.f32 %v4187, %v4315
        %v4444 = vadd.f32 %v4188, %v4316
        %v4445 = vadd.f32 %v4189, %v4317
        %v4446 = vadd.f32 %v4190, %v4318
        %v4447 = vadd.f32 %v4191, %v4319
        %v4448 = vadd.f32 %v4192, %v4320
        %v4449 = vadd.f32 %v4193, %v4321
        %v4450 = vadd.f32 %v4194, %v4322
        %v4451 = vadd.f32 %v4195, %v4323
        %v4452 = vadd.f32 %v4196, %v4324
        %v4453 = vadd.f32 %v4197, %v4325
        %v4454 = vadd.f32 %v4198, %v4326
        %v4455 = vadd.f32 %v4199, %v4327
        %v4456 = vadd.f32 %v4200, %v4328
        %v4457 = vadd.f32 %v4201, %v4329
        %v4458 = vadd.f32 %v4202, %v4330
        %v4459 = vadd.f32 %v4203, %v4331
        %v4460 = vadd.f32 %v4204, %v4332
        %v4461 = vadd.f32 %v4205, %v4333
        %v4462 = vadd.f32 %v4206, %v4334
        %v4463 = vadd.f32 %v4207, %v4335
        %v4464 = vadd.f32 %v4208, %v4336
        %v4465 = vadd.f32 %v4209, %v4337
        %v4466 = vadd.f32 %v4210, %v4338
        %v4467 = vadd.f32 %v4211, %v4339
        %v4468 = vadd.f32 %v4212, %v4340
        %v4469 = vadd.f32 %v4213, %v4341
        %v4470 = vadd.f32 %v4214, %v4342
        %v4471 = vadd.f32 %v4215, %v4343
        %v4472 = vadd.f32 %v4216, %v4344
        %v4473 = vadd.f32 %v4217, %v4345
        %v4474 = vadd.f32 %v4218, %v4346
        %v4475 = vadd.f32 %v4219, %v4347
        %v4476 = vadd.f32 %v4220, %v4348
        %v4477 = vadd.f32 %v4221, %v4349
        %v4478 = vrsqrt.pop %v4350
        %v4479 = vmul.f32 %v4350, %v4478
        %vm4480 = vcmp.eq.f32.partialorder %v4350, inf
        %v4481 = vsel %vm4480, %v4350, %v4479
        %vm4482 = vcmp.eq.f32.partialorder %v4350, 0.0
        %v4483 = vand.u32 %v4350, 2147483648
        %v4484 = vsel %vm4482, %v4483, %v4481
        %v4485 = vrsqrt.pop %v4351
        %v4486 = vmul.f32 %v4351, %v4485
        %vm4487 = vcmp.eq.f32.partialorder %v4351, inf
        %v4488 = vsel %vm4487, %v4351, %v4486
        %vm4489 = vcmp.eq.f32.partialorder %v4351, 0.0
        %v4490 = vand.u32 %v4351, 2147483648
        %v4491 = vsel %vm4489, %v4490, %v4488
        %v4492 = vrsqrt.pop %v4352
        %v4493 = vmul.f32 %v4352, %v4492
        %vm4494 = vcmp.eq.f32.partialorder %v4352, inf
        %v4495 = vsel %vm4494, %v4352, %v4493
        %vm4496 = vcmp.eq.f32.partialorder %v4352, 0.0
        %v4497 = vand.u32 %v4352, 2147483648
        %v4498 = vsel %vm4496, %v4497, %v4495
        %v4499 = vrsqrt.pop %v4353
        %v4500 = vmul.f32 %v4353, %v4499
        %vm4501 = vcmp.eq.f32.partialorder %v4353, inf
        %v4502 = vsel %vm4501, %v4353, %v4500
        %vm4503 = vcmp.eq.f32.partialorder %v4353, 0.0
        %v4504 = vand.u32 %v4353, 2147483648
        %v4505 = vsel %vm4503, %v4504, %v4502
        %v4506 = vrsqrt.pop %v4354
        %v4507 = vmul.f32 %v4354, %v4506
        %vm4508 = vcmp.eq.f32.partialorder %v4354, inf
        %v4509 = vsel %vm4508, %v4354, %v4507
        %vm4510 = vcmp.eq.f32.partialorder %v4354, 0.0
        %v4511 = vand.u32 %v4354, 2147483648
        %v4512 = vsel %vm4510, %v4511, %v4509
        %v4513 = vrsqrt.pop %v4355
        %v4514 = vmul.f32 %v4355, %v4513
        %vm4515 = vcmp.eq.f32.partialorder %v4355, inf
        %v4516 = vsel %vm4515, %v4355, %v4514
        %vm4517 = vcmp.eq.f32.partialorder %v4355, 0.0
        %v4518 = vand.u32 %v4355, 2147483648
        %v4519 = vsel %vm4517, %v4518, %v4516
        %v4520 = vrsqrt.pop %v4356
        %v4521 = vmul.f32 %v4356, %v4520
        %vm4522 = vcmp.eq.f32.partialorder %v4356, inf
        %v4523 = vsel %vm4522, %v4356, %v4521
        %vm4524 = vcmp.eq.f32.partialorder %v4356, 0.0
        %v4525 = vand.u32 %v4356, 2147483648
        %v4526 = vsel %vm4524, %v4525, %v4523
        %v4527 = vrsqrt.pop %v4357
        %v4528 = vmul.f32 %v4357, %v4527
        %vm4529 = vcmp.eq.f32.partialorder %v4357, inf
        %v4530 = vsel %vm4529, %v4357, %v4528
        %vm4531 = vcmp.eq.f32.partialorder %v4357, 0.0
        %v4532 = vand.u32 %v4357, 2147483648
        %v4533 = vsel %vm4531, %v4532, %v4530
        %v4534 = vrsqrt.pop %v4358
        %v4535 = vmul.f32 %v4358, %v4534
        %vm4536 = vcmp.eq.f32.partialorder %v4358, inf
        %v4537 = vsel %vm4536, %v4358, %v4535
        %vm4538 = vcmp.eq.f32.partialorder %v4358, 0.0
        %v4539 = vand.u32 %v4358, 2147483648
        %v4540 = vsel %vm4538, %v4539, %v4537
        %v4541 = vrsqrt.pop %v4359
        %v4542 = vmul.f32 %v4359, %v4541
        %vm4543 = vcmp.eq.f32.partialorder %v4359, inf
        %v4544 = vsel %vm4543, %v4359, %v4542
        %vm4545 = vcmp.eq.f32.partialorder %v4359, 0.0
        %v4546 = vand.u32 %v4359, 2147483648
        %v4547 = vsel %vm4545, %v4546, %v4544
        %v4548 = vrsqrt.pop %v4360
        %v4549 = vmul.f32 %v4360, %v4548
        %vm4550 = vcmp.eq.f32.partialorder %v4360, inf
        %v4551 = vsel %vm4550, %v4360, %v4549
        %vm4552 = vcmp.eq.f32.partialorder %v4360, 0.0
        %v4553 = vand.u32 %v4360, 2147483648
        %v4554 = vsel %vm4552, %v4553, %v4551
        %v4555 = vrsqrt.pop %v4361
        %v4556 = vmul.f32 %v4361, %v4555
        %vm4557 = vcmp.eq.f32.partialorder %v4361, inf
        %v4558 = vsel %vm4557, %v4361, %v4556
        %vm4559 = vcmp.eq.f32.partialorder %v4361, 0.0
        %v4560 = vand.u32 %v4361, 2147483648
        %v4561 = vsel %vm4559, %v4560, %v4558
        %v4562 = vrsqrt.pop %v4362
        %v4563 = vmul.f32 %v4362, %v4562
        %vm4564 = vcmp.eq.f32.partialorder %v4362, inf
        %v4565 = vsel %vm4564, %v4362, %v4563
        %vm4566 = vcmp.eq.f32.partialorder %v4362, 0.0
        %v4567 = vand.u32 %v4362, 2147483648
        %v4568 = vsel %vm4566, %v4567, %v4565
        %v4569 = vrsqrt.pop %v4363
        %v4570 = vmul.f32 %v4363, %v4569
        %vm4571 = vcmp.eq.f32.partialorder %v4363, inf
        %v4572 = vsel %vm4571, %v4363, %v4570
        %vm4573 = vcmp.eq.f32.partialorder %v4363, 0.0
        %v4574 = vand.u32 %v4363, 2147483648
        %v4575 = vsel %vm4573, %v4574, %v4572
        %v4576 = vrsqrt.pop %v4364
        %v4577 = vmul.f32 %v4364, %v4576
        %vm4578 = vcmp.eq.f32.partialorder %v4364, inf
        %v4579 = vsel %vm4578, %v4364, %v4577
        %vm4580 = vcmp.eq.f32.partialorder %v4364, 0.0
        %v4581 = vand.u32 %v4364, 2147483648
        %v4582 = vsel %vm4580, %v4581, %v4579
        %v4583 = vrsqrt.pop %v4365
        %v4584 = vmul.f32 %v4365, %v4583
        %vm4585 = vcmp.eq.f32.partialorder %v4365, inf
        %v4586 = vsel %vm4585, %v4365, %v4584
        %vm4587 = vcmp.eq.f32.partialorder %v4365, 0.0
        %v4588 = vand.u32 %v4365, 2147483648
        %v4589 = vsel %vm4587, %v4588, %v4586
        %v4590 = vrsqrt.pop %v4366
        %v4591 = vmul.f32 %v4366, %v4590
        %vm4592 = vcmp.eq.f32.partialorder %v4366, inf
        %v4593 = vsel %vm4592, %v4366, %v4591
        %vm4594 = vcmp.eq.f32.partialorder %v4366, 0.0
        %v4595 = vand.u32 %v4366, 2147483648
        %v4596 = vsel %vm4594, %v4595, %v4593
        %v4597 = vrsqrt.pop %v4367
        %v4598 = vmul.f32 %v4367, %v4597
        %vm4599 = vcmp.eq.f32.partialorder %v4367, inf
        %v4600 = vsel %vm4599, %v4367, %v4598
        %vm4601 = vcmp.eq.f32.partialorder %v4367, 0.0
        %v4602 = vand.u32 %v4367, 2147483648
        %v4603 = vsel %vm4601, %v4602, %v4600
        %v4604 = vrsqrt.pop %v4368
        %v4605 = vmul.f32 %v4368, %v4604
        %vm4606 = vcmp.eq.f32.partialorder %v4368, inf
        %v4607 = vsel %vm4606, %v4368, %v4605
        %vm4608 = vcmp.eq.f32.partialorder %v4368, 0.0
        %v4609 = vand.u32 %v4368, 2147483648
        %v4610 = vsel %vm4608, %v4609, %v4607
        %v4611 = vrsqrt.pop %v4369
        %v4612 = vmul.f32 %v4369, %v4611
        %vm4613 = vcmp.eq.f32.partialorder %v4369, inf
        %v4614 = vsel %vm4613, %v4369, %v4612
        %vm4615 = vcmp.eq.f32.partialorder %v4369, 0.0
        %v4616 = vand.u32 %v4369, 2147483648
        %v4617 = vsel %vm4615, %v4616, %v4614
        %v4618 = vrsqrt.pop %v4370
        %v4619 = vmul.f32 %v4370, %v4618
        %vm4620 = vcmp.eq.f32.partialorder %v4370, inf
        %v4621 = vsel %vm4620, %v4370, %v4619
        %vm4622 = vcmp.eq.f32.partialorder %v4370, 0.0
        %v4623 = vand.u32 %v4370, 2147483648
        %v4624 = vsel %vm4622, %v4623, %v4621
        %v4625 = vrsqrt.pop %v4371
        %v4626 = vmul.f32 %v4371, %v4625
        %vm4627 = vcmp.eq.f32.partialorder %v4371, inf
        %v4628 = vsel %vm4627, %v4371, %v4626
        %vm4629 = vcmp.eq.f32.partialorder %v4371, 0.0
        %v4630 = vand.u32 %v4371, 2147483648
        %v4631 = vsel %vm4629, %v4630, %v4628
        %v4632 = vrsqrt.pop %v4372
        %v4633 = vmul.f32 %v4372, %v4632
        %vm4634 = vcmp.eq.f32.partialorder %v4372, inf
        %v4635 = vsel %vm4634, %v4372, %v4633
        %vm4636 = vcmp.eq.f32.partialorder %v4372, 0.0
        %v4637 = vand.u32 %v4372, 2147483648
        %v4638 = vsel %vm4636, %v4637, %v4635
        %v4639 = vrsqrt.pop %v4373
        %v4640 = vmul.f32 %v4373, %v4639
        %vm4641 = vcmp.eq.f32.partialorder %v4373, inf
        %v4642 = vsel %vm4641, %v4373, %v4640
        %vm4643 = vcmp.eq.f32.partialorder %v4373, 0.0
        %v4644 = vand.u32 %v4373, 2147483648
        %v4645 = vsel %vm4643, %v4644, %v4642
        %v4646 = vrsqrt.pop %v4374
        %v4647 = vmul.f32 %v4374, %v4646
        %vm4648 = vcmp.eq.f32.partialorder %v4374, inf
        %v4649 = vsel %vm4648, %v4374, %v4647
        %vm4650 = vcmp.eq.f32.partialorder %v4374, 0.0
        %v4651 = vand.u32 %v4374, 2147483648
        %v4652 = vsel %vm4650, %v4651, %v4649
        %v4653 = vrsqrt.pop %v4375
        %v4654 = vmul.f32 %v4375, %v4653
        %vm4655 = vcmp.eq.f32.partialorder %v4375, inf
        %v4656 = vsel %vm4655, %v4375, %v4654
        %vm4657 = vcmp.eq.f32.partialorder %v4375, 0.0
        %v4658 = vand.u32 %v4375, 2147483648
        %v4659 = vsel %vm4657, %v4658, %v4656
        %v4660 = vrsqrt.pop %v4376
        %v4661 = vmul.f32 %v4376, %v4660
        %vm4662 = vcmp.eq.f32.partialorder %v4376, inf
        %v4663 = vsel %vm4662, %v4376, %v4661
        %vm4664 = vcmp.eq.f32.partialorder %v4376, 0.0
        %v4665 = vand.u32 %v4376, 2147483648
        %v4666 = vsel %vm4664, %v4665, %v4663
        %v4667 = vrsqrt.pop %v4377
        %v4668 = vmul.f32 %v4377, %v4667
        %vm4669 = vcmp.eq.f32.partialorder %v4377, inf
        %v4670 = vsel %vm4669, %v4377, %v4668
        %vm4671 = vcmp.eq.f32.partialorder %v4377, 0.0
        %v4672 = vand.u32 %v4377, 2147483648
        %v4673 = vsel %vm4671, %v4672, %v4670
        %v4674 = vrsqrt.pop %v4378
        %v4675 = vmul.f32 %v4378, %v4674
        %vm4676 = vcmp.eq.f32.partialorder %v4378, inf
        %v4677 = vsel %vm4676, %v4378, %v4675
        %vm4678 = vcmp.eq.f32.partialorder %v4378, 0.0
        %v4679 = vand.u32 %v4378, 2147483648
        %v4680 = vsel %vm4678, %v4679, %v4677
        %v4681 = vrsqrt.pop %v4379
        %v4682 = vmul.f32 %v4379, %v4681
        %vm4683 = vcmp.eq.f32.partialorder %v4379, inf
        %v4684 = vsel %vm4683, %v4379, %v4682
        %vm4685 = vcmp.eq.f32.partialorder %v4379, 0.0
        %v4686 = vand.u32 %v4379, 2147483648
        %v4687 = vsel %vm4685, %v4686, %v4684
        %v4688 = vrsqrt.pop %v4380
        %v4689 = vmul.f32 %v4380, %v4688
        %vm4690 = vcmp.eq.f32.partialorder %v4380, inf
        %v4691 = vsel %vm4690, %v4380, %v4689
        %vm4692 = vcmp.eq.f32.partialorder %v4380, 0.0
        %v4693 = vand.u32 %v4380, 2147483648
        %v4694 = vsel %vm4692, %v4693, %v4691
        %v4695 = vrsqrt.pop %v4381
        %v4696 = vmul.f32 %v4381, %v4695
        %vm4697 = vcmp.eq.f32.partialorder %v4381, inf
        %v4698 = vsel %vm4697, %v4381, %v4696
        %vm4699 = vcmp.eq.f32.partialorder %v4381, 0.0
        %v4700 = vand.u32 %v4381, 2147483648
        %v4701 = vsel %vm4699, %v4700, %v4698
        %v4702 = vrsqrt.pop %v4382
        %v4703 = vmul.f32 %v4382, %v4702
        %vm4704 = vcmp.eq.f32.partialorder %v4382, inf
        %v4705 = vsel %vm4704, %v4382, %v4703
        %vm4706 = vcmp.eq.f32.partialorder %v4382, 0.0
        %v4707 = vand.u32 %v4382, 2147483648
        %v4708 = vsel %vm4706, %v4707, %v4705
        %v4709 = vrsqrt.pop %v4383
        %v4710 = vmul.f32 %v4383, %v4709
        %vm4711 = vcmp.eq.f32.partialorder %v4383, inf
        %v4712 = vsel %vm4711, %v4383, %v4710
        %vm4713 = vcmp.eq.f32.partialorder %v4383, 0.0
        %v4714 = vand.u32 %v4383, 2147483648
        %v4715 = vsel %vm4713, %v4714, %v4712
        %v4716 = vrsqrt.pop %v4384
        %v4717 = vmul.f32 %v4384, %v4716
        %vm4718 = vcmp.eq.f32.partialorder %v4384, inf
        %v4719 = vsel %vm4718, %v4384, %v4717
        %vm4720 = vcmp.eq.f32.partialorder %v4384, 0.0
        %v4721 = vand.u32 %v4384, 2147483648
        %v4722 = vsel %vm4720, %v4721, %v4719
        %v4723 = vrsqrt.pop %v4385
        %v4724 = vmul.f32 %v4385, %v4723
        %vm4725 = vcmp.eq.f32.partialorder %v4385, inf
        %v4726 = vsel %vm4725, %v4385, %v4724
        %vm4727 = vcmp.eq.f32.partialorder %v4385, 0.0
        %v4728 = vand.u32 %v4385, 2147483648
        %v4729 = vsel %vm4727, %v4728, %v4726
        %v4730 = vrsqrt.pop %v4386
        %v4731 = vmul.f32 %v4386, %v4730
        %vm4732 = vcmp.eq.f32.partialorder %v4386, inf
        %v4733 = vsel %vm4732, %v4386, %v4731
        %vm4734 = vcmp.eq.f32.partialorder %v4386, 0.0
        %v4735 = vand.u32 %v4386, 2147483648
        %v4736 = vsel %vm4734, %v4735, %v4733
        %v4737 = vrsqrt.pop %v4387
        %v4738 = vmul.f32 %v4387, %v4737
        %vm4739 = vcmp.eq.f32.partialorder %v4387, inf
        %v4740 = vsel %vm4739, %v4387, %v4738
        %vm4741 = vcmp.eq.f32.partialorder %v4387, 0.0
        %v4742 = vand.u32 %v4387, 2147483648
        %v4743 = vsel %vm4741, %v4742, %v4740
        %v4744 = vrsqrt.pop %v4388
        %v4745 = vmul.f32 %v4388, %v4744
        %vm4746 = vcmp.eq.f32.partialorder %v4388, inf
        %v4747 = vsel %vm4746, %v4388, %v4745
        %vm4748 = vcmp.eq.f32.partialorder %v4388, 0.0
        %v4749 = vand.u32 %v4388, 2147483648
        %v4750 = vsel %vm4748, %v4749, %v4747
        %v4751 = vrsqrt.pop %v4389
        %v4752 = vmul.f32 %v4389, %v4751
        %vm4753 = vcmp.eq.f32.partialorder %v4389, inf
        %v4754 = vsel %vm4753, %v4389, %v4752
        %vm4755 = vcmp.eq.f32.partialorder %v4389, 0.0
        %v4756 = vand.u32 %v4389, 2147483648
        %v4757 = vsel %vm4755, %v4756, %v4754
        %v4758 = vrsqrt.pop %v4390
        %v4759 = vmul.f32 %v4390, %v4758
        %vm4760 = vcmp.eq.f32.partialorder %v4390, inf
        %v4761 = vsel %vm4760, %v4390, %v4759
        %vm4762 = vcmp.eq.f32.partialorder %v4390, 0.0
        %v4763 = vand.u32 %v4390, 2147483648
        %v4764 = vsel %vm4762, %v4763, %v4761
        %v4765 = vrsqrt.pop %v4391
        %v4766 = vmul.f32 %v4391, %v4765
        %vm4767 = vcmp.eq.f32.partialorder %v4391, inf
        %v4768 = vsel %vm4767, %v4391, %v4766
        %vm4769 = vcmp.eq.f32.partialorder %v4391, 0.0
        %v4770 = vand.u32 %v4391, 2147483648
        %v4771 = vsel %vm4769, %v4770, %v4768
        %v4772 = vrsqrt.pop %v4392
        %v4773 = vmul.f32 %v4392, %v4772
        %vm4774 = vcmp.eq.f32.partialorder %v4392, inf
        %v4775 = vsel %vm4774, %v4392, %v4773
        %vm4776 = vcmp.eq.f32.partialorder %v4392, 0.0
        %v4777 = vand.u32 %v4392, 2147483648
        %v4778 = vsel %vm4776, %v4777, %v4775
        %v4779 = vrsqrt.pop %v4393
        %v4780 = vmul.f32 %v4393, %v4779
        %vm4781 = vcmp.eq.f32.partialorder %v4393, inf
        %v4782 = vsel %vm4781, %v4393, %v4780
        %vm4783 = vcmp.eq.f32.partialorder %v4393, 0.0
        %v4784 = vand.u32 %v4393, 2147483648
        %v4785 = vsel %vm4783, %v4784, %v4782
        %v4786 = vrsqrt.pop %v4394
        %v4787 = vmul.f32 %v4394, %v4786
        %vm4788 = vcmp.eq.f32.partialorder %v4394, inf
        %v4789 = vsel %vm4788, %v4394, %v4787
        %vm4790 = vcmp.eq.f32.partialorder %v4394, 0.0
        %v4791 = vand.u32 %v4394, 2147483648
        %v4792 = vsel %vm4790, %v4791, %v4789
        %v4793 = vrsqrt.pop %v4395
        %v4794 = vmul.f32 %v4395, %v4793
        %vm4795 = vcmp.eq.f32.partialorder %v4395, inf
        %v4796 = vsel %vm4795, %v4395, %v4794
        %vm4797 = vcmp.eq.f32.partialorder %v4395, 0.0
        %v4798 = vand.u32 %v4395, 2147483648
        %v4799 = vsel %vm4797, %v4798, %v4796
        %v4800 = vrsqrt.pop %v4396
        %v4801 = vmul.f32 %v4396, %v4800
        %vm4802 = vcmp.eq.f32.partialorder %v4396, inf
        %v4803 = vsel %vm4802, %v4396, %v4801
        %vm4804 = vcmp.eq.f32.partialorder %v4396, 0.0
        %v4805 = vand.u32 %v4396, 2147483648
        %v4806 = vsel %vm4804, %v4805, %v4803
        %v4807 = vrsqrt.pop %v4397
        %v4808 = vmul.f32 %v4397, %v4807
        %vm4809 = vcmp.eq.f32.partialorder %v4397, inf
        %v4810 = vsel %vm4809, %v4397, %v4808
        %vm4811 = vcmp.eq.f32.partialorder %v4397, 0.0
        %v4812 = vand.u32 %v4397, 2147483648
        %v4813 = vsel %vm4811, %v4812, %v4810
        %v4814 = vrsqrt.pop %v4398
        %v4815 = vmul.f32 %v4398, %v4814
        %vm4816 = vcmp.eq.f32.partialorder %v4398, inf
        %v4817 = vsel %vm4816, %v4398, %v4815
        %vm4818 = vcmp.eq.f32.partialorder %v4398, 0.0
        %v4819 = vand.u32 %v4398, 2147483648
        %v4820 = vsel %vm4818, %v4819, %v4817
        %v4821 = vrsqrt.pop %v4399
        %v4822 = vmul.f32 %v4399, %v4821
        %vm4823 = vcmp.eq.f32.partialorder %v4399, inf
        %v4824 = vsel %vm4823, %v4399, %v4822
        %vm4825 = vcmp.eq.f32.partialorder %v4399, 0.0
        %v4826 = vand.u32 %v4399, 2147483648
        %v4827 = vsel %vm4825, %v4826, %v4824
        %v4828 = vrsqrt.pop %v4400
        %v4829 = vmul.f32 %v4400, %v4828
        %vm4830 = vcmp.eq.f32.partialorder %v4400, inf
        %v4831 = vsel %vm4830, %v4400, %v4829
        %vm4832 = vcmp.eq.f32.partialorder %v4400, 0.0
        %v4833 = vand.u32 %v4400, 2147483648
        %v4834 = vsel %vm4832, %v4833, %v4831
        %v4835 = vrsqrt.pop %v4401
        %v4836 = vmul.f32 %v4401, %v4835
        %vm4837 = vcmp.eq.f32.partialorder %v4401, inf
        %v4838 = vsel %vm4837, %v4401, %v4836
        %vm4839 = vcmp.eq.f32.partialorder %v4401, 0.0
        %v4840 = vand.u32 %v4401, 2147483648
        %v4841 = vsel %vm4839, %v4840, %v4838
        %v4842 = vrsqrt.pop %v4402
        %v4843 = vmul.f32 %v4402, %v4842
        %vm4844 = vcmp.eq.f32.partialorder %v4402, inf
        %v4845 = vsel %vm4844, %v4402, %v4843
        %vm4846 = vcmp.eq.f32.partialorder %v4402, 0.0
        %v4847 = vand.u32 %v4402, 2147483648
        %v4848 = vsel %vm4846, %v4847, %v4845
        %v4849 = vrsqrt.pop %v4403
        %v4850 = vmul.f32 %v4403, %v4849
        %vm4851 = vcmp.eq.f32.partialorder %v4403, inf
        %v4852 = vsel %vm4851, %v4403, %v4850
        %vm4853 = vcmp.eq.f32.partialorder %v4403, 0.0
        %v4854 = vand.u32 %v4403, 2147483648
        %v4855 = vsel %vm4853, %v4854, %v4852
        %v4856 = vrsqrt.pop %v4404
        %v4857 = vmul.f32 %v4404, %v4856
        %vm4858 = vcmp.eq.f32.partialorder %v4404, inf
        %v4859 = vsel %vm4858, %v4404, %v4857
        %vm4860 = vcmp.eq.f32.partialorder %v4404, 0.0
        %v4861 = vand.u32 %v4404, 2147483648
        %v4862 = vsel %vm4860, %v4861, %v4859
        %v4863 = vrsqrt.pop %v4405
        %v4864 = vmul.f32 %v4405, %v4863
        %vm4865 = vcmp.eq.f32.partialorder %v4405, inf
        %v4866 = vsel %vm4865, %v4405, %v4864
        %vm4867 = vcmp.eq.f32.partialorder %v4405, 0.0
        %v4868 = vand.u32 %v4405, 2147483648
        %v4869 = vsel %vm4867, %v4868, %v4866
        %v4870 = vrsqrt.pop %v4406
        %v4871 = vmul.f32 %v4406, %v4870
        %vm4872 = vcmp.eq.f32.partialorder %v4406, inf
        %v4873 = vsel %vm4872, %v4406, %v4871
        %vm4874 = vcmp.eq.f32.partialorder %v4406, 0.0
        %v4875 = vand.u32 %v4406, 2147483648
        %v4876 = vsel %vm4874, %v4875, %v4873
        %v4877 = vrsqrt.pop %v4407
        %v4878 = vmul.f32 %v4407, %v4877
        %vm4879 = vcmp.eq.f32.partialorder %v4407, inf
        %v4880 = vsel %vm4879, %v4407, %v4878
        %vm4881 = vcmp.eq.f32.partialorder %v4407, 0.0
        %v4882 = vand.u32 %v4407, 2147483648
        %v4883 = vsel %vm4881, %v4882, %v4880
        %v4884 = vrsqrt.pop %v4408
        %v4885 = vmul.f32 %v4408, %v4884
        %vm4886 = vcmp.eq.f32.partialorder %v4408, inf
        %v4887 = vsel %vm4886, %v4408, %v4885
        %vm4888 = vcmp.eq.f32.partialorder %v4408, 0.0
        %v4889 = vand.u32 %v4408, 2147483648
        %v4890 = vsel %vm4888, %v4889, %v4887
        %v4891 = vrsqrt.pop %v4409
        %v4892 = vmul.f32 %v4409, %v4891
        %vm4893 = vcmp.eq.f32.partialorder %v4409, inf
        %v4894 = vsel %vm4893, %v4409, %v4892
        %vm4895 = vcmp.eq.f32.partialorder %v4409, 0.0
        %v4896 = vand.u32 %v4409, 2147483648
        %v4897 = vsel %vm4895, %v4896, %v4894
        %v4898 = vrsqrt.pop %v4410
        %v4899 = vmul.f32 %v4410, %v4898
        %vm4900 = vcmp.eq.f32.partialorder %v4410, inf
        %v4901 = vsel %vm4900, %v4410, %v4899
        %vm4902 = vcmp.eq.f32.partialorder %v4410, 0.0
        %v4903 = vand.u32 %v4410, 2147483648
        %v4904 = vsel %vm4902, %v4903, %v4901
        %v4905 = vrsqrt.pop %v4411
        %v4906 = vmul.f32 %v4411, %v4905
        %vm4907 = vcmp.eq.f32.partialorder %v4411, inf
        %v4908 = vsel %vm4907, %v4411, %v4906
        %vm4909 = vcmp.eq.f32.partialorder %v4411, 0.0
        %v4910 = vand.u32 %v4411, 2147483648
        %v4911 = vsel %vm4909, %v4910, %v4908
        %v4912 = vrsqrt.pop %v4412
        %v4913 = vmul.f32 %v4412, %v4912
        %vm4914 = vcmp.eq.f32.partialorder %v4412, inf
        %v4915 = vsel %vm4914, %v4412, %v4913
        %vm4916 = vcmp.eq.f32.partialorder %v4412, 0.0
        %v4917 = vand.u32 %v4412, 2147483648
        %v4918 = vsel %vm4916, %v4917, %v4915
        %v4919 = vrsqrt.pop %v4413
        %v4920 = vmul.f32 %v4413, %v4919
        %vm4921 = vcmp.eq.f32.partialorder %v4413, inf
        %v4922 = vsel %vm4921, %v4413, %v4920
        %vm4923 = vcmp.eq.f32.partialorder %v4413, 0.0
        %v4924 = vand.u32 %v4413, 2147483648
        %v4925 = vsel %vm4923, %v4924, %v4922
        %v4926 = vrsqrt.pop %v4414
        %v4927 = vmul.f32 %v4414, %v4926
        %vm4928 = vcmp.eq.f32.partialorder %v4414, inf
        %v4929 = vsel %vm4928, %v4414, %v4927
        %vm4930 = vcmp.eq.f32.partialorder %v4414, 0.0
        %v4931 = vand.u32 %v4414, 2147483648
        %v4932 = vsel %vm4930, %v4931, %v4929
        %v4933 = vrsqrt.pop %v4415
        %v4934 = vmul.f32 %v4415, %v4933
        %vm4935 = vcmp.eq.f32.partialorder %v4415, inf
        %v4936 = vsel %vm4935, %v4415, %v4934
        %vm4937 = vcmp.eq.f32.partialorder %v4415, 0.0
        %v4938 = vand.u32 %v4415, 2147483648
        %v4939 = vsel %vm4937, %v4938, %v4936
        %v4940 = vrsqrt.pop %v4416
        %v4941 = vmul.f32 %v4416, %v4940
        %vm4942 = vcmp.eq.f32.partialorder %v4416, inf
        %v4943 = vsel %vm4942, %v4416, %v4941
        %vm4944 = vcmp.eq.f32.partialorder %v4416, 0.0
        %v4945 = vand.u32 %v4416, 2147483648
        %v4946 = vsel %vm4944, %v4945, %v4943
        %v4947 = vrsqrt.pop %v4417
        %v4948 = vmul.f32 %v4417, %v4947
        %vm4949 = vcmp.eq.f32.partialorder %v4417, inf
        %v4950 = vsel %vm4949, %v4417, %v4948
        %vm4951 = vcmp.eq.f32.partialorder %v4417, 0.0
        %v4952 = vand.u32 %v4417, 2147483648
        %v4953 = vsel %vm4951, %v4952, %v4950
        %v4954 = vrsqrt.pop %v4418
        %v4955 = vmul.f32 %v4418, %v4954
        %vm4956 = vcmp.eq.f32.partialorder %v4418, inf
        %v4957 = vsel %vm4956, %v4418, %v4955
        %vm4958 = vcmp.eq.f32.partialorder %v4418, 0.0
        %v4959 = vand.u32 %v4418, 2147483648
        %v4960 = vsel %vm4958, %v4959, %v4957
        %v4961 = vrsqrt.pop %v4419
        %v4962 = vmul.f32 %v4419, %v4961
        %vm4963 = vcmp.eq.f32.partialorder %v4419, inf
        %v4964 = vsel %vm4963, %v4419, %v4962
        %vm4965 = vcmp.eq.f32.partialorder %v4419, 0.0
        %v4966 = vand.u32 %v4419, 2147483648
        %v4967 = vsel %vm4965, %v4966, %v4964
        %v4968 = vrsqrt.pop %v4420
        %v4969 = vmul.f32 %v4420, %v4968
        %vm4970 = vcmp.eq.f32.partialorder %v4420, inf
        %v4971 = vsel %vm4970, %v4420, %v4969
        %vm4972 = vcmp.eq.f32.partialorder %v4420, 0.0
        %v4973 = vand.u32 %v4420, 2147483648
        %v4974 = vsel %vm4972, %v4973, %v4971
        %v4975 = vrsqrt.pop %v4421
        %v4976 = vmul.f32 %v4421, %v4975
        %vm4977 = vcmp.eq.f32.partialorder %v4421, inf
        %v4978 = vsel %vm4977, %v4421, %v4976
        %vm4979 = vcmp.eq.f32.partialorder %v4421, 0.0
        %v4980 = vand.u32 %v4421, 2147483648
        %v4981 = vsel %vm4979, %v4980, %v4978
        %v4982 = vrsqrt.pop %v4422
        %v4983 = vmul.f32 %v4422, %v4982
        %vm4984 = vcmp.eq.f32.partialorder %v4422, inf
        %v4985 = vsel %vm4984, %v4422, %v4983
        %vm4986 = vcmp.eq.f32.partialorder %v4422, 0.0
        %v4987 = vand.u32 %v4422, 2147483648
        %v4988 = vsel %vm4986, %v4987, %v4985
        %v4989 = vrsqrt.pop %v4423
        %v4990 = vmul.f32 %v4423, %v4989
        %vm4991 = vcmp.eq.f32.partialorder %v4423, inf
        %v4992 = vsel %vm4991, %v4423, %v4990
        %vm4993 = vcmp.eq.f32.partialorder %v4423, 0.0
        %v4994 = vand.u32 %v4423, 2147483648
        %v4995 = vsel %vm4993, %v4994, %v4992
        %v4996 = vrsqrt.pop %v4424
        %v4997 = vmul.f32 %v4424, %v4996
        %vm4998 = vcmp.eq.f32.partialorder %v4424, inf
        %v4999 = vsel %vm4998, %v4424, %v4997
        %vm5000 = vcmp.eq.f32.partialorder %v4424, 0.0
        %v5001 = vand.u32 %v4424, 2147483648
        %v5002 = vsel %vm5000, %v5001, %v4999
        %v5003 = vrsqrt.pop %v4425
        %v5004 = vmul.f32 %v4425, %v5003
        %vm5005 = vcmp.eq.f32.partialorder %v4425, inf
        %v5006 = vsel %vm5005, %v4425, %v5004
        %vm5007 = vcmp.eq.f32.partialorder %v4425, 0.0
        %v5008 = vand.u32 %v4425, 2147483648
        %v5009 = vsel %vm5007, %v5008, %v5006
        %v5010 = vrsqrt.pop %v4426
        %v5011 = vmul.f32 %v4426, %v5010
        %vm5012 = vcmp.eq.f32.partialorder %v4426, inf
        %v5013 = vsel %vm5012, %v4426, %v5011
        %vm5014 = vcmp.eq.f32.partialorder %v4426, 0.0
        %v5015 = vand.u32 %v4426, 2147483648
        %v5016 = vsel %vm5014, %v5015, %v5013
        %v5017 = vrsqrt.pop %v4427
        %v5018 = vmul.f32 %v4427, %v5017
        %vm5019 = vcmp.eq.f32.partialorder %v4427, inf
        %v5020 = vsel %vm5019, %v4427, %v5018
        %vm5021 = vcmp.eq.f32.partialorder %v4427, 0.0
        %v5022 = vand.u32 %v4427, 2147483648
        %v5023 = vsel %vm5021, %v5022, %v5020
        %v5024 = vrsqrt.pop %v4428
        %v5025 = vmul.f32 %v4428, %v5024
        %vm5026 = vcmp.eq.f32.partialorder %v4428, inf
        %v5027 = vsel %vm5026, %v4428, %v5025
        %vm5028 = vcmp.eq.f32.partialorder %v4428, 0.0
        %v5029 = vand.u32 %v4428, 2147483648
        %v5030 = vsel %vm5028, %v5029, %v5027
        %v5031 = vrsqrt.pop %v4429
        %v5032 = vmul.f32 %v4429, %v5031
        %vm5033 = vcmp.eq.f32.partialorder %v4429, inf
        %v5034 = vsel %vm5033, %v4429, %v5032
        %vm5035 = vcmp.eq.f32.partialorder %v4429, 0.0
        %v5036 = vand.u32 %v4429, 2147483648
        %v5037 = vsel %vm5035, %v5036, %v5034
        %v5038 = vrsqrt.pop %v4430
        %v5039 = vmul.f32 %v4430, %v5038
        %vm5040 = vcmp.eq.f32.partialorder %v4430, inf
        %v5041 = vsel %vm5040, %v4430, %v5039
        %vm5042 = vcmp.eq.f32.partialorder %v4430, 0.0
        %v5043 = vand.u32 %v4430, 2147483648
        %v5044 = vsel %vm5042, %v5043, %v5041
        %v5045 = vrsqrt.pop %v4431
        %v5046 = vmul.f32 %v4431, %v5045
        %vm5047 = vcmp.eq.f32.partialorder %v4431, inf
        %v5048 = vsel %vm5047, %v4431, %v5046
        %vm5049 = vcmp.eq.f32.partialorder %v4431, 0.0
        %v5050 = vand.u32 %v4431, 2147483648
        %v5051 = vsel %vm5049, %v5050, %v5048
        %v5052 = vrsqrt.pop %v4432
        %v5053 = vmul.f32 %v4432, %v5052
        %vm5054 = vcmp.eq.f32.partialorder %v4432, inf
        %v5055 = vsel %vm5054, %v4432, %v5053
        %vm5056 = vcmp.eq.f32.partialorder %v4432, 0.0
        %v5057 = vand.u32 %v4432, 2147483648
        %v5058 = vsel %vm5056, %v5057, %v5055
        %v5059 = vrsqrt.pop %v4433
        %v5060 = vmul.f32 %v4433, %v5059
        %vm5061 = vcmp.eq.f32.partialorder %v4433, inf
        %v5062 = vsel %vm5061, %v4433, %v5060
        %vm5063 = vcmp.eq.f32.partialorder %v4433, 0.0
        %v5064 = vand.u32 %v4433, 2147483648
        %v5065 = vsel %vm5063, %v5064, %v5062
        %v5066 = vrsqrt.pop %v4434
        %v5067 = vmul.f32 %v4434, %v5066
        %vm5068 = vcmp.eq.f32.partialorder %v4434, inf
        %v5069 = vsel %vm5068, %v4434, %v5067
        %vm5070 = vcmp.eq.f32.partialorder %v4434, 0.0
        %v5071 = vand.u32 %v4434, 2147483648
        %v5072 = vsel %vm5070, %v5071, %v5069
        %v5073 = vrsqrt.pop %v4435
        %v5074 = vmul.f32 %v4435, %v5073
        %vm5075 = vcmp.eq.f32.partialorder %v4435, inf
        %v5076 = vsel %vm5075, %v4435, %v5074
        %vm5077 = vcmp.eq.f32.partialorder %v4435, 0.0
        %v5078 = vand.u32 %v4435, 2147483648
        %v5079 = vsel %vm5077, %v5078, %v5076
        %v5080 = vrsqrt.pop %v4436
        %v5081 = vmul.f32 %v4436, %v5080
        %vm5082 = vcmp.eq.f32.partialorder %v4436, inf
        %v5083 = vsel %vm5082, %v4436, %v5081
        %vm5084 = vcmp.eq.f32.partialorder %v4436, 0.0
        %v5085 = vand.u32 %v4436, 2147483648
        %v5086 = vsel %vm5084, %v5085, %v5083
        %v5087 = vrsqrt.pop %v4437
        %v5088 = vmul.f32 %v4437, %v5087
        %vm5089 = vcmp.eq.f32.partialorder %v4437, inf
        %v5090 = vsel %vm5089, %v4437, %v5088
        %vm5091 = vcmp.eq.f32.partialorder %v4437, 0.0
        %v5092 = vand.u32 %v4437, 2147483648
        %v5093 = vsel %vm5091, %v5092, %v5090
        %v5094 = vrsqrt.pop %v4438
        %v5095 = vmul.f32 %v4438, %v5094
        %vm5096 = vcmp.eq.f32.partialorder %v4438, inf
        %v5097 = vsel %vm5096, %v4438, %v5095
        %vm5098 = vcmp.eq.f32.partialorder %v4438, 0.0
        %v5099 = vand.u32 %v4438, 2147483648
        %v5100 = vsel %vm5098, %v5099, %v5097
        %v5101 = vrsqrt.pop %v4439
        %v5102 = vmul.f32 %v4439, %v5101
        %vm5103 = vcmp.eq.f32.partialorder %v4439, inf
        %v5104 = vsel %vm5103, %v4439, %v5102
        %vm5105 = vcmp.eq.f32.partialorder %v4439, 0.0
        %v5106 = vand.u32 %v4439, 2147483648
        %v5107 = vsel %vm5105, %v5106, %v5104
        %v5108 = vrsqrt.pop %v4440
        %v5109 = vmul.f32 %v4440, %v5108
        %vm5110 = vcmp.eq.f32.partialorder %v4440, inf
        %v5111 = vsel %vm5110, %v4440, %v5109
        %vm5112 = vcmp.eq.f32.partialorder %v4440, 0.0
        %v5113 = vand.u32 %v4440, 2147483648
        %v5114 = vsel %vm5112, %v5113, %v5111
        %v5115 = vrsqrt.pop %v4441
        %v5116 = vmul.f32 %v4441, %v5115
        %vm5117 = vcmp.eq.f32.partialorder %v4441, inf
        %v5118 = vsel %vm5117, %v4441, %v5116
        %vm5119 = vcmp.eq.f32.partialorder %v4441, 0.0
        %v5120 = vand.u32 %v4441, 2147483648
        %v5121 = vsel %vm5119, %v5120, %v5118
        %v5122 = vrsqrt.pop %v4442
        %v5123 = vmul.f32 %v4442, %v5122
        %vm5124 = vcmp.eq.f32.partialorder %v4442, inf
        %v5125 = vsel %vm5124, %v4442, %v5123
        %vm5126 = vcmp.eq.f32.partialorder %v4442, 0.0
        %v5127 = vand.u32 %v4442, 2147483648
        %v5128 = vsel %vm5126, %v5127, %v5125
        %v5129 = vrsqrt.pop %v4443
        %v5130 = vmul.f32 %v4443, %v5129
        %vm5131 = vcmp.eq.f32.partialorder %v4443, inf
        %v5132 = vsel %vm5131, %v4443, %v5130
        %vm5133 = vcmp.eq.f32.partialorder %v4443, 0.0
        %v5134 = vand.u32 %v4443, 2147483648
        %v5135 = vsel %vm5133, %v5134, %v5132
        %v5136 = vrsqrt.pop %v4444
        %v5137 = vmul.f32 %v4444, %v5136
        %vm5138 = vcmp.eq.f32.partialorder %v4444, inf
        %v5139 = vsel %vm5138, %v4444, %v5137
        %vm5140 = vcmp.eq.f32.partialorder %v4444, 0.0
        %v5141 = vand.u32 %v4444, 2147483648
        %v5142 = vsel %vm5140, %v5141, %v5139
        %v5143 = vrsqrt.pop %v4445
        %v5144 = vmul.f32 %v4445, %v5143
        %vm5145 = vcmp.eq.f32.partialorder %v4445, inf
        %v5146 = vsel %vm5145, %v4445, %v5144
        %vm5147 = vcmp.eq.f32.partialorder %v4445, 0.0
        %v5148 = vand.u32 %v4445, 2147483648
        %v5149 = vsel %vm5147, %v5148, %v5146
        %v5150 = vrsqrt.pop %v4446
        %v5151 = vmul.f32 %v4446, %v5150
        %vm5152 = vcmp.eq.f32.partialorder %v4446, inf
        %v5153 = vsel %vm5152, %v4446, %v5151
        %vm5154 = vcmp.eq.f32.partialorder %v4446, 0.0
        %v5155 = vand.u32 %v4446, 2147483648
        %v5156 = vsel %vm5154, %v5155, %v5153
        %v5157 = vrsqrt.pop %v4447
        %v5158 = vmul.f32 %v4447, %v5157
        %vm5159 = vcmp.eq.f32.partialorder %v4447, inf
        %v5160 = vsel %vm5159, %v4447, %v5158
        %vm5161 = vcmp.eq.f32.partialorder %v4447, 0.0
        %v5162 = vand.u32 %v4447, 2147483648
        %v5163 = vsel %vm5161, %v5162, %v5160
        %v5164 = vrsqrt.pop %v4448
        %v5165 = vmul.f32 %v4448, %v5164
        %vm5166 = vcmp.eq.f32.partialorder %v4448, inf
        %v5167 = vsel %vm5166, %v4448, %v5165
        %vm5168 = vcmp.eq.f32.partialorder %v4448, 0.0
        %v5169 = vand.u32 %v4448, 2147483648
        %v5170 = vsel %vm5168, %v5169, %v5167
        %v5171 = vrsqrt.pop %v4449
        %v5172 = vmul.f32 %v4449, %v5171
        %vm5173 = vcmp.eq.f32.partialorder %v4449, inf
        %v5174 = vsel %vm5173, %v4449, %v5172
        %vm5175 = vcmp.eq.f32.partialorder %v4449, 0.0
        %v5176 = vand.u32 %v4449, 2147483648
        %v5177 = vsel %vm5175, %v5176, %v5174
        %v5178 = vrsqrt.pop %v4450
        %v5179 = vmul.f32 %v4450, %v5178
        %vm5180 = vcmp.eq.f32.partialorder %v4450, inf
        %v5181 = vsel %vm5180, %v4450, %v5179
        %vm5182 = vcmp.eq.f32.partialorder %v4450, 0.0
        %v5183 = vand.u32 %v4450, 2147483648
        %v5184 = vsel %vm5182, %v5183, %v5181
        %v5185 = vrsqrt.pop %v4451
        %v5186 = vmul.f32 %v4451, %v5185
        %vm5187 = vcmp.eq.f32.partialorder %v4451, inf
        %v5188 = vsel %vm5187, %v4451, %v5186
        %vm5189 = vcmp.eq.f32.partialorder %v4451, 0.0
        %v5190 = vand.u32 %v4451, 2147483648
        %v5191 = vsel %vm5189, %v5190, %v5188
        %v5192 = vrsqrt.pop %v4452
        %v5193 = vmul.f32 %v4452, %v5192
        %vm5194 = vcmp.eq.f32.partialorder %v4452, inf
        %v5195 = vsel %vm5194, %v4452, %v5193
        %vm5196 = vcmp.eq.f32.partialorder %v4452, 0.0
        %v5197 = vand.u32 %v4452, 2147483648
        %v5198 = vsel %vm5196, %v5197, %v5195
        %v5199 = vrsqrt.pop %v4453
        %v5200 = vmul.f32 %v4453, %v5199
        %vm5201 = vcmp.eq.f32.partialorder %v4453, inf
        %v5202 = vsel %vm5201, %v4453, %v5200
        %vm5203 = vcmp.eq.f32.partialorder %v4453, 0.0
        %v5204 = vand.u32 %v4453, 2147483648
        %v5205 = vsel %vm5203, %v5204, %v5202
        %v5206 = vrsqrt.pop %v4454
        %v5207 = vmul.f32 %v4454, %v5206
        %vm5208 = vcmp.eq.f32.partialorder %v4454, inf
        %v5209 = vsel %vm5208, %v4454, %v5207
        %vm5210 = vcmp.eq.f32.partialorder %v4454, 0.0
        %v5211 = vand.u32 %v4454, 2147483648
        %v5212 = vsel %vm5210, %v5211, %v5209
        %v5213 = vrsqrt.pop %v4455
        %v5214 = vmul.f32 %v4455, %v5213
        %vm5215 = vcmp.eq.f32.partialorder %v4455, inf
        %v5216 = vsel %vm5215, %v4455, %v5214
        %vm5217 = vcmp.eq.f32.partialorder %v4455, 0.0
        %v5218 = vand.u32 %v4455, 2147483648
        %v5219 = vsel %vm5217, %v5218, %v5216
        %v5220 = vrsqrt.pop %v4456
        %v5221 = vmul.f32 %v4456, %v5220
        %vm5222 = vcmp.eq.f32.partialorder %v4456, inf
        %v5223 = vsel %vm5222, %v4456, %v5221
        %vm5224 = vcmp.eq.f32.partialorder %v4456, 0.0
        %v5225 = vand.u32 %v4456, 2147483648
        %v5226 = vsel %vm5224, %v5225, %v5223
        %v5227 = vrsqrt.pop %v4457
        %v5228 = vmul.f32 %v4457, %v5227
        %vm5229 = vcmp.eq.f32.partialorder %v4457, inf
        %v5230 = vsel %vm5229, %v4457, %v5228
        %vm5231 = vcmp.eq.f32.partialorder %v4457, 0.0
        %v5232 = vand.u32 %v4457, 2147483648
        %v5233 = vsel %vm5231, %v5232, %v5230
        %v5234 = vrsqrt.pop %v4458
        %v5235 = vmul.f32 %v4458, %v5234
        %vm5236 = vcmp.eq.f32.partialorder %v4458, inf
        %v5237 = vsel %vm5236, %v4458, %v5235
        %vm5238 = vcmp.eq.f32.partialorder %v4458, 0.0
        %v5239 = vand.u32 %v4458, 2147483648
        %v5240 = vsel %vm5238, %v5239, %v5237
        %v5241 = vrsqrt.pop %v4459
        %v5242 = vmul.f32 %v4459, %v5241
        %vm5243 = vcmp.eq.f32.partialorder %v4459, inf
        %v5244 = vsel %vm5243, %v4459, %v5242
        %vm5245 = vcmp.eq.f32.partialorder %v4459, 0.0
        %v5246 = vand.u32 %v4459, 2147483648
        %v5247 = vsel %vm5245, %v5246, %v5244
        %v5248 = vrsqrt.pop %v4460
        %v5249 = vmul.f32 %v4460, %v5248
        %vm5250 = vcmp.eq.f32.partialorder %v4460, inf
        %v5251 = vsel %vm5250, %v4460, %v5249
        %vm5252 = vcmp.eq.f32.partialorder %v4460, 0.0
        %v5253 = vand.u32 %v4460, 2147483648
        %v5254 = vsel %vm5252, %v5253, %v5251
        %v5255 = vrsqrt.pop %v4461
        %v5256 = vmul.f32 %v4461, %v5255
        %vm5257 = vcmp.eq.f32.partialorder %v4461, inf
        %v5258 = vsel %vm5257, %v4461, %v5256
        %vm5259 = vcmp.eq.f32.partialorder %v4461, 0.0
        %v5260 = vand.u32 %v4461, 2147483648
        %v5261 = vsel %vm5259, %v5260, %v5258
        %v5262 = vrsqrt.pop %v4462
        %v5263 = vmul.f32 %v4462, %v5262
        %vm5264 = vcmp.eq.f32.partialorder %v4462, inf
        %v5265 = vsel %vm5264, %v4462, %v5263
        %vm5266 = vcmp.eq.f32.partialorder %v4462, 0.0
        %v5267 = vand.u32 %v4462, 2147483648
        %v5268 = vsel %vm5266, %v5267, %v5265
        %v5269 = vrsqrt.pop %v4463
        %v5270 = vmul.f32 %v4463, %v5269
        %vm5271 = vcmp.eq.f32.partialorder %v4463, inf
        %v5272 = vsel %vm5271, %v4463, %v5270
        %vm5273 = vcmp.eq.f32.partialorder %v4463, 0.0
        %v5274 = vand.u32 %v4463, 2147483648
        %v5275 = vsel %vm5273, %v5274, %v5272
        %v5276 = vrsqrt.pop %v4464
        %v5277 = vmul.f32 %v4464, %v5276
        %vm5278 = vcmp.eq.f32.partialorder %v4464, inf
        %v5279 = vsel %vm5278, %v4464, %v5277
        %vm5280 = vcmp.eq.f32.partialorder %v4464, 0.0
        %v5281 = vand.u32 %v4464, 2147483648
        %v5282 = vsel %vm5280, %v5281, %v5279
        %v5283 = vrsqrt.pop %v4465
        %v5284 = vmul.f32 %v4465, %v5283
        %vm5285 = vcmp.eq.f32.partialorder %v4465, inf
        %v5286 = vsel %vm5285, %v4465, %v5284
        %vm5287 = vcmp.eq.f32.partialorder %v4465, 0.0
        %v5288 = vand.u32 %v4465, 2147483648
        %v5289 = vsel %vm5287, %v5288, %v5286
        %v5290 = vrsqrt.pop %v4466
        %v5291 = vmul.f32 %v4466, %v5290
        %vm5292 = vcmp.eq.f32.partialorder %v4466, inf
        %v5293 = vsel %vm5292, %v4466, %v5291
        %vm5294 = vcmp.eq.f32.partialorder %v4466, 0.0
        %v5295 = vand.u32 %v4466, 2147483648
        %v5296 = vsel %vm5294, %v5295, %v5293
        %v5297 = vrsqrt.pop %v4467
        %v5298 = vmul.f32 %v4467, %v5297
        %vm5299 = vcmp.eq.f32.partialorder %v4467, inf
        %v5300 = vsel %vm5299, %v4467, %v5298
        %vm5301 = vcmp.eq.f32.partialorder %v4467, 0.0
        %v5302 = vand.u32 %v4467, 2147483648
        %v5303 = vsel %vm5301, %v5302, %v5300
        %v5304 = vrsqrt.pop %v4468
        %v5305 = vmul.f32 %v4468, %v5304
        %vm5306 = vcmp.eq.f32.partialorder %v4468, inf
        %v5307 = vsel %vm5306, %v4468, %v5305
        %vm5308 = vcmp.eq.f32.partialorder %v4468, 0.0
        %v5309 = vand.u32 %v4468, 2147483648
        %v5310 = vsel %vm5308, %v5309, %v5307
        %v5311 = vrsqrt.pop %v4469
        %v5312 = vmul.f32 %v4469, %v5311
        %vm5313 = vcmp.eq.f32.partialorder %v4469, inf
        %v5314 = vsel %vm5313, %v4469, %v5312
        %vm5315 = vcmp.eq.f32.partialorder %v4469, 0.0
        %v5316 = vand.u32 %v4469, 2147483648
        %v5317 = vsel %vm5315, %v5316, %v5314
        %v5318 = vrsqrt.pop %v4470
        %v5319 = vmul.f32 %v4470, %v5318
        %vm5320 = vcmp.eq.f32.partialorder %v4470, inf
        %v5321 = vsel %vm5320, %v4470, %v5319
        %vm5322 = vcmp.eq.f32.partialorder %v4470, 0.0
        %v5323 = vand.u32 %v4470, 2147483648
        %v5324 = vsel %vm5322, %v5323, %v5321
        %v5325 = vrsqrt.pop %v4471
        %v5326 = vmul.f32 %v4471, %v5325
        %vm5327 = vcmp.eq.f32.partialorder %v4471, inf
        %v5328 = vsel %vm5327, %v4471, %v5326
        %vm5329 = vcmp.eq.f32.partialorder %v4471, 0.0
        %v5330 = vand.u32 %v4471, 2147483648
        %v5331 = vsel %vm5329, %v5330, %v5328
        %v5332 = vrsqrt.pop %v4472
        %v5333 = vmul.f32 %v4472, %v5332
        %vm5334 = vcmp.eq.f32.partialorder %v4472, inf
        %v5335 = vsel %vm5334, %v4472, %v5333
        %vm5336 = vcmp.eq.f32.partialorder %v4472, 0.0
        %v5337 = vand.u32 %v4472, 2147483648
        %v5338 = vsel %vm5336, %v5337, %v5335
        %v5339 = vrsqrt.pop %v4473
        %v5340 = vmul.f32 %v4473, %v5339
        %vm5341 = vcmp.eq.f32.partialorder %v4473, inf
        %v5342 = vsel %vm5341, %v4473, %v5340
        %vm5343 = vcmp.eq.f32.partialorder %v4473, 0.0
        %v5344 = vand.u32 %v4473, 2147483648
        %v5345 = vsel %vm5343, %v5344, %v5342
        %v5346 = vrsqrt.pop %v4474
        %v5347 = vmul.f32 %v4474, %v5346
        %vm5348 = vcmp.eq.f32.partialorder %v4474, inf
        %v5349 = vsel %vm5348, %v4474, %v5347
        %vm5350 = vcmp.eq.f32.partialorder %v4474, 0.0
        %v5351 = vand.u32 %v4474, 2147483648
        %v5352 = vsel %vm5350, %v5351, %v5349
        %v5353 = vrsqrt.pop %v4475
        %v5354 = vmul.f32 %v4475, %v5353
        %vm5355 = vcmp.eq.f32.partialorder %v4475, inf
        %v5356 = vsel %vm5355, %v4475, %v5354
        %vm5357 = vcmp.eq.f32.partialorder %v4475, 0.0
        %v5358 = vand.u32 %v4475, 2147483648
        %v5359 = vsel %vm5357, %v5358, %v5356
        %v5360 = vrsqrt.pop %v4476
        %v5361 = vmul.f32 %v4476, %v5360
        %vm5362 = vcmp.eq.f32.partialorder %v4476, inf
        %v5363 = vsel %vm5362, %v4476, %v5361
        %vm5364 = vcmp.eq.f32.partialorder %v4476, 0.0
        %v5365 = vand.u32 %v4476, 2147483648
        %v5366 = vsel %vm5364, %v5365, %v5363
        %v5367 = vrsqrt.pop %v4477
        %v5368 = vmul.f32 %v4477, %v5367
        %vm5369 = vcmp.eq.f32.partialorder %v4477, inf
        %v5370 = vsel %vm5369, %v4477, %v5368
        %vm5371 = vcmp.eq.f32.partialorder %v4477, 0.0
        %v5372 = vand.u32 %v4477, 2147483648
        %v5373 = vsel %vm5371, %v5372, %v5370
        %v5374 = vsub.f32 %v2100, %v4484
        %v5375 = vsub.f32 %v2107, %v4491
        %v5376 = vsub.f32 %v2114, %v4498
        %v5377 = vsub.f32 %v2121, %v4505
        %v5378 = vsub.f32 %v2128, %v4512
        %v5379 = vsub.f32 %v2135, %v4519
        %v5380 = vsub.f32 %v2142, %v4526
        %v5381 = vsub.f32 %v2149, %v4533
        %v5382 = vsub.f32 %v2156, %v4540
        %v5383 = vsub.f32 %v2163, %v4547
        %v5384 = vsub.f32 %v2170, %v4554
        %v5385 = vsub.f32 %v2177, %v4561
        %v5386 = vsub.f32 %v2184, %v4568
        %v5387 = vsub.f32 %v2191, %v4575
        %v5388 = vsub.f32 %v2198, %v4582
        %v5389 = vsub.f32 %v2205, %v4589
        %v5390 = vsub.f32 %v2212, %v4596
        %v5391 = vsub.f32 %v2219, %v4603
        %v5392 = vsub.f32 %v2226, %v4610
        %v5393 = vsub.f32 %v2233, %v4617
        %v5394 = vsub.f32 %v2240, %v4624
        %v5395 = vsub.f32 %v2247, %v4631
        %v5396 = vsub.f32 %v2254, %v4638
        %v5397 = vsub.f32 %v2261, %v4645
        %v5398 = vsub.f32 %v2268, %v4652
        %v5399 = vsub.f32 %v2275, %v4659
        %v5400 = vsub.f32 %v2282, %v4666
        %v5401 = vsub.f32 %v2289, %v4673
        %v5402 = vsub.f32 %v2296, %v4680
        %v5403 = vsub.f32 %v2303, %v4687
        %v5404 = vsub.f32 %v2310, %v4694
        %v5405 = vsub.f32 %v2317, %v4701
        %v5406 = vsub.f32 %v2324, %v4708
        %v5407 = vsub.f32 %v2331, %v4715
        %v5408 = vsub.f32 %v2338, %v4722
        %v5409 = vsub.f32 %v2345, %v4729
        %v5410 = vsub.f32 %v2352, %v4736
        %v5411 = vsub.f32 %v2359, %v4743
        %v5412 = vsub.f32 %v2366, %v4750
        %v5413 = vsub.f32 %v2373, %v4757
        %v5414 = vsub.f32 %v2380, %v4764
        %v5415 = vsub.f32 %v2387, %v4771
        %v5416 = vsub.f32 %v2394, %v4778
        %v5417 = vsub.f32 %v2401, %v4785
        %v5418 = vsub.f32 %v2408, %v4792
        %v5419 = vsub.f32 %v2415, %v4799
        %v5420 = vsub.f32 %v2422, %v4806
        %v5421 = vsub.f32 %v2429, %v4813
        %v5422 = vsub.f32 %v2436, %v4820
        %v5423 = vsub.f32 %v2443, %v4827
        %v5424 = vsub.f32 %v2450, %v4834
        %v5425 = vsub.f32 %v2457, %v4841
        %v5426 = vsub.f32 %v2464, %v4848
        %v5427 = vsub.f32 %v2471, %v4855
        %v5428 = vsub.f32 %v2478, %v4862
        %v5429 = vsub.f32 %v2485, %v4869
        %v5430 = vsub.f32 %v2492, %v4876
        %v5431 = vsub.f32 %v2499, %v4883
        %v5432 = vsub.f32 %v2506, %v4890
        %v5433 = vsub.f32 %v2513, %v4897
        %v5434 = vsub.f32 %v2520, %v4904
        %v5435 = vsub.f32 %v2527, %v4911
        %v5436 = vsub.f32 %v2534, %v4918
        %v5437 = vsub.f32 %v2541, %v4925
        %v5438 = vsub.f32 %v2548, %v4932
        %v5439 = vsub.f32 %v2555, %v4939
        %v5440 = vsub.f32 %v2562, %v4946
        %v5441 = vsub.f32 %v2569, %v4953
        %v5442 = vsub.f32 %v2576, %v4960
        %v5443 = vsub.f32 %v2583, %v4967
        %v5444 = vsub.f32 %v2590, %v4974
        %v5445 = vsub.f32 %v2597, %v4981
        %v5446 = vsub.f32 %v2604, %v4988
        %v5447 = vsub.f32 %v2611, %v4995
        %v5448 = vsub.f32 %v2618, %v5002
        %v5449 = vsub.f32 %v2625, %v5009
        %v5450 = vsub.f32 %v2632, %v5016
        %v5451 = vsub.f32 %v2639, %v5023
        %v5452 = vsub.f32 %v2646, %v5030
        %v5453 = vsub.f32 %v2653, %v5037
        %v5454 = vsub.f32 %v2660, %v5044
        %v5455 = vsub.f32 %v2667, %v5051
        %v5456 = vsub.f32 %v2674, %v5058
        %v5457 = vsub.f32 %v2681, %v5065
        %v5458 = vsub.f32 %v2688, %v5072
        %v5459 = vsub.f32 %v2695, %v5079
        %v5460 = vsub.f32 %v2702, %v5086
        %v5461 = vsub.f32 %v2709, %v5093
        %v5462 = vsub.f32 %v2716, %v5100
        %v5463 = vsub.f32 %v2723, %v5107
        %v5464 = vsub.f32 %v2730, %v5114
        %v5465 = vsub.f32 %v2737, %v5121
        %v5466 = vsub.f32 %v2744, %v5128
        %v5467 = vsub.f32 %v2751, %v5135
        %v5468 = vsub.f32 %v2758, %v5142
        %v5469 = vsub.f32 %v2765, %v5149
        %v5470 = vsub.f32 %v2772, %v5156
        %v5471 = vsub.f32 %v2779, %v5163
        %v5472 = vsub.f32 %v2786, %v5170
        %v5473 = vsub.f32 %v2793, %v5177
        %v5474 = vsub.f32 %v2800, %v5184
        %v5475 = vsub.f32 %v2807, %v5191
        %v5476 = vsub.f32 %v2814, %v5198
        %v5477 = vsub.f32 %v2821, %v5205
        %v5478 = vsub.f32 %v2828, %v5212
        %v5479 = vsub.f32 %v2835, %v5219
        %v5480 = vsub.f32 %v2842, %v5226
        %v5481 = vsub.f32 %v2849, %v5233
        %v5482 = vsub.f32 %v2856, %v5240
        %v5483 = vsub.f32 %v2863, %v5247
        %v5484 = vsub.f32 %v2870, %v5254
        %v5485 = vsub.f32 %v2877, %v5261
        %v5486 = vsub.f32 %v2884, %v5268
        %v5487 = vsub.f32 %v2891, %v5275
        %v5488 = vsub.f32 %v2898, %v5282
        %v5489 = vsub.f32 %v2905, %v5289
        %v5490 = vsub.f32 %v2912, %v5296
        %v5491 = vsub.f32 %v2919, %v5303
        %v5492 = vsub.f32 %v2926, %v5310
        %v5493 = vsub.f32 %v2933, %v5317
        %v5494 = vsub.f32 %v2940, %v5324
        %v5495 = vsub.f32 %v2947, %v5331
        %v5496 = vsub.f32 %v2954, %v5338
        %v5497 = vsub.f32 %v2961, %v5345
        %v5498 = vsub.f32 %v2968, %v5352
        %v5499 = vsub.f32 %v2975, %v5359
        %v5500 = vsub.f32 %v2982, %v5366
        %v5501 = vsub.f32 %v2989, %v5373
        %v5502 = vld [vmem:[%s444] sm:$0xff]
        %v5503 = vld [vmem:[%s444 + $0x8] sm:$0xff]
        %v5504 = vld [vmem:[%s444 + $0x10] sm:$0xff]
        %v5505 = vld [vmem:[%s444 + $0x18] sm:$0xff]
        %v5506 = vld [vmem:[%s444 + $0x20] sm:$0xff]
        %v5507 = vld [vmem:[%s444 + $0x28] sm:$0xff]
        %v5508 = vld [vmem:[%s444 + $0x30] sm:$0xff]
        %v5509 = vld [vmem:[%s444 + $0x38] sm:$0xff]
        %v5510 = vld [vmem:[%s444 + $0x40] sm:$0xff]
        %v5511 = vld [vmem:[%s444 + $0x48] sm:$0xff]
        %v5512 = vld [vmem:[%s444 + $0x50] sm:$0xff]
        %v5513 = vld [vmem:[%s444 + $0x58] sm:$0xff]
        %v5514 = vld [vmem:[%s444 + $0x60] sm:$0xff]
        %v5515 = vld [vmem:[%s444 + $0x68] sm:$0xff]
        %v5516 = vld [vmem:[%s444 + $0x70] sm:$0xff]
        %v5517 = vld [vmem:[%s444 + $0x78] sm:$0xff]
        %v5518 = vld [vmem:[%s444 + $0x80] sm:$0xff]
        %v5519 = vld [vmem:[%s444 + $0x88] sm:$0xff]
        %v5520 = vld [vmem:[%s444 + $0x90] sm:$0xff]
        %v5521 = vld [vmem:[%s444 + $0x98] sm:$0xff]
        %v5522 = vld [vmem:[%s444 + $0xa0] sm:$0xff]
        %v5523 = vld [vmem:[%s444 + $0xa8] sm:$0xff]
        %v5524 = vld [vmem:[%s444 + $0xb0] sm:$0xff]
        %v5525 = vld [vmem:[%s444 + $0xb8] sm:$0xff]
        %v5526 = vld [vmem:[%s444 + $0xc0] sm:$0xff]
        %v5527 = vld [vmem:[%s444 + $0xc8] sm:$0xff]
        %v5528 = vld [vmem:[%s444 + $0xd0] sm:$0xff]
        %v5529 = vld [vmem:[%s444 + $0xd8] sm:$0xff]
        %v5530 = vld [vmem:[%s444 + $0xe0] sm:$0xff]
        %v5531 = vld [vmem:[%s444 + $0xe8] sm:$0xff]
        %v5532 = vld [vmem:[%s444 + $0xf0] sm:$0xff]
        %v5533 = vld [vmem:[%s444 + $0xf8] sm:$0xff]
        %v5534 = vld [vmem:[%s451] sm:$0xf]
        %5535 = vset.pattern.permute.xlu0 0
        %5536 = vperm.xlu0 %5535, %v5502
        %v5537 = vpop.permute.xlu0 %5536
        %5538 = vset.pattern.permute.xlu0 0
        %5539 = vperm.xlu0 %5538, %v5503
        %v5540 = vpop.permute.xlu0 %5539
        %5541 = vset.pattern.permute.xlu0 0
        %5542 = vperm.xlu0 %5541, %v5504
        %v5543 = vpop.permute.xlu0 %5542
        %5544 = vset.pattern.permute.xlu0 0
        %5545 = vperm.xlu0 %5544, %v5505
        %v5546 = vpop.permute.xlu0 %5545
        %5547 = vset.pattern.permute.xlu0 0
        %5548 = vperm.xlu0 %5547, %v5506
        %v5549 = vpop.permute.xlu0 %5548
        %5550 = vset.pattern.permute.xlu0 0
        %5551 = vperm.xlu0 %5550, %v5507
        %v5552 = vpop.permute.xlu0 %5551
        %5553 = vset.pattern.permute.xlu0 0
        %5554 = vperm.xlu0 %5553, %v5508
        %v5555 = vpop.permute.xlu0 %5554
        %5556 = vset.pattern.permute.xlu0 0
        %5557 = vperm.xlu0 %5556, %v5509
        %v5558 = vpop.permute.xlu0 %5557
        %5559 = vset.pattern.permute.xlu0 0
        %5560 = vperm.xlu0 %5559, %v5510
        %v5561 = vpop.permute.xlu0 %5560
        %5562 = vset.pattern.permute.xlu0 0
        %5563 = vperm.xlu0 %5562, %v5511
        %v5564 = vpop.permute.xlu0 %5563
        %5565 = vset.pattern.permute.xlu0 0
        %5566 = vperm.xlu0 %5565, %v5512
        %v5567 = vpop.permute.xlu0 %5566
        %5568 = vset.pattern.permute.xlu0 0
        %5569 = vperm.xlu0 %5568, %v5513
        %v5570 = vpop.permute.xlu0 %5569
        %5571 = vset.pattern.permute.xlu0 0
        %5572 = vperm.xlu0 %5571, %v5514
        %v5573 = vpop.permute.xlu0 %5572
        %5574 = vset.pattern.permute.xlu0 0
        %5575 = vperm.xlu0 %5574, %v5515
        %v5576 = vpop.permute.xlu0 %5575
        %5577 = vset.pattern.permute.xlu0 0
        %5578 = vperm.xlu0 %5577, %v5516
        %v5579 = vpop.permute.xlu0 %5578
        %5580 = vset.pattern.permute.xlu0 0
        %5581 = vperm.xlu0 %5580, %v5517
        %v5582 = vpop.permute.xlu0 %5581
        %5583 = vset.pattern.permute.xlu0 0
        %5584 = vperm.xlu0 %5583, %v5518
        %v5585 = vpop.permute.xlu0 %5584
        %5586 = vset.pattern.permute.xlu0 0
        %5587 = vperm.xlu0 %5586, %v5519
        %v5588 = vpop.permute.xlu0 %5587
        %5589 = vset.pattern.permute.xlu0 0
        %5590 = vperm.xlu0 %5589, %v5520
        %v5591 = vpop.permute.xlu0 %5590
        %5592 = vset.pattern.permute.xlu0 0
        %5593 = vperm.xlu0 %5592, %v5521
        %v5594 = vpop.permute.xlu0 %5593
        %5595 = vset.pattern.permute.xlu0 0
        %5596 = vperm.xlu0 %5595, %v5522
        %v5597 = vpop.permute.xlu0 %5596
        %5598 = vset.pattern.permute.xlu0 0
        %5599 = vperm.xlu0 %5598, %v5523
        %v5600 = vpop.permute.xlu0 %5599
        %5601 = vset.pattern.permute.xlu0 0
        %5602 = vperm.xlu0 %5601, %v5524
        %v5603 = vpop.permute.xlu0 %5602
        %5604 = vset.pattern.permute.xlu0 0
        %5605 = vperm.xlu0 %5604, %v5525
        %v5606 = vpop.permute.xlu0 %5605
        %5607 = vset.pattern.permute.xlu0 0
        %5608 = vperm.xlu0 %5607, %v5526
        %v5609 = vpop.permute.xlu0 %5608
        %5610 = vset.pattern.permute.xlu0 0
        %5611 = vperm.xlu0 %5610, %v5527
        %v5612 = vpop.permute.xlu0 %5611
        %5613 = vset.pattern.permute.xlu0 0
        %5614 = vperm.xlu0 %5613, %v5528
        %v5615 = vpop.permute.xlu0 %5614
        %5616 = vset.pattern.permute.xlu0 0
        %5617 = vperm.xlu0 %5616, %v5529
        %v5618 = vpop.permute.xlu0 %5617
        %5619 = vset.pattern.permute.xlu0 0
        %5620 = vperm.xlu0 %5619, %v5530
        %v5621 = vpop.permute.xlu0 %5620
        %5622 = vset.pattern.permute.xlu0 0
        %5623 = vperm.xlu0 %5622, %v5531
        %v5624 = vpop.permute.xlu0 %5623
        %5625 = vset.pattern.permute.xlu0 0
        %5626 = vperm.xlu0 %5625, %v5532
        %v5627 = vpop.permute.xlu0 %5626
        %5628 = vset.pattern.permute.xlu0 0
        %5629 = vperm.xlu0 %5628, %v5533
        %v5630 = vpop.permute.xlu0 %5629
        %v5631 = vlaneseq
        %v5632 = vshrl.u32 %v5631, 7
        %v5633 = vsub.s32 0, %v5632
        %v5634 = vrot.slane %v5534, %v5633
        %v5635 = vlaneseq
        %v5636 = vshrl.u32 %v5635, 7
        %v5637 = vsub.s32 1, %v5636
        %v5638 = vrot.slane %v5534, %v5637
        %v5639 = vlaneseq
        %v5640 = vshrl.u32 %v5639, 7
        %v5641 = vsub.s32 2, %v5640
        %v5642 = vrot.slane %v5534, %v5641
        %v5643 = vlaneseq
        %v5644 = vshrl.u32 %v5643, 7
        %v5645 = vsub.s32 3, %v5644
        %v5646 = vrot.slane %v5534, %v5645
        %vm5647 = vcmp.eq.s32.totalorder %v5537, %v5634
        %vm5648 = vcmp.eq.s32.totalorder %v5537, %v5638
        %vm5649 = vcmp.eq.s32.totalorder %v5537, %v5642
        %vm5650 = vcmp.eq.s32.totalorder %v5537, %v5646
        %vm5651 = vcmp.eq.s32.totalorder %v5540, %v5634
        %vm5652 = vcmp.eq.s32.totalorder %v5540, %v5638
        %vm5653 = vcmp.eq.s32.totalorder %v5540, %v5642
        %vm5654 = vcmp.eq.s32.totalorder %v5540, %v5646
        %vm5655 = vcmp.eq.s32.totalorder %v5543, %v5634
        %vm5656 = vcmp.eq.s32.totalorder %v5543, %v5638
        %vm5657 = vcmp.eq.s32.totalorder %v5543, %v5642
        %vm5658 = vcmp.eq.s32.totalorder %v5543, %v5646
        %vm5659 = vcmp.eq.s32.totalorder %v5546, %v5634
        %vm5660 = vcmp.eq.s32.totalorder %v5546, %v5638
        %vm5661 = vcmp.eq.s32.totalorder %v5546, %v5642
        %vm5662 = vcmp.eq.s32.totalorder %v5546, %v5646
        %vm5663 = vcmp.eq.s32.totalorder %v5549, %v5634
        %vm5664 = vcmp.eq.s32.totalorder %v5549, %v5638
        %vm5665 = vcmp.eq.s32.totalorder %v5549, %v5642
        %vm5666 = vcmp.eq.s32.totalorder %v5549, %v5646
        %vm5667 = vcmp.eq.s32.totalorder %v5552, %v5634
        %vm5668 = vcmp.eq.s32.totalorder %v5552, %v5638
        %vm5669 = vcmp.eq.s32.totalorder %v5552, %v5642
        %vm5670 = vcmp.eq.s32.totalorder %v5552, %v5646
        %vm5671 = vcmp.eq.s32.totalorder %v5555, %v5634
        %vm5672 = vcmp.eq.s32.totalorder %v5555, %v5638
        %vm5673 = vcmp.eq.s32.totalorder %v5555, %v5642
        %vm5674 = vcmp.eq.s32.totalorder %v5555, %v5646
        %vm5675 = vcmp.eq.s32.totalorder %v5558, %v5634
        %vm5676 = vcmp.eq.s32.totalorder %v5558, %v5638
        %vm5677 = vcmp.eq.s32.totalorder %v5558, %v5642
        %vm5678 = vcmp.eq.s32.totalorder %v5558, %v5646
        %vm5679 = vcmp.eq.s32.totalorder %v5561, %v5634
        %vm5680 = vcmp.eq.s32.totalorder %v5561, %v5638
        %vm5681 = vcmp.eq.s32.totalorder %v5561, %v5642
        %vm5682 = vcmp.eq.s32.totalorder %v5561, %v5646
        %vm5683 = vcmp.eq.s32.totalorder %v5564, %v5634
        %vm5684 = vcmp.eq.s32.totalorder %v5564, %v5638
        %vm5685 = vcmp.eq.s32.totalorder %v5564, %v5642
        %vm5686 = vcmp.eq.s32.totalorder %v5564, %v5646
        %vm5687 = vcmp.eq.s32.totalorder %v5567, %v5634
        %vm5688 = vcmp.eq.s32.totalorder %v5567, %v5638
        %vm5689 = vcmp.eq.s32.totalorder %v5567, %v5642
        %vm5690 = vcmp.eq.s32.totalorder %v5567, %v5646
        %vm5691 = vcmp.eq.s32.totalorder %v5570, %v5634
        %vm5692 = vcmp.eq.s32.totalorder %v5570, %v5638
        %vm5693 = vcmp.eq.s32.totalorder %v5570, %v5642
        %vm5694 = vcmp.eq.s32.totalorder %v5570, %v5646
        %vm5695 = vcmp.eq.s32.totalorder %v5573, %v5634
        %vm5696 = vcmp.eq.s32.totalorder %v5573, %v5638
        %vm5697 = vcmp.eq.s32.totalorder %v5573, %v5642
        %vm5698 = vcmp.eq.s32.totalorder %v5573, %v5646
        %vm5699 = vcmp.eq.s32.totalorder %v5576, %v5634
        %vm5700 = vcmp.eq.s32.totalorder %v5576, %v5638
        %vm5701 = vcmp.eq.s32.totalorder %v5576, %v5642
        %vm5702 = vcmp.eq.s32.totalorder %v5576, %v5646
        %vm5703 = vcmp.eq.s32.totalorder %v5579, %v5634
        %vm5704 = vcmp.eq.s32.totalorder %v5579, %v5638
        %vm5705 = vcmp.eq.s32.totalorder %v5579, %v5642
        %vm5706 = vcmp.eq.s32.totalorder %v5579, %v5646
        %vm5707 = vcmp.eq.s32.totalorder %v5582, %v5634
        %vm5708 = vcmp.eq.s32.totalorder %v5582, %v5638
        %vm5709 = vcmp.eq.s32.totalorder %v5582, %v5642
        %vm5710 = vcmp.eq.s32.totalorder %v5582, %v5646
        %vm5711 = vcmp.eq.s32.totalorder %v5585, %v5634
        %vm5712 = vcmp.eq.s32.totalorder %v5585, %v5638
        %vm5713 = vcmp.eq.s32.totalorder %v5585, %v5642
        %vm5714 = vcmp.eq.s32.totalorder %v5585, %v5646
        %vm5715 = vcmp.eq.s32.totalorder %v5588, %v5634
        %vm5716 = vcmp.eq.s32.totalorder %v5588, %v5638
        %vm5717 = vcmp.eq.s32.totalorder %v5588, %v5642
        %vm5718 = vcmp.eq.s32.totalorder %v5588, %v5646
        %vm5719 = vcmp.eq.s32.totalorder %v5591, %v5634
        %vm5720 = vcmp.eq.s32.totalorder %v5591, %v5638
        %vm5721 = vcmp.eq.s32.totalorder %v5591, %v5642
        %vm5722 = vcmp.eq.s32.totalorder %v5591, %v5646
        %vm5723 = vcmp.eq.s32.totalorder %v5594, %v5634
        %vm5724 = vcmp.eq.s32.totalorder %v5594, %v5638
        %vm5725 = vcmp.eq.s32.totalorder %v5594, %v5642
        %vm5726 = vcmp.eq.s32.totalorder %v5594, %v5646
        %vm5727 = vcmp.eq.s32.totalorder %v5597, %v5634
        %vm5728 = vcmp.eq.s32.totalorder %v5597, %v5638
        %vm5729 = vcmp.eq.s32.totalorder %v5597, %v5642
        %vm5730 = vcmp.eq.s32.totalorder %v5597, %v5646
        %vm5731 = vcmp.eq.s32.totalorder %v5600, %v5634
        %vm5732 = vcmp.eq.s32.totalorder %v5600, %v5638
        %vm5733 = vcmp.eq.s32.totalorder %v5600, %v5642
        %vm5734 = vcmp.eq.s32.totalorder %v5600, %v5646
        %vm5735 = vcmp.eq.s32.totalorder %v5603, %v5634
        %vm5736 = vcmp.eq.s32.totalorder %v5603, %v5638
        %vm5737 = vcmp.eq.s32.totalorder %v5603, %v5642
        %vm5738 = vcmp.eq.s32.totalorder %v5603, %v5646
        %vm5739 = vcmp.eq.s32.totalorder %v5606, %v5634
        %vm5740 = vcmp.eq.s32.totalorder %v5606, %v5638
        %vm5741 = vcmp.eq.s32.totalorder %v5606, %v5642
        %vm5742 = vcmp.eq.s32.totalorder %v5606, %v5646
        %vm5743 = vcmp.eq.s32.totalorder %v5609, %v5634
        %vm5744 = vcmp.eq.s32.totalorder %v5609, %v5638
        %vm5745 = vcmp.eq.s32.totalorder %v5609, %v5642
        %vm5746 = vcmp.eq.s32.totalorder %v5609, %v5646
        %vm5747 = vcmp.eq.s32.totalorder %v5612, %v5634
        %vm5748 = vcmp.eq.s32.totalorder %v5612, %v5638
        %vm5749 = vcmp.eq.s32.totalorder %v5612, %v5642
        %vm5750 = vcmp.eq.s32.totalorder %v5612, %v5646
        %vm5751 = vcmp.eq.s32.totalorder %v5615, %v5634
        %vm5752 = vcmp.eq.s32.totalorder %v5615, %v5638
        %vm5753 = vcmp.eq.s32.totalorder %v5615, %v5642
        %vm5754 = vcmp.eq.s32.totalorder %v5615, %v5646
        %vm5755 = vcmp.eq.s32.totalorder %v5618, %v5634
        %vm5756 = vcmp.eq.s32.totalorder %v5618, %v5638
        %vm5757 = vcmp.eq.s32.totalorder %v5618, %v5642
        %vm5758 = vcmp.eq.s32.totalorder %v5618, %v5646
        %vm5759 = vcmp.eq.s32.totalorder %v5621, %v5634
        %vm5760 = vcmp.eq.s32.totalorder %v5621, %v5638
        %vm5761 = vcmp.eq.s32.totalorder %v5621, %v5642
        %vm5762 = vcmp.eq.s32.totalorder %v5621, %v5646
        %vm5763 = vcmp.eq.s32.totalorder %v5624, %v5634
        %vm5764 = vcmp.eq.s32.totalorder %v5624, %v5638
        %vm5765 = vcmp.eq.s32.totalorder %v5624, %v5642
        %vm5766 = vcmp.eq.s32.totalorder %v5624, %v5646
        %vm5767 = vcmp.eq.s32.totalorder %v5627, %v5634
        %vm5768 = vcmp.eq.s32.totalorder %v5627, %v5638
        %vm5769 = vcmp.eq.s32.totalorder %v5627, %v5642
        %vm5770 = vcmp.eq.s32.totalorder %v5627, %v5646
        %vm5771 = vcmp.eq.s32.totalorder %v5630, %v5634
        %vm5772 = vcmp.eq.s32.totalorder %v5630, %v5638
        %vm5773 = vcmp.eq.s32.totalorder %v5630, %v5642
        %vm5774 = vcmp.eq.s32.totalorder %v5630, %v5646
        %v5775 = vand.u32 2147483647, %v5374
        %v5776 = vand.u32 2147483647, %v5375
        %v5777 = vand.u32 2147483647, %v5376
        %v5778 = vand.u32 2147483647, %v5377
        %v5779 = vand.u32 2147483647, %v5378
        %v5780 = vand.u32 2147483647, %v5379
        %v5781 = vand.u32 2147483647, %v5380
        %v5782 = vand.u32 2147483647, %v5381
        %v5783 = vand.u32 2147483647, %v5382
        %v5784 = vand.u32 2147483647, %v5383
        %v5785 = vand.u32 2147483647, %v5384
        %v5786 = vand.u32 2147483647, %v5385
        %v5787 = vand.u32 2147483647, %v5386
        %v5788 = vand.u32 2147483647, %v5387
        %v5789 = vand.u32 2147483647, %v5388
        %v5790 = vand.u32 2147483647, %v5389
        %v5791 = vand.u32 2147483647, %v5390
        %v5792 = vand.u32 2147483647, %v5391
        %v5793 = vand.u32 2147483647, %v5392
        %v5794 = vand.u32 2147483647, %v5393
        %v5795 = vand.u32 2147483647, %v5394
        %v5796 = vand.u32 2147483647, %v5395
        %v5797 = vand.u32 2147483647, %v5396
        %v5798 = vand.u32 2147483647, %v5397
        %v5799 = vand.u32 2147483647, %v5398
        %v5800 = vand.u32 2147483647, %v5399
        %v5801 = vand.u32 2147483647, %v5400
        %v5802 = vand.u32 2147483647, %v5401
        %v5803 = vand.u32 2147483647, %v5402
        %v5804 = vand.u32 2147483647, %v5403
        %v5805 = vand.u32 2147483647, %v5404
        %v5806 = vand.u32 2147483647, %v5405
        %v5807 = vand.u32 2147483647, %v5406
        %v5808 = vand.u32 2147483647, %v5407
        %v5809 = vand.u32 2147483647, %v5408
        %v5810 = vand.u32 2147483647, %v5409
        %v5811 = vand.u32 2147483647, %v5410
        %v5812 = vand.u32 2147483647, %v5411
        %v5813 = vand.u32 2147483647, %v5412
        %v5814 = vand.u32 2147483647, %v5413
        %v5815 = vand.u32 2147483647, %v5414
        %v5816 = vand.u32 2147483647, %v5415
        %v5817 = vand.u32 2147483647, %v5416
        %v5818 = vand.u32 2147483647, %v5417
        %v5819 = vand.u32 2147483647, %v5418
        %v5820 = vand.u32 2147483647, %v5419
        %v5821 = vand.u32 2147483647, %v5420
        %v5822 = vand.u32 2147483647, %v5421
        %v5823 = vand.u32 2147483647, %v5422
        %v5824 = vand.u32 2147483647, %v5423
        %v5825 = vand.u32 2147483647, %v5424
        %v5826 = vand.u32 2147483647, %v5425
        %v5827 = vand.u32 2147483647, %v5426
        %v5828 = vand.u32 2147483647, %v5427
        %v5829 = vand.u32 2147483647, %v5428
        %v5830 = vand.u32 2147483647, %v5429
        %v5831 = vand.u32 2147483647, %v5430
        %v5832 = vand.u32 2147483647, %v5431
        %v5833 = vand.u32 2147483647, %v5432
        %v5834 = vand.u32 2147483647, %v5433
        %v5835 = vand.u32 2147483647, %v5434
        %v5836 = vand.u32 2147483647, %v5435
        %v5837 = vand.u32 2147483647, %v5436
        %v5838 = vand.u32 2147483647, %v5437
        %v5839 = vand.u32 2147483647, %v5438
        %v5840 = vand.u32 2147483647, %v5439
        %v5841 = vand.u32 2147483647, %v5440
        %v5842 = vand.u32 2147483647, %v5441
        %v5843 = vand.u32 2147483647, %v5442
        %v5844 = vand.u32 2147483647, %v5443
        %v5845 = vand.u32 2147483647, %v5444
        %v5846 = vand.u32 2147483647, %v5445
        %v5847 = vand.u32 2147483647, %v5446
        %v5848 = vand.u32 2147483647, %v5447
        %v5849 = vand.u32 2147483647, %v5448
        %v5850 = vand.u32 2147483647, %v5449
        %v5851 = vand.u32 2147483647, %v5450
        %v5852 = vand.u32 2147483647, %v5451
        %v5853 = vand.u32 2147483647, %v5452
        %v5854 = vand.u32 2147483647, %v5453
        %v5855 = vand.u32 2147483647, %v5454
        %v5856 = vand.u32 2147483647, %v5455
        %v5857 = vand.u32 2147483647, %v5456
        %v5858 = vand.u32 2147483647, %v5457
        %v5859 = vand.u32 2147483647, %v5458
        %v5860 = vand.u32 2147483647, %v5459
        %v5861 = vand.u32 2147483647, %v5460
        %v5862 = vand.u32 2147483647, %v5461
        %v5863 = vand.u32 2147483647, %v5462
        %v5864 = vand.u32 2147483647, %v5463
        %v5865 = vand.u32 2147483647, %v5464
        %v5866 = vand.u32 2147483647, %v5465
        %v5867 = vand.u32 2147483647, %v5466
        %v5868 = vand.u32 2147483647, %v5467
        %v5869 = vand.u32 2147483647, %v5468
        %v5870 = vand.u32 2147483647, %v5469
        %v5871 = vand.u32 2147483647, %v5470
        %v5872 = vand.u32 2147483647, %v5471
        %v5873 = vand.u32 2147483647, %v5472
        %v5874 = vand.u32 2147483647, %v5473
        %v5875 = vand.u32 2147483647, %v5474
        %v5876 = vand.u32 2147483647, %v5475
        %v5877 = vand.u32 2147483647, %v5476
        %v5878 = vand.u32 2147483647, %v5477
        %v5879 = vand.u32 2147483647, %v5478
        %v5880 = vand.u32 2147483647, %v5479
        %v5881 = vand.u32 2147483647, %v5480
        %v5882 = vand.u32 2147483647, %v5481
        %v5883 = vand.u32 2147483647, %v5482
        %v5884 = vand.u32 2147483647, %v5483
        %v5885 = vand.u32 2147483647, %v5484
        %v5886 = vand.u32 2147483647, %v5485
        %v5887 = vand.u32 2147483647, %v5486
        %v5888 = vand.u32 2147483647, %v5487
        %v5889 = vand.u32 2147483647, %v5488
        %v5890 = vand.u32 2147483647, %v5489
        %v5891 = vand.u32 2147483647, %v5490
        %v5892 = vand.u32 2147483647, %v5491
        %v5893 = vand.u32 2147483647, %v5492
        %v5894 = vand.u32 2147483647, %v5493
        %v5895 = vand.u32 2147483647, %v5494
        %v5896 = vand.u32 2147483647, %v5495
        %v5897 = vand.u32 2147483647, %v5496
        %v5898 = vand.u32 2147483647, %v5497
        %v5899 = vand.u32 2147483647, %v5498
        %v5900 = vand.u32 2147483647, %v5499
        %v5901 = vand.u32 2147483647, %v5500
        %v5902 = vand.u32 2147483647, %v5501
        %v5903 = vsel %vm5647, %v5775, 0.0
        %v5904 = vsel %vm5648, %v5776, 0.0
        %v5905 = vsel %vm5649, %v5777, 0.0
        %v5906 = vsel %vm5650, %v5778, 0.0
        %v5907 = vsel %vm5651, %v5779, 0.0
        %v5908 = vsel %vm5652, %v5780, 0.0
        %v5909 = vsel %vm5653, %v5781, 0.0
        %v5910 = vsel %vm5654, %v5782, 0.0
        %v5911 = vsel %vm5655, %v5783, 0.0
        %v5912 = vsel %vm5656, %v5784, 0.0
        %v5913 = vsel %vm5657, %v5785, 0.0
        %v5914 = vsel %vm5658, %v5786, 0.0
        %v5915 = vsel %vm5659, %v5787, 0.0
        %v5916 = vsel %vm5660, %v5788, 0.0
        %v5917 = vsel %vm5661, %v5789, 0.0
        %v5918 = vsel %vm5662, %v5790, 0.0
        %v5919 = vsel %vm5663, %v5791, 0.0
        %v5920 = vsel %vm5664, %v5792, 0.0
        %v5921 = vsel %vm5665, %v5793, 0.0
        %v5922 = vsel %vm5666, %v5794, 0.0
        %v5923 = vsel %vm5667, %v5795, 0.0
        %v5924 = vsel %vm5668, %v5796, 0.0
        %v5925 = vsel %vm5669, %v5797, 0.0
        %v5926 = vsel %vm5670, %v5798, 0.0
        %v5927 = vsel %vm5671, %v5799, 0.0
        %v5928 = vsel %vm5672, %v5800, 0.0
        %v5929 = vsel %vm5673, %v5801, 0.0
        %v5930 = vsel %vm5674, %v5802, 0.0
        %v5931 = vsel %vm5675, %v5803, 0.0
        %v5932 = vsel %vm5676, %v5804, 0.0
        %v5933 = vsel %vm5677, %v5805, 0.0
        %v5934 = vsel %vm5678, %v5806, 0.0
        %v5935 = vsel %vm5679, %v5807, 0.0
        %v5936 = vsel %vm5680, %v5808, 0.0
        %v5937 = vsel %vm5681, %v5809, 0.0
        %v5938 = vsel %vm5682, %v5810, 0.0
        %v5939 = vsel %vm5683, %v5811, 0.0
        %v5940 = vsel %vm5684, %v5812, 0.0
        %v5941 = vsel %vm5685, %v5813, 0.0
        %v5942 = vsel %vm5686, %v5814, 0.0
        %v5943 = vsel %vm5687, %v5815, 0.0
        %v5944 = vsel %vm5688, %v5816, 0.0
        %v5945 = vsel %vm5689, %v5817, 0.0
        %v5946 = vsel %vm5690, %v5818, 0.0
        %v5947 = vsel %vm5691, %v5819, 0.0
        %v5948 = vsel %vm5692, %v5820, 0.0
        %v5949 = vsel %vm5693, %v5821, 0.0
        %v5950 = vsel %vm5694, %v5822, 0.0
        %v5951 = vsel %vm5695, %v5823, 0.0
        %v5952 = vsel %vm5696, %v5824, 0.0
        %v5953 = vsel %vm5697, %v5825, 0.0
        %v5954 = vsel %vm5698, %v5826, 0.0
        %v5955 = vsel %vm5699, %v5827, 0.0
        %v5956 = vsel %vm5700, %v5828, 0.0
        %v5957 = vsel %vm5701, %v5829, 0.0
        %v5958 = vsel %vm5702, %v5830, 0.0
        %v5959 = vsel %vm5703, %v5831, 0.0
        %v5960 = vsel %vm5704, %v5832, 0.0
        %v5961 = vsel %vm5705, %v5833, 0.0
        %v5962 = vsel %vm5706, %v5834, 0.0
        %v5963 = vsel %vm5707, %v5835, 0.0
        %v5964 = vsel %vm5708, %v5836, 0.0
        %v5965 = vsel %vm5709, %v5837, 0.0
        %v5966 = vsel %vm5710, %v5838, 0.0
        %v5967 = vsel %vm5711, %v5839, 0.0
        %v5968 = vsel %vm5712, %v5840, 0.0
        %v5969 = vsel %vm5713, %v5841, 0.0
        %v5970 = vsel %vm5714, %v5842, 0.0
        %v5971 = vsel %vm5715, %v5843, 0.0
        %v5972 = vsel %vm5716, %v5844, 0.0
        %v5973 = vsel %vm5717, %v5845, 0.0
        %v5974 = vsel %vm5718, %v5846, 0.0
        %v5975 = vsel %vm5719, %v5847, 0.0
        %v5976 = vsel %vm5720, %v5848, 0.0
        %v5977 = vsel %vm5721, %v5849, 0.0
        %v5978 = vsel %vm5722, %v5850, 0.0
        %v5979 = vsel %vm5723, %v5851, 0.0
        %v5980 = vsel %vm5724, %v5852, 0.0
        %v5981 = vsel %vm5725, %v5853, 0.0
        %v5982 = vsel %vm5726, %v5854, 0.0
        %v5983 = vsel %vm5727, %v5855, 0.0
        %v5984 = vsel %vm5728, %v5856, 0.0
        %v5985 = vsel %vm5729, %v5857, 0.0
        %v5986 = vsel %vm5730, %v5858, 0.0
        %v5987 = vsel %vm5731, %v5859, 0.0
        %v5988 = vsel %vm5732, %v5860, 0.0
        %v5989 = vsel %vm5733, %v5861, 0.0
        %v5990 = vsel %vm5734, %v5862, 0.0
        %v5991 = vsel %vm5735, %v5863, 0.0
        %v5992 = vsel %vm5736, %v5864, 0.0
        %v5993 = vsel %vm5737, %v5865, 0.0
        %v5994 = vsel %vm5738, %v5866, 0.0
        %v5995 = vsel %vm5739, %v5867, 0.0
        %v5996 = vsel %vm5740, %v5868, 0.0
        %v5997 = vsel %vm5741, %v5869, 0.0
        %v5998 = vsel %vm5742, %v5870, 0.0
        %v5999 = vsel %vm5743, %v5871, 0.0
        %v6000 = vsel %vm5744, %v5872, 0.0
        %v6001 = vsel %vm5745, %v5873, 0.0
        %v6002 = vsel %vm5746, %v5874, 0.0
        %v6003 = vsel %vm5747, %v5875, 0.0
        %v6004 = vsel %vm5748, %v5876, 0.0
        %v6005 = vsel %vm5749, %v5877, 0.0
        %v6006 = vsel %vm5750, %v5878, 0.0
        %v6007 = vsel %vm5751, %v5879, 0.0
        %v6008 = vsel %vm5752, %v5880, 0.0
        %v6009 = vsel %vm5753, %v5881, 0.0
        %v6010 = vsel %vm5754, %v5882, 0.0
        %v6011 = vsel %vm5755, %v5883, 0.0
        %v6012 = vsel %vm5756, %v5884, 0.0
        %v6013 = vsel %vm5757, %v5885, 0.0
        %v6014 = vsel %vm5758, %v5886, 0.0
        %v6015 = vsel %vm5759, %v5887, 0.0
        %v6016 = vsel %vm5760, %v5888, 0.0
        %v6017 = vsel %vm5761, %v5889, 0.0
        %v6018 = vsel %vm5762, %v5890, 0.0
        %v6019 = vsel %vm5763, %v5891, 0.0
        %v6020 = vsel %vm5764, %v5892, 0.0
        %v6021 = vsel %vm5765, %v5893, 0.0
        %v6022 = vsel %vm5766, %v5894, 0.0
        %v6023 = vsel %vm5767, %v5895, 0.0
        %v6024 = vsel %vm5768, %v5896, 0.0
        %v6025 = vsel %vm5769, %v5897, 0.0
        %v6026 = vsel %vm5770, %v5898, 0.0
        %v6027 = vsel %vm5771, %v5899, 0.0
        %v6028 = vsel %vm5772, %v5900, 0.0
        %v6029 = vsel %vm5773, %v5901, 0.0
        %v6030 = vsel %vm5774, %v5902, 0.0
        %v6031 = vmul.f32 %v5903, %v5903
        %v6032 = vmul.f32 %v5907, %v5907
        %v6033 = vmul.f32 %v5911, %v5911
        %v6034 = vmul.f32 %v5915, %v5915
        %v6035 = vmul.f32 %v5919, %v5919
        %v6036 = vmul.f32 %v5923, %v5923
        %v6037 = vmul.f32 %v5927, %v5927
        %v6038 = vmul.f32 %v5931, %v5931
        %v6039 = vmul.f32 %v5935, %v5935
        %v6040 = vmul.f32 %v5939, %v5939
        %v6041 = vmul.f32 %v5943, %v5943
        %v6042 = vmul.f32 %v5947, %v5947
        %v6043 = vmul.f32 %v5951, %v5951
        %v6044 = vmul.f32 %v5955, %v5955
        %v6045 = vmul.f32 %v5959, %v5959
        %v6046 = vmul.f32 %v5963, %v5963
        %v6047 = vmul.f32 %v5967, %v5967
        %v6048 = vmul.f32 %v5971, %v5971
        %v6049 = vmul.f32 %v5975, %v5975
        %v6050 = vmul.f32 %v5979, %v5979
        %v6051 = vmul.f32 %v5983, %v5983
        %v6052 = vmul.f32 %v5987, %v5987
        %v6053 = vmul.f32 %v5991, %v5991
        %v6054 = vmul.f32 %v5995, %v5995
        %v6055 = vmul.f32 %v5999, %v5999
        %v6056 = vmul.f32 %v6003, %v6003
        %v6057 = vmul.f32 %v6007, %v6007
        %v6058 = vmul.f32 %v6011, %v6011
        %v6059 = vmul.f32 %v6015, %v6015
        %v6060 = vmul.f32 %v6019, %v6019
        %v6061 = vmul.f32 %v6023, %v6023
        %v6062 = vmul.f32 %v6027, %v6027
        %v6063 = vadd.f32 %v5903, %v5904
        %v6064 = vadd.f32 %v5907, %v5908
        %v6065 = vadd.f32 %v5911, %v5912
        %v6066 = vadd.f32 %v5915, %v5916
        %v6067 = vadd.f32 %v5919, %v5920
        %v6068 = vadd.f32 %v5923, %v5924
        %v6069 = vadd.f32 %v5927, %v5928
        %v6070 = vadd.f32 %v5931, %v5932
        %v6071 = vadd.f32 %v5935, %v5936
        %v6072 = vadd.f32 %v5939, %v5940
        %v6073 = vadd.f32 %v5943, %v5944
        %v6074 = vadd.f32 %v5947, %v5948
        %v6075 = vadd.f32 %v5951, %v5952
        %v6076 = vadd.f32 %v5955, %v5956
        %v6077 = vadd.f32 %v5959, %v5960
        %v6078 = vadd.f32 %v5963, %v5964
        %v6079 = vadd.f32 %v5967, %v5968
        %v6080 = vadd.f32 %v5971, %v5972
        %v6081 = vadd.f32 %v5975, %v5976
        %v6082 = vadd.f32 %v5979, %v5980
        %v6083 = vadd.f32 %v5983, %v5984
        %v6084 = vadd.f32 %v5987, %v5988
        %v6085 = vadd.f32 %v5991, %v5992
        %v6086 = vadd.f32 %v5995, %v5996
        %v6087 = vadd.f32 %v5999, %v6000
        %v6088 = vadd.f32 %v6003, %v6004
        %v6089 = vadd.f32 %v6007, %v6008
        %v6090 = vadd.f32 %v6011, %v6012
        %v6091 = vadd.f32 %v6015, %v6016
        %v6092 = vadd.f32 %v6019, %v6020
        %v6093 = vadd.f32 %v6023, %v6024
        %v6094 = vadd.f32 %v6027, %v6028
        %v6095 = vmul.f32 %v5904, %v5904
        %v6096 = vmul.f32 %v5908, %v5908
        %v6097 = vmul.f32 %v5912, %v5912
        %v6098 = vmul.f32 %v5916, %v5916
        %v6099 = vmul.f32 %v5920, %v5920
        %v6100 = vmul.f32 %v5924, %v5924
        %v6101 = vmul.f32 %v5928, %v5928
        %v6102 = vmul.f32 %v5932, %v5932
        %v6103 = vmul.f32 %v5936, %v5936
        %v6104 = vmul.f32 %v5940, %v5940
        %v6105 = vmul.f32 %v5944, %v5944
        %v6106 = vmul.f32 %v5948, %v5948
        %v6107 = vmul.f32 %v5952, %v5952
        %v6108 = vmul.f32 %v5956, %v5956
        %v6109 = vmul.f32 %v5960, %v5960
        %v6110 = vmul.f32 %v5964, %v5964
        %v6111 = vmul.f32 %v5968, %v5968
        %v6112 = vmul.f32 %v5972, %v5972
        %v6113 = vmul.f32 %v5976, %v5976
        %v6114 = vmul.f32 %v5980, %v5980
        %v6115 = vmul.f32 %v5984, %v5984
        %v6116 = vmul.f32 %v5988, %v5988
        %v6117 = vmul.f32 %v5992, %v5992
        %v6118 = vmul.f32 %v5996, %v5996
        %v6119 = vmul.f32 %v6000, %v6000
        %v6120 = vmul.f32 %v6004, %v6004
        %v6121 = vmul.f32 %v6008, %v6008
        %v6122 = vmul.f32 %v6012, %v6012
        %v6123 = vmul.f32 %v6016, %v6016
        %v6124 = vmul.f32 %v6020, %v6020
        %v6125 = vmul.f32 %v6024, %v6024
        %v6126 = vmul.f32 %v6028, %v6028
        %v6127 = vadd.f32 %v6031, %v6095
        %v6128 = vadd.f32 %v6032, %v6096
        %v6129 = vadd.f32 %v6033, %v6097
        %v6130 = vadd.f32 %v6034, %v6098
        %v6131 = vadd.f32 %v6035, %v6099
        %v6132 = vadd.f32 %v6036, %v6100
        %v6133 = vadd.f32 %v6037, %v6101
        %v6134 = vadd.f32 %v6038, %v6102
        %v6135 = vadd.f32 %v6039, %v6103
        %v6136 = vadd.f32 %v6040, %v6104
        %v6137 = vadd.f32 %v6041, %v6105
        %v6138 = vadd.f32 %v6042, %v6106
        %v6139 = vadd.f32 %v6043, %v6107
        %v6140 = vadd.f32 %v6044, %v6108
        %v6141 = vadd.f32 %v6045, %v6109
        %v6142 = vadd.f32 %v6046, %v6110
        %v6143 = vadd.f32 %v6047, %v6111
        %v6144 = vadd.f32 %v6048, %v6112
        %v6145 = vadd.f32 %v6049, %v6113
        %v6146 = vadd.f32 %v6050, %v6114
        %v6147 = vadd.f32 %v6051, %v6115
        %v6148 = vadd.f32 %v6052, %v6116
        %v6149 = vadd.f32 %v6053, %v6117
        %v6150 = vadd.f32 %v6054, %v6118
        %v6151 = vadd.f32 %v6055, %v6119
        %v6152 = vadd.f32 %v6056, %v6120
        %v6153 = vadd.f32 %v6057, %v6121
        %v6154 = vadd.f32 %v6058, %v6122
        %v6155 = vadd.f32 %v6059, %v6123
        %v6156 = vadd.f32 %v6060, %v6124
        %v6157 = vadd.f32 %v6061, %v6125
        %v6158 = vadd.f32 %v6062, %v6126
        %v6159 = vadd.f32 %v6063, %v5905
        %v6160 = vadd.f32 %v6064, %v5909
        %v6161 = vadd.f32 %v6065, %v5913
        %v6162 = vadd.f32 %v6066, %v5917
        %v6163 = vadd.f32 %v6067, %v5921
        %v6164 = vadd.f32 %v6068, %v5925
        %v6165 = vadd.f32 %v6069, %v5929
        %v6166 = vadd.f32 %v6070, %v5933
        %v6167 = vadd.f32 %v6071, %v5937
        %v6168 = vadd.f32 %v6072, %v5941
        %v6169 = vadd.f32 %v6073, %v5945
        %v6170 = vadd.f32 %v6074, %v5949
        %v6171 = vadd.f32 %v6075, %v5953
        %v6172 = vadd.f32 %v6076, %v5957
        %v6173 = vadd.f32 %v6077, %v5961
        %v6174 = vadd.f32 %v6078, %v5965
        %v6175 = vadd.f32 %v6079, %v5969
        %v6176 = vadd.f32 %v6080, %v5973
        %v6177 = vadd.f32 %v6081, %v5977
        %v6178 = vadd.f32 %v6082, %v5981
        %v6179 = vadd.f32 %v6083, %v5985
        %v6180 = vadd.f32 %v6084, %v5989
        %v6181 = vadd.f32 %v6085, %v5993
        %v6182 = vadd.f32 %v6086, %v5997
        %v6183 = vadd.f32 %v6087, %v6001
        %v6184 = vadd.f32 %v6088, %v6005
        %v6185 = vadd.f32 %v6089, %v6009
        %v6186 = vadd.f32 %v6090, %v6013
        %v6187 = vadd.f32 %v6091, %v6017
        %v6188 = vadd.f32 %v6092, %v6021
        %v6189 = vadd.f32 %v6093, %v6025
        %v6190 = vadd.f32 %v6094, %v6029
        %v6191 = vmul.f32 %v5905, %v5905
        %v6192 = vmul.f32 %v5909, %v5909
        %v6193 = vmul.f32 %v5913, %v5913
        %v6194 = vmul.f32 %v5917, %v5917
        %v6195 = vmul.f32 %v5921, %v5921
        %v6196 = vmul.f32 %v5925, %v5925
        %v6197 = vmul.f32 %v5929, %v5929
        %v6198 = vmul.f32 %v5933, %v5933
        %v6199 = vmul.f32 %v5937, %v5937
        %v6200 = vmul.f32 %v5941, %v5941
        %v6201 = vmul.f32 %v5945, %v5945
        %v6202 = vmul.f32 %v5949, %v5949
        %v6203 = vmul.f32 %v5953, %v5953
        %v6204 = vmul.f32 %v5957, %v5957
        %v6205 = vmul.f32 %v5961, %v5961
        %v6206 = vmul.f32 %v5965, %v5965
        %v6207 = vmul.f32 %v5969, %v5969
        %v6208 = vmul.f32 %v5973, %v5973
        %v6209 = vmul.f32 %v5977, %v5977
        %v6210 = vmul.f32 %v5981, %v5981
        %v6211 = vmul.f32 %v5985, %v5985
        %v6212 = vmul.f32 %v5989, %v5989
        %v6213 = vmul.f32 %v5993, %v5993
        %v6214 = vmul.f32 %v5997, %v5997
        %v6215 = vmul.f32 %v6001, %v6001
        %v6216 = vmul.f32 %v6005, %v6005
        %v6217 = vmul.f32 %v6009, %v6009
        %v6218 = vmul.f32 %v6013, %v6013
        %v6219 = vmul.f32 %v6017, %v6017
        %v6220 = vmul.f32 %v6021, %v6021
        %v6221 = vmul.f32 %v6025, %v6025
        %v6222 = vmul.f32 %v6029, %v6029
        %v6223 = vadd.f32 %v6127, %v6191
        %v6224 = vadd.f32 %v6128, %v6192
        %v6225 = vadd.f32 %v6129, %v6193
        %v6226 = vadd.f32 %v6130, %v6194
        %v6227 = vadd.f32 %v6131, %v6195
        %v6228 = vadd.f32 %v6132, %v6196
        %v6229 = vadd.f32 %v6133, %v6197
        %v6230 = vadd.f32 %v6134, %v6198
        %v6231 = vadd.f32 %v6135, %v6199
        %v6232 = vadd.f32 %v6136, %v6200
        %v6233 = vadd.f32 %v6137, %v6201
        %v6234 = vadd.f32 %v6138, %v6202
        %v6235 = vadd.f32 %v6139, %v6203
        %v6236 = vadd.f32 %v6140, %v6204
        %v6237 = vadd.f32 %v6141, %v6205
        %v6238 = vadd.f32 %v6142, %v6206
        %v6239 = vadd.f32 %v6143, %v6207
        %v6240 = vadd.f32 %v6144, %v6208
        %v6241 = vadd.f32 %v6145, %v6209
        %v6242 = vadd.f32 %v6146, %v6210
        %v6243 = vadd.f32 %v6147, %v6211
        %v6244 = vadd.f32 %v6148, %v6212
        %v6245 = vadd.f32 %v6149, %v6213
        %v6246 = vadd.f32 %v6150, %v6214
        %v6247 = vadd.f32 %v6151, %v6215
        %v6248 = vadd.f32 %v6152, %v6216
        %v6249 = vadd.f32 %v6153, %v6217
        %v6250 = vadd.f32 %v6154, %v6218
        %v6251 = vadd.f32 %v6155, %v6219
        %v6252 = vadd.f32 %v6156, %v6220
        %v6253 = vadd.f32 %v6157, %v6221
        %v6254 = vadd.f32 %v6158, %v6222
        %v6255 = vadd.f32 %v6159, %v5906
        %v6256 = vadd.f32 %v6160, %v5910
        %v6257 = vadd.f32 %v6161, %v5914
        %v6258 = vadd.f32 %v6162, %v5918
        %v6259 = vadd.f32 %v6163, %v5922
        %v6260 = vadd.f32 %v6164, %v5926
        %v6261 = vadd.f32 %v6165, %v5930
        %v6262 = vadd.f32 %v6166, %v5934
        %v6263 = vadd.f32 %v6167, %v5938
        %v6264 = vadd.f32 %v6168, %v5942
        %v6265 = vadd.f32 %v6169, %v5946
        %v6266 = vadd.f32 %v6170, %v5950
        %v6267 = vadd.f32 %v6171, %v5954
        %v6268 = vadd.f32 %v6172, %v5958
        %v6269 = vadd.f32 %v6173, %v5962
        %v6270 = vadd.f32 %v6174, %v5966
        %v6271 = vadd.f32 %v6175, %v5970
        %v6272 = vadd.f32 %v6176, %v5974
        %v6273 = vadd.f32 %v6177, %v5978
        %v6274 = vadd.f32 %v6178, %v5982
        %v6275 = vadd.f32 %v6179, %v5986
        %v6276 = vadd.f32 %v6180, %v5990
        %v6277 = vadd.f32 %v6181, %v5994
        %v6278 = vadd.f32 %v6182, %v5998
        %v6279 = vadd.f32 %v6183, %v6002
        %v6280 = vadd.f32 %v6184, %v6006
        %v6281 = vadd.f32 %v6185, %v6010
        %v6282 = vadd.f32 %v6186, %v6014
        %v6283 = vadd.f32 %v6187, %v6018
        %v6284 = vadd.f32 %v6188, %v6022
        %v6285 = vadd.f32 %v6189, %v6026
        %v6286 = vadd.f32 %v6190, %v6030
        %v6287 = vmul.f32 %v5906, %v5906
        %v6288 = vmul.f32 %v5910, %v5910
        %v6289 = vmul.f32 %v5914, %v5914
        %v6290 = vmul.f32 %v5918, %v5918
        %v6291 = vmul.f32 %v5922, %v5922
        %v6292 = vmul.f32 %v5926, %v5926
        %v6293 = vmul.f32 %v5930, %v5930
        %v6294 = vmul.f32 %v5934, %v5934
        %v6295 = vmul.f32 %v5938, %v5938
        %v6296 = vmul.f32 %v5942, %v5942
        %v6297 = vmul.f32 %v5946, %v5946
        %v6298 = vmul.f32 %v5950, %v5950
        %v6299 = vmul.f32 %v5954, %v5954
        %v6300 = vmul.f32 %v5958, %v5958
        %v6301 = vmul.f32 %v5962, %v5962
        %v6302 = vmul.f32 %v5966, %v5966
        %v6303 = vmul.f32 %v5970, %v5970
        %v6304 = vmul.f32 %v5974, %v5974
        %v6305 = vmul.f32 %v5978, %v5978
        %v6306 = vmul.f32 %v5982, %v5982
        %v6307 = vmul.f32 %v5986, %v5986
        %v6308 = vmul.f32 %v5990, %v5990
        %v6309 = vmul.f32 %v5994, %v5994
        %v6310 = vmul.f32 %v5998, %v5998
        %v6311 = vmul.f32 %v6002, %v6002
        %v6312 = vmul.f32 %v6006, %v6006
        %v6313 = vmul.f32 %v6010, %v6010
        %v6314 = vmul.f32 %v6014, %v6014
        %v6315 = vmul.f32 %v6018, %v6018
        %v6316 = vmul.f32 %v6022, %v6022
        %v6317 = vmul.f32 %v6026, %v6026
        %v6318 = vmul.f32 %v6030, %v6030
        %v6319 = vadd.f32 %v6223, %v6287
        %v6320 = vadd.f32 %v6224, %v6288
        %v6321 = vadd.f32 %v6225, %v6289
        %v6322 = vadd.f32 %v6226, %v6290
        %v6323 = vadd.f32 %v6227, %v6291
        %v6324 = vadd.f32 %v6228, %v6292
        %v6325 = vadd.f32 %v6229, %v6293
        %v6326 = vadd.f32 %v6230, %v6294
        %v6327 = vadd.f32 %v6231, %v6295
        %v6328 = vadd.f32 %v6232, %v6296
        %v6329 = vadd.f32 %v6233, %v6297
        %v6330 = vadd.f32 %v6234, %v6298
        %v6331 = vadd.f32 %v6235, %v6299
        %v6332 = vadd.f32 %v6236, %v6300
        %v6333 = vadd.f32 %v6237, %v6301
        %v6334 = vadd.f32 %v6238, %v6302
        %v6335 = vadd.f32 %v6239, %v6303
        %v6336 = vadd.f32 %v6240, %v6304
        %v6337 = vadd.f32 %v6241, %v6305
        %v6338 = vadd.f32 %v6242, %v6306
        %v6339 = vadd.f32 %v6243, %v6307
        %v6340 = vadd.f32 %v6244, %v6308
        %v6341 = vadd.f32 %v6245, %v6309
        %v6342 = vadd.f32 %v6246, %v6310
        %v6343 = vadd.f32 %v6247, %v6311
        %v6344 = vadd.f32 %v6248, %v6312
        %v6345 = vadd.f32 %v6249, %v6313
        %v6346 = vadd.f32 %v6250, %v6314
        %v6347 = vadd.f32 %v6251, %v6315
        %v6348 = vadd.f32 %v6252, %v6316
        %v6349 = vadd.f32 %v6253, %v6317
        %v6350 = vadd.f32 %v6254, %v6318
        %v6351 = vadd.f32 %v6255, %v6256
        %v6352 = vadd.f32 %v6319, %v6320
        %v6353 = vadd.f32 %v6351, %v6257
        %v6354 = vadd.f32 %v6352, %v6321
        %v6355 = vadd.f32 %v6353, %v6258
        %v6356 = vadd.f32 %v6354, %v6322
        %v6357 = vadd.f32 %v6355, %v6259
        %v6358 = vadd.f32 %v6356, %v6323
        %v6359 = vadd.f32 %v6357, %v6260
        %v6360 = vadd.f32 %v6358, %v6324
        %v6361 = vadd.f32 %v6359, %v6261
        %v6362 = vadd.f32 %v6360, %v6325
        %v6363 = vadd.f32 %v6361, %v6262
        %v6364 = vadd.f32 %v6362, %v6326
        %v6365 = vadd.f32 %v6363, %v6263
        %v6366 = vadd.f32 %v6364, %v6327
        %v6367 = vadd.f32 %v6365, %v6264
        %v6368 = vadd.f32 %v6366, %v6328
        %v6369 = vadd.f32 %v6367, %v6265
        %v6370 = vadd.f32 %v6368, %v6329
        %v6371 = vadd.f32 %v6369, %v6266
        %v6372 = vadd.f32 %v6370, %v6330
        %v6373 = vadd.f32 %v6371, %v6267
        %v6374 = vadd.f32 %v6372, %v6331
        %v6375 = vadd.f32 %v6373, %v6268
        %v6376 = vadd.f32 %v6374, %v6332
        %v6377 = vadd.f32 %v6375, %v6269
        %v6378 = vadd.f32 %v6376, %v6333
        %v6379 = vadd.f32 %v6377, %v6270
        %v6380 = vadd.f32 %v6378, %v6334
        %v6381 = vadd.f32 %v6379, %v6271
        %v6382 = vadd.f32 %v6380, %v6335
        %v6383 = vadd.f32 %v6381, %v6272
        %v6384 = vadd.f32 %v6382, %v6336
        %v6385 = vadd.f32 %v6383, %v6273
        %v6386 = vadd.f32 %v6384, %v6337
        %v6387 = vadd.f32 %v6385, %v6274
        %v6388 = vadd.f32 %v6386, %v6338
        %v6389 = vadd.f32 %v6387, %v6275
        %v6390 = vadd.f32 %v6388, %v6339
        %v6391 = vadd.f32 %v6389, %v6276
        %v6392 = vadd.f32 %v6390, %v6340
        %v6393 = vadd.f32 %v6391, %v6277
        %v6394 = vadd.f32 %v6392, %v6341
        %v6395 = vadd.f32 %v6393, %v6278
        %v6396 = vadd.f32 %v6394, %v6342
        %v6397 = vadd.f32 %v6395, %v6279
        %v6398 = vadd.f32 %v6396, %v6343
        %v6399 = vadd.f32 %v6397, %v6280
        %v6400 = vadd.f32 %v6398, %v6344
        %v6401 = vadd.f32 %v6399, %v6281
        %v6402 = vadd.f32 %v6400, %v6345
        %v6403 = vadd.f32 %v6401, %v6282
        %v6404 = vadd.f32 %v6402, %v6346
        %v6405 = vadd.f32 %v6403, %v6283
        %v6406 = vadd.f32 %v6404, %v6347
        %v6407 = vadd.f32 %v6405, %v6284
        %v6408 = vadd.f32 %v6406, %v6348
        %v6409 = vadd.f32 %v6407, %v6285
        %v6410 = vadd.f32 %v6408, %v6349
        %v6411 = vadd.f32 %v6409, %v6286
        %v6412 = vadd.f32 %v6410, %v6350
        %v6413 = vld [vmem:[#allocation2] sm:$0xff]
        %v6414 = vadd.f32 %v6413, %v6411
        %6415 = vst [vmem:[#allocation2] sm:$0xff] %v6414
        %v6416 = vld [vmem:[#allocation3] sm:$0xff]
        %v6417 = vadd.f32 %v6416, %v6412
        %6418 = vst [vmem:[#allocation3] sm:$0xff] %v6417
      $region52: #{_forward_impl.3} parent=43 // pred_fallthru
        _
      // Predicated region
      $region53: #{_forward_impl.3} parent=43 // pred_check
        %p6419 = pneg %p463
      $region54: #{_forward_impl.3} parent=43 // pred_check_branch
        %6421 = sbr.rel (%p6419) target = $region56
      $region55: #{_forward_impl.3} parent=43 // pred_region
        %v6422 = vld [vmem:[#allocation2] sm:$0xff]
        %6423 = vst [vmem:[%s458] sm:$0xff] %v6422
        %v6424 = vld [vmem:[#allocation3] sm:$0xff]
        %6425 = vst [vmem:[%s462] sm:$0xff] %v6424
      $region56: #{_forward_impl.3} parent=43 // pred_fallthru
        _
      %p6426 = scmp.lt.s32.totalorder %s35, 1
      %s6427 = scalar_select %p6426, %s35, 1
      %s6428 = smul.addr %s6427, 8
      %s6429 = scalar_lea.vmem %s8, %s6428
      %p6430 = scmp.lt.s32.totalorder %s35, 1
      %s6431 = scalar_select %p6430, %s35, 1
      %s6432 = smul.addr %s6431, 8
      %s6433 = scalar_lea.vmem %s9, %s6432
      // Predicated region
      $region57: #{_forward_impl.3} parent=43 // pred_check
        %p6434 = pneg %p229
      $region58: #{_forward_impl.3} parent=43 // pred_check_branch
        %6436 = sbr.rel (%p6434) target = $region60
      $region59: #{_forward_impl.3} parent=43 // pred_region
        _
      $region60: #{_forward_impl.3} parent=43 // pred_fallthru
        _
      // Predicated region
      $region61: #{_forward_impl.3} parent=43 // pred_check
        %p6437 = pneg %p255
      $region62: #{_forward_impl.3} parent=43 // pred_check_branch
        %6439 = sbr.rel (%p6437) target = $region64
      $region63: #{_forward_impl.3} parent=43 // pred_region
        _
      $region64: #{_forward_impl.3} parent=43 // pred_fallthru
        _
    $region44: #{_forward_impl.3} parent=5 // pred_fallthru
      _
    %p6440 = scmp.le.s32.totalorder 2, %s26
    // Predicated region
    $region65: #{_forward_impl.3} parent=5 // pred_check
      %p6441 = pneg %p6440
    $region66: #{_forward_impl.3} parent=5 // pred_check_branch
      %6443 = sbr.rel (%p6441) target = $region68
    $region67: #{_forward_impl.3} parent=5 // pred_region
      %s6444 = ssub.s32 %s26, 2
      // Predicated region
      $region69: #{_forward_impl.3} parent=67 // pred_check
        %p6445 = pneg %p235
      $region70: #{_forward_impl.3} parent=67 // pred_check_branch
        %6447 = sbr.rel (%p6445) target = $region72
      $region71: #{_forward_impl.3} parent=67 // pred_region
        %p6448 = scmp.lt.s32.totalorder %s37, 1
        %s6449 = scalar_select %p6448, %s37, 1
        %s6450 = smul.addr %s6449, 8
        %s6451 = scalar_lea.vmem %s8, %s6450
      $region72: #{_forward_impl.3} parent=67 // pred_fallthru
        _
      // Predicated region
      $region73: #{_forward_impl.3} parent=67 // pred_check
        %p6452 = pneg %p261
      $region74: #{_forward_impl.3} parent=67 // pred_check_branch
        %6454 = sbr.rel (%p6452) target = $region76
      $region75: #{_forward_impl.3} parent=67 // pred_region
        %p6455 = scmp.lt.s32.totalorder %s37, 1
        %s6456 = scalar_select %p6455, %s37, 1
        %s6457 = smul.addr %s6456, 8
        %s6458 = scalar_lea.vmem %s9, %s6457
      $region76: #{_forward_impl.3} parent=67 // pred_fallthru
        _
    $region68: #{_forward_impl.3} parent=5 // pred_fallthru
      _
  $region6: #{_forward_impl.3} parent=0 // loop_footer
    %s30 = sadd.s32 1, %s26
  $region7: #{_forward_impl.3} parent=0 // loop_footer_branch
    %25 = sbr.rel target = $region3
  $region8: #{_forward_impl.3} parent=0 // loop_exit
    _

</llo_original>
